<compile_context>
chip_gen: v5e
topology: v5e:2x2
jax: 0.10.0
libtpu: 0.0.40
codegen_flags: <defaults>
</compile_context>

<pallas_src>
import functools

import jax
import jax.numpy as jnp
from jax import lax
from jax.experimental import pallas as pl
from jax.experimental.pallas import tpu as pltpu

VMEM_SPEC = pl.BlockSpec(memory_space=pltpu.MemorySpace.VMEM)
_COMPILER_PARAMS = pltpu.CompilerParams(vmem_limit_bytes=32 * 1024 * 1024)


# ---------------------------------------------------------------------------
# Fused bidirectional LSTM cell: both directions in one matmul + one sigmoid.
# Gate columns interleaved per gate block [i_f i_b | f_f f_b | g_f g_b | o_f
# o_b]; carries h, c are (B, 2H) = [fwd | bwd].  The g-gate columns of the
# packed weights are pre-scaled by 2 so tanh(z) = 2*sigmoid(2z) - 1 falls out
# of the single full-width sigmoid.
# ---------------------------------------------------------------------------
def _fused_cell(gx_t, h, c, w_hh, hidden):
    h2 = 2 * hidden
    gates = gx_t + jnp.dot(h, w_hh, preferred_element_type=jnp.float32)
    s = jax.nn.sigmoid(gates)                         # one (B, 8H) EUP push
    i_g = s[:, 0 * h2:1 * h2]
    f_g = s[:, 1 * h2:2 * h2]
    g_g = 2.0 * s[:, 2 * h2:3 * h2] - 1.0             # tanh via scaled sigmoid
    o_g = s[:, 3 * h2:4 * h2]
    c_new = f_g * c + i_g * g_g
    h_new = o_g * jnp.tanh(c_new)
    return h_new, c_new


# ---------------------------------------------------------------------------
# Bidirectional LSTM layer (full (T, B, 2H) output) — used for all but the
# last layer.
# ---------------------------------------------------------------------------
def _bilstm_layer_kernel(x_ref, mask_ref, w_ih_ref, w_hh_ref, b_ref,
                         y_ref, gx_ref, *, seq_len, batch, hidden):
    H, H2 = hidden, 2 * hidden

    # Hoisted input projection: one (T*B, Din)@(Din, 8H) MXU matmul for BOTH
    # directions, bias folded in once.
    x_flat = x_ref[...].reshape(seq_len * batch, -1)
    gx_ref[...] = (jnp.dot(x_flat, w_ih_ref[...],
                           preferred_element_type=jnp.float32)
                   + b_ref[...]).reshape(seq_len, batch, 4 * H2)

    w_hh = w_hh_ref[...]                              # hoisted weight load
    fwd_cols = jnp.broadcast_to(mask_ref[...], (batch, 4 * H2)) > 0.5

    def step(t, carry):
        h, c = carry
        rt = seq_len - 1 - t
        # fwd columns take time t, bwd columns take time T-1-t (cheap VPU
        # select, off the h->h serial critical path).
        gx_t = jnp.where(fwd_cols, gx_ref[t], gx_ref[rt])
        h_new, c_new = _fused_cell(gx_t, h, c, w_hh, hidden)
        y_ref[t, :, 0:H] = h_new[:, 0:H]              # fwd output at time t
        y_ref[rt, :, H:H2] = h_new[:, H:H2]           # bwd output at time T-1-t
        return h_new, c_new

    init = (jnp.zeros((batch, H2), jnp.float32),
            jnp.zeros((batch, H2), jnp.float32))
    lax.fori_loop(0, seq_len, step, init, unroll=True)


def bilstm_layer(x_tbd, layer_params, gate_mask):
    seq_len, batch, _ = x_tbd.shape
    hidden = layer_params["w_hh"].shape[0] // 2
    kernel = functools.partial(_bilstm_layer_kernel, seq_len=seq_len,
                               batch=batch, hidden=hidden)
    return pl.pallas_call(
        kernel,
        out_shape=jax.ShapeDtypeStruct((seq_len, batch, 2 * hidden),
                                       jnp.float32),
        in_specs=[VMEM_SPEC] * 5,
        out_specs=VMEM_SPEC,
        scratch_shapes=[pltpu.VMEM((seq_len, batch, 8 * hidden), jnp.float32)],
        compiler_params=_COMPILER_PARAMS,
    )(x_tbd, gate_mask, layer_params["w_ih"], layer_params["w_hh"],
      layer_params["b"])


# ---------------------------------------------------------------------------
# Final fused stage: last bidirectional LSTM layer (last-timestep feature
# only) + full CNN branch + FC head, all in ONE pallas_call.
# ---------------------------------------------------------------------------
def _final_fused_kernel(y_ref, mask_ref, w_ih_ref, w_hh_ref, b_ref,
                        x_ref, conv_w_ref, conv_b_ref, gamma_ref, beta_ref,
                        fc1c_ref, fc1rf_ref, fc1rb_ref, fc1b_ref,
                        fc2w_ref, fc2b_ref, fc3w_ref, fc3b_ref,
                        out_ref, gx_ref, xpad_ref,
                        *, seq_len, batch, hidden, emb, eps):
    H, H2 = hidden, 2 * hidden
    T, B = seq_len, batch

    # ---------------- last bidirectional LSTM layer -------------------------
    y_flat = y_ref[...].reshape(T * B, -1)
    gx_ref[...] = (jnp.dot(y_flat, w_ih_ref[...],
                           preferred_element_type=jnp.float32)
                   + b_ref[...]).reshape(T, B, 4 * H2)

    w_hh = w_hh_ref[...]
    fwd_cols = jnp.broadcast_to(mask_ref[...], (B, 4 * H2)) > 0.5

    # Peeled step 0: the backward half of output[:, -1, :] is the backward
    # state after processing ONLY the last token, i.e. after this first step.
    zeros2h = jnp.zeros((B, H2), jnp.float32)
    gx0 = jnp.where(fwd_cols, gx_ref[0], gx_ref[T - 1])
    h0, c0 = _fused_cell(gx0, zeros2h, zeros2h, w_hh, hidden)
    rnn_bwd = h0[:, H:H2]

    def step(t, carry):
        h_p, c_p = carry
        rt = T - 1 - t
        gx_t = jnp.where(fwd_cols, gx_ref[t], gx_ref[rt])
        return _fused_cell(gx_t, h_p, c_p, w_hh, hidden)

    h_fin, _ = lax.fori_loop(1, T, step, (h0, c0), unroll=True)
    rnn_fwd = h_fin[:, 0:H]          # fwd final hidden == output[:, -1, :H]

    # ---------------- CNN branch ---------------------------------------------
    # 'same' padding via in-kernel zero halo (no host-side jnp.pad / HBM trip).
    xpad_ref[0:3] = jnp.zeros((3, B, emb), jnp.float32)
    xpad_ref[3:3 + T] = x_ref[...]
    xpad_ref[3 + T:6 + T] = jnp.zeros((3, B, emb), jnp.float32)
    xpf = xpad_ref[...].reshape((T + 6) * B, emb)

    # 3x Conv1d (k=3/5/7) fused as 7 accumulating matmuls against per-tap,
    # lane-padded (E, 128) weights — no lane-axis concat, no relayout.
    acc = jnp.dot(xpf[0:T * B], conv_w_ref[0],
                  preferred_element_type=jnp.float32)
    for m in range(1, 7):
        acc = acc + jnp.dot(xpf[m * B:m * B + T * B], conv_w_ref[m],
                            preferred_element_type=jnp.float32)
    acc = acc + conv_b_ref[...]

    # Shared BatchNorm1d, training-mode batch stats over (batch, length),
    # two-pass mean / centred variance for numerical robustness.
    # TODO(synk): running-stat updates are not modeled (do not affect output).
    inv_n = 1.0 / float(T * B)
    mean = jnp.sum(acc, axis=0, keepdims=True) * inv_n
    cent = acc - mean
    var = jnp.sum(cent * cent, axis=0, keepdims=True) * inv_n
    yb = cent * lax.rsqrt(var + eps) * gamma_ref[...] + beta_ref[...]
    yb = jnp.maximum(yb, 0.0)                                   # ReLU
    cnn_feat = jnp.max(yb.reshape(T, B, -1), axis=0)            # global max-pool

    # ---------------- FC head (feature concat fused into fc1) ----------------
    h1 = (jnp.dot(cnn_feat, fc1c_ref[...], preferred_element_type=jnp.float32)
          + jnp.dot(rnn_fwd, fc1rf_ref[...], preferred_element_type=jnp.float32)
          + jnp.dot(rnn_bwd, fc1rb_ref[...], preferred_element_type=jnp.float32)
          + fc1b_ref[...])
    h1 = jnp.maximum(h1, 0.0)
    h2 = jnp.maximum(jnp.dot(h1, fc2w_ref[...],
                             preferred_element_type=jnp.float32)
                     + fc2b_ref[...], 0.0)
    out_ref[...] = (jnp.dot(h2, fc3w_ref[...],
                            preferred_element_type=jnp.float32)
                    + fc3b_ref[...])


def final_fused_stage(y_prev, x_emb, params):
    seq_len, batch, _ = y_prev.shape
    lp = params["lstm"][-1]
    hidden = lp["w_hh"].shape[0] // 2
    emb = x_emb.shape[-1]
    label_num = params["fc3_w"].shape[-1]
    kernel = functools.partial(_final_fused_kernel, seq_len=seq_len,
                               batch=batch, hidden=hidden, emb=emb, eps=1e-5)
    return pl.pallas_call(
        kernel,
        out_shape=jax.ShapeDtypeStruct((batch, label_num), jnp.float32),
        in_specs=[VMEM_SPEC] * 18,
        out_specs=VMEM_SPEC,
        scratch_shapes=[pltpu.VMEM((seq_len, batch, 8 * hidden), jnp.float32),
                        pltpu.VMEM((seq_len + 6, batch, emb), jnp.float32)],
        compiler_params=_COMPILER_PARAMS,
    )(y_prev, params["gate_mask"], lp["w_ih"], lp["w_hh"], lp["b"],
      x_emb, params["conv_w"], params["conv_b"],
      params["bn_gamma"], params["bn_beta"],
      params["fc1_w_cnn"], params["fc1_w_rnn_f"], params["fc1_w_rnn_b"],
      params["fc1_b"], params["fc2_w"], params["fc2_b"],
      params["fc3_w"], params["fc3_b"])


# ---------------------------------------------------------------------------
# Full forward
# ---------------------------------------------------------------------------
def c_rnn_forward(token_ids, params):
    # Embedding lookup produced time-major directly (only the tiny int id
    # matrix is transposed, not the embedded activations). Gather stays in
    # plain JAX (glue).
    ids_t = jnp.transpose(token_ids)                              # (T, B)
    x = params["embedding"][ids_t].astype(jnp.float32)            # (T, B, E)

    h = x
    for layer_params in params["lstm"][:-1]:
        h = bilstm_layer(h, layer_params, params["gate_mask"])    # (T, B, 2H)
    return final_fused_stage(h, x, params)                        # (B, labels)


# ---------------------------------------------------------------------------
# Deterministic synthetic parameters (shapes follow the PyTorch __init__),
# packed into the fused operand layouts used by the kernels.
# ---------------------------------------------------------------------------
def _pack_bilstm_dir_weights(fwd, bwd, hidden):
    """Pack per-direction PyTorch-layout LSTM weights into fused operands.

    fwd/bwd: (W_ih (4H, Din), W_hh (4H, H), b (4H,) = b_ih + b_hh), gate order
    i, f, g, o.  Returns W_ih (Din, 8H), W_hh (2H, 8H block-diagonal) and
    b (1, 8H) with per-gate interleaved columns [._f | ._b]; g-gate columns
    are pre-scaled by 2 for the single-sigmoid tanh trick.
    """
    w_ih_f, w_hh_f, b_f = fwd
    w_ih_b, w_hh_b, b_b = bwd
    H = hidden
    din = w_ih_f.shape[1]
    wih = jnp.zeros((din, 8 * H), jnp.float32)
    whh = jnp.zeros((2 * H, 8 * H), jnp.float32)
    bias = jnp.zeros((1, 8 * H), jnp.float32)
    for q in range(4):                          # i, f, g, o
        scale = 2.0 if q == 2 else 1.0
        c0 = 2 * q * H
        rows = slice(q * H, (q + 1) * H)
        wih = wih.at[:, c0:c0 + H].set(scale * w_ih_f[rows].T)
        wih = wih.at[:, c0 + H:c0 + 2 * H].set(scale * w_ih_b[rows].T)
        whh = whh.at[0:H, c0:c0 + H].set(scale * w_hh_f[rows].T)
        whh = whh.at[H:2 * H, c0 + H:c0 + 2 * H].set(scale * w_hh_b[rows].T)
        bias = bias.at[0, c0:c0 + H].set(scale * b_f[rows])
        bias = bias.at[0, c0 + H:c0 + 2 * H].set(scale * b_b[rows])
    return wih, whh, bias


def init_params(key, *, num_embeddings, embed_dim, out_channels,
                hidden, layers, label_num):
    keys = iter(jax.random.split(key, 128))

    def nrm(shape, scale=0.1):
        return (scale * jax.random.normal(next(keys), shape)).astype(jnp.float32)

    params = {}
    params["embedding"] = nrm((num_embeddings, embed_dim), 1.0)

    # ---- CNN: per-tap conv weights, output channels lane-padded to 128 ----
    C = out_channels
    C3 = 3 * C
    CP = ((C3 + 127) // 128) * 128            # 48 -> 128, exact zero padding
    conv_w = jnp.zeros((7, embed_dim, CP), jnp.float32)
    conv_b = jnp.zeros((1, CP), jnp.float32)
    for ci, k in enumerate((3, 5, 7)):
        w_k = nrm((C, embed_dim, k))          # PyTorch Conv1d weight layout
        b_k = nrm((C,))
        off = (7 - k) // 2                    # align pad=(k-1)//2 taps
        for j in range(k):
            conv_w = conv_w.at[off + j, :,
                               ci * C:(ci + 1) * C].set(w_k[:, :, j].T)
        conv_b = conv_b.at[0, ci * C:(ci + 1) * C].set(b_k)
    params["conv_w"] = conv_w
    params["conv_b"] = conv_b
    # Shared BatchNorm1d (default gamma=1, beta=0) tiled per conv block;
    # padded lanes get gamma=0 so they stay exactly zero through BN/ReLU/max.
    params["bn_gamma"] = jnp.zeros((1, CP), jnp.float32).at[0, :C3].set(1.0)
    params["bn_beta"] = jnp.zeros((1, CP), jnp.float32)

    # ---- bidirectional LSTM, fused/interleaved packed weights ----
    H = hidden
    lstm = []
    in_dim = embed_dim
    for _layer in range(layers):
        dirs = []
        for _d in range(2):
            dirs.append((nrm((4 * H, in_dim)),              # W_ih
                         nrm((4 * H, H)),                   # W_hh
                         nrm((4 * H,)) + nrm((4 * H,))))    # b_ih + b_hh
        w_ih, w_hh, b = _pack_bilstm_dir_weights(dirs[0], dirs[1], H)
        lstm.append({"w_ih": w_ih, "w_hh": w_hh, "b": b})
        in_dim = 2 * H
    params["lstm"] = lstm
    # Constant column mask: 1.0 on forward-direction gate columns.
    cols = jnp.arange(8 * H)
    params["gate_mask"] = ((cols % (2 * H)) < H).astype(jnp.float32).reshape(
        1, 8 * H)

    # ---- FC head: concat fused via split fc1 weight; fc2 out lane-padded ----
    fc1_w = nrm((C3 + 2 * H, 256))
    params["fc1_w_cnn"] = jnp.zeros((CP, 256), jnp.float32).at[:C3].set(
        fc1_w[:C3])
    params["fc1_w_rnn_f"] = fc1_w[C3:C3 + H]
    params["fc1_w_rnn_b"] = fc1_w[C3 + H:C3 + 2 * H]
    params["fc1_b"] = nrm((1, 256))
    params["fc2_w"] = jnp.zeros((256, 128), jnp.float32).at[:, :64].set(
        nrm((256, 64)))
    params["fc2_b"] = jnp.zeros((1, 128), jnp.float32).at[0, :64].set(
        nrm((64,)))
    params["fc3_w"] = jnp.zeros((128, label_num), jnp.float32).at[:64].set(
        nrm((64, label_num)))
    params["fc3_b"] = nrm((1, label_num))
    return params


if __name__ == "__main__":
    # batch chosen as a multiple of 8 so in-kernel (T,B,D)->(T*B,D) flattens
    # are sublane-aligned pure leading-dim collapses (no relayout).
    B, T = 8, 16
    NUM_EMB, EMB_DIM, OUT_CH, HIDDEN, LAYERS, LABELS = 100, 32, 16, 32, 2, 5

    root = jax.random.PRNGKey(0)
    pkey, xkey = jax.random.split(root)
    params = init_params(pkey, num_embeddings=NUM_EMB, embed_dim=EMB_DIM,
                         out_channels=OUT_CH, hidden=HIDDEN, layers=LAYERS,
                         label_num=LABELS)
    token_ids = jax.random.randint(xkey, (B, T), 0, NUM_EMB, dtype=jnp.int32)

    out = jax.jit(c_rnn_forward)(token_ids, params)
    out = jax.block_until_ready(out)

    assert out.shape == (B, LABELS), out.shape
    assert bool(jnp.all(jnp.isfinite(out)))
    print("KERNEL_OK")
</pallas_src>

<mosaic_0001>
module attributes {stable_mosaic.version = 11 : i64} {
  func.func @_final_fused_kernel(%arg0: memref<16x8x64xf32, #tpu.memory_space<vmem>>, %arg1: memref<1x256xf32, #tpu.memory_space<vmem>>, %arg2: memref<64x256xf32, #tpu.memory_space<vmem>>, %arg3: memref<64x256xf32, #tpu.memory_space<vmem>>, %arg4: memref<1x256xf32, #tpu.memory_space<vmem>>, %arg5: memref<16x8x32xf32, #tpu.memory_space<vmem>>, %arg6: memref<7x32x128xf32, #tpu.memory_space<vmem>>, %arg7: memref<1x128xf32, #tpu.memory_space<vmem>>, %arg8: memref<1x128xf32, #tpu.memory_space<vmem>>, %arg9: memref<1x128xf32, #tpu.memory_space<vmem>>, %arg10: memref<128x256xf32, #tpu.memory_space<vmem>>, %arg11: memref<32x256xf32, #tpu.memory_space<vmem>>, %arg12: memref<32x256xf32, #tpu.memory_space<vmem>>, %arg13: memref<1x256xf32, #tpu.memory_space<vmem>>, %arg14: memref<256x128xf32, #tpu.memory_space<vmem>>, %arg15: memref<1x128xf32, #tpu.memory_space<vmem>>, %arg16: memref<128x5xf32, #tpu.memory_space<vmem>>, %arg17: memref<1x5xf32, #tpu.memory_space<vmem>>, %arg18: memref<8x5xf32, #tpu.memory_space<vmem>>, %arg19: memref<16x8x256xf32, #tpu.memory_space<vmem>>, %arg20: memref<22x8x32xf32, #tpu.memory_space<vmem>>) attributes {dimension_semantics = [], scalar_prefetch = 0 : i64, scratch_operands = 2 : i64, tpu.core_type = #tpu.core_type<tc>} {
    %c0 = arith.constant 0 : index
    %c0_0 = arith.constant 0 : index
    %c0_1 = arith.constant 0 : index
    %0 = vector.load %arg0[%c0, %c0_0, %c0_1] : memref<16x8x64xf32, #tpu.memory_space<vmem>>, vector<16x8x64xf32>
    %1 = vector.shape_cast %0 : vector<16x8x64xf32> to vector<128x64xf32>
    %c0_2 = arith.constant 0 : index
    %c0_3 = arith.constant 0 : index
    %2 = vector.load %arg2[%c0_2, %c0_3] : memref<64x256xf32, #tpu.memory_space<vmem>>, vector<64x256xf32>
    %cst = arith.constant dense<0.000000e+00> : vector<128x256xf32>
    %3 = tpu.matmul %1, %2, %cst {dimension_numbers = #tpu.dot_dimension_numbers<[1], [0], [0], [1], [0, 0, 1, 1], [], []>} : vector<128x64xf32>, vector<64x256xf32>, vector<128x256xf32> -> vector<128x256xf32>
    %c0_4 = arith.constant 0 : index
    %c0_5 = arith.constant 0 : index
    %4 = vector.load %arg4[%c0_4, %c0_5] : memref<1x256xf32, #tpu.memory_space<vmem>>, vector<1x256xf32>
    %5 = vector.broadcast %4 : vector<1x256xf32> to vector<128x256xf32>
    %6 = arith.addf %3, %5 : vector<128x256xf32>
    %7 = vector.shape_cast %6 : vector<128x256xf32> to vector<16x8x256xf32>
    %c0_6 = arith.constant 0 : index
    %c0_7 = arith.constant 0 : index
    %c0_8 = arith.constant 0 : index
    %8 = vector.load %arg19[%c0_6, %c0_7, %c0_8] : memref<16x8x256xf32, #tpu.memory_space<vmem>>, vector<16x8x256xf32>
    tpu.vector_store %arg19[%c0_6, %c0_7, %c0_8], %7 {strides = array<i32>} : memref<16x8x256xf32, #tpu.memory_space<vmem>>, vector<16x8x256xf32>,
    %c0_9 = arith.constant 0 : index
    %c0_10 = arith.constant 0 : index
    %9 = vector.load %arg3[%c0_9, %c0_10] : memref<64x256xf32, #tpu.memory_space<vmem>>, vector<64x256xf32>
    %c0_11 = arith.constant 0 : index
    %c0_12 = arith.constant 0 : index
    %10 = vector.load %arg1[%c0_11, %c0_12] : memref<1x256xf32, #tpu.memory_space<vmem>>, vector<1x256xf32>
    %11 = vector.shape_cast %10 : vector<1x256xf32> to vector<1x256xf32>
    %12 = vector.broadcast %11 : vector<1x256xf32> to vector<8x256xf32>
    %cst_13 = arith.constant 5.000000e-01 : f32
    %13 = vector.broadcast %cst_13 : f32 to vector<8x256xf32>
    %14 = arith.cmpf ogt, %12, %13 : vector<8x256xf32>
    %cst_14 = arith.constant 0.000000e+00 : f32
    %15 = vector.broadcast %cst_14 : f32 to vector<8x64xf32>
    %c0_15 = arith.constant 0 : index
    %c0_16 = arith.constant 0 : index
    %c0_17 = arith.constant 0 : index
    %16 = vector.load %arg19[%c0_15, %c0_16, %c0_17] : memref<16x8x256xf32, #tpu.memory_space<vmem>>, vector<1x8x256xf32>
    %17 = vector.shape_cast %16 : vector<1x8x256xf32> to vector<8x256xf32>
    %c15 = arith.constant 15 : index
    %c0_18 = arith.constant 0 : index
    %c0_19 = arith.constant 0 : index
    %18 = vector.load %arg19[%c15, %c0_18, %c0_19] : memref<16x8x256xf32, #tpu.memory_space<vmem>>, vector<1x8x256xf32>
    %19 = vector.shape_cast %18 : vector<1x8x256xf32> to vector<8x256xf32>
    %20 = arith.select %14, %17, %19 : vector<8x256xi1>, vector<8x256xf32>
    %cst_20 = arith.constant dense<0.000000e+00> : vector<8x256xf32>
    %21 = tpu.matmul %15, %9, %cst_20 {dimension_numbers = #tpu.dot_dimension_numbers<[1], [0], [0], [1], [0, 0, 1, 1], [], []>} : vector<8x64xf32>, vector<64x256xf32>, vector<8x256xf32> -> vector<8x256xf32>
    %22 = arith.addf %20, %21 : vector<8x256xf32>
    %23 = arith.negf %22 : vector<8x256xf32>
    %24 = math.exp %23 : vector<8x256xf32>
    %cst_21 = arith.constant 1.000000e+00 : f32
    %25 = vector.broadcast %cst_21 : f32 to vector<8x256xf32>
    %26 = arith.addf %25, %24 : vector<8x256xf32>
    %27 = arith.divf %25, %26 : vector<8x256xf32>
    %28 = vector.extract_strided_slice %27 {offsets = [0, 0], sizes = [8, 64], strides = [1, 1]} : vector<8x256xf32> to vector<8x64xf32>
    %29 = vector.extract_strided_slice %27 {offsets = [0, 64], sizes = [8, 64], strides = [1, 1]} : vector<8x256xf32> to vector<8x64xf32>
    %30 = vector.extract_strided_slice %27 {offsets = [0, 128], sizes = [8, 64], strides = [1, 1]} : vector<8x256xf32> to vector<8x64xf32>
    %cst_22 = arith.constant 2.000000e+00 : f32
    %31 = vector.broadcast %cst_22 : f32 to vector<8x64xf32>
    %32 = arith.mulf %31, %30 : vector<8x64xf32>
    %cst_23 = arith.constant 1.000000e+00 : f32
    %33 = vector.broadcast %cst_23 : f32 to vector<8x64xf32>
    %34 = arith.subf %32, %33 : vector<8x64xf32>
    %35 = vector.extract_strided_slice %27 {offsets = [0, 192], sizes = [8, 64], strides = [1, 1]} : vector<8x256xf32> to vector<8x64xf32>
    %36 = arith.mulf %29, %15 : vector<8x64xf32>
    %37 = arith.mulf %28, %34 : vector<8x64xf32>
    %38 = arith.addf %36, %37 : vector<8x64xf32>
    %39 = math.tanh %38 : vector<8x64xf32>
    %40 = arith.mulf %35, %39 : vector<8x64xf32>
    %41 = vector.extract_strided_slice %40 {offsets = [0, 32], sizes = [8, 32], strides = [1, 1]} : vector<8x64xf32> to vector<8x32xf32>
    %c1_i32 = arith.constant 1 : i32
    %c15_i32 = arith.constant 15 : i32
    %42 = arith.subi %c15_i32, %c1_i32 : i32
    %43 = arith.index_cast %c1_i32 : i32 to index
    %c0_24 = arith.constant 0 : index
    %c0_25 = arith.constant 0 : index
    %44 = vector.load %arg19[%43, %c0_24, %c0_25] : memref<16x8x256xf32, #tpu.memory_space<vmem>>, vector<1x8x256xf32>
    %45 = vector.shape_cast %44 : vector<1x8x256xf32> to vector<8x256xf32>
    %46 = arith.index_cast %42 : i32 to index
    %c0_26 = arith.constant 0 : index
    %c0_27 = arith.constant 0 : index
    %47 = vector.load %arg19[%46, %c0_26, %c0_27] : memref<16x8x256xf32, #tpu.memory_space<vmem>>, vector<1x8x256xf32>
    %48 = vector.shape_cast %47 : vector<1x8x256xf32> to vector<8x256xf32>
    %49 = arith.select %14, %45, %48 : vector<8x256xi1>, vector<8x256xf32>
    %cst_28 = arith.constant dense<0.000000e+00> : vector<8x256xf32>
    %50 = tpu.matmul %40, %9, %cst_28 {dimension_numbers = #tpu.dot_dimension_numbers<[1], [0], [0], [1], [0, 0, 1, 1], [], []>} : vector<8x64xf32>, vector<64x256xf32>, vector<8x256xf32> -> vector<8x256xf32>
    %51 = arith.addf %49, %50 : vector<8x256xf32>
    %52 = arith.negf %51 : vector<8x256xf32>
    %53 = math.exp %52 : vector<8x256xf32>
    %cst_29 = arith.constant 1.000000e+00 : f32
    %54 = vector.broadcast %cst_29 : f32 to vector<8x256xf32>
    %55 = arith.addf %54, %53 : vector<8x256xf32>
    %56 = arith.divf %54, %55 : vector<8x256xf32>
    %57 = vector.extract_strided_slice %56 {offsets = [0, 0], sizes = [8, 64], strides = [1, 1]} : vector<8x256xf32> to vector<8x64xf32>
    %58 = vector.extract_strided_slice %56 {offsets = [0, 64], sizes = [8, 64], strides = [1, 1]} : vector<8x256xf32> to vector<8x64xf32>
    %59 = vector.extract_strided_slice %56 {offsets = [0, 128], sizes = [8, 64], strides = [1, 1]} : vector<8x256xf32> to vector<8x64xf32>
    %cst_30 = arith.constant 2.000000e+00 : f32
    %60 = vector.broadcast %cst_30 : f32 to vector<8x64xf32>
    %61 = arith.mulf %60, %59 : vector<8x64xf32>
    %cst_31 = arith.constant 1.000000e+00 : f32
    %62 = vector.broadcast %cst_31 : f32 to vector<8x64xf32>
    %63 = arith.subf %61, %62 : vector<8x64xf32>
    %64 = vector.extract_strided_slice %56 {offsets = [0, 192], sizes = [8, 64], strides = [1, 1]} : vector<8x256xf32> to vector<8x64xf32>
    %65 = arith.mulf %58, %38 : vector<8x64xf32>
    %66 = arith.mulf %57, %63 : vector<8x64xf32>
    %67 = arith.addf %65, %66 : vector<8x64xf32>
    %68 = math.tanh %67 : vector<8x64xf32>
    %69 = arith.mulf %64, %68 : vector<8x64xf32>
    %c2_i32 = arith.constant 2 : i32
    %c15_i32_32 = arith.constant 15 : i32
    %70 = arith.subi %c15_i32_32, %c2_i32 : i32
    %71 = arith.index_cast %c2_i32 : i32 to index
    %c0_33 = arith.constant 0 : index
    %c0_34 = arith.constant 0 : index
    %72 = vector.load %arg19[%71, %c0_33, %c0_34] : memref<16x8x256xf32, #tpu.memory_space<vmem>>, vector<1x8x256xf32>
    %73 = vector.shape_cast %72 : vector<1x8x256xf32> to vector<8x256xf32>
    %74 = arith.index_cast %70 : i32 to index
    %c0_35 = arith.constant 0 : index
    %c0_36 = arith.constant 0 : index
    %75 = vector.load %arg19[%74, %c0_35, %c0_36] : memref<16x8x256xf32, #tpu.memory_space<vmem>>, vector<1x8x256xf32>
    %76 = vector.shape_cast %75 : vector<1x8x256xf32> to vector<8x256xf32>
    %77 = arith.select %14, %73, %76 : vector<8x256xi1>, vector<8x256xf32>
    %cst_37 = arith.constant dense<0.000000e+00> : vector<8x256xf32>
    %78 = tpu.matmul %69, %9, %cst_37 {dimension_numbers = #tpu.dot_dimension_numbers<[1], [0], [0], [1], [0, 0, 1, 1], [], []>} : vector<8x64xf32>, vector<64x256xf32>, vector<8x256xf32> -> vector<8x256xf32>
    %79 = arith.addf %77, %78 : vector<8x256xf32>
    %80 = arith.negf %79 : vector<8x256xf32>
    %81 = math.exp %80 : vector<8x256xf32>
    %cst_38 = arith.constant 1.000000e+00 : f32
    %82 = vector.broadcast %cst_38 : f32 to vector<8x256xf32>
    %83 = arith.addf %82, %81 : vector<8x256xf32>
    %84 = arith.divf %82, %83 : vector<8x256xf32>
    %85 = vector.extract_strided_slice %84 {offsets = [0, 0], sizes = [8, 64], strides = [1, 1]} : vector<8x256xf32> to vector<8x64xf32>
    %86 = vector.extract_strided_slice %84 {offsets = [0, 64], sizes = [8, 64], strides = [1, 1]} : vector<8x256xf32> to vector<8x64xf32>
    %87 = vector.extract_strided_slice %84 {offsets = [0, 128], sizes = [8, 64], strides = [1, 1]} : vector<8x256xf32> to vector<8x64xf32>
    %cst_39 = arith.constant 2.000000e+00 : f32
    %88 = vector.broadcast %cst_39 : f32 to vector<8x64xf32>
    %89 = arith.mulf %88, %87 : vector<8x64xf32>
    %cst_40 = arith.constant 1.000000e+00 : f32
    %90 = vector.broadcast %cst_40 : f32 to vector<8x64xf32>
    %91 = arith.subf %89, %90 : vector<8x64xf32>
    %92 = vector.extract_strided_slice %84 {offsets = [0, 192], sizes = [8, 64], strides = [1, 1]} : vector<8x256xf32> to vector<8x64xf32>
    %93 = arith.mulf %86, %67 : vector<8x64xf32>
    %94 = arith.mulf %85, %91 : vector<8x64xf32>
    %95 = arith.addf %93, %94 : vector<8x64xf32>
    %96 = math.tanh %95 : vector<8x64xf32>
    %97 = arith.mulf %92, %96 : vector<8x64xf32>
    %c3_i32 = arith.constant 3 : i32
    %c15_i32_41 = arith.constant 15 : i32
    %98 = arith.subi %c15_i32_41, %c3_i32 : i32
    %99 = arith.index_cast %c3_i32 : i32 to index
    %c0_42 = arith.constant 0 : index
    %c0_43 = arith.constant 0 : index
    %100 = vector.load %arg19[%99, %c0_42, %c0_43] : memref<16x8x256xf32, #tpu.memory_space<vmem>>, vector<1x8x256xf32>
    %101 = vector.shape_cast %100 : vector<1x8x256xf32> to vector<8x256xf32>
    %102 = arith.index_cast %98 : i32 to index
    %c0_44 = arith.constant 0 : index
    %c0_45 = arith.constant 0 : index
    %103 = vector.load %arg19[%102, %c0_44, %c0_45] : memref<16x8x256xf32, #tpu.memory_space<vmem>>, vector<1x8x256xf32>
    %104 = vector.shape_cast %103 : vector<1x8x256xf32> to vector<8x256xf32>
    %105 = arith.select %14, %101, %104 : vector<8x256xi1>, vector<8x256xf32>
    %cst_46 = arith.constant dense<0.000000e+00> : vector<8x256xf32>
    %106 = tpu.matmul %97, %9, %cst_46 {dimension_numbers = #tpu.dot_dimension_numbers<[1], [0], [0], [1], [0, 0, 1, 1], [], []>} : vector<8x64xf32>, vector<64x256xf32>, vector<8x256xf32> -> vector<8x256xf32>
    %107 = arith.addf %105, %106 : vector<8x256xf32>
    %108 = arith.negf %107 : vector<8x256xf32>
    %109 = math.exp %108 : vector<8x256xf32>
    %cst_47 = arith.constant 1.000000e+00 : f32
    %110 = vector.broadcast %cst_47 : f32 to vector<8x256xf32>
    %111 = arith.addf %110, %109 : vector<8x256xf32>
    %112 = arith.divf %110, %111 : vector<8x256xf32>
    %113 = vector.extract_strided_slice %112 {offsets = [0, 0], sizes = [8, 64], strides = [1, 1]} : vector<8x256xf32> to vector<8x64xf32>
    %114 = vector.extract_strided_slice %112 {offsets = [0, 64], sizes = [8, 64], strides = [1, 1]} : vector<8x256xf32> to vector<8x64xf32>
    %115 = vector.extract_strided_slice %112 {offsets = [0, 128], sizes = [8, 64], strides = [1, 1]} : vector<8x256xf32> to vector<8x64xf32>
    %cst_48 = arith.constant 2.000000e+00 : f32
    %116 = vector.broadcast %cst_48 : f32 to vector<8x64xf32>
    %117 = arith.mulf %116, %115 : vector<8x64xf32>
    %cst_49 = arith.constant 1.000000e+00 : f32
    %118 = vector.broadcast %cst_49 : f32 to vector<8x64xf32>
    %119 = arith.subf %117, %118 : vector<8x64xf32>
    %120 = vector.extract_strided_slice %112 {offsets = [0, 192], sizes = [8, 64], strides = [1, 1]} : vector<8x256xf32> to vector<8x64xf32>
    %121 = arith.mulf %114, %95 : vector<8x64xf32>
    %122 = arith.mulf %113, %119 : vector<8x64xf32>
    %123 = arith.addf %121, %122 : vector<8x64xf32>
    %124 = math.tanh %123 : vector<8x64xf32>
    %125 = arith.mulf %120, %124 : vector<8x64xf32>
    %c4_i32 = arith.constant 4 : i32
    %c15_i32_50 = arith.constant 15 : i32
    %126 = arith.subi %c15_i32_50, %c4_i32 : i32
    %127 = arith.index_cast %c4_i32 : i32 to index
    %c0_51 = arith.constant 0 : index
    %c0_52 = arith.constant 0 : index
    %128 = vector.load %arg19[%127, %c0_51, %c0_52] : memref<16x8x256xf32, #tpu.memory_space<vmem>>, vector<1x8x256xf32>
    %129 = vector.shape_cast %128 : vector<1x8x256xf32> to vector<8x256xf32>
    %130 = arith.index_cast %126 : i32 to index
    %c0_53 = arith.constant 0 : index
    %c0_54 = arith.constant 0 : index
    %131 = vector.load %arg19[%130, %c0_53, %c0_54] : memref<16x8x256xf32, #tpu.memory_space<vmem>>, vector<1x8x256xf32>
    %132 = vector.shape_cast %131 : vector<1x8x256xf32> to vector<8x256xf32>
    %133 = arith.select %14, %129, %132 : vector<8x256xi1>, vector<8x256xf32>
    %cst_55 = arith.constant dense<0.000000e+00> : vector<8x256xf32>
    %134 = tpu.matmul %125, %9, %cst_55 {dimension_numbers = #tpu.dot_dimension_numbers<[1], [0], [0], [1], [0, 0, 1, 1], [], []>} : vector<8x64xf32>, vector<64x256xf32>, vector<8x256xf32> -> vector<8x256xf32>
    %135 = arith.addf %133, %134 : vector<8x256xf32>
    %136 = arith.negf %135 : vector<8x256xf32>
    %137 = math.exp %136 : vector<8x256xf32>
    %cst_56 = arith.constant 1.000000e+00 : f32
    %138 = vector.broadcast %cst_56 : f32 to vector<8x256xf32>
    %139 = arith.addf %138, %137 : vector<8x256xf32>
    %140 = arith.divf %138, %139 : vector<8x256xf32>
    %141 = vector.extract_strided_slice %140 {offsets = [0, 0], sizes = [8, 64], strides = [1, 1]} : vector<8x256xf32> to vector<8x64xf32>
    %142 = vector.extract_strided_slice %140 {offsets = [0, 64], sizes = [8, 64], strides = [1, 1]} : vector<8x256xf32> to vector<8x64xf32>
    %143 = vector.extract_strided_slice %140 {offsets = [0, 128], sizes = [8, 64], strides = [1, 1]} : vector<8x256xf32> to vector<8x64xf32>
    %cst_57 = arith.constant 2.000000e+00 : f32
    %144 = vector.broadcast %cst_57 : f32 to vector<8x64xf32>
    %145 = arith.mulf %144, %143 : vector<8x64xf32>
    %cst_58 = arith.constant 1.000000e+00 : f32
    %146 = vector.broadcast %cst_58 : f32 to vector<8x64xf32>
    %147 = arith.subf %145, %146 : vector<8x64xf32>
    %148 = vector.extract_strided_slice %140 {offsets = [0, 192], sizes = [8, 64], strides = [1, 1]} : vector<8x256xf32> to vector<8x64xf32>
    %149 = arith.mulf %142, %123 : vector<8x64xf32>
    %150 = arith.mulf %141, %147 : vector<8x64xf32>
    %151 = arith.addf %149, %150 : vector<8x64xf32>
    %152 = math.tanh %151 : vector<8x64xf32>
    %153 = arith.mulf %148, %152 : vector<8x64xf32>
    %c5_i32 = arith.constant 5 : i32
    %c15_i32_59 = arith.constant 15 : i32
    %154 = arith.subi %c15_i32_59, %c5_i32 : i32
    %155 = arith.index_cast %c5_i32 : i32 to index
    %c0_60 = arith.constant 0 : index
    %c0_61 = arith.constant 0 : index
    %156 = vector.load %arg19[%155, %c0_60, %c0_61] : memref<16x8x256xf32, #tpu.memory_space<vmem>>, vector<1x8x256xf32>
    %157 = vector.shape_cast %156 : vector<1x8x256xf32> to vector<8x256xf32>
    %158 = arith.index_cast %154 : i32 to index
    %c0_62 = arith.constant 0 : index
    %c0_63 = arith.constant 0 : index
    %159 = vector.load %arg19[%158, %c0_62, %c0_63] : memref<16x8x256xf32, #tpu.memory_space<vmem>>, vector<1x8x256xf32>
    %160 = vector.shape_cast %159 : vector<1x8x256xf32> to vector<8x256xf32>
    %161 = arith.select %14, %157, %160 : vector<8x256xi1>, vector<8x256xf32>
    %cst_64 = arith.constant dense<0.000000e+00> : vector<8x256xf32>
    %162 = tpu.matmul %153, %9, %cst_64 {dimension_numbers = #tpu.dot_dimension_numbers<[1], [0], [0], [1], [0, 0, 1, 1], [], []>} : vector<8x64xf32>, vector<64x256xf32>, vector<8x256xf32> -> vector<8x256xf32>
    %163 = arith.addf %161, %162 : vector<8x256xf32>
    %164 = arith.negf %163 : vector<8x256xf32>
    %165 = math.exp %164 : vector<8x256xf32>
    %cst_65 = arith.constant 1.000000e+00 : f32
    %166 = vector.broadcast %cst_65 : f32 to vector<8x256xf32>
    %167 = arith.addf %166, %165 : vector<8x256xf32>
    %168 = arith.divf %166, %167 : vector<8x256xf32>
    %169 = vector.extract_strided_slice %168 {offsets = [0, 0], sizes = [8, 64], strides = [1, 1]} : vector<8x256xf32> to vector<8x64xf32>
    %170 = vector.extract_strided_slice %168 {offsets = [0, 64], sizes = [8, 64], strides = [1, 1]} : vector<8x256xf32> to vector<8x64xf32>
    %171 = vector.extract_strided_slice %168 {offsets = [0, 128], sizes = [8, 64], strides = [1, 1]} : vector<8x256xf32> to vector<8x64xf32>
    %cst_66 = arith.constant 2.000000e+00 : f32
    %172 = vector.broadcast %cst_66 : f32 to vector<8x64xf32>
    %173 = arith.mulf %172, %171 : vector<8x64xf32>
    %cst_67 = arith.constant 1.000000e+00 : f32
    %174 = vector.broadcast %cst_67 : f32 to vector<8x64xf32>
    %175 = arith.subf %173, %174 : vector<8x64xf32>
    %176 = vector.extract_strided_slice %168 {offsets = [0, 192], sizes = [8, 64], strides = [1, 1]} : vector<8x256xf32> to vector<8x64xf32>
    %177 = arith.mulf %170, %151 : vector<8x64xf32>
    %178 = arith.mulf %169, %175 : vector<8x64xf32>
    %179 = arith.addf %177, %178 : vector<8x64xf32>
    %180 = math.tanh %179 : vector<8x64xf32>
    %181 = arith.mulf %176, %180 : vector<8x64xf32>
    %c6_i32 = arith.constant 6 : i32
    %c15_i32_68 = arith.constant 15 : i32
    %182 = arith.subi %c15_i32_68, %c6_i32 : i32
    %183 = arith.index_cast %c6_i32 : i32 to index
    %c0_69 = arith.constant 0 : index
    %c0_70 = arith.constant 0 : index
    %184 = vector.load %arg19[%183, %c0_69, %c0_70] : memref<16x8x256xf32, #tpu.memory_space<vmem>>, vector<1x8x256xf32>
    %185 = vector.shape_cast %184 : vector<1x8x256xf32> to vector<8x256xf32>
    %186 = arith.index_cast %182 : i32 to index
    %c0_71 = arith.constant 0 : index
    %c0_72 = arith.constant 0 : index
    %187 = vector.load %arg19[%186, %c0_71, %c0_72] : memref<16x8x256xf32, #tpu.memory_space<vmem>>, vector<1x8x256xf32>
    %188 = vector.shape_cast %187 : vector<1x8x256xf32> to vector<8x256xf32>
    %189 = arith.select %14, %185, %188 : vector<8x256xi1>, vector<8x256xf32>
    %cst_73 = arith.constant dense<0.000000e+00> : vector<8x256xf32>
    %190 = tpu.matmul %181, %9, %cst_73 {dimension_numbers = #tpu.dot_dimension_numbers<[1], [0], [0], [1], [0, 0, 1, 1], [], []>} : vector<8x64xf32>, vector<64x256xf32>, vector<8x256xf32> -> vector<8x256xf32>
    %191 = arith.addf %189, %190 : vector<8x256xf32>
    %192 = arith.negf %191 : vector<8x256xf32>
    %193 = math.exp %192 : vector<8x256xf32>
    %cst_74 = arith.constant 1.000000e+00 : f32
    %194 = vector.broadcast %cst_74 : f32 to vector<8x256xf32>
    %195 = arith.addf %194, %193 : vector<8x256xf32>
    %196 = arith.divf %194, %195 : vector<8x256xf32>
    %197 = vector.extract_strided_slice %196 {offsets = [0, 0], sizes = [8, 64], strides = [1, 1]} : vector<8x256xf32> to vector<8x64xf32>
    %198 = vector.extract_strided_slice %196 {offsets = [0, 64], sizes = [8, 64], strides = [1, 1]} : vector<8x256xf32> to vector<8x64xf32>
    %199 = vector.extract_strided_slice %196 {offsets = [0, 128], sizes = [8, 64], strides = [1, 1]} : vector<8x256xf32> to vector<8x64xf32>
    %cst_75 = arith.constant 2.000000e+00 : f32
    %200 = vector.broadcast %cst_75 : f32 to vector<8x64xf32>
    %201 = arith.mulf %200, %199 : vector<8x64xf32>
    %cst_76 = arith.constant 1.000000e+00 : f32
    %202 = vector.broadcast %cst_76 : f32 to vector<8x64xf32>
    %203 = arith.subf %201, %202 : vector<8x64xf32>
    %204 = vector.extract_strided_slice %196 {offsets = [0, 192], sizes = [8, 64], strides = [1, 1]} : vector<8x256xf32> to vector<8x64xf32>
    %205 = arith.mulf %198, %179 : vector<8x64xf32>
    %206 = arith.mulf %197, %203 : vector<8x64xf32>
    %207 = arith.addf %205, %206 : vector<8x64xf32>
    %208 = math.tanh %207 : vector<8x64xf32>
    %209 = arith.mulf %204, %208 : vector<8x64xf32>
    %c7_i32 = arith.constant 7 : i32
    %c15_i32_77 = arith.constant 15 : i32
    %210 = arith.subi %c15_i32_77, %c7_i32 : i32
    %211 = arith.index_cast %c7_i32 : i32 to index
    %c0_78 = arith.constant 0 : index
    %c0_79 = arith.constant 0 : index
    %212 = vector.load %arg19[%211, %c0_78, %c0_79] : memref<16x8x256xf32, #tpu.memory_space<vmem>>, vector<1x8x256xf32>
    %213 = vector.shape_cast %212 : vector<1x8x256xf32> to vector<8x256xf32>
    %214 = arith.index_cast %210 : i32 to index
    %c0_80 = arith.constant 0 : index
    %c0_81 = arith.constant 0 : index
    %215 = vector.load %arg19[%214, %c0_80, %c0_81] : memref<16x8x256xf32, #tpu.memory_space<vmem>>, vector<1x8x256xf32>
    %216 = vector.shape_cast %215 : vector<1x8x256xf32> to vector<8x256xf32>
    %217 = arith.select %14, %213, %216 : vector<8x256xi1>, vector<8x256xf32>
    %cst_82 = arith.constant dense<0.000000e+00> : vector<8x256xf32>
    %218 = tpu.matmul %209, %9, %cst_82 {dimension_numbers = #tpu.dot_dimension_numbers<[1], [0], [0], [1], [0, 0, 1, 1], [], []>} : vector<8x64xf32>, vector<64x256xf32>, vector<8x256xf32> -> vector<8x256xf32>
    %219 = arith.addf %217, %218 : vector<8x256xf32>
    %220 = arith.negf %219 : vector<8x256xf32>
    %221 = math.exp %220 : vector<8x256xf32>
    %cst_83 = arith.constant 1.000000e+00 : f32
    %222 = vector.broadcast %cst_83 : f32 to vector<8x256xf32>
    %223 = arith.addf %222, %221 : vector<8x256xf32>
    %224 = arith.divf %222, %223 : vector<8x256xf32>
    %225 = vector.extract_strided_slice %224 {offsets = [0, 0], sizes = [8, 64], strides = [1, 1]} : vector<8x256xf32> to vector<8x64xf32>
    %226 = vector.extract_strided_slice %224 {offsets = [0, 64], sizes = [8, 64], strides = [1, 1]} : vector<8x256xf32> to vector<8x64xf32>
    %227 = vector.extract_strided_slice %224 {offsets = [0, 128], sizes = [8, 64], strides = [1, 1]} : vector<8x256xf32> to vector<8x64xf32>
    %cst_84 = arith.constant 2.000000e+00 : f32
    %228 = vector.broadcast %cst_84 : f32 to vector<8x64xf32>
    %229 = arith.mulf %228, %227 : vector<8x64xf32>
    %cst_85 = arith.constant 1.000000e+00 : f32
    %230 = vector.broadcast %cst_85 : f32 to vector<8x64xf32>
    %231 = arith.subf %229, %230 : vector<8x64xf32>
    %232 = vector.extract_strided_slice %224 {offsets = [0, 192], sizes = [8, 64], strides = [1, 1]} : vector<8x256xf32> to vector<8x64xf32>
    %233 = arith.mulf %226, %207 : vector<8x64xf32>
    %234 = arith.mulf %225, %231 : vector<8x64xf32>
    %235 = arith.addf %233, %234 : vector<8x64xf32>
    %236 = math.tanh %235 : vector<8x64xf32>
    %237 = arith.mulf %232, %236 : vector<8x64xf32>
    %c8_i32 = arith.constant 8 : i32
    %c15_i32_86 = arith.constant 15 : i32
    %238 = arith.subi %c15_i32_86, %c8_i32 : i32
    %239 = arith.index_cast %c8_i32 : i32 to index
    %c0_87 = arith.constant 0 : index
    %c0_88 = arith.constant 0 : index
    %240 = vector.load %arg19[%239, %c0_87, %c0_88] : memref<16x8x256xf32, #tpu.memory_space<vmem>>, vector<1x8x256xf32>
    %241 = vector.shape_cast %240 : vector<1x8x256xf32> to vector<8x256xf32>
    %242 = arith.index_cast %238 : i32 to index
    %c0_89 = arith.constant 0 : index
    %c0_90 = arith.constant 0 : index
    %243 = vector.load %arg19[%242, %c0_89, %c0_90] : memref<16x8x256xf32, #tpu.memory_space<vmem>>, vector<1x8x256xf32>
    %244 = vector.shape_cast %243 : vector<1x8x256xf32> to vector<8x256xf32>
    %245 = arith.select %14, %241, %244 : vector<8x256xi1>, vector<8x256xf32>
    %cst_91 = arith.constant dense<0.000000e+00> : vector<8x256xf32>
    %246 = tpu.matmul %237, %9, %cst_91 {dimension_numbers = #tpu.dot_dimension_numbers<[1], [0], [0], [1], [0, 0, 1, 1], [], []>} : vector<8x64xf32>, vector<64x256xf32>, vector<8x256xf32> -> vector<8x256xf32>
    %247 = arith.addf %245, %246 : vector<8x256xf32>
    %248 = arith.negf %247 : vector<8x256xf32>
    %249 = math.exp %248 : vector<8x256xf32>
    %cst_92 = arith.constant 1.000000e+00 : f32
    %250 = vector.broadcast %cst_92 : f32 to vector<8x256xf32>
    %251 = arith.addf %250, %249 : vector<8x256xf32>
    %252 = arith.divf %250, %251 : vector<8x256xf32>
    %253 = vector.extract_strided_slice %252 {offsets = [0, 0], sizes = [8, 64], strides = [1, 1]} : vector<8x256xf32> to vector<8x64xf32>
    %254 = vector.extract_strided_slice %252 {offsets = [0, 64], sizes = [8, 64], strides = [1, 1]} : vector<8x256xf32> to vector<8x64xf32>
    %255 = vector.extract_strided_slice %252 {offsets = [0, 128], sizes = [8, 64], strides = [1, 1]} : vector<8x256xf32> to vector<8x64xf32>
    %cst_93 = arith.constant 2.000000e+00 : f32
    %256 = vector.broadcast %cst_93 : f32 to vector<8x64xf32>
    %257 = arith.mulf %256, %255 : vector<8x64xf32>
    %cst_94 = arith.constant 1.000000e+00 : f32
    %258 = vector.broadcast %cst_94 : f32 to vector<8x64xf32>
    %259 = arith.subf %257, %258 : vector<8x64xf32>
    %260 = vector.extract_strided_slice %252 {offsets = [0, 192], sizes = [8, 64], strides = [1, 1]} : vector<8x256xf32> to vector<8x64xf32>
    %261 = arith.mulf %254, %235 : vector<8x64xf32>
    %262 = arith.mulf %253, %259 : vector<8x64xf32>
    %263 = arith.addf %261, %262 : vector<8x64xf32>
    %264 = math.tanh %263 : vector<8x64xf32>
    %265 = arith.mulf %260, %264 : vector<8x64xf32>
    %c9_i32 = arith.constant 9 : i32
    %c15_i32_95 = arith.constant 15 : i32
    %266 = arith.subi %c15_i32_95, %c9_i32 : i32
    %267 = arith.index_cast %c9_i32 : i32 to index
    %c0_96 = arith.constant 0 : index
    %c0_97 = arith.constant 0 : index
    %268 = vector.load %arg19[%267, %c0_96, %c0_97] : memref<16x8x256xf32, #tpu.memory_space<vmem>>, vector<1x8x256xf32>
    %269 = vector.shape_cast %268 : vector<1x8x256xf32> to vector<8x256xf32>
    %270 = arith.index_cast %266 : i32 to index
    %c0_98 = arith.constant 0 : index
    %c0_99 = arith.constant 0 : index
    %271 = vector.load %arg19[%270, %c0_98, %c0_99] : memref<16x8x256xf32, #tpu.memory_space<vmem>>, vector<1x8x256xf32>
    %272 = vector.shape_cast %271 : vector<1x8x256xf32> to vector<8x256xf32>
    %273 = arith.select %14, %269, %272 : vector<8x256xi1>, vector<8x256xf32>
    %cst_100 = arith.constant dense<0.000000e+00> : vector<8x256xf32>
    %274 = tpu.matmul %265, %9, %cst_100 {dimension_numbers = #tpu.dot_dimension_numbers<[1], [0], [0], [1], [0, 0, 1, 1], [], []>} : vector<8x64xf32>, vector<64x256xf32>, vector<8x256xf32> -> vector<8x256xf32>
    %275 = arith.addf %273, %274 : vector<8x256xf32>
    %276 = arith.negf %275 : vector<8x256xf32>
    %277 = math.exp %276 : vector<8x256xf32>
    %cst_101 = arith.constant 1.000000e+00 : f32
    %278 = vector.broadcast %cst_101 : f32 to vector<8x256xf32>
    %279 = arith.addf %278, %277 : vector<8x256xf32>
    %280 = arith.divf %278, %279 : vector<8x256xf32>
    %281 = vector.extract_strided_slice %280 {offsets = [0, 0], sizes = [8, 64], strides = [1, 1]} : vector<8x256xf32> to vector<8x64xf32>
    %282 = vector.extract_strided_slice %280 {offsets = [0, 64], sizes = [8, 64], strides = [1, 1]} : vector<8x256xf32> to vector<8x64xf32>
    %283 = vector.extract_strided_slice %280 {offsets = [0, 128], sizes = [8, 64], strides = [1, 1]} : vector<8x256xf32> to vector<8x64xf32>
    %cst_102 = arith.constant 2.000000e+00 : f32
    %284 = vector.broadcast %cst_102 : f32 to vector<8x64xf32>
    %285 = arith.mulf %284, %283 : vector<8x64xf32>
    %cst_103 = arith.constant 1.000000e+00 : f32
    %286 = vector.broadcast %cst_103 : f32 to vector<8x64xf32>
    %287 = arith.subf %285, %286 : vector<8x64xf32>
    %288 = vector.extract_strided_slice %280 {offsets = [0, 192], sizes = [8, 64], strides = [1, 1]} : vector<8x256xf32> to vector<8x64xf32>
    %289 = arith.mulf %282, %263 : vector<8x64xf32>
    %290 = arith.mulf %281, %287 : vector<8x64xf32>
    %291 = arith.addf %289, %290 : vector<8x64xf32>
    %292 = math.tanh %291 : vector<8x64xf32>
    %293 = arith.mulf %288, %292 : vector<8x64xf32>
    %c10_i32 = arith.constant 10 : i32
    %c15_i32_104 = arith.constant 15 : i32
    %294 = arith.subi %c15_i32_104, %c10_i32 : i32
    %295 = arith.index_cast %c10_i32 : i32 to index
    %c0_105 = arith.constant 0 : index
    %c0_106 = arith.constant 0 : index
    %296 = vector.load %arg19[%295, %c0_105, %c0_106] : memref<16x8x256xf32, #tpu.memory_space<vmem>>, vector<1x8x256xf32>
    %297 = vector.shape_cast %296 : vector<1x8x256xf32> to vector<8x256xf32>
    %298 = arith.index_cast %294 : i32 to index
    %c0_107 = arith.constant 0 : index
    %c0_108 = arith.constant 0 : index
    %299 = vector.load %arg19[%298, %c0_107, %c0_108] : memref<16x8x256xf32, #tpu.memory_space<vmem>>, vector<1x8x256xf32>
    %300 = vector.shape_cast %299 : vector<1x8x256xf32> to vector<8x256xf32>
    %301 = arith.select %14, %297, %300 : vector<8x256xi1>, vector<8x256xf32>
    %cst_109 = arith.constant dense<0.000000e+00> : vector<8x256xf32>
    %302 = tpu.matmul %293, %9, %cst_109 {dimension_numbers = #tpu.dot_dimension_numbers<[1], [0], [0], [1], [0, 0, 1, 1], [], []>} : vector<8x64xf32>, vector<64x256xf32>, vector<8x256xf32> -> vector<8x256xf32>
    %303 = arith.addf %301, %302 : vector<8x256xf32>
    %304 = arith.negf %303 : vector<8x256xf32>
    %305 = math.exp %304 : vector<8x256xf32>
    %cst_110 = arith.constant 1.000000e+00 : f32
    %306 = vector.broadcast %cst_110 : f32 to vector<8x256xf32>
    %307 = arith.addf %306, %305 : vector<8x256xf32>
    %308 = arith.divf %306, %307 : vector<8x256xf32>
    %309 = vector.extract_strided_slice %308 {offsets = [0, 0], sizes = [8, 64], strides = [1, 1]} : vector<8x256xf32> to vector<8x64xf32>
    %310 = vector.extract_strided_slice %308 {offsets = [0, 64], sizes = [8, 64], strides = [1, 1]} : vector<8x256xf32> to vector<8x64xf32>
    %311 = vector.extract_strided_slice %308 {offsets = [0, 128], sizes = [8, 64], strides = [1, 1]} : vector<8x256xf32> to vector<8x64xf32>
    %cst_111 = arith.constant 2.000000e+00 : f32
    %312 = vector.broadcast %cst_111 : f32 to vector<8x64xf32>
    %313 = arith.mulf %312, %311 : vector<8x64xf32>
    %cst_112 = arith.constant 1.000000e+00 : f32
    %314 = vector.broadcast %cst_112 : f32 to vector<8x64xf32>
    %315 = arith.subf %313, %314 : vector<8x64xf32>
    %316 = vector.extract_strided_slice %308 {offsets = [0, 192], sizes = [8, 64], strides = [1, 1]} : vector<8x256xf32> to vector<8x64xf32>
    %317 = arith.mulf %310, %291 : vector<8x64xf32>
    %318 = arith.mulf %309, %315 : vector<8x64xf32>
    %319 = arith.addf %317, %318 : vector<8x64xf32>
    %320 = math.tanh %319 : vector<8x64xf32>
    %321 = arith.mulf %316, %320 : vector<8x64xf32>
    %c11_i32 = arith.constant 11 : i32
    %c15_i32_113 = arith.constant 15 : i32
    %322 = arith.subi %c15_i32_113, %c11_i32 : i32
    %323 = arith.index_cast %c11_i32 : i32 to index
    %c0_114 = arith.constant 0 : index
    %c0_115 = arith.constant 0 : index
    %324 = vector.load %arg19[%323, %c0_114, %c0_115] : memref<16x8x256xf32, #tpu.memory_space<vmem>>, vector<1x8x256xf32>
    %325 = vector.shape_cast %324 : vector<1x8x256xf32> to vector<8x256xf32>
    %326 = arith.index_cast %322 : i32 to index
    %c0_116 = arith.constant 0 : index
    %c0_117 = arith.constant 0 : index
    %327 = vector.load %arg19[%326, %c0_116, %c0_117] : memref<16x8x256xf32, #tpu.memory_space<vmem>>, vector<1x8x256xf32>
    %328 = vector.shape_cast %327 : vector<1x8x256xf32> to vector<8x256xf32>
    %329 = arith.select %14, %325, %328 : vector<8x256xi1>, vector<8x256xf32>
    %cst_118 = arith.constant dense<0.000000e+00> : vector<8x256xf32>
    %330 = tpu.matmul %321, %9, %cst_118 {dimension_numbers = #tpu.dot_dimension_numbers<[1], [0], [0], [1], [0, 0, 1, 1], [], []>} : vector<8x64xf32>, vector<64x256xf32>, vector<8x256xf32> -> vector<8x256xf32>
    %331 = arith.addf %329, %330 : vector<8x256xf32>
    %332 = arith.negf %331 : vector<8x256xf32>
    %333 = math.exp %332 : vector<8x256xf32>
    %cst_119 = arith.constant 1.000000e+00 : f32
    %334 = vector.broadcast %cst_119 : f32 to vector<8x256xf32>
    %335 = arith.addf %334, %333 : vector<8x256xf32>
    %336 = arith.divf %334, %335 : vector<8x256xf32>
    %337 = vector.extract_strided_slice %336 {offsets = [0, 0], sizes = [8, 64], strides = [1, 1]} : vector<8x256xf32> to vector<8x64xf32>
    %338 = vector.extract_strided_slice %336 {offsets = [0, 64], sizes = [8, 64], strides = [1, 1]} : vector<8x256xf32> to vector<8x64xf32>
    %339 = vector.extract_strided_slice %336 {offsets = [0, 128], sizes = [8, 64], strides = [1, 1]} : vector<8x256xf32> to vector<8x64xf32>
    %cst_120 = arith.constant 2.000000e+00 : f32
    %340 = vector.broadcast %cst_120 : f32 to vector<8x64xf32>
    %341 = arith.mulf %340, %339 : vector<8x64xf32>
    %cst_121 = arith.constant 1.000000e+00 : f32
    %342 = vector.broadcast %cst_121 : f32 to vector<8x64xf32>
    %343 = arith.subf %341, %342 : vector<8x64xf32>
    %344 = vector.extract_strided_slice %336 {offsets = [0, 192], sizes = [8, 64], strides = [1, 1]} : vector<8x256xf32> to vector<8x64xf32>
    %345 = arith.mulf %338, %319 : vector<8x64xf32>
    %346 = arith.mulf %337, %343 : vector<8x64xf32>
    %347 = arith.addf %345, %346 : vector<8x64xf32>
    %348 = math.tanh %347 : vector<8x64xf32>
    %349 = arith.mulf %344, %348 : vector<8x64xf32>
    %c12_i32 = arith.constant 12 : i32
    %c15_i32_122 = arith.constant 15 : i32
    %350 = arith.subi %c15_i32_122, %c12_i32 : i32
    %351 = arith.index_cast %c12_i32 : i32 to index
    %c0_123 = arith.constant 0 : index
    %c0_124 = arith.constant 0 : index
    %352 = vector.load %arg19[%351, %c0_123, %c0_124] : memref<16x8x256xf32, #tpu.memory_space<vmem>>, vector<1x8x256xf32>
    %353 = vector.shape_cast %352 : vector<1x8x256xf32> to vector<8x256xf32>
    %354 = arith.index_cast %350 : i32 to index
    %c0_125 = arith.constant 0 : index
    %c0_126 = arith.constant 0 : index
    %355 = vector.load %arg19[%354, %c0_125, %c0_126] : memref<16x8x256xf32, #tpu.memory_space<vmem>>, vector<1x8x256xf32>
    %356 = vector.shape_cast %355 : vector<1x8x256xf32> to vector<8x256xf32>
    %357 = arith.select %14, %353, %356 : vector<8x256xi1>, vector<8x256xf32>
    %cst_127 = arith.constant dense<0.000000e+00> : vector<8x256xf32>
    %358 = tpu.matmul %349, %9, %cst_127 {dimension_numbers = #tpu.dot_dimension_numbers<[1], [0], [0], [1], [0, 0, 1, 1], [], []>} : vector<8x64xf32>, vector<64x256xf32>, vector<8x256xf32> -> vector<8x256xf32>
    %359 = arith.addf %357, %358 : vector<8x256xf32>
    %360 = arith.negf %359 : vector<8x256xf32>
    %361 = math.exp %360 : vector<8x256xf32>
    %cst_128 = arith.constant 1.000000e+00 : f32
    %362 = vector.broadcast %cst_128 : f32 to vector<8x256xf32>
    %363 = arith.addf %362, %361 : vector<8x256xf32>
    %364 = arith.divf %362, %363 : vector<8x256xf32>
    %365 = vector.extract_strided_slice %364 {offsets = [0, 0], sizes = [8, 64], strides = [1, 1]} : vector<8x256xf32> to vector<8x64xf32>
    %366 = vector.extract_strided_slice %364 {offsets = [0, 64], sizes = [8, 64], strides = [1, 1]} : vector<8x256xf32> to vector<8x64xf32>
    %367 = vector.extract_strided_slice %364 {offsets = [0, 128], sizes = [8, 64], strides = [1, 1]} : vector<8x256xf32> to vector<8x64xf32>
    %cst_129 = arith.constant 2.000000e+00 : f32
    %368 = vector.broadcast %cst_129 : f32 to vector<8x64xf32>
    %369 = arith.mulf %368, %367 : vector<8x64xf32>
    %cst_130 = arith.constant 1.000000e+00 : f32
    %370 = vector.broadcast %cst_130 : f32 to vector<8x64xf32>
    %371 = arith.subf %369, %370 : vector<8x64xf32>
    %372 = vector.extract_strided_slice %364 {offsets = [0, 192], sizes = [8, 64], strides = [1, 1]} : vector<8x256xf32> to vector<8x64xf32>
    %373 = arith.mulf %366, %347 : vector<8x64xf32>
    %374 = arith.mulf %365, %371 : vector<8x64xf32>
    %375 = arith.addf %373, %374 : vector<8x64xf32>
    %376 = math.tanh %375 : vector<8x64xf32>
    %377 = arith.mulf %372, %376 : vector<8x64xf32>
    %c13_i32 = arith.constant 13 : i32
    %c15_i32_131 = arith.constant 15 : i32
    %378 = arith.subi %c15_i32_131, %c13_i32 : i32
    %379 = arith.index_cast %c13_i32 : i32 to index
    %c0_132 = arith.constant 0 : index
    %c0_133 = arith.constant 0 : index
    %380 = vector.load %arg19[%379, %c0_132, %c0_133] : memref<16x8x256xf32, #tpu.memory_space<vmem>>, vector<1x8x256xf32>
    %381 = vector.shape_cast %380 : vector<1x8x256xf32> to vector<8x256xf32>
    %382 = arith.index_cast %378 : i32 to index
    %c0_134 = arith.constant 0 : index
    %c0_135 = arith.constant 0 : index
    %383 = vector.load %arg19[%382, %c0_134, %c0_135] : memref<16x8x256xf32, #tpu.memory_space<vmem>>, vector<1x8x256xf32>
    %384 = vector.shape_cast %383 : vector<1x8x256xf32> to vector<8x256xf32>
    %385 = arith.select %14, %381, %384 : vector<8x256xi1>, vector<8x256xf32>
    %cst_136 = arith.constant dense<0.000000e+00> : vector<8x256xf32>
    %386 = tpu.matmul %377, %9, %cst_136 {dimension_numbers = #tpu.dot_dimension_numbers<[1], [0], [0], [1], [0, 0, 1, 1], [], []>} : vector<8x64xf32>, vector<64x256xf32>, vector<8x256xf32> -> vector<8x256xf32>
    %387 = arith.addf %385, %386 : vector<8x256xf32>
    %388 = arith.negf %387 : vector<8x256xf32>
    %389 = math.exp %388 : vector<8x256xf32>
    %cst_137 = arith.constant 1.000000e+00 : f32
    %390 = vector.broadcast %cst_137 : f32 to vector<8x256xf32>
    %391 = arith.addf %390, %389 : vector<8x256xf32>
    %392 = arith.divf %390, %391 : vector<8x256xf32>
    %393 = vector.extract_strided_slice %392 {offsets = [0, 0], sizes = [8, 64], strides = [1, 1]} : vector<8x256xf32> to vector<8x64xf32>
    %394 = vector.extract_strided_slice %392 {offsets = [0, 64], sizes = [8, 64], strides = [1, 1]} : vector<8x256xf32> to vector<8x64xf32>
    %395 = vector.extract_strided_slice %392 {offsets = [0, 128], sizes = [8, 64], strides = [1, 1]} : vector<8x256xf32> to vector<8x64xf32>
    %cst_138 = arith.constant 2.000000e+00 : f32
    %396 = vector.broadcast %cst_138 : f32 to vector<8x64xf32>
    %397 = arith.mulf %396, %395 : vector<8x64xf32>
    %cst_139 = arith.constant 1.000000e+00 : f32
    %398 = vector.broadcast %cst_139 : f32 to vector<8x64xf32>
    %399 = arith.subf %397, %398 : vector<8x64xf32>
    %400 = vector.extract_strided_slice %392 {offsets = [0, 192], sizes = [8, 64], strides = [1, 1]} : vector<8x256xf32> to vector<8x64xf32>
    %401 = arith.mulf %394, %375 : vector<8x64xf32>
    %402 = arith.mulf %393, %399 : vector<8x64xf32>
    %403 = arith.addf %401, %402 : vector<8x64xf32>
    %404 = math.tanh %403 : vector<8x64xf32>
    %405 = arith.mulf %400, %404 : vector<8x64xf32>
    %c14_i32 = arith.constant 14 : i32
    %c15_i32_140 = arith.constant 15 : i32
    %406 = arith.subi %c15_i32_140, %c14_i32 : i32
    %407 = arith.index_cast %c14_i32 : i32 to index
    %c0_141 = arith.constant 0 : index
    %c0_142 = arith.constant 0 : index
    %408 = vector.load %arg19[%407, %c0_141, %c0_142] : memref<16x8x256xf32, #tpu.memory_space<vmem>>, vector<1x8x256xf32>
    %409 = vector.shape_cast %408 : vector<1x8x256xf32> to vector<8x256xf32>
    %410 = arith.index_cast %406 : i32 to index
    %c0_143 = arith.constant 0 : index
    %c0_144 = arith.constant 0 : index
    %411 = vector.load %arg19[%410, %c0_143, %c0_144] : memref<16x8x256xf32, #tpu.memory_space<vmem>>, vector<1x8x256xf32>
    %412 = vector.shape_cast %411 : vector<1x8x256xf32> to vector<8x256xf32>
    %413 = arith.select %14, %409, %412 : vector<8x256xi1>, vector<8x256xf32>
    %cst_145 = arith.constant dense<0.000000e+00> : vector<8x256xf32>
    %414 = tpu.matmul %405, %9, %cst_145 {dimension_numbers = #tpu.dot_dimension_numbers<[1], [0], [0], [1], [0, 0, 1, 1], [], []>} : vector<8x64xf32>, vector<64x256xf32>, vector<8x256xf32> -> vector<8x256xf32>
    %415 = arith.addf %413, %414 : vector<8x256xf32>
    %416 = arith.negf %415 : vector<8x256xf32>
    %417 = math.exp %416 : vector<8x256xf32>
    %cst_146 = arith.constant 1.000000e+00 : f32
    %418 = vector.broadcast %cst_146 : f32 to vector<8x256xf32>
    %419 = arith.addf %418, %417 : vector<8x256xf32>
    %420 = arith.divf %418, %419 : vector<8x256xf32>
    %421 = vector.extract_strided_slice %420 {offsets = [0, 0], sizes = [8, 64], strides = [1, 1]} : vector<8x256xf32> to vector<8x64xf32>
    %422 = vector.extract_strided_slice %420 {offsets = [0, 64], sizes = [8, 64], strides = [1, 1]} : vector<8x256xf32> to vector<8x64xf32>
    %423 = vector.extract_strided_slice %420 {offsets = [0, 128], sizes = [8, 64], strides = [1, 1]} : vector<8x256xf32> to vector<8x64xf32>
    %cst_147 = arith.constant 2.000000e+00 : f32
    %424 = vector.broadcast %cst_147 : f32 to vector<8x64xf32>
    %425 = arith.mulf %424, %423 : vector<8x64xf32>
    %cst_148 = arith.constant 1.000000e+00 : f32
    %426 = vector.broadcast %cst_148 : f32 to vector<8x64xf32>
    %427 = arith.subf %425, %426 : vector<8x64xf32>
    %428 = vector.extract_strided_slice %420 {offsets = [0, 192], sizes = [8, 64], strides = [1, 1]} : vector<8x256xf32> to vector<8x64xf32>
    %429 = arith.mulf %422, %403 : vector<8x64xf32>
    %430 = arith.mulf %421, %427 : vector<8x64xf32>
    %431 = arith.addf %429, %430 : vector<8x64xf32>
    %432 = math.tanh %431 : vector<8x64xf32>
    %433 = arith.mulf %428, %432 : vector<8x64xf32>
    %c15_i32_149 = arith.constant 15 : i32
    %c15_i32_150 = arith.constant 15 : i32
    %434 = arith.subi %c15_i32_150, %c15_i32_149 : i32
    %435 = arith.index_cast %c15_i32_149 : i32 to index
    %c0_151 = arith.constant 0 : index
    %c0_152 = arith.constant 0 : index
    %436 = vector.load %arg19[%435, %c0_151, %c0_152] : memref<16x8x256xf32, #tpu.memory_space<vmem>>, vector<1x8x256xf32>
    %437 = vector.shape_cast %436 : vector<1x8x256xf32> to vector<8x256xf32>
    %438 = arith.index_cast %434 : i32 to index
    %c0_153 = arith.constant 0 : index
    %c0_154 = arith.constant 0 : index
    %439 = vector.load %arg19[%438, %c0_153, %c0_154] : memref<16x8x256xf32, #tpu.memory_space<vmem>>, vector<1x8x256xf32>
    %440 = vector.shape_cast %439 : vector<1x8x256xf32> to vector<8x256xf32>
    %441 = arith.select %14, %437, %440 : vector<8x256xi1>, vector<8x256xf32>
    %cst_155 = arith.constant dense<0.000000e+00> : vector<8x256xf32>
    %442 = tpu.matmul %433, %9, %cst_155 {dimension_numbers = #tpu.dot_dimension_numbers<[1], [0], [0], [1], [0, 0, 1, 1], [], []>} : vector<8x64xf32>, vector<64x256xf32>, vector<8x256xf32> -> vector<8x256xf32>
    %443 = arith.addf %441, %442 : vector<8x256xf32>
    %444 = arith.negf %443 : vector<8x256xf32>
    %445 = math.exp %444 : vector<8x256xf32>
    %cst_156 = arith.constant 1.000000e+00 : f32
    %446 = vector.broadcast %cst_156 : f32 to vector<8x256xf32>
    %447 = arith.addf %446, %445 : vector<8x256xf32>
    %448 = arith.divf %446, %447 : vector<8x256xf32>
    %449 = vector.extract_strided_slice %448 {offsets = [0, 0], sizes = [8, 64], strides = [1, 1]} : vector<8x256xf32> to vector<8x64xf32>
    %450 = vector.extract_strided_slice %448 {offsets = [0, 64], sizes = [8, 64], strides = [1, 1]} : vector<8x256xf32> to vector<8x64xf32>
    %451 = vector.extract_strided_slice %448 {offsets = [0, 128], sizes = [8, 64], strides = [1, 1]} : vector<8x256xf32> to vector<8x64xf32>
    %cst_157 = arith.constant 2.000000e+00 : f32
    %452 = vector.broadcast %cst_157 : f32 to vector<8x64xf32>
    %453 = arith.mulf %452, %451 : vector<8x64xf32>
    %cst_158 = arith.constant 1.000000e+00 : f32
    %454 = vector.broadcast %cst_158 : f32 to vector<8x64xf32>
    %455 = arith.subf %453, %454 : vector<8x64xf32>
    %456 = vector.extract_strided_slice %448 {offsets = [0, 192], sizes = [8, 64], strides = [1, 1]} : vector<8x256xf32> to vector<8x64xf32>
    %457 = arith.mulf %450, %431 : vector<8x64xf32>
    %458 = arith.mulf %449, %455 : vector<8x64xf32>
    %459 = arith.addf %457, %458 : vector<8x64xf32>
    %460 = math.tanh %459 : vector<8x64xf32>
    %461 = arith.mulf %456, %460 : vector<8x64xf32>
    %c15_i32_159 = arith.constant 15 : i32
    %462 = vector.extract_strided_slice %461 {offsets = [0, 0], sizes = [8, 32], strides = [1, 1]} : vector<8x64xf32> to vector<8x32xf32>
    %cst_160 = arith.constant 0.000000e+00 : f32
    %463 = vector.broadcast %cst_160 : f32 to vector<3x8x32xf32>
    %c0_161 = arith.constant 0 : index
    %c0_162 = arith.constant 0 : index
    %c0_163 = arith.constant 0 : index
    %464 = vector.load %arg20[%c0_161, %c0_162, %c0_163] : memref<22x8x32xf32, #tpu.memory_space<vmem>>, vector<3x8x32xf32>
    tpu.vector_store %arg20[%c0_161, %c0_162, %c0_163], %463 {strides = array<i32>} : memref<22x8x32xf32, #tpu.memory_space<vmem>>, vector<3x8x32xf32>,
    %c0_164 = arith.constant 0 : index
    %c0_165 = arith.constant 0 : index
    %c0_166 = arith.constant 0 : index
    %465 = vector.load %arg5[%c0_164, %c0_165, %c0_166] : memref<16x8x32xf32, #tpu.memory_space<vmem>>, vector<16x8x32xf32>
    %c3 = arith.constant 3 : index
    %c0_167 = arith.constant 0 : index
    %c0_168 = arith.constant 0 : index
    %466 = vector.load %arg20[%c3, %c0_167, %c0_168] : memref<22x8x32xf32, #tpu.memory_space<vmem>>, vector<16x8x32xf32>
    tpu.vector_store %arg20[%c3, %c0_167, %c0_168], %465 {strides = array<i32>} : memref<22x8x32xf32, #tpu.memory_space<vmem>>, vector<16x8x32xf32>,
    %cst_169 = arith.constant 0.000000e+00 : f32
    %467 = vector.broadcast %cst_169 : f32 to vector<3x8x32xf32>
    %c19 = arith.constant 19 : index
    %c0_170 = arith.constant 0 : index
    %c0_171 = arith.constant 0 : index
    %468 = vector.load %arg20[%c19, %c0_170, %c0_171] : memref<22x8x32xf32, #tpu.memory_space<vmem>>, vector<3x8x32xf32>
    tpu.vector_store %arg20[%c19, %c0_170, %c0_171], %467 {strides = array<i32>} : memref<22x8x32xf32, #tpu.memory_space<vmem>>, vector<3x8x32xf32>,
    %c0_172 = arith.constant 0 : index
    %c0_173 = arith.constant 0 : index
    %c0_174 = arith.constant 0 : index
    %469 = vector.load %arg20[%c0_172, %c0_173, %c0_174] : memref<22x8x32xf32, #tpu.memory_space<vmem>>, vector<22x8x32xf32>
    %470 = vector.shape_cast %469 : vector<22x8x32xf32> to vector<176x32xf32>
    %471 = vector.extract_strided_slice %470 {offsets = [0, 0], sizes = [128, 32], strides = [1, 1]} : vector<176x32xf32> to vector<128x32xf32>
    %c0_175 = arith.constant 0 : index
    %c0_176 = arith.constant 0 : index
    %c0_177 = arith.constant 0 : index
    %472 = vector.load %arg6[%c0_175, %c0_176, %c0_177] : memref<7x32x128xf32, #tpu.memory_space<vmem>>, vector<1x32x128xf32>
    %473 = vector.shape_cast %472 : vector<1x32x128xf32> to vector<32x128xf32>
    %cst_178 = arith.constant dense<0.000000e+00> : vector<128x128xf32>
    %474 = tpu.matmul %471, %473, %cst_178 {dimension_numbers = #tpu.dot_dimension_numbers<[1], [0], [0], [1], [0, 0, 1, 1], [], []>} : vector<128x32xf32>, vector<32x128xf32>, vector<128x128xf32> -> vector<128x128xf32>
    %475 = vector.extract_strided_slice %470 {offsets = [8, 0], sizes = [128, 32], strides = [1, 1]} : vector<176x32xf32> to vector<128x32xf32>
    %c1 = arith.constant 1 : index
    %c0_179 = arith.constant 0 : index
    %c0_180 = arith.constant 0 : index
    %476 = vector.load %arg6[%c1, %c0_179, %c0_180] : memref<7x32x128xf32, #tpu.memory_space<vmem>>, vector<1x32x128xf32>
    %477 = vector.shape_cast %476 : vector<1x32x128xf32> to vector<32x128xf32>
    %cst_181 = arith.constant dense<0.000000e+00> : vector<128x128xf32>
    %478 = tpu.matmul %475, %477, %cst_181 {dimension_numbers = #tpu.dot_dimension_numbers<[1], [0], [0], [1], [0, 0, 1, 1], [], []>} : vector<128x32xf32>, vector<32x128xf32>, vector<128x128xf32> -> vector<128x128xf32>
    %479 = arith.addf %474, %478 : vector<128x128xf32>
    %480 = vector.extract_strided_slice %470 {offsets = [16, 0], sizes = [128, 32], strides = [1, 1]} : vector<176x32xf32> to vector<128x32xf32>
    %c2 = arith.constant 2 : index
    %c0_182 = arith.constant 0 : index
    %c0_183 = arith.constant 0 : index
    %481 = vector.load %arg6[%c2, %c0_182, %c0_183] : memref<7x32x128xf32, #tpu.memory_space<vmem>>, vector<1x32x128xf32>
    %482 = vector.shape_cast %481 : vector<1x32x128xf32> to vector<32x128xf32>
    %cst_184 = arith.constant dense<0.000000e+00> : vector<128x128xf32>
    %483 = tpu.matmul %480, %482, %cst_184 {dimension_numbers = #tpu.dot_dimension_numbers<[1], [0], [0], [1], [0, 0, 1, 1], [], []>} : vector<128x32xf32>, vector<32x128xf32>, vector<128x128xf32> -> vector<128x128xf32>
    %484 = arith.addf %479, %483 : vector<128x128xf32>
    %485 = vector.extract_strided_slice %470 {offsets = [24, 0], sizes = [128, 32], strides = [1, 1]} : vector<176x32xf32> to vector<128x32xf32>
    %c3_185 = arith.constant 3 : index
    %c0_186 = arith.constant 0 : index
    %c0_187 = arith.constant 0 : index
    %486 = vector.load %arg6[%c3_185, %c0_186, %c0_187] : memref<7x32x128xf32, #tpu.memory_space<vmem>>, vector<1x32x128xf32>
    %487 = vector.shape_cast %486 : vector<1x32x128xf32> to vector<32x128xf32>
    %cst_188 = arith.constant dense<0.000000e+00> : vector<128x128xf32>
    %488 = tpu.matmul %485, %487, %cst_188 {dimension_numbers = #tpu.dot_dimension_numbers<[1], [0], [0], [1], [0, 0, 1, 1], [], []>} : vector<128x32xf32>, vector<32x128xf32>, vector<128x128xf32> -> vector<128x128xf32>
    %489 = arith.addf %484, %488 : vector<128x128xf32>
    %490 = vector.extract_strided_slice %470 {offsets = [32, 0], sizes = [128, 32], strides = [1, 1]} : vector<176x32xf32> to vector<128x32xf32>
    %c4 = arith.constant 4 : index
    %c0_189 = arith.constant 0 : index
    %c0_190 = arith.constant 0 : index
    %491 = vector.load %arg6[%c4, %c0_189, %c0_190] : memref<7x32x128xf32, #tpu.memory_space<vmem>>, vector<1x32x128xf32>
    %492 = vector.shape_cast %491 : vector<1x32x128xf32> to vector<32x128xf32>
    %cst_191 = arith.constant dense<0.000000e+00> : vector<128x128xf32>
    %493 = tpu.matmul %490, %492, %cst_191 {dimension_numbers = #tpu.dot_dimension_numbers<[1], [0], [0], [1], [0, 0, 1, 1], [], []>} : vector<128x32xf32>, vector<32x128xf32>, vector<128x128xf32> -> vector<128x128xf32>
    %494 = arith.addf %489, %493 : vector<128x128xf32>
    %495 = vector.extract_strided_slice %470 {offsets = [40, 0], sizes = [128, 32], strides = [1, 1]} : vector<176x32xf32> to vector<128x32xf32>
    %c5 = arith.constant 5 : index
    %c0_192 = arith.constant 0 : index
    %c0_193 = arith.constant 0 : index
    %496 = vector.load %arg6[%c5, %c0_192, %c0_193] : memref<7x32x128xf32, #tpu.memory_space<vmem>>, vector<1x32x128xf32>
    %497 = vector.shape_cast %496 : vector<1x32x128xf32> to vector<32x128xf32>
    %cst_194 = arith.constant dense<0.000000e+00> : vector<128x128xf32>
    %498 = tpu.matmul %495, %497, %cst_194 {dimension_numbers = #tpu.dot_dimension_numbers<[1], [0], [0], [1], [0, 0, 1, 1], [], []>} : vector<128x32xf32>, vector<32x128xf32>, vector<128x128xf32> -> vector<128x128xf32>
    %499 = arith.addf %494, %498 : vector<128x128xf32>
    %500 = vector.extract_strided_slice %470 {offsets = [48, 0], sizes = [128, 32], strides = [1, 1]} : vector<176x32xf32> to vector<128x32xf32>
    %c6 = arith.constant 6 : index
    %c0_195 = arith.constant 0 : index
    %c0_196 = arith.constant 0 : index
    %501 = vector.load %arg6[%c6, %c0_195, %c0_196] : memref<7x32x128xf32, #tpu.memory_space<vmem>>, vector<1x32x128xf32>
    %502 = vector.shape_cast %501 : vector<1x32x128xf32> to vector<32x128xf32>
    %cst_197 = arith.constant dense<0.000000e+00> : vector<128x128xf32>
    %503 = tpu.matmul %500, %502, %cst_197 {dimension_numbers = #tpu.dot_dimension_numbers<[1], [0], [0], [1], [0, 0, 1, 1], [], []>} : vector<128x32xf32>, vector<32x128xf32>, vector<128x128xf32> -> vector<128x128xf32>
    %504 = arith.addf %499, %503 : vector<128x128xf32>
    %c0_198 = arith.constant 0 : index
    %c0_199 = arith.constant 0 : index
    %505 = vector.load %arg7[%c0_198, %c0_199] : memref<1x128xf32, #tpu.memory_space<vmem>>, vector<1x128xf32>
    %506 = vector.broadcast %505 : vector<1x128xf32> to vector<128x128xf32>
    %507 = arith.addf %504, %506 : vector<128x128xf32>
    %cst_200 = arith.constant dense<0.000000e+00> : vector<128xf32>
    %508 = vector.multi_reduction <add>, %507, %cst_200 [0] : vector<128x128xf32> to vector<128xf32>
    %509 = vector.shape_cast %508 : vector<128xf32> to vector<1x128xf32>
    %cst_201 = arith.constant 7.812500e-03 : f32
    %510 = vector.broadcast %cst_201 : f32 to vector<1x128xf32>
    %511 = arith.mulf %509, %510 : vector<1x128xf32>
    %512 = vector.broadcast %511 : vector<1x128xf32> to vector<128x128xf32>
    %513 = arith.subf %507, %512 : vector<128x128xf32>
    %514 = arith.mulf %513, %513 : vector<128x128xf32>
    %cst_202 = arith.constant dense<0.000000e+00> : vector<128xf32>
    %515 = vector.multi_reduction <add>, %514, %cst_202 [0] : vector<128x128xf32> to vector<128xf32>
    %516 = vector.shape_cast %515 : vector<128xf32> to vector<1x128xf32>
    %cst_203 = arith.constant 7.812500e-03 : f32
    %517 = vector.broadcast %cst_203 : f32 to vector<1x128xf32>
    %518 = arith.mulf %516, %517 : vector<1x128xf32>
    %cst_204 = arith.constant 9.99999974E-6 : f32
    %519 = vector.broadcast %cst_204 : f32 to vector<1x128xf32>
    %520 = arith.addf %518, %519 : vector<1x128xf32>
    %521 = math.rsqrt %520 : vector<1x128xf32>
    %522 = vector.broadcast %521 : vector<1x128xf32> to vector<128x128xf32>
    %523 = arith.mulf %513, %522 : vector<128x128xf32>
    %c0_205 = arith.constant 0 : index
    %c0_206 = arith.constant 0 : index
    %524 = vector.load %arg8[%c0_205, %c0_206] : memref<1x128xf32, #tpu.memory_space<vmem>>, vector<1x128xf32>
    %525 = vector.broadcast %524 : vector<1x128xf32> to vector<128x128xf32>
    %526 = arith.mulf %523, %525 : vector<128x128xf32>
    %c0_207 = arith.constant 0 : index
    %c0_208 = arith.constant 0 : index
    %527 = vector.load %arg9[%c0_207, %c0_208] : memref<1x128xf32, #tpu.memory_space<vmem>>, vector<1x128xf32>
    %528 = vector.broadcast %527 : vector<1x128xf32> to vector<128x128xf32>
    %529 = arith.addf %526, %528 : vector<128x128xf32>
    %cst_209 = arith.constant 0.000000e+00 : f32
    %530 = vector.broadcast %cst_209 : f32 to vector<128x128xf32>
    %531 = arith.maximumf %529, %530 : vector<128x128xf32>
    %532 = vector.shape_cast %531 : vector<128x128xf32> to vector<16x8x128xf32>
    %cst_210 = arith.constant dense<0xFF800000> : vector<8x128xf32>
    %533 = vector.multi_reduction <maximumf>, %532, %cst_210 [0] : vector<16x8x128xf32> to vector<8x128xf32>
    %c0_211 = arith.constant 0 : index
    %c0_212 = arith.constant 0 : index
    %534 = vector.load %arg10[%c0_211, %c0_212] : memref<128x256xf32, #tpu.memory_space<vmem>>, vector<128x256xf32>
    %cst_213 = arith.constant dense<0.000000e+00> : vector<8x256xf32>
    %535 = tpu.matmul %533, %534, %cst_213 {dimension_numbers = #tpu.dot_dimension_numbers<[1], [0], [0], [1], [0, 0, 1, 1], [], []>} : vector<8x128xf32>, vector<128x256xf32>, vector<8x256xf32> -> vector<8x256xf32>
    %c0_214 = arith.constant 0 : index
    %c0_215 = arith.constant 0 : index
    %536 = vector.load %arg11[%c0_214, %c0_215] : memref<32x256xf32, #tpu.memory_space<vmem>>, vector<32x256xf32>
    %cst_216 = arith.constant dense<0.000000e+00> : vector<8x256xf32>
    %537 = tpu.matmul %462, %536, %cst_216 {dimension_numbers = #tpu.dot_dimension_numbers<[1], [0], [0], [1], [0, 0, 1, 1], [], []>} : vector<8x32xf32>, vector<32x256xf32>, vector<8x256xf32> -> vector<8x256xf32>
    %538 = arith.addf %535, %537 : vector<8x256xf32>
    %c0_217 = arith.constant 0 : index
    %c0_218 = arith.constant 0 : index
    %539 = vector.load %arg12[%c0_217, %c0_218] : memref<32x256xf32, #tpu.memory_space<vmem>>, vector<32x256xf32>
    %cst_219 = arith.constant dense<0.000000e+00> : vector<8x256xf32>
    %540 = tpu.matmul %41, %539, %cst_219 {dimension_numbers = #tpu.dot_dimension_numbers<[1], [0], [0], [1], [0, 0, 1, 1], [], []>} : vector<8x32xf32>, vector<32x256xf32>, vector<8x256xf32> -> vector<8x256xf32>
    %541 = arith.addf %538, %540 : vector<8x256xf32>
    %c0_220 = arith.constant 0 : index
    %c0_221 = arith.constant 0 : index
    %542 = vector.load %arg13[%c0_220, %c0_221] : memref<1x256xf32, #tpu.memory_space<vmem>>, vector<1x256xf32>
    %543 = vector.broadcast %542 : vector<1x256xf32> to vector<8x256xf32>
    %544 = arith.addf %541, %543 : vector<8x256xf32>
    %cst_222 = arith.constant 0.000000e+00 : f32
    %545 = vector.broadcast %cst_222 : f32 to vector<8x256xf32>
    %546 = arith.maximumf %544, %545 : vector<8x256xf32>
    %c0_223 = arith.constant 0 : index
    %c0_224 = arith.constant 0 : index
    %547 = vector.load %arg14[%c0_223, %c0_224] : memref<256x128xf32, #tpu.memory_space<vmem>>, vector<256x128xf32>
    %cst_225 = arith.constant dense<0.000000e+00> : vector<8x128xf32>
    %548 = tpu.matmul %546, %547, %cst_225 {dimension_numbers = #tpu.dot_dimension_numbers<[1], [0], [0], [1], [0, 0, 1, 1], [], []>} : vector<8x256xf32>, vector<256x128xf32>, vector<8x128xf32> -> vector<8x128xf32>
    %c0_226 = arith.constant 0 : index
    %c0_227 = arith.constant 0 : index
    %549 = vector.load %arg15[%c0_226, %c0_227] : memref<1x128xf32, #tpu.memory_space<vmem>>, vector<1x128xf32>
    %550 = vector.broadcast %549 : vector<1x128xf32> to vector<8x128xf32>
    %551 = arith.addf %548, %550 : vector<8x128xf32>
    %cst_228 = arith.constant 0.000000e+00 : f32
    %552 = vector.broadcast %cst_228 : f32 to vector<8x128xf32>
    %553 = arith.maximumf %551, %552 : vector<8x128xf32>
    %c0_229 = arith.constant 0 : index
    %c0_230 = arith.constant 0 : index
    %554 = vector.load %arg16[%c0_229, %c0_230] : memref<128x5xf32, #tpu.memory_space<vmem>>, vector<128x5xf32>
    %cst_231 = arith.constant dense<0.000000e+00> : vector<8x5xf32>
    %555 = tpu.matmul %553, %554, %cst_231 {dimension_numbers = #tpu.dot_dimension_numbers<[1], [0], [0], [1], [0, 0, 1, 1], [], []>} : vector<8x128xf32>, vector<128x5xf32>, vector<8x5xf32> -> vector<8x5xf32>
    %c0_232 = arith.constant 0 : index
    %c0_233 = arith.constant 0 : index
    %556 = vector.load %arg17[%c0_232, %c0_233] : memref<1x5xf32, #tpu.memory_space<vmem>>, vector<1x5xf32>
    %557 = vector.broadcast %556 : vector<1x5xf32> to vector<8x5xf32>
    %558 = arith.addf %555, %557 : vector<8x5xf32>
    %c0_234 = arith.constant 0 : index
    %c0_235 = arith.constant 0 : index
    %559 = vector.load %arg18[%c0_234, %c0_235] : memref<8x5xf32, #tpu.memory_space<vmem>>, vector<8x5xf32>
    tpu.vector_store %arg18[%c0_234, %c0_235], %558 {strides = array<i32>} : memref<8x5xf32, #tpu.memory_space<vmem>>, vector<8x5xf32>,
    return
  }
}

module attributes {stable_mosaic.version = 11 : i64} {
  func.func @_bilstm_layer_kernel(%arg0: memref<16x8x32xf32, #tpu.memory_space<vmem>>, %arg1: memref<1x256xf32, #tpu.memory_space<vmem>>, %arg2: memref<32x256xf32, #tpu.memory_space<vmem>>, %arg3: memref<64x256xf32, #tpu.memory_space<vmem>>, %arg4: memref<1x256xf32, #tpu.memory_space<vmem>>, %arg5: memref<16x8x64xf32, #tpu.memory_space<vmem>>, %arg6: memref<16x8x256xf32, #tpu.memory_space<vmem>>) attributes {dimension_semantics = [], scalar_prefetch = 0 : i64, scratch_operands = 1 : i64, tpu.core_type = #tpu.core_type<tc>} {
    %c0 = arith.constant 0 : index
    %c0_0 = arith.constant 0 : index
    %c0_1 = arith.constant 0 : index
    %0 = vector.load %arg0[%c0, %c0_0, %c0_1] : memref<16x8x32xf32, #tpu.memory_space<vmem>>, vector<16x8x32xf32>
    %1 = vector.shape_cast %0 : vector<16x8x32xf32> to vector<128x32xf32>
    %c0_2 = arith.constant 0 : index
    %c0_3 = arith.constant 0 : index
    %2 = vector.load %arg2[%c0_2, %c0_3] : memref<32x256xf32, #tpu.memory_space<vmem>>, vector<32x256xf32>
    %cst = arith.constant dense<0.000000e+00> : vector<128x256xf32>
    %3 = tpu.matmul %1, %2, %cst {dimension_numbers = #tpu.dot_dimension_numbers<[1], [0], [0], [1], [0, 0, 1, 1], [], []>} : vector<128x32xf32>, vector<32x256xf32>, vector<128x256xf32> -> vector<128x256xf32>
    %c0_4 = arith.constant 0 : index
    %c0_5 = arith.constant 0 : index
    %4 = vector.load %arg4[%c0_4, %c0_5] : memref<1x256xf32, #tpu.memory_space<vmem>>, vector<1x256xf32>
    %5 = vector.broadcast %4 : vector<1x256xf32> to vector<128x256xf32>
    %6 = arith.addf %3, %5 : vector<128x256xf32>
    %7 = vector.shape_cast %6 : vector<128x256xf32> to vector<16x8x256xf32>
    %c0_6 = arith.constant 0 : index
    %c0_7 = arith.constant 0 : index
    %c0_8 = arith.constant 0 : index
    %8 = vector.load %arg6[%c0_6, %c0_7, %c0_8] : memref<16x8x256xf32, #tpu.memory_space<vmem>>, vector<16x8x256xf32>
    tpu.vector_store %arg6[%c0_6, %c0_7, %c0_8], %7 {strides = array<i32>} : memref<16x8x256xf32, #tpu.memory_space<vmem>>, vector<16x8x256xf32>,
    %c0_9 = arith.constant 0 : index
    %c0_10 = arith.constant 0 : index
    %9 = vector.load %arg3[%c0_9, %c0_10] : memref<64x256xf32, #tpu.memory_space<vmem>>, vector<64x256xf32>
    %c0_11 = arith.constant 0 : index
    %c0_12 = arith.constant 0 : index
    %10 = vector.load %arg1[%c0_11, %c0_12] : memref<1x256xf32, #tpu.memory_space<vmem>>, vector<1x256xf32>
    %11 = vector.shape_cast %10 : vector<1x256xf32> to vector<1x256xf32>
    %12 = vector.broadcast %11 : vector<1x256xf32> to vector<8x256xf32>
    %cst_13 = arith.constant 5.000000e-01 : f32
    %13 = vector.broadcast %cst_13 : f32 to vector<8x256xf32>
    %14 = arith.cmpf ogt, %12, %13 : vector<8x256xf32>
    %cst_14 = arith.constant 0.000000e+00 : f32
    %15 = vector.broadcast %cst_14 : f32 to vector<8x64xf32>
    %cst_15 = arith.constant 0.000000e+00 : f32
    %16 = vector.broadcast %cst_15 : f32 to vector<8x64xf32>
    %c0_i32 = arith.constant 0 : i32
    %c15_i32 = arith.constant 15 : i32
    %17 = arith.subi %c15_i32, %c0_i32 : i32
    %18 = arith.index_cast %c0_i32 : i32 to index
    %c0_16 = arith.constant 0 : index
    %c0_17 = arith.constant 0 : index
    %19 = vector.load %arg6[%18, %c0_16, %c0_17] : memref<16x8x256xf32, #tpu.memory_space<vmem>>, vector<1x8x256xf32>
    %20 = vector.shape_cast %19 : vector<1x8x256xf32> to vector<8x256xf32>
    %21 = arith.index_cast %17 : i32 to index
    %c0_18 = arith.constant 0 : index
    %c0_19 = arith.constant 0 : index
    %22 = vector.load %arg6[%21, %c0_18, %c0_19] : memref<16x8x256xf32, #tpu.memory_space<vmem>>, vector<1x8x256xf32>
    %23 = vector.shape_cast %22 : vector<1x8x256xf32> to vector<8x256xf32>
    %24 = arith.select %14, %20, %23 : vector<8x256xi1>, vector<8x256xf32>
    %cst_20 = arith.constant dense<0.000000e+00> : vector<8x256xf32>
    %25 = tpu.matmul %15, %9, %cst_20 {dimension_numbers = #tpu.dot_dimension_numbers<[1], [0], [0], [1], [0, 0, 1, 1], [], []>} : vector<8x64xf32>, vector<64x256xf32>, vector<8x256xf32> -> vector<8x256xf32>
    %26 = arith.addf %24, %25 : vector<8x256xf32>
    %27 = arith.negf %26 : vector<8x256xf32>
    %28 = math.exp %27 : vector<8x256xf32>
    %cst_21 = arith.constant 1.000000e+00 : f32
    %29 = vector.broadcast %cst_21 : f32 to vector<8x256xf32>
    %30 = arith.addf %29, %28 : vector<8x256xf32>
    %31 = arith.divf %29, %30 : vector<8x256xf32>
    %32 = vector.extract_strided_slice %31 {offsets = [0, 0], sizes = [8, 64], strides = [1, 1]} : vector<8x256xf32> to vector<8x64xf32>
    %33 = vector.extract_strided_slice %31 {offsets = [0, 64], sizes = [8, 64], strides = [1, 1]} : vector<8x256xf32> to vector<8x64xf32>
    %34 = vector.extract_strided_slice %31 {offsets = [0, 128], sizes = [8, 64], strides = [1, 1]} : vector<8x256xf32> to vector<8x64xf32>
    %cst_22 = arith.constant 2.000000e+00 : f32
    %35 = vector.broadcast %cst_22 : f32 to vector<8x64xf32>
    %36 = arith.mulf %35, %34 : vector<8x64xf32>
    %cst_23 = arith.constant 1.000000e+00 : f32
    %37 = vector.broadcast %cst_23 : f32 to vector<8x64xf32>
    %38 = arith.subf %36, %37 : vector<8x64xf32>
    %39 = vector.extract_strided_slice %31 {offsets = [0, 192], sizes = [8, 64], strides = [1, 1]} : vector<8x256xf32> to vector<8x64xf32>
    %40 = arith.mulf %33, %16 : vector<8x64xf32>
    %41 = arith.mulf %32, %38 : vector<8x64xf32>
    %42 = arith.addf %40, %41 : vector<8x64xf32>
    %43 = math.tanh %42 : vector<8x64xf32>
    %44 = arith.mulf %39, %43 : vector<8x64xf32>
    %45 = vector.extract_strided_slice %44 {offsets = [0, 0], sizes = [8, 32], strides = [1, 1]} : vector<8x64xf32> to vector<8x32xf32>
    %46 = arith.index_cast %c0_i32 : i32 to index
    %c0_24 = arith.constant 0 : index
    %c0_25 = arith.constant 0 : index
    %47 = vector.load %arg5[%46, %c0_24, %c0_25] : memref<16x8x64xf32, #tpu.memory_space<vmem>>, vector<1x8x32xf32>
    %48 = vector.shape_cast %47 : vector<1x8x32xf32> to vector<8x32xf32>
    %49 = vector.shape_cast %45 : vector<8x32xf32> to vector<1x8x32xf32>
    tpu.vector_store %arg5[%46, %c0_24, %c0_25], %49 {strides = array<i32>} : memref<16x8x64xf32, #tpu.memory_space<vmem>>, vector<1x8x32xf32>,
    %50 = vector.extract_strided_slice %44 {offsets = [0, 32], sizes = [8, 32], strides = [1, 1]} : vector<8x64xf32> to vector<8x32xf32>
    %51 = arith.index_cast %17 : i32 to index
    %c0_26 = arith.constant 0 : index
    %c32 = arith.constant 32 : index
    %52 = vector.load %arg5[%51, %c0_26, %c32] : memref<16x8x64xf32, #tpu.memory_space<vmem>>, vector<1x8x32xf32>
    %53 = vector.shape_cast %52 : vector<1x8x32xf32> to vector<8x32xf32>
    %54 = vector.shape_cast %50 : vector<8x32xf32> to vector<1x8x32xf32>
    tpu.vector_store %arg5[%51, %c0_26, %c32], %54 {strides = array<i32>} : memref<16x8x64xf32, #tpu.memory_space<vmem>>, vector<1x8x32xf32>,
    %c1_i32 = arith.constant 1 : i32
    %c15_i32_27 = arith.constant 15 : i32
    %55 = arith.subi %c15_i32_27, %c1_i32 : i32
    %56 = arith.index_cast %c1_i32 : i32 to index
    %c0_28 = arith.constant 0 : index
    %c0_29 = arith.constant 0 : index
    %57 = vector.load %arg6[%56, %c0_28, %c0_29] : memref<16x8x256xf32, #tpu.memory_space<vmem>>, vector<1x8x256xf32>
    %58 = vector.shape_cast %57 : vector<1x8x256xf32> to vector<8x256xf32>
    %59 = arith.index_cast %55 : i32 to index
    %c0_30 = arith.constant 0 : index
    %c0_31 = arith.constant 0 : index
    %60 = vector.load %arg6[%59, %c0_30, %c0_31] : memref<16x8x256xf32, #tpu.memory_space<vmem>>, vector<1x8x256xf32>
    %61 = vector.shape_cast %60 : vector<1x8x256xf32> to vector<8x256xf32>
    %62 = arith.select %14, %58, %61 : vector<8x256xi1>, vector<8x256xf32>
    %cst_32 = arith.constant dense<0.000000e+00> : vector<8x256xf32>
    %63 = tpu.matmul %44, %9, %cst_32 {dimension_numbers = #tpu.dot_dimension_numbers<[1], [0], [0], [1], [0, 0, 1, 1], [], []>} : vector<8x64xf32>, vector<64x256xf32>, vector<8x256xf32> -> vector<8x256xf32>
    %64 = arith.addf %62, %63 : vector<8x256xf32>
    %65 = arith.negf %64 : vector<8x256xf32>
    %66 = math.exp %65 : vector<8x256xf32>
    %cst_33 = arith.constant 1.000000e+00 : f32
    %67 = vector.broadcast %cst_33 : f32 to vector<8x256xf32>
    %68 = arith.addf %67, %66 : vector<8x256xf32>
    %69 = arith.divf %67, %68 : vector<8x256xf32>
    %70 = vector.extract_strided_slice %69 {offsets = [0, 0], sizes = [8, 64], strides = [1, 1]} : vector<8x256xf32> to vector<8x64xf32>
    %71 = vector.extract_strided_slice %69 {offsets = [0, 64], sizes = [8, 64], strides = [1, 1]} : vector<8x256xf32> to vector<8x64xf32>
    %72 = vector.extract_strided_slice %69 {offsets = [0, 128], sizes = [8, 64], strides = [1, 1]} : vector<8x256xf32> to vector<8x64xf32>
    %cst_34 = arith.constant 2.000000e+00 : f32
    %73 = vector.broadcast %cst_34 : f32 to vector<8x64xf32>
    %74 = arith.mulf %73, %72 : vector<8x64xf32>
    %cst_35 = arith.constant 1.000000e+00 : f32
    %75 = vector.broadcast %cst_35 : f32 to vector<8x64xf32>
    %76 = arith.subf %74, %75 : vector<8x64xf32>
    %77 = vector.extract_strided_slice %69 {offsets = [0, 192], sizes = [8, 64], strides = [1, 1]} : vector<8x256xf32> to vector<8x64xf32>
    %78 = arith.mulf %71, %42 : vector<8x64xf32>
    %79 = arith.mulf %70, %76 : vector<8x64xf32>
    %80 = arith.addf %78, %79 : vector<8x64xf32>
    %81 = math.tanh %80 : vector<8x64xf32>
    %82 = arith.mulf %77, %81 : vector<8x64xf32>
    %83 = vector.extract_strided_slice %82 {offsets = [0, 0], sizes = [8, 32], strides = [1, 1]} : vector<8x64xf32> to vector<8x32xf32>
    %84 = arith.index_cast %c1_i32 : i32 to index
    %c0_36 = arith.constant 0 : index
    %c0_37 = arith.constant 0 : index
    %85 = vector.load %arg5[%84, %c0_36, %c0_37] : memref<16x8x64xf32, #tpu.memory_space<vmem>>, vector<1x8x32xf32>
    %86 = vector.shape_cast %85 : vector<1x8x32xf32> to vector<8x32xf32>
    %87 = vector.shape_cast %83 : vector<8x32xf32> to vector<1x8x32xf32>
    tpu.vector_store %arg5[%84, %c0_36, %c0_37], %87 {strides = array<i32>} : memref<16x8x64xf32, #tpu.memory_space<vmem>>, vector<1x8x32xf32>,
    %88 = vector.extract_strided_slice %82 {offsets = [0, 32], sizes = [8, 32], strides = [1, 1]} : vector<8x64xf32> to vector<8x32xf32>
    %89 = arith.index_cast %55 : i32 to index
    %c0_38 = arith.constant 0 : index
    %c32_39 = arith.constant 32 : index
    %90 = vector.load %arg5[%89, %c0_38, %c32_39] : memref<16x8x64xf32, #tpu.memory_space<vmem>>, vector<1x8x32xf32>
    %91 = vector.shape_cast %90 : vector<1x8x32xf32> to vector<8x32xf32>
    %92 = vector.shape_cast %88 : vector<8x32xf32> to vector<1x8x32xf32>
    tpu.vector_store %arg5[%89, %c0_38, %c32_39], %92 {strides = array<i32>} : memref<16x8x64xf32, #tpu.memory_space<vmem>>, vector<1x8x32xf32>,
    %c2_i32 = arith.constant 2 : i32
    %c15_i32_40 = arith.constant 15 : i32
    %93 = arith.subi %c15_i32_40, %c2_i32 : i32
    %94 = arith.index_cast %c2_i32 : i32 to index
    %c0_41 = arith.constant 0 : index
    %c0_42 = arith.constant 0 : index
    %95 = vector.load %arg6[%94, %c0_41, %c0_42] : memref<16x8x256xf32, #tpu.memory_space<vmem>>, vector<1x8x256xf32>
    %96 = vector.shape_cast %95 : vector<1x8x256xf32> to vector<8x256xf32>
    %97 = arith.index_cast %93 : i32 to index
    %c0_43 = arith.constant 0 : index
    %c0_44 = arith.constant 0 : index
    %98 = vector.load %arg6[%97, %c0_43, %c0_44] : memref<16x8x256xf32, #tpu.memory_space<vmem>>, vector<1x8x256xf32>
    %99 = vector.shape_cast %98 : vector<1x8x256xf32> to vector<8x256xf32>
    %100 = arith.select %14, %96, %99 : vector<8x256xi1>, vector<8x256xf32>
    %cst_45 = arith.constant dense<0.000000e+00> : vector<8x256xf32>
    %101 = tpu.matmul %82, %9, %cst_45 {dimension_numbers = #tpu.dot_dimension_numbers<[1], [0], [0], [1], [0, 0, 1, 1], [], []>} : vector<8x64xf32>, vector<64x256xf32>, vector<8x256xf32> -> vector<8x256xf32>
    %102 = arith.addf %100, %101 : vector<8x256xf32>
    %103 = arith.negf %102 : vector<8x256xf32>
    %104 = math.exp %103 : vector<8x256xf32>
    %cst_46 = arith.constant 1.000000e+00 : f32
    %105 = vector.broadcast %cst_46 : f32 to vector<8x256xf32>
    %106 = arith.addf %105, %104 : vector<8x256xf32>
    %107 = arith.divf %105, %106 : vector<8x256xf32>
    %108 = vector.extract_strided_slice %107 {offsets = [0, 0], sizes = [8, 64], strides = [1, 1]} : vector<8x256xf32> to vector<8x64xf32>
    %109 = vector.extract_strided_slice %107 {offsets = [0, 64], sizes = [8, 64], strides = [1, 1]} : vector<8x256xf32> to vector<8x64xf32>
    %110 = vector.extract_strided_slice %107 {offsets = [0, 128], sizes = [8, 64], strides = [1, 1]} : vector<8x256xf32> to vector<8x64xf32>
    %cst_47 = arith.constant 2.000000e+00 : f32
    %111 = vector.broadcast %cst_47 : f32 to vector<8x64xf32>
    %112 = arith.mulf %111, %110 : vector<8x64xf32>
    %cst_48 = arith.constant 1.000000e+00 : f32
    %113 = vector.broadcast %cst_48 : f32 to vector<8x64xf32>
    %114 = arith.subf %112, %113 : vector<8x64xf32>
    %115 = vector.extract_strided_slice %107 {offsets = [0, 192], sizes = [8, 64], strides = [1, 1]} : vector<8x256xf32> to vector<8x64xf32>
    %116 = arith.mulf %109, %80 : vector<8x64xf32>
    %117 = arith.mulf %108, %114 : vector<8x64xf32>
    %118 = arith.addf %116, %117 : vector<8x64xf32>
    %119 = math.tanh %118 : vector<8x64xf32>
    %120 = arith.mulf %115, %119 : vector<8x64xf32>
    %121 = vector.extract_strided_slice %120 {offsets = [0, 0], sizes = [8, 32], strides = [1, 1]} : vector<8x64xf32> to vector<8x32xf32>
    %122 = arith.index_cast %c2_i32 : i32 to index
    %c0_49 = arith.constant 0 : index
    %c0_50 = arith.constant 0 : index
    %123 = vector.load %arg5[%122, %c0_49, %c0_50] : memref<16x8x64xf32, #tpu.memory_space<vmem>>, vector<1x8x32xf32>
    %124 = vector.shape_cast %123 : vector<1x8x32xf32> to vector<8x32xf32>
    %125 = vector.shape_cast %121 : vector<8x32xf32> to vector<1x8x32xf32>
    tpu.vector_store %arg5[%122, %c0_49, %c0_50], %125 {strides = array<i32>} : memref<16x8x64xf32, #tpu.memory_space<vmem>>, vector<1x8x32xf32>,
    %126 = vector.extract_strided_slice %120 {offsets = [0, 32], sizes = [8, 32], strides = [1, 1]} : vector<8x64xf32> to vector<8x32xf32>
    %127 = arith.index_cast %93 : i32 to index
    %c0_51 = arith.constant 0 : index
    %c32_52 = arith.constant 32 : index
    %128 = vector.load %arg5[%127, %c0_51, %c32_52] : memref<16x8x64xf32, #tpu.memory_space<vmem>>, vector<1x8x32xf32>
    %129 = vector.shape_cast %128 : vector<1x8x32xf32> to vector<8x32xf32>
    %130 = vector.shape_cast %126 : vector<8x32xf32> to vector<1x8x32xf32>
    tpu.vector_store %arg5[%127, %c0_51, %c32_52], %130 {strides = array<i32>} : memref<16x8x64xf32, #tpu.memory_space<vmem>>, vector<1x8x32xf32>,
    %c3_i32 = arith.constant 3 : i32
    %c15_i32_53 = arith.constant 15 : i32
    %131 = arith.subi %c15_i32_53, %c3_i32 : i32
    %132 = arith.index_cast %c3_i32 : i32 to index
    %c0_54 = arith.constant 0 : index
    %c0_55 = arith.constant 0 : index
    %133 = vector.load %arg6[%132, %c0_54, %c0_55] : memref<16x8x256xf32, #tpu.memory_space<vmem>>, vector<1x8x256xf32>
    %134 = vector.shape_cast %133 : vector<1x8x256xf32> to vector<8x256xf32>
    %135 = arith.index_cast %131 : i32 to index
    %c0_56 = arith.constant 0 : index
    %c0_57 = arith.constant 0 : index
    %136 = vector.load %arg6[%135, %c0_56, %c0_57] : memref<16x8x256xf32, #tpu.memory_space<vmem>>, vector<1x8x256xf32>
    %137 = vector.shape_cast %136 : vector<1x8x256xf32> to vector<8x256xf32>
    %138 = arith.select %14, %134, %137 : vector<8x256xi1>, vector<8x256xf32>
    %cst_58 = arith.constant dense<0.000000e+00> : vector<8x256xf32>
    %139 = tpu.matmul %120, %9, %cst_58 {dimension_numbers = #tpu.dot_dimension_numbers<[1], [0], [0], [1], [0, 0, 1, 1], [], []>} : vector<8x64xf32>, vector<64x256xf32>, vector<8x256xf32> -> vector<8x256xf32>
    %140 = arith.addf %138, %139 : vector<8x256xf32>
    %141 = arith.negf %140 : vector<8x256xf32>
    %142 = math.exp %141 : vector<8x256xf32>
    %cst_59 = arith.constant 1.000000e+00 : f32
    %143 = vector.broadcast %cst_59 : f32 to vector<8x256xf32>
    %144 = arith.addf %143, %142 : vector<8x256xf32>
    %145 = arith.divf %143, %144 : vector<8x256xf32>
    %146 = vector.extract_strided_slice %145 {offsets = [0, 0], sizes = [8, 64], strides = [1, 1]} : vector<8x256xf32> to vector<8x64xf32>
    %147 = vector.extract_strided_slice %145 {offsets = [0, 64], sizes = [8, 64], strides = [1, 1]} : vector<8x256xf32> to vector<8x64xf32>
    %148 = vector.extract_strided_slice %145 {offsets = [0, 128], sizes = [8, 64], strides = [1, 1]} : vector<8x256xf32> to vector<8x64xf32>
    %cst_60 = arith.constant 2.000000e+00 : f32
    %149 = vector.broadcast %cst_60 : f32 to vector<8x64xf32>
    %150 = arith.mulf %149, %148 : vector<8x64xf32>
    %cst_61 = arith.constant 1.000000e+00 : f32
    %151 = vector.broadcast %cst_61 : f32 to vector<8x64xf32>
    %152 = arith.subf %150, %151 : vector<8x64xf32>
    %153 = vector.extract_strided_slice %145 {offsets = [0, 192], sizes = [8, 64], strides = [1, 1]} : vector<8x256xf32> to vector<8x64xf32>
    %154 = arith.mulf %147, %118 : vector<8x64xf32>
    %155 = arith.mulf %146, %152 : vector<8x64xf32>
    %156 = arith.addf %154, %155 : vector<8x64xf32>
    %157 = math.tanh %156 : vector<8x64xf32>
    %158 = arith.mulf %153, %157 : vector<8x64xf32>
    %159 = vector.extract_strided_slice %158 {offsets = [0, 0], sizes = [8, 32], strides = [1, 1]} : vector<8x64xf32> to vector<8x32xf32>
    %160 = arith.index_cast %c3_i32 : i32 to index
    %c0_62 = arith.constant 0 : index
    %c0_63 = arith.constant 0 : index
    %161 = vector.load %arg5[%160, %c0_62, %c0_63] : memref<16x8x64xf32, #tpu.memory_space<vmem>>, vector<1x8x32xf32>
    %162 = vector.shape_cast %161 : vector<1x8x32xf32> to vector<8x32xf32>
    %163 = vector.shape_cast %159 : vector<8x32xf32> to vector<1x8x32xf32>
    tpu.vector_store %arg5[%160, %c0_62, %c0_63], %163 {strides = array<i32>} : memref<16x8x64xf32, #tpu.memory_space<vmem>>, vector<1x8x32xf32>,
    %164 = vector.extract_strided_slice %158 {offsets = [0, 32], sizes = [8, 32], strides = [1, 1]} : vector<8x64xf32> to vector<8x32xf32>
    %165 = arith.index_cast %131 : i32 to index
    %c0_64 = arith.constant 0 : index
    %c32_65 = arith.constant 32 : index
    %166 = vector.load %arg5[%165, %c0_64, %c32_65] : memref<16x8x64xf32, #tpu.memory_space<vmem>>, vector<1x8x32xf32>
    %167 = vector.shape_cast %166 : vector<1x8x32xf32> to vector<8x32xf32>
    %168 = vector.shape_cast %164 : vector<8x32xf32> to vector<1x8x32xf32>
    tpu.vector_store %arg5[%165, %c0_64, %c32_65], %168 {strides = array<i32>} : memref<16x8x64xf32, #tpu.memory_space<vmem>>, vector<1x8x32xf32>,
    %c4_i32 = arith.constant 4 : i32
    %c15_i32_66 = arith.constant 15 : i32
    %169 = arith.subi %c15_i32_66, %c4_i32 : i32
    %170 = arith.index_cast %c4_i32 : i32 to index
    %c0_67 = arith.constant 0 : index
    %c0_68 = arith.constant 0 : index
    %171 = vector.load %arg6[%170, %c0_67, %c0_68] : memref<16x8x256xf32, #tpu.memory_space<vmem>>, vector<1x8x256xf32>
    %172 = vector.shape_cast %171 : vector<1x8x256xf32> to vector<8x256xf32>
    %173 = arith.index_cast %169 : i32 to index
    %c0_69 = arith.constant 0 : index
    %c0_70 = arith.constant 0 : index
    %174 = vector.load %arg6[%173, %c0_69, %c0_70] : memref<16x8x256xf32, #tpu.memory_space<vmem>>, vector<1x8x256xf32>
    %175 = vector.shape_cast %174 : vector<1x8x256xf32> to vector<8x256xf32>
    %176 = arith.select %14, %172, %175 : vector<8x256xi1>, vector<8x256xf32>
    %cst_71 = arith.constant dense<0.000000e+00> : vector<8x256xf32>
    %177 = tpu.matmul %158, %9, %cst_71 {dimension_numbers = #tpu.dot_dimension_numbers<[1], [0], [0], [1], [0, 0, 1, 1], [], []>} : vector<8x64xf32>, vector<64x256xf32>, vector<8x256xf32> -> vector<8x256xf32>
    %178 = arith.addf %176, %177 : vector<8x256xf32>
    %179 = arith.negf %178 : vector<8x256xf32>
    %180 = math.exp %179 : vector<8x256xf32>
    %cst_72 = arith.constant 1.000000e+00 : f32
    %181 = vector.broadcast %cst_72 : f32 to vector<8x256xf32>
    %182 = arith.addf %181, %180 : vector<8x256xf32>
    %183 = arith.divf %181, %182 : vector<8x256xf32>
    %184 = vector.extract_strided_slice %183 {offsets = [0, 0], sizes = [8, 64], strides = [1, 1]} : vector<8x256xf32> to vector<8x64xf32>
    %185 = vector.extract_strided_slice %183 {offsets = [0, 64], sizes = [8, 64], strides = [1, 1]} : vector<8x256xf32> to vector<8x64xf32>
    %186 = vector.extract_strided_slice %183 {offsets = [0, 128], sizes = [8, 64], strides = [1, 1]} : vector<8x256xf32> to vector<8x64xf32>
    %cst_73 = arith.constant 2.000000e+00 : f32
    %187 = vector.broadcast %cst_73 : f32 to vector<8x64xf32>
    %188 = arith.mulf %187, %186 : vector<8x64xf32>
    %cst_74 = arith.constant 1.000000e+00 : f32
    %189 = vector.broadcast %cst_74 : f32 to vector<8x64xf32>
    %190 = arith.subf %188, %189 : vector<8x64xf32>
    %191 = vector.extract_strided_slice %183 {offsets = [0, 192], sizes = [8, 64], strides = [1, 1]} : vector<8x256xf32> to vector<8x64xf32>
    %192 = arith.mulf %185, %156 : vector<8x64xf32>
    %193 = arith.mulf %184, %190 : vector<8x64xf32>
    %194 = arith.addf %192, %193 : vector<8x64xf32>
    %195 = math.tanh %194 : vector<8x64xf32>
    %196 = arith.mulf %191, %195 : vector<8x64xf32>
    %197 = vector.extract_strided_slice %196 {offsets = [0, 0], sizes = [8, 32], strides = [1, 1]} : vector<8x64xf32> to vector<8x32xf32>
    %198 = arith.index_cast %c4_i32 : i32 to index
    %c0_75 = arith.constant 0 : index
    %c0_76 = arith.constant 0 : index
    %199 = vector.load %arg5[%198, %c0_75, %c0_76] : memref<16x8x64xf32, #tpu.memory_space<vmem>>, vector<1x8x32xf32>
    %200 = vector.shape_cast %199 : vector<1x8x32xf32> to vector<8x32xf32>
    %201 = vector.shape_cast %197 : vector<8x32xf32> to vector<1x8x32xf32>
    tpu.vector_store %arg5[%198, %c0_75, %c0_76], %201 {strides = array<i32>} : memref<16x8x64xf32, #tpu.memory_space<vmem>>, vector<1x8x32xf32>,
    %202 = vector.extract_strided_slice %196 {offsets = [0, 32], sizes = [8, 32], strides = [1, 1]} : vector<8x64xf32> to vector<8x32xf32>
    %203 = arith.index_cast %169 : i32 to index
    %c0_77 = arith.constant 0 : index
    %c32_78 = arith.constant 32 : index
    %204 = vector.load %arg5[%203, %c0_77, %c32_78] : memref<16x8x64xf32, #tpu.memory_space<vmem>>, vector<1x8x32xf32>
    %205 = vector.shape_cast %204 : vector<1x8x32xf32> to vector<8x32xf32>
    %206 = vector.shape_cast %202 : vector<8x32xf32> to vector<1x8x32xf32>
    tpu.vector_store %arg5[%203, %c0_77, %c32_78], %206 {strides = array<i32>} : memref<16x8x64xf32, #tpu.memory_space<vmem>>, vector<1x8x32xf32>,
    %c5_i32 = arith.constant 5 : i32
    %c15_i32_79 = arith.constant 15 : i32
    %207 = arith.subi %c15_i32_79, %c5_i32 : i32
    %208 = arith.index_cast %c5_i32 : i32 to index
    %c0_80 = arith.constant 0 : index
    %c0_81 = arith.constant 0 : index
    %209 = vector.load %arg6[%208, %c0_80, %c0_81] : memref<16x8x256xf32, #tpu.memory_space<vmem>>, vector<1x8x256xf32>
    %210 = vector.shape_cast %209 : vector<1x8x256xf32> to vector<8x256xf32>
    %211 = arith.index_cast %207 : i32 to index
    %c0_82 = arith.constant 0 : index
    %c0_83 = arith.constant 0 : index
    %212 = vector.load %arg6[%211, %c0_82, %c0_83] : memref<16x8x256xf32, #tpu.memory_space<vmem>>, vector<1x8x256xf32>
    %213 = vector.shape_cast %212 : vector<1x8x256xf32> to vector<8x256xf32>
    %214 = arith.select %14, %210, %213 : vector<8x256xi1>, vector<8x256xf32>
    %cst_84 = arith.constant dense<0.000000e+00> : vector<8x256xf32>
    %215 = tpu.matmul %196, %9, %cst_84 {dimension_numbers = #tpu.dot_dimension_numbers<[1], [0], [0], [1], [0, 0, 1, 1], [], []>} : vector<8x64xf32>, vector<64x256xf32>, vector<8x256xf32> -> vector<8x256xf32>
    %216 = arith.addf %214, %215 : vector<8x256xf32>
    %217 = arith.negf %216 : vector<8x256xf32>
    %218 = math.exp %217 : vector<8x256xf32>
    %cst_85 = arith.constant 1.000000e+00 : f32
    %219 = vector.broadcast %cst_85 : f32 to vector<8x256xf32>
    %220 = arith.addf %219, %218 : vector<8x256xf32>
    %221 = arith.divf %219, %220 : vector<8x256xf32>
    %222 = vector.extract_strided_slice %221 {offsets = [0, 0], sizes = [8, 64], strides = [1, 1]} : vector<8x256xf32> to vector<8x64xf32>
    %223 = vector.extract_strided_slice %221 {offsets = [0, 64], sizes = [8, 64], strides = [1, 1]} : vector<8x256xf32> to vector<8x64xf32>
    %224 = vector.extract_strided_slice %221 {offsets = [0, 128], sizes = [8, 64], strides = [1, 1]} : vector<8x256xf32> to vector<8x64xf32>
    %cst_86 = arith.constant 2.000000e+00 : f32
    %225 = vector.broadcast %cst_86 : f32 to vector<8x64xf32>
    %226 = arith.mulf %225, %224 : vector<8x64xf32>
    %cst_87 = arith.constant 1.000000e+00 : f32
    %227 = vector.broadcast %cst_87 : f32 to vector<8x64xf32>
    %228 = arith.subf %226, %227 : vector<8x64xf32>
    %229 = vector.extract_strided_slice %221 {offsets = [0, 192], sizes = [8, 64], strides = [1, 1]} : vector<8x256xf32> to vector<8x64xf32>
    %230 = arith.mulf %223, %194 : vector<8x64xf32>
    %231 = arith.mulf %222, %228 : vector<8x64xf32>
    %232 = arith.addf %230, %231 : vector<8x64xf32>
    %233 = math.tanh %232 : vector<8x64xf32>
    %234 = arith.mulf %229, %233 : vector<8x64xf32>
    %235 = vector.extract_strided_slice %234 {offsets = [0, 0], sizes = [8, 32], strides = [1, 1]} : vector<8x64xf32> to vector<8x32xf32>
    %236 = arith.index_cast %c5_i32 : i32 to index
    %c0_88 = arith.constant 0 : index
    %c0_89 = arith.constant 0 : index
    %237 = vector.load %arg5[%236, %c0_88, %c0_89] : memref<16x8x64xf32, #tpu.memory_space<vmem>>, vector<1x8x32xf32>
    %238 = vector.shape_cast %237 : vector<1x8x32xf32> to vector<8x32xf32>
    %239 = vector.shape_cast %235 : vector<8x32xf32> to vector<1x8x32xf32>
    tpu.vector_store %arg5[%236, %c0_88, %c0_89], %239 {strides = array<i32>} : memref<16x8x64xf32, #tpu.memory_space<vmem>>, vector<1x8x32xf32>,
    %240 = vector.extract_strided_slice %234 {offsets = [0, 32], sizes = [8, 32], strides = [1, 1]} : vector<8x64xf32> to vector<8x32xf32>
    %241 = arith.index_cast %207 : i32 to index
    %c0_90 = arith.constant 0 : index
    %c32_91 = arith.constant 32 : index
    %242 = vector.load %arg5[%241, %c0_90, %c32_91] : memref<16x8x64xf32, #tpu.memory_space<vmem>>, vector<1x8x32xf32>
    %243 = vector.shape_cast %242 : vector<1x8x32xf32> to vector<8x32xf32>
    %244 = vector.shape_cast %240 : vector<8x32xf32> to vector<1x8x32xf32>
    tpu.vector_store %arg5[%241, %c0_90, %c32_91], %244 {strides = array<i32>} : memref<16x8x64xf32, #tpu.memory_space<vmem>>, vector<1x8x32xf32>,
    %c6_i32 = arith.constant 6 : i32
    %c15_i32_92 = arith.constant 15 : i32
    %245 = arith.subi %c15_i32_92, %c6_i32 : i32
    %246 = arith.index_cast %c6_i32 : i32 to index
    %c0_93 = arith.constant 0 : index
    %c0_94 = arith.constant 0 : index
    %247 = vector.load %arg6[%246, %c0_93, %c0_94] : memref<16x8x256xf32, #tpu.memory_space<vmem>>, vector<1x8x256xf32>
    %248 = vector.shape_cast %247 : vector<1x8x256xf32> to vector<8x256xf32>
    %249 = arith.index_cast %245 : i32 to index
    %c0_95 = arith.constant 0 : index
    %c0_96 = arith.constant 0 : index
    %250 = vector.load %arg6[%249, %c0_95, %c0_96] : memref<16x8x256xf32, #tpu.memory_space<vmem>>, vector<1x8x256xf32>
    %251 = vector.shape_cast %250 : vector<1x8x256xf32> to vector<8x256xf32>
    %252 = arith.select %14, %248, %251 : vector<8x256xi1>, vector<8x256xf32>
    %cst_97 = arith.constant dense<0.000000e+00> : vector<8x256xf32>
    %253 = tpu.matmul %234, %9, %cst_97 {dimension_numbers = #tpu.dot_dimension_numbers<[1], [0], [0], [1], [0, 0, 1, 1], [], []>} : vector<8x64xf32>, vector<64x256xf32>, vector<8x256xf32> -> vector<8x256xf32>
    %254 = arith.addf %252, %253 : vector<8x256xf32>
    %255 = arith.negf %254 : vector<8x256xf32>
    %256 = math.exp %255 : vector<8x256xf32>
    %cst_98 = arith.constant 1.000000e+00 : f32
    %257 = vector.broadcast %cst_98 : f32 to vector<8x256xf32>
    %258 = arith.addf %257, %256 : vector<8x256xf32>
    %259 = arith.divf %257, %258 : vector<8x256xf32>
    %260 = vector.extract_strided_slice %259 {offsets = [0, 0], sizes = [8, 64], strides = [1, 1]} : vector<8x256xf32> to vector<8x64xf32>
    %261 = vector.extract_strided_slice %259 {offsets = [0, 64], sizes = [8, 64], strides = [1, 1]} : vector<8x256xf32> to vector<8x64xf32>
    %262 = vector.extract_strided_slice %259 {offsets = [0, 128], sizes = [8, 64], strides = [1, 1]} : vector<8x256xf32> to vector<8x64xf32>
    %cst_99 = arith.constant 2.000000e+00 : f32
    %263 = vector.broadcast %cst_99 : f32 to vector<8x64xf32>
    %264 = arith.mulf %263, %262 : vector<8x64xf32>
    %cst_100 = arith.constant 1.000000e+00 : f32
    %265 = vector.broadcast %cst_100 : f32 to vector<8x64xf32>
    %266 = arith.subf %264, %265 : vector<8x64xf32>
    %267 = vector.extract_strided_slice %259 {offsets = [0, 192], sizes = [8, 64], strides = [1, 1]} : vector<8x256xf32> to vector<8x64xf32>
    %268 = arith.mulf %261, %232 : vector<8x64xf32>
    %269 = arith.mulf %260, %266 : vector<8x64xf32>
    %270 = arith.addf %268, %269 : vector<8x64xf32>
    %271 = math.tanh %270 : vector<8x64xf32>
    %272 = arith.mulf %267, %271 : vector<8x64xf32>
    %273 = vector.extract_strided_slice %272 {offsets = [0, 0], sizes = [8, 32], strides = [1, 1]} : vector<8x64xf32> to vector<8x32xf32>
    %274 = arith.index_cast %c6_i32 : i32 to index
    %c0_101 = arith.constant 0 : index
    %c0_102 = arith.constant 0 : index
    %275 = vector.load %arg5[%274, %c0_101, %c0_102] : memref<16x8x64xf32, #tpu.memory_space<vmem>>, vector<1x8x32xf32>
    %276 = vector.shape_cast %275 : vector<1x8x32xf32> to vector<8x32xf32>
    %277 = vector.shape_cast %273 : vector<8x32xf32> to vector<1x8x32xf32>
    tpu.vector_store %arg5[%274, %c0_101, %c0_102], %277 {strides = array<i32>} : memref<16x8x64xf32, #tpu.memory_space<vmem>>, vector<1x8x32xf32>,
    %278 = vector.extract_strided_slice %272 {offsets = [0, 32], sizes = [8, 32], strides = [1, 1]} : vector<8x64xf32> to vector<8x32xf32>
    %279 = arith.index_cast %245 : i32 to index
    %c0_103 = arith.constant 0 : index
    %c32_104 = arith.constant 32 : index
    %280 = vector.load %arg5[%279, %c0_103, %c32_104] : memref<16x8x64xf32, #tpu.memory_space<vmem>>, vector<1x8x32xf32>
    %281 = vector.shape_cast %280 : vector<1x8x32xf32> to vector<8x32xf32>
    %282 = vector.shape_cast %278 : vector<8x32xf32> to vector<1x8x32xf32>
    tpu.vector_store %arg5[%279, %c0_103, %c32_104], %282 {strides = array<i32>} : memref<16x8x64xf32, #tpu.memory_space<vmem>>, vector<1x8x32xf32>,
    %c7_i32 = arith.constant 7 : i32
    %c15_i32_105 = arith.constant 15 : i32
    %283 = arith.subi %c15_i32_105, %c7_i32 : i32
    %284 = arith.index_cast %c7_i32 : i32 to index
    %c0_106 = arith.constant 0 : index
    %c0_107 = arith.constant 0 : index
    %285 = vector.load %arg6[%284, %c0_106, %c0_107] : memref<16x8x256xf32, #tpu.memory_space<vmem>>, vector<1x8x256xf32>
    %286 = vector.shape_cast %285 : vector<1x8x256xf32> to vector<8x256xf32>
    %287 = arith.index_cast %283 : i32 to index
    %c0_108 = arith.constant 0 : index
    %c0_109 = arith.constant 0 : index
    %288 = vector.load %arg6[%287, %c0_108, %c0_109] : memref<16x8x256xf32, #tpu.memory_space<vmem>>, vector<1x8x256xf32>
    %289 = vector.shape_cast %288 : vector<1x8x256xf32> to vector<8x256xf32>
    %290 = arith.select %14, %286, %289 : vector<8x256xi1>, vector<8x256xf32>
    %cst_110 = arith.constant dense<0.000000e+00> : vector<8x256xf32>
    %291 = tpu.matmul %272, %9, %cst_110 {dimension_numbers = #tpu.dot_dimension_numbers<[1], [0], [0], [1], [0, 0, 1, 1], [], []>} : vector<8x64xf32>, vector<64x256xf32>, vector<8x256xf32> -> vector<8x256xf32>
    %292 = arith.addf %290, %291 : vector<8x256xf32>
    %293 = arith.negf %292 : vector<8x256xf32>
    %294 = math.exp %293 : vector<8x256xf32>
    %cst_111 = arith.constant 1.000000e+00 : f32
    %295 = vector.broadcast %cst_111 : f32 to vector<8x256xf32>
    %296 = arith.addf %295, %294 : vector<8x256xf32>
    %297 = arith.divf %295, %296 : vector<8x256xf32>
    %298 = vector.extract_strided_slice %297 {offsets = [0, 0], sizes = [8, 64], strides = [1, 1]} : vector<8x256xf32> to vector<8x64xf32>
    %299 = vector.extract_strided_slice %297 {offsets = [0, 64], sizes = [8, 64], strides = [1, 1]} : vector<8x256xf32> to vector<8x64xf32>
    %300 = vector.extract_strided_slice %297 {offsets = [0, 128], sizes = [8, 64], strides = [1, 1]} : vector<8x256xf32> to vector<8x64xf32>
    %cst_112 = arith.constant 2.000000e+00 : f32
    %301 = vector.broadcast %cst_112 : f32 to vector<8x64xf32>
    %302 = arith.mulf %301, %300 : vector<8x64xf32>
    %cst_113 = arith.constant 1.000000e+00 : f32
    %303 = vector.broadcast %cst_113 : f32 to vector<8x64xf32>
    %304 = arith.subf %302, %303 : vector<8x64xf32>
    %305 = vector.extract_strided_slice %297 {offsets = [0, 192], sizes = [8, 64], strides = [1, 1]} : vector<8x256xf32> to vector<8x64xf32>
    %306 = arith.mulf %299, %270 : vector<8x64xf32>
    %307 = arith.mulf %298, %304 : vector<8x64xf32>
    %308 = arith.addf %306, %307 : vector<8x64xf32>
    %309 = math.tanh %308 : vector<8x64xf32>
    %310 = arith.mulf %305, %309 : vector<8x64xf32>
    %311 = vector.extract_strided_slice %310 {offsets = [0, 0], sizes = [8, 32], strides = [1, 1]} : vector<8x64xf32> to vector<8x32xf32>
    %312 = arith.index_cast %c7_i32 : i32 to index
    %c0_114 = arith.constant 0 : index
    %c0_115 = arith.constant 0 : index
    %313 = vector.load %arg5[%312, %c0_114, %c0_115] : memref<16x8x64xf32, #tpu.memory_space<vmem>>, vector<1x8x32xf32>
    %314 = vector.shape_cast %313 : vector<1x8x32xf32> to vector<8x32xf32>
    %315 = vector.shape_cast %311 : vector<8x32xf32> to vector<1x8x32xf32>
    tpu.vector_store %arg5[%312, %c0_114, %c0_115], %315 {strides = array<i32>} : memref<16x8x64xf32, #tpu.memory_space<vmem>>, vector<1x8x32xf32>,
    %316 = vector.extract_strided_slice %310 {offsets = [0, 32], sizes = [8, 32], strides = [1, 1]} : vector<8x64xf32> to vector<8x32xf32>
    %317 = arith.index_cast %283 : i32 to index
    %c0_116 = arith.constant 0 : index
    %c32_117 = arith.constant 32 : index
    %318 = vector.load %arg5[%317, %c0_116, %c32_117] : memref<16x8x64xf32, #tpu.memory_space<vmem>>, vector<1x8x32xf32>
    %319 = vector.shape_cast %318 : vector<1x8x32xf32> to vector<8x32xf32>
    %320 = vector.shape_cast %316 : vector<8x32xf32> to vector<1x8x32xf32>
    tpu.vector_store %arg5[%317, %c0_116, %c32_117], %320 {strides = array<i32>} : memref<16x8x64xf32, #tpu.memory_space<vmem>>, vector<1x8x32xf32>,
    %c8_i32 = arith.constant 8 : i32
    %c15_i32_118 = arith.constant 15 : i32
    %321 = arith.subi %c15_i32_118, %c8_i32 : i32
    %322 = arith.index_cast %c8_i32 : i32 to index
    %c0_119 = arith.constant 0 : index
    %c0_120 = arith.constant 0 : index
    %323 = vector.load %arg6[%322, %c0_119, %c0_120] : memref<16x8x256xf32, #tpu.memory_space<vmem>>, vector<1x8x256xf32>
    %324 = vector.shape_cast %323 : vector<1x8x256xf32> to vector<8x256xf32>
    %325 = arith.index_cast %321 : i32 to index
    %c0_121 = arith.constant 0 : index
    %c0_122 = arith.constant 0 : index
    %326 = vector.load %arg6[%325, %c0_121, %c0_122] : memref<16x8x256xf32, #tpu.memory_space<vmem>>, vector<1x8x256xf32>
    %327 = vector.shape_cast %326 : vector<1x8x256xf32> to vector<8x256xf32>
    %328 = arith.select %14, %324, %327 : vector<8x256xi1>, vector<8x256xf32>
    %cst_123 = arith.constant dense<0.000000e+00> : vector<8x256xf32>
    %329 = tpu.matmul %310, %9, %cst_123 {dimension_numbers = #tpu.dot_dimension_numbers<[1], [0], [0], [1], [0, 0, 1, 1], [], []>} : vector<8x64xf32>, vector<64x256xf32>, vector<8x256xf32> -> vector<8x256xf32>
    %330 = arith.addf %328, %329 : vector<8x256xf32>
    %331 = arith.negf %330 : vector<8x256xf32>
    %332 = math.exp %331 : vector<8x256xf32>
    %cst_124 = arith.constant 1.000000e+00 : f32
    %333 = vector.broadcast %cst_124 : f32 to vector<8x256xf32>
    %334 = arith.addf %333, %332 : vector<8x256xf32>
    %335 = arith.divf %333, %334 : vector<8x256xf32>
    %336 = vector.extract_strided_slice %335 {offsets = [0, 0], sizes = [8, 64], strides = [1, 1]} : vector<8x256xf32> to vector<8x64xf32>
    %337 = vector.extract_strided_slice %335 {offsets = [0, 64], sizes = [8, 64], strides = [1, 1]} : vector<8x256xf32> to vector<8x64xf32>
    %338 = vector.extract_strided_slice %335 {offsets = [0, 128], sizes = [8, 64], strides = [1, 1]} : vector<8x256xf32> to vector<8x64xf32>
    %cst_125 = arith.constant 2.000000e+00 : f32
    %339 = vector.broadcast %cst_125 : f32 to vector<8x64xf32>
    %340 = arith.mulf %339, %338 : vector<8x64xf32>
    %cst_126 = arith.constant 1.000000e+00 : f32
    %341 = vector.broadcast %cst_126 : f32 to vector<8x64xf32>
    %342 = arith.subf %340, %341 : vector<8x64xf32>
    %343 = vector.extract_strided_slice %335 {offsets = [0, 192], sizes = [8, 64], strides = [1, 1]} : vector<8x256xf32> to vector<8x64xf32>
    %344 = arith.mulf %337, %308 : vector<8x64xf32>
    %345 = arith.mulf %336, %342 : vector<8x64xf32>
    %346 = arith.addf %344, %345 : vector<8x64xf32>
    %347 = math.tanh %346 : vector<8x64xf32>
    %348 = arith.mulf %343, %347 : vector<8x64xf32>
    %349 = vector.extract_strided_slice %348 {offsets = [0, 0], sizes = [8, 32], strides = [1, 1]} : vector<8x64xf32> to vector<8x32xf32>
    %350 = arith.index_cast %c8_i32 : i32 to index
    %c0_127 = arith.constant 0 : index
    %c0_128 = arith.constant 0 : index
    %351 = vector.load %arg5[%350, %c0_127, %c0_128] : memref<16x8x64xf32, #tpu.memory_space<vmem>>, vector<1x8x32xf32>
    %352 = vector.shape_cast %351 : vector<1x8x32xf32> to vector<8x32xf32>
    %353 = vector.shape_cast %349 : vector<8x32xf32> to vector<1x8x32xf32>
    tpu.vector_store %arg5[%350, %c0_127, %c0_128], %353 {strides = array<i32>} : memref<16x8x64xf32, #tpu.memory_space<vmem>>, vector<1x8x32xf32>,
    %354 = vector.extract_strided_slice %348 {offsets = [0, 32], sizes = [8, 32], strides = [1, 1]} : vector<8x64xf32> to vector<8x32xf32>
    %355 = arith.index_cast %321 : i32 to index
    %c0_129 = arith.constant 0 : index
    %c32_130 = arith.constant 32 : index
    %356 = vector.load %arg5[%355, %c0_129, %c32_130] : memref<16x8x64xf32, #tpu.memory_space<vmem>>, vector<1x8x32xf32>
    %357 = vector.shape_cast %356 : vector<1x8x32xf32> to vector<8x32xf32>
    %358 = vector.shape_cast %354 : vector<8x32xf32> to vector<1x8x32xf32>
    tpu.vector_store %arg5[%355, %c0_129, %c32_130], %358 {strides = array<i32>} : memref<16x8x64xf32, #tpu.memory_space<vmem>>, vector<1x8x32xf32>,
    %c9_i32 = arith.constant 9 : i32
    %c15_i32_131 = arith.constant 15 : i32
    %359 = arith.subi %c15_i32_131, %c9_i32 : i32
    %360 = arith.index_cast %c9_i32 : i32 to index
    %c0_132 = arith.constant 0 : index
    %c0_133 = arith.constant 0 : index
    %361 = vector.load %arg6[%360, %c0_132, %c0_133] : memref<16x8x256xf32, #tpu.memory_space<vmem>>, vector<1x8x256xf32>
    %362 = vector.shape_cast %361 : vector<1x8x256xf32> to vector<8x256xf32>
    %363 = arith.index_cast %359 : i32 to index
    %c0_134 = arith.constant 0 : index
    %c0_135 = arith.constant 0 : index
    %364 = vector.load %arg6[%363, %c0_134, %c0_135] : memref<16x8x256xf32, #tpu.memory_space<vmem>>, vector<1x8x256xf32>
    %365 = vector.shape_cast %364 : vector<1x8x256xf32> to vector<8x256xf32>
    %366 = arith.select %14, %362, %365 : vector<8x256xi1>, vector<8x256xf32>
    %cst_136 = arith.constant dense<0.000000e+00> : vector<8x256xf32>
    %367 = tpu.matmul %348, %9, %cst_136 {dimension_numbers = #tpu.dot_dimension_numbers<[1], [0], [0], [1], [0, 0, 1, 1], [], []>} : vector<8x64xf32>, vector<64x256xf32>, vector<8x256xf32> -> vector<8x256xf32>
    %368 = arith.addf %366, %367 : vector<8x256xf32>
    %369 = arith.negf %368 : vector<8x256xf32>
    %370 = math.exp %369 : vector<8x256xf32>
    %cst_137 = arith.constant 1.000000e+00 : f32
    %371 = vector.broadcast %cst_137 : f32 to vector<8x256xf32>
    %372 = arith.addf %371, %370 : vector<8x256xf32>
    %373 = arith.divf %371, %372 : vector<8x256xf32>
    %374 = vector.extract_strided_slice %373 {offsets = [0, 0], sizes = [8, 64], strides = [1, 1]} : vector<8x256xf32> to vector<8x64xf32>
    %375 = vector.extract_strided_slice %373 {offsets = [0, 64], sizes = [8, 64], strides = [1, 1]} : vector<8x256xf32> to vector<8x64xf32>
    %376 = vector.extract_strided_slice %373 {offsets = [0, 128], sizes = [8, 64], strides = [1, 1]} : vector<8x256xf32> to vector<8x64xf32>
    %cst_138 = arith.constant 2.000000e+00 : f32
    %377 = vector.broadcast %cst_138 : f32 to vector<8x64xf32>
    %378 = arith.mulf %377, %376 : vector<8x64xf32>
    %cst_139 = arith.constant 1.000000e+00 : f32
    %379 = vector.broadcast %cst_139 : f32 to vector<8x64xf32>
    %380 = arith.subf %378, %379 : vector<8x64xf32>
    %381 = vector.extract_strided_slice %373 {offsets = [0, 192], sizes = [8, 64], strides = [1, 1]} : vector<8x256xf32> to vector<8x64xf32>
    %382 = arith.mulf %375, %346 : vector<8x64xf32>
    %383 = arith.mulf %374, %380 : vector<8x64xf32>
    %384 = arith.addf %382, %383 : vector<8x64xf32>
    %385 = math.tanh %384 : vector<8x64xf32>
    %386 = arith.mulf %381, %385 : vector<8x64xf32>
    %387 = vector.extract_strided_slice %386 {offsets = [0, 0], sizes = [8, 32], strides = [1, 1]} : vector<8x64xf32> to vector<8x32xf32>
    %388 = arith.index_cast %c9_i32 : i32 to index
    %c0_140 = arith.constant 0 : index
    %c0_141 = arith.constant 0 : index
    %389 = vector.load %arg5[%388, %c0_140, %c0_141] : memref<16x8x64xf32, #tpu.memory_space<vmem>>, vector<1x8x32xf32>
    %390 = vector.shape_cast %389 : vector<1x8x32xf32> to vector<8x32xf32>
    %391 = vector.shape_cast %387 : vector<8x32xf32> to vector<1x8x32xf32>
    tpu.vector_store %arg5[%388, %c0_140, %c0_141], %391 {strides = array<i32>} : memref<16x8x64xf32, #tpu.memory_space<vmem>>, vector<1x8x32xf32>,
    %392 = vector.extract_strided_slice %386 {offsets = [0, 32], sizes = [8, 32], strides = [1, 1]} : vector<8x64xf32> to vector<8x32xf32>
    %393 = arith.index_cast %359 : i32 to index
    %c0_142 = arith.constant 0 : index
    %c32_143 = arith.constant 32 : index
    %394 = vector.load %arg5[%393, %c0_142, %c32_143] : memref<16x8x64xf32, #tpu.memory_space<vmem>>, vector<1x8x32xf32>
    %395 = vector.shape_cast %394 : vector<1x8x32xf32> to vector<8x32xf32>
    %396 = vector.shape_cast %392 : vector<8x32xf32> to vector<1x8x32xf32>
    tpu.vector_store %arg5[%393, %c0_142, %c32_143], %396 {strides = array<i32>} : memref<16x8x64xf32, #tpu.memory_space<vmem>>, vector<1x8x32xf32>,
    %c10_i32 = arith.constant 10 : i32
    %c15_i32_144 = arith.constant 15 : i32
    %397 = arith.subi %c15_i32_144, %c10_i32 : i32
    %398 = arith.index_cast %c10_i32 : i32 to index
    %c0_145 = arith.constant 0 : index
    %c0_146 = arith.constant 0 : index
    %399 = vector.load %arg6[%398, %c0_145, %c0_146] : memref<16x8x256xf32, #tpu.memory_space<vmem>>, vector<1x8x256xf32>
    %400 = vector.shape_cast %399 : vector<1x8x256xf32> to vector<8x256xf32>
    %401 = arith.index_cast %397 : i32 to index
    %c0_147 = arith.constant 0 : index
    %c0_148 = arith.constant 0 : index
    %402 = vector.load %arg6[%401, %c0_147, %c0_148] : memref<16x8x256xf32, #tpu.memory_space<vmem>>, vector<1x8x256xf32>
    %403 = vector.shape_cast %402 : vector<1x8x256xf32> to vector<8x256xf32>
    %404 = arith.select %14, %400, %403 : vector<8x256xi1>, vector<8x256xf32>
    %cst_149 = arith.constant dense<0.000000e+00> : vector<8x256xf32>
    %405 = tpu.matmul %386, %9, %cst_149 {dimension_numbers = #tpu.dot_dimension_numbers<[1], [0], [0], [1], [0, 0, 1, 1], [], []>} : vector<8x64xf32>, vector<64x256xf32>, vector<8x256xf32> -> vector<8x256xf32>
    %406 = arith.addf %404, %405 : vector<8x256xf32>
    %407 = arith.negf %406 : vector<8x256xf32>
    %408 = math.exp %407 : vector<8x256xf32>
    %cst_150 = arith.constant 1.000000e+00 : f32
    %409 = vector.broadcast %cst_150 : f32 to vector<8x256xf32>
    %410 = arith.addf %409, %408 : vector<8x256xf32>
    %411 = arith.divf %409, %410 : vector<8x256xf32>
    %412 = vector.extract_strided_slice %411 {offsets = [0, 0], sizes = [8, 64], strides = [1, 1]} : vector<8x256xf32> to vector<8x64xf32>
    %413 = vector.extract_strided_slice %411 {offsets = [0, 64], sizes = [8, 64], strides = [1, 1]} : vector<8x256xf32> to vector<8x64xf32>
    %414 = vector.extract_strided_slice %411 {offsets = [0, 128], sizes = [8, 64], strides = [1, 1]} : vector<8x256xf32> to vector<8x64xf32>
    %cst_151 = arith.constant 2.000000e+00 : f32
    %415 = vector.broadcast %cst_151 : f32 to vector<8x64xf32>
    %416 = arith.mulf %415, %414 : vector<8x64xf32>
    %cst_152 = arith.constant 1.000000e+00 : f32
    %417 = vector.broadcast %cst_152 : f32 to vector<8x64xf32>
    %418 = arith.subf %416, %417 : vector<8x64xf32>
    %419 = vector.extract_strided_slice %411 {offsets = [0, 192], sizes = [8, 64], strides = [1, 1]} : vector<8x256xf32> to vector<8x64xf32>
    %420 = arith.mulf %413, %384 : vector<8x64xf32>
    %421 = arith.mulf %412, %418 : vector<8x64xf32>
    %422 = arith.addf %420, %421 : vector<8x64xf32>
    %423 = math.tanh %422 : vector<8x64xf32>
    %424 = arith.mulf %419, %423 : vector<8x64xf32>
    %425 = vector.extract_strided_slice %424 {offsets = [0, 0], sizes = [8, 32], strides = [1, 1]} : vector<8x64xf32> to vector<8x32xf32>
    %426 = arith.index_cast %c10_i32 : i32 to index
    %c0_153 = arith.constant 0 : index
    %c0_154 = arith.constant 0 : index
    %427 = vector.load %arg5[%426, %c0_153, %c0_154] : memref<16x8x64xf32, #tpu.memory_space<vmem>>, vector<1x8x32xf32>
    %428 = vector.shape_cast %427 : vector<1x8x32xf32> to vector<8x32xf32>
    %429 = vector.shape_cast %425 : vector<8x32xf32> to vector<1x8x32xf32>
    tpu.vector_store %arg5[%426, %c0_153, %c0_154], %429 {strides = array<i32>} : memref<16x8x64xf32, #tpu.memory_space<vmem>>, vector<1x8x32xf32>,
    %430 = vector.extract_strided_slice %424 {offsets = [0, 32], sizes = [8, 32], strides = [1, 1]} : vector<8x64xf32> to vector<8x32xf32>
    %431 = arith.index_cast %397 : i32 to index
    %c0_155 = arith.constant 0 : index
    %c32_156 = arith.constant 32 : index
    %432 = vector.load %arg5[%431, %c0_155, %c32_156] : memref<16x8x64xf32, #tpu.memory_space<vmem>>, vector<1x8x32xf32>
    %433 = vector.shape_cast %432 : vector<1x8x32xf32> to vector<8x32xf32>
    %434 = vector.shape_cast %430 : vector<8x32xf32> to vector<1x8x32xf32>
    tpu.vector_store %arg5[%431, %c0_155, %c32_156], %434 {strides = array<i32>} : memref<16x8x64xf32, #tpu.memory_space<vmem>>, vector<1x8x32xf32>,
    %c11_i32 = arith.constant 11 : i32
    %c15_i32_157 = arith.constant 15 : i32
    %435 = arith.subi %c15_i32_157, %c11_i32 : i32
    %436 = arith.index_cast %c11_i32 : i32 to index
    %c0_158 = arith.constant 0 : index
    %c0_159 = arith.constant 0 : index
    %437 = vector.load %arg6[%436, %c0_158, %c0_159] : memref<16x8x256xf32, #tpu.memory_space<vmem>>, vector<1x8x256xf32>
    %438 = vector.shape_cast %437 : vector<1x8x256xf32> to vector<8x256xf32>
    %439 = arith.index_cast %435 : i32 to index
    %c0_160 = arith.constant 0 : index
    %c0_161 = arith.constant 0 : index
    %440 = vector.load %arg6[%439, %c0_160, %c0_161] : memref<16x8x256xf32, #tpu.memory_space<vmem>>, vector<1x8x256xf32>
    %441 = vector.shape_cast %440 : vector<1x8x256xf32> to vector<8x256xf32>
    %442 = arith.select %14, %438, %441 : vector<8x256xi1>, vector<8x256xf32>
    %cst_162 = arith.constant dense<0.000000e+00> : vector<8x256xf32>
    %443 = tpu.matmul %424, %9, %cst_162 {dimension_numbers = #tpu.dot_dimension_numbers<[1], [0], [0], [1], [0, 0, 1, 1], [], []>} : vector<8x64xf32>, vector<64x256xf32>, vector<8x256xf32> -> vector<8x256xf32>
    %444 = arith.addf %442, %443 : vector<8x256xf32>
    %445 = arith.negf %444 : vector<8x256xf32>
    %446 = math.exp %445 : vector<8x256xf32>
    %cst_163 = arith.constant 1.000000e+00 : f32
    %447 = vector.broadcast %cst_163 : f32 to vector<8x256xf32>
    %448 = arith.addf %447, %446 : vector<8x256xf32>
    %449 = arith.divf %447, %448 : vector<8x256xf32>
    %450 = vector.extract_strided_slice %449 {offsets = [0, 0], sizes = [8, 64], strides = [1, 1]} : vector<8x256xf32> to vector<8x64xf32>
    %451 = vector.extract_strided_slice %449 {offsets = [0, 64], sizes = [8, 64], strides = [1, 1]} : vector<8x256xf32> to vector<8x64xf32>
    %452 = vector.extract_strided_slice %449 {offsets = [0, 128], sizes = [8, 64], strides = [1, 1]} : vector<8x256xf32> to vector<8x64xf32>
    %cst_164 = arith.constant 2.000000e+00 : f32
    %453 = vector.broadcast %cst_164 : f32 to vector<8x64xf32>
    %454 = arith.mulf %453, %452 : vector<8x64xf32>
    %cst_165 = arith.constant 1.000000e+00 : f32
    %455 = vector.broadcast %cst_165 : f32 to vector<8x64xf32>
    %456 = arith.subf %454, %455 : vector<8x64xf32>
    %457 = vector.extract_strided_slice %449 {offsets = [0, 192], sizes = [8, 64], strides = [1, 1]} : vector<8x256xf32> to vector<8x64xf32>
    %458 = arith.mulf %451, %422 : vector<8x64xf32>
    %459 = arith.mulf %450, %456 : vector<8x64xf32>
    %460 = arith.addf %458, %459 : vector<8x64xf32>
    %461 = math.tanh %460 : vector<8x64xf32>
    %462 = arith.mulf %457, %461 : vector<8x64xf32>
    %463 = vector.extract_strided_slice %462 {offsets = [0, 0], sizes = [8, 32], strides = [1, 1]} : vector<8x64xf32> to vector<8x32xf32>
    %464 = arith.index_cast %c11_i32 : i32 to index
    %c0_166 = arith.constant 0 : index
    %c0_167 = arith.constant 0 : index
    %465 = vector.load %arg5[%464, %c0_166, %c0_167] : memref<16x8x64xf32, #tpu.memory_space<vmem>>, vector<1x8x32xf32>
    %466 = vector.shape_cast %465 : vector<1x8x32xf32> to vector<8x32xf32>
    %467 = vector.shape_cast %463 : vector<8x32xf32> to vector<1x8x32xf32>
    tpu.vector_store %arg5[%464, %c0_166, %c0_167], %467 {strides = array<i32>} : memref<16x8x64xf32, #tpu.memory_space<vmem>>, vector<1x8x32xf32>,
    %468 = vector.extract_strided_slice %462 {offsets = [0, 32], sizes = [8, 32], strides = [1, 1]} : vector<8x64xf32> to vector<8x32xf32>
    %469 = arith.index_cast %435 : i32 to index
    %c0_168 = arith.constant 0 : index
    %c32_169 = arith.constant 32 : index
    %470 = vector.load %arg5[%469, %c0_168, %c32_169] : memref<16x8x64xf32, #tpu.memory_space<vmem>>, vector<1x8x32xf32>
    %471 = vector.shape_cast %470 : vector<1x8x32xf32> to vector<8x32xf32>
    %472 = vector.shape_cast %468 : vector<8x32xf32> to vector<1x8x32xf32>
    tpu.vector_store %arg5[%469, %c0_168, %c32_169], %472 {strides = array<i32>} : memref<16x8x64xf32, #tpu.memory_space<vmem>>, vector<1x8x32xf32>,
    %c12_i32 = arith.constant 12 : i32
    %c15_i32_170 = arith.constant 15 : i32
    %473 = arith.subi %c15_i32_170, %c12_i32 : i32
    %474 = arith.index_cast %c12_i32 : i32 to index
    %c0_171 = arith.constant 0 : index
    %c0_172 = arith.constant 0 : index
    %475 = vector.load %arg6[%474, %c0_171, %c0_172] : memref<16x8x256xf32, #tpu.memory_space<vmem>>, vector<1x8x256xf32>
    %476 = vector.shape_cast %475 : vector<1x8x256xf32> to vector<8x256xf32>
    %477 = arith.index_cast %473 : i32 to index
    %c0_173 = arith.constant 0 : index
    %c0_174 = arith.constant 0 : index
    %478 = vector.load %arg6[%477, %c0_173, %c0_174] : memref<16x8x256xf32, #tpu.memory_space<vmem>>, vector<1x8x256xf32>
    %479 = vector.shape_cast %478 : vector<1x8x256xf32> to vector<8x256xf32>
    %480 = arith.select %14, %476, %479 : vector<8x256xi1>, vector<8x256xf32>
    %cst_175 = arith.constant dense<0.000000e+00> : vector<8x256xf32>
    %481 = tpu.matmul %462, %9, %cst_175 {dimension_numbers = #tpu.dot_dimension_numbers<[1], [0], [0], [1], [0, 0, 1, 1], [], []>} : vector<8x64xf32>, vector<64x256xf32>, vector<8x256xf32> -> vector<8x256xf32>
    %482 = arith.addf %480, %481 : vector<8x256xf32>
    %483 = arith.negf %482 : vector<8x256xf32>
    %484 = math.exp %483 : vector<8x256xf32>
    %cst_176 = arith.constant 1.000000e+00 : f32
    %485 = vector.broadcast %cst_176 : f32 to vector<8x256xf32>
    %486 = arith.addf %485, %484 : vector<8x256xf32>
    %487 = arith.divf %485, %486 : vector<8x256xf32>
    %488 = vector.extract_strided_slice %487 {offsets = [0, 0], sizes = [8, 64], strides = [1, 1]} : vector<8x256xf32> to vector<8x64xf32>
    %489 = vector.extract_strided_slice %487 {offsets = [0, 64], sizes = [8, 64], strides = [1, 1]} : vector<8x256xf32> to vector<8x64xf32>
    %490 = vector.extract_strided_slice %487 {offsets = [0, 128], sizes = [8, 64], strides = [1, 1]} : vector<8x256xf32> to vector<8x64xf32>
    %cst_177 = arith.constant 2.000000e+00 : f32
    %491 = vector.broadcast %cst_177 : f32 to vector<8x64xf32>
    %492 = arith.mulf %491, %490 : vector<8x64xf32>
    %cst_178 = arith.constant 1.000000e+00 : f32
    %493 = vector.broadcast %cst_178 : f32 to vector<8x64xf32>
    %494 = arith.subf %492, %493 : vector<8x64xf32>
    %495 = vector.extract_strided_slice %487 {offsets = [0, 192], sizes = [8, 64], strides = [1, 1]} : vector<8x256xf32> to vector<8x64xf32>
    %496 = arith.mulf %489, %460 : vector<8x64xf32>
    %497 = arith.mulf %488, %494 : vector<8x64xf32>
    %498 = arith.addf %496, %497 : vector<8x64xf32>
    %499 = math.tanh %498 : vector<8x64xf32>
    %500 = arith.mulf %495, %499 : vector<8x64xf32>
    %501 = vector.extract_strided_slice %500 {offsets = [0, 0], sizes = [8, 32], strides = [1, 1]} : vector<8x64xf32> to vector<8x32xf32>
    %502 = arith.index_cast %c12_i32 : i32 to index
    %c0_179 = arith.constant 0 : index
    %c0_180 = arith.constant 0 : index
    %503 = vector.load %arg5[%502, %c0_179, %c0_180] : memref<16x8x64xf32, #tpu.memory_space<vmem>>, vector<1x8x32xf32>
    %504 = vector.shape_cast %503 : vector<1x8x32xf32> to vector<8x32xf32>
    %505 = vector.shape_cast %501 : vector<8x32xf32> to vector<1x8x32xf32>
    tpu.vector_store %arg5[%502, %c0_179, %c0_180], %505 {strides = array<i32>} : memref<16x8x64xf32, #tpu.memory_space<vmem>>, vector<1x8x32xf32>,
    %506 = vector.extract_strided_slice %500 {offsets = [0, 32], sizes = [8, 32], strides = [1, 1]} : vector<8x64xf32> to vector<8x32xf32>
    %507 = arith.index_cast %473 : i32 to index
    %c0_181 = arith.constant 0 : index
    %c32_182 = arith.constant 32 : index
    %508 = vector.load %arg5[%507, %c0_181, %c32_182] : memref<16x8x64xf32, #tpu.memory_space<vmem>>, vector<1x8x32xf32>
    %509 = vector.shape_cast %508 : vector<1x8x32xf32> to vector<8x32xf32>
    %510 = vector.shape_cast %506 : vector<8x32xf32> to vector<1x8x32xf32>
    tpu.vector_store %arg5[%507, %c0_181, %c32_182], %510 {strides = array<i32>} : memref<16x8x64xf32, #tpu.memory_space<vmem>>, vector<1x8x32xf32>,
    %c13_i32 = arith.constant 13 : i32
    %c15_i32_183 = arith.constant 15 : i32
    %511 = arith.subi %c15_i32_183, %c13_i32 : i32
    %512 = arith.index_cast %c13_i32 : i32 to index
    %c0_184 = arith.constant 0 : index
    %c0_185 = arith.constant 0 : index
    %513 = vector.load %arg6[%512, %c0_184, %c0_185] : memref<16x8x256xf32, #tpu.memory_space<vmem>>, vector<1x8x256xf32>
    %514 = vector.shape_cast %513 : vector<1x8x256xf32> to vector<8x256xf32>
    %515 = arith.index_cast %511 : i32 to index
    %c0_186 = arith.constant 0 : index
    %c0_187 = arith.constant 0 : index
    %516 = vector.load %arg6[%515, %c0_186, %c0_187] : memref<16x8x256xf32, #tpu.memory_space<vmem>>, vector<1x8x256xf32>
    %517 = vector.shape_cast %516 : vector<1x8x256xf32> to vector<8x256xf32>
    %518 = arith.select %14, %514, %517 : vector<8x256xi1>, vector<8x256xf32>
    %cst_188 = arith.constant dense<0.000000e+00> : vector<8x256xf32>
    %519 = tpu.matmul %500, %9, %cst_188 {dimension_numbers = #tpu.dot_dimension_numbers<[1], [0], [0], [1], [0, 0, 1, 1], [], []>} : vector<8x64xf32>, vector<64x256xf32>, vector<8x256xf32> -> vector<8x256xf32>
    %520 = arith.addf %518, %519 : vector<8x256xf32>
    %521 = arith.negf %520 : vector<8x256xf32>
    %522 = math.exp %521 : vector<8x256xf32>
    %cst_189 = arith.constant 1.000000e+00 : f32
    %523 = vector.broadcast %cst_189 : f32 to vector<8x256xf32>
    %524 = arith.addf %523, %522 : vector<8x256xf32>
    %525 = arith.divf %523, %524 : vector<8x256xf32>
    %526 = vector.extract_strided_slice %525 {offsets = [0, 0], sizes = [8, 64], strides = [1, 1]} : vector<8x256xf32> to vector<8x64xf32>
    %527 = vector.extract_strided_slice %525 {offsets = [0, 64], sizes = [8, 64], strides = [1, 1]} : vector<8x256xf32> to vector<8x64xf32>
    %528 = vector.extract_strided_slice %525 {offsets = [0, 128], sizes = [8, 64], strides = [1, 1]} : vector<8x256xf32> to vector<8x64xf32>
    %cst_190 = arith.constant 2.000000e+00 : f32
    %529 = vector.broadcast %cst_190 : f32 to vector<8x64xf32>
    %530 = arith.mulf %529, %528 : vector<8x64xf32>
    %cst_191 = arith.constant 1.000000e+00 : f32
    %531 = vector.broadcast %cst_191 : f32 to vector<8x64xf32>
    %532 = arith.subf %530, %531 : vector<8x64xf32>
    %533 = vector.extract_strided_slice %525 {offsets = [0, 192], sizes = [8, 64], strides = [1, 1]} : vector<8x256xf32> to vector<8x64xf32>
    %534 = arith.mulf %527, %498 : vector<8x64xf32>
    %535 = arith.mulf %526, %532 : vector<8x64xf32>
    %536 = arith.addf %534, %535 : vector<8x64xf32>
    %537 = math.tanh %536 : vector<8x64xf32>
    %538 = arith.mulf %533, %537 : vector<8x64xf32>
    %539 = vector.extract_strided_slice %538 {offsets = [0, 0], sizes = [8, 32], strides = [1, 1]} : vector<8x64xf32> to vector<8x32xf32>
    %540 = arith.index_cast %c13_i32 : i32 to index
    %c0_192 = arith.constant 0 : index
    %c0_193 = arith.constant 0 : index
    %541 = vector.load %arg5[%540, %c0_192, %c0_193] : memref<16x8x64xf32, #tpu.memory_space<vmem>>, vector<1x8x32xf32>
    %542 = vector.shape_cast %541 : vector<1x8x32xf32> to vector<8x32xf32>
    %543 = vector.shape_cast %539 : vector<8x32xf32> to vector<1x8x32xf32>
    tpu.vector_store %arg5[%540, %c0_192, %c0_193], %543 {strides = array<i32>} : memref<16x8x64xf32, #tpu.memory_space<vmem>>, vector<1x8x32xf32>,
    %544 = vector.extract_strided_slice %538 {offsets = [0, 32], sizes = [8, 32], strides = [1, 1]} : vector<8x64xf32> to vector<8x32xf32>
    %545 = arith.index_cast %511 : i32 to index
    %c0_194 = arith.constant 0 : index
    %c32_195 = arith.constant 32 : index
    %546 = vector.load %arg5[%545, %c0_194, %c32_195] : memref<16x8x64xf32, #tpu.memory_space<vmem>>, vector<1x8x32xf32>
    %547 = vector.shape_cast %546 : vector<1x8x32xf32> to vector<8x32xf32>
    %548 = vector.shape_cast %544 : vector<8x32xf32> to vector<1x8x32xf32>
    tpu.vector_store %arg5[%545, %c0_194, %c32_195], %548 {strides = array<i32>} : memref<16x8x64xf32, #tpu.memory_space<vmem>>, vector<1x8x32xf32>,
    %c14_i32 = arith.constant 14 : i32
    %c15_i32_196 = arith.constant 15 : i32
    %549 = arith.subi %c15_i32_196, %c14_i32 : i32
    %550 = arith.index_cast %c14_i32 : i32 to index
    %c0_197 = arith.constant 0 : index
    %c0_198 = arith.constant 0 : index
    %551 = vector.load %arg6[%550, %c0_197, %c0_198] : memref<16x8x256xf32, #tpu.memory_space<vmem>>, vector<1x8x256xf32>
    %552 = vector.shape_cast %551 : vector<1x8x256xf32> to vector<8x256xf32>
    %553 = arith.index_cast %549 : i32 to index
    %c0_199 = arith.constant 0 : index
    %c0_200 = arith.constant 0 : index
    %554 = vector.load %arg6[%553, %c0_199, %c0_200] : memref<16x8x256xf32, #tpu.memory_space<vmem>>, vector<1x8x256xf32>
    %555 = vector.shape_cast %554 : vector<1x8x256xf32> to vector<8x256xf32>
    %556 = arith.select %14, %552, %555 : vector<8x256xi1>, vector<8x256xf32>
    %cst_201 = arith.constant dense<0.000000e+00> : vector<8x256xf32>
    %557 = tpu.matmul %538, %9, %cst_201 {dimension_numbers = #tpu.dot_dimension_numbers<[1], [0], [0], [1], [0, 0, 1, 1], [], []>} : vector<8x64xf32>, vector<64x256xf32>, vector<8x256xf32> -> vector<8x256xf32>
    %558 = arith.addf %556, %557 : vector<8x256xf32>
    %559 = arith.negf %558 : vector<8x256xf32>
    %560 = math.exp %559 : vector<8x256xf32>
    %cst_202 = arith.constant 1.000000e+00 : f32
    %561 = vector.broadcast %cst_202 : f32 to vector<8x256xf32>
    %562 = arith.addf %561, %560 : vector<8x256xf32>
    %563 = arith.divf %561, %562 : vector<8x256xf32>
    %564 = vector.extract_strided_slice %563 {offsets = [0, 0], sizes = [8, 64], strides = [1, 1]} : vector<8x256xf32> to vector<8x64xf32>
    %565 = vector.extract_strided_slice %563 {offsets = [0, 64], sizes = [8, 64], strides = [1, 1]} : vector<8x256xf32> to vector<8x64xf32>
    %566 = vector.extract_strided_slice %563 {offsets = [0, 128], sizes = [8, 64], strides = [1, 1]} : vector<8x256xf32> to vector<8x64xf32>
    %cst_203 = arith.constant 2.000000e+00 : f32
    %567 = vector.broadcast %cst_203 : f32 to vector<8x64xf32>
    %568 = arith.mulf %567, %566 : vector<8x64xf32>
    %cst_204 = arith.constant 1.000000e+00 : f32
    %569 = vector.broadcast %cst_204 : f32 to vector<8x64xf32>
    %570 = arith.subf %568, %569 : vector<8x64xf32>
    %571 = vector.extract_strided_slice %563 {offsets = [0, 192], sizes = [8, 64], strides = [1, 1]} : vector<8x256xf32> to vector<8x64xf32>
    %572 = arith.mulf %565, %536 : vector<8x64xf32>
    %573 = arith.mulf %564, %570 : vector<8x64xf32>
    %574 = arith.addf %572, %573 : vector<8x64xf32>
    %575 = math.tanh %574 : vector<8x64xf32>
    %576 = arith.mulf %571, %575 : vector<8x64xf32>
    %577 = vector.extract_strided_slice %576 {offsets = [0, 0], sizes = [8, 32], strides = [1, 1]} : vector<8x64xf32> to vector<8x32xf32>
    %578 = arith.index_cast %c14_i32 : i32 to index
    %c0_205 = arith.constant 0 : index
    %c0_206 = arith.constant 0 : index
    %579 = vector.load %arg5[%578, %c0_205, %c0_206] : memref<16x8x64xf32, #tpu.memory_space<vmem>>, vector<1x8x32xf32>
    %580 = vector.shape_cast %579 : vector<1x8x32xf32> to vector<8x32xf32>
    %581 = vector.shape_cast %577 : vector<8x32xf32> to vector<1x8x32xf32>
    tpu.vector_store %arg5[%578, %c0_205, %c0_206], %581 {strides = array<i32>} : memref<16x8x64xf32, #tpu.memory_space<vmem>>, vector<1x8x32xf32>,
    %582 = vector.extract_strided_slice %576 {offsets = [0, 32], sizes = [8, 32], strides = [1, 1]} : vector<8x64xf32> to vector<8x32xf32>
    %583 = arith.index_cast %549 : i32 to index
    %c0_207 = arith.constant 0 : index
    %c32_208 = arith.constant 32 : index
    %584 = vector.load %arg5[%583, %c0_207, %c32_208] : memref<16x8x64xf32, #tpu.memory_space<vmem>>, vector<1x8x32xf32>
    %585 = vector.shape_cast %584 : vector<1x8x32xf32> to vector<8x32xf32>
    %586 = vector.shape_cast %582 : vector<8x32xf32> to vector<1x8x32xf32>
    tpu.vector_store %arg5[%583, %c0_207, %c32_208], %586 {strides = array<i32>} : memref<16x8x64xf32, #tpu.memory_space<vmem>>, vector<1x8x32xf32>,
    %c15_i32_209 = arith.constant 15 : i32
    %c15_i32_210 = arith.constant 15 : i32
    %587 = arith.subi %c15_i32_210, %c15_i32_209 : i32
    %588 = arith.index_cast %c15_i32_209 : i32 to index
    %c0_211 = arith.constant 0 : index
    %c0_212 = arith.constant 0 : index
    %589 = vector.load %arg6[%588, %c0_211, %c0_212] : memref<16x8x256xf32, #tpu.memory_space<vmem>>, vector<1x8x256xf32>
    %590 = vector.shape_cast %589 : vector<1x8x256xf32> to vector<8x256xf32>
    %591 = arith.index_cast %587 : i32 to index
    %c0_213 = arith.constant 0 : index
    %c0_214 = arith.constant 0 : index
    %592 = vector.load %arg6[%591, %c0_213, %c0_214] : memref<16x8x256xf32, #tpu.memory_space<vmem>>, vector<1x8x256xf32>
    %593 = vector.shape_cast %592 : vector<1x8x256xf32> to vector<8x256xf32>
    %594 = arith.select %14, %590, %593 : vector<8x256xi1>, vector<8x256xf32>
    %cst_215 = arith.constant dense<0.000000e+00> : vector<8x256xf32>
    %595 = tpu.matmul %576, %9, %cst_215 {dimension_numbers = #tpu.dot_dimension_numbers<[1], [0], [0], [1], [0, 0, 1, 1], [], []>} : vector<8x64xf32>, vector<64x256xf32>, vector<8x256xf32> -> vector<8x256xf32>
    %596 = arith.addf %594, %595 : vector<8x256xf32>
    %597 = arith.negf %596 : vector<8x256xf32>
    %598 = math.exp %597 : vector<8x256xf32>
    %cst_216 = arith.constant 1.000000e+00 : f32
    %599 = vector.broadcast %cst_216 : f32 to vector<8x256xf32>
    %600 = arith.addf %599, %598 : vector<8x256xf32>
    %601 = arith.divf %599, %600 : vector<8x256xf32>
    %602 = vector.extract_strided_slice %601 {offsets = [0, 0], sizes = [8, 64], strides = [1, 1]} : vector<8x256xf32> to vector<8x64xf32>
    %603 = vector.extract_strided_slice %601 {offsets = [0, 64], sizes = [8, 64], strides = [1, 1]} : vector<8x256xf32> to vector<8x64xf32>
    %604 = vector.extract_strided_slice %601 {offsets = [0, 128], sizes = [8, 64], strides = [1, 1]} : vector<8x256xf32> to vector<8x64xf32>
    %cst_217 = arith.constant 2.000000e+00 : f32
    %605 = vector.broadcast %cst_217 : f32 to vector<8x64xf32>
    %606 = arith.mulf %605, %604 : vector<8x64xf32>
    %cst_218 = arith.constant 1.000000e+00 : f32
    %607 = vector.broadcast %cst_218 : f32 to vector<8x64xf32>
    %608 = arith.subf %606, %607 : vector<8x64xf32>
    %609 = vector.extract_strided_slice %601 {offsets = [0, 192], sizes = [8, 64], strides = [1, 1]} : vector<8x256xf32> to vector<8x64xf32>
    %610 = arith.mulf %603, %574 : vector<8x64xf32>
    %611 = arith.mulf %602, %608 : vector<8x64xf32>
    %612 = arith.addf %610, %611 : vector<8x64xf32>
    %613 = math.tanh %612 : vector<8x64xf32>
    %614 = arith.mulf %609, %613 : vector<8x64xf32>
    %615 = vector.extract_strided_slice %614 {offsets = [0, 0], sizes = [8, 32], strides = [1, 1]} : vector<8x64xf32> to vector<8x32xf32>
    %616 = arith.index_cast %c15_i32_209 : i32 to index
    %c0_219 = arith.constant 0 : index
    %c0_220 = arith.constant 0 : index
    %617 = vector.load %arg5[%616, %c0_219, %c0_220] : memref<16x8x64xf32, #tpu.memory_space<vmem>>, vector<1x8x32xf32>
    %618 = vector.shape_cast %617 : vector<1x8x32xf32> to vector<8x32xf32>
    %619 = vector.shape_cast %615 : vector<8x32xf32> to vector<1x8x32xf32>
    tpu.vector_store %arg5[%616, %c0_219, %c0_220], %619 {strides = array<i32>} : memref<16x8x64xf32, #tpu.memory_space<vmem>>, vector<1x8x32xf32>,
    %620 = vector.extract_strided_slice %614 {offsets = [0, 32], sizes = [8, 32], strides = [1, 1]} : vector<8x64xf32> to vector<8x32xf32>
    %621 = arith.index_cast %587 : i32 to index
    %c0_221 = arith.constant 0 : index
    %c32_222 = arith.constant 32 : index
    %622 = vector.load %arg5[%621, %c0_221, %c32_222] : memref<16x8x64xf32, #tpu.memory_space<vmem>>, vector<1x8x32xf32>
    %623 = vector.shape_cast %622 : vector<1x8x32xf32> to vector<8x32xf32>
    %624 = vector.shape_cast %620 : vector<8x32xf32> to vector<1x8x32xf32>
    tpu.vector_store %arg5[%621, %c0_221, %c32_222], %624 {strides = array<i32>} : memref<16x8x64xf32, #tpu.memory_space<vmem>>, vector<1x8x32xf32>,
    %c16_i32 = arith.constant 16 : i32
    return
  }
}

</mosaic_0001>

<llo_original>
// kernel: c_rnn_forward.2
$region0: #{c_rnn_forward.2}
  #allocation0 [shape = 'u32[]', space=smem, size = 0x4, offset = 0x4, fixed_abs, tag = 'smem constant byte address 0x4 - core index']
  #allocation1 [shape = 'u32[72,128]{1,0:T(1,128)}', space=vmem, size = 0x9000, scoped, tag = 'internal scratch']
  #allocation2 [shape = 'f32[16,8,256]{2,1,0:T(8,128)}', space=vmem, size = 0x20000, scoped, tag = 'scratch operand']
  %s0 = inlined_call_operand.vmem [shape: f32[16,8,32], index: 0, kind: input, shape index: {}]
  %s1 = inlined_call_operand.vmem [shape: f32[1,256], index: 1, kind: input, shape index: {}]
  %s2 = inlined_call_operand.vmem [shape: f32[32,256], index: 2, kind: input, shape index: {}]
  %s3 = inlined_call_operand.vmem [shape: f32[64,256], index: 3, kind: input, shape index: {}]
  %s4 = inlined_call_operand.vmem [shape: f32[1,256], index: 4, kind: input, shape index: {}]
  %s5 = inlined_call_operand.vmem [shape: f32[16,8,64], index: 5, kind: output, shape index: {}]
  %s6 = sld [smem:[#allocation0]]
  $region30: #{c_rnn_forward.2} parent=0
    _
  %s8 = ssub.s32 1, %s6
  %s9 = scalar_select 0, %s8, %s6
  // Predicated region
  $region2: #{c_rnn_forward.2} parent=0 // pred_check
    _
  $region3: #{c_rnn_forward.2} parent=0 // pred_check_branch
    %11 = sbr.rel (0) target = $region5
  $region4: #{c_rnn_forward.2} parent=0 // pred_region
    _
  $region5: #{c_rnn_forward.2} parent=0 // pred_fallthru
    _
  // Predicated region
  $region6: #{c_rnn_forward.2} parent=0 // pred_check
    _
  $region7: #{c_rnn_forward.2} parent=0 // pred_check_branch
    %13 = sbr.rel (0) target = $region9
  $region8: #{c_rnn_forward.2} parent=0 // pred_region
    _
  $region9: #{c_rnn_forward.2} parent=0 // pred_fallthru
    _
  // Predicated region
  $region10: #{c_rnn_forward.2} parent=0 // pred_check
    _
  $region11: #{c_rnn_forward.2} parent=0 // pred_check_branch
    %15 = sbr.rel (0) target = $region13
  $region12: #{c_rnn_forward.2} parent=0 // pred_region
    _
  $region13: #{c_rnn_forward.2} parent=0 // pred_fallthru
    _
  // Predicated region
  $region14: #{c_rnn_forward.2} parent=0 // pred_check
    _
  $region15: #{c_rnn_forward.2} parent=0 // pred_check_branch
    %17 = sbr.rel (0) target = $region17
  $region16: #{c_rnn_forward.2} parent=0 // pred_region
    _
  $region17: #{c_rnn_forward.2} parent=0 // pred_fallthru
    _
  // Predicated region
  $region18: #{c_rnn_forward.2} parent=0 // pred_check
    _
  $region19: #{c_rnn_forward.2} parent=0 // pred_check_branch
    %19 = sbr.rel (0) target = $region21
  $region20: #{c_rnn_forward.2} parent=0 // pred_region
    _
  $region21: #{c_rnn_forward.2} parent=0 // pred_fallthru
    _
  %v20 = vld [vmem:[%s0] sm:$0xff]
  %v21 = vld [vmem:[%s0 + $0x8] sm:$0xff]
  %v22 = vld [vmem:[%s0 + $0x10] sm:$0xff]
  %v23 = vld [vmem:[%s0 + $0x18] sm:$0xff]
  %v24 = vld [vmem:[%s0 + $0x20] sm:$0xff]
  %v25 = vld [vmem:[%s0 + $0x28] sm:$0xff]
  %v26 = vld [vmem:[%s0 + $0x30] sm:$0xff]
  %v27 = vld [vmem:[%s0 + $0x38] sm:$0xff]
  %v28 = vld [vmem:[%s0 + $0x40] sm:$0xff]
  %v29 = vld [vmem:[%s0 + $0x48] sm:$0xff]
  %v30 = vld [vmem:[%s0 + $0x50] sm:$0xff]
  %v31 = vld [vmem:[%s0 + $0x58] sm:$0xff]
  %v32 = vld [vmem:[%s0 + $0x60] sm:$0xff]
  %v33 = vld [vmem:[%s0 + $0x68] sm:$0xff]
  %v34 = vld [vmem:[%s0 + $0x70] sm:$0xff]
  %v35 = vld [vmem:[%s0 + $0x78] sm:$0xff]
  %v36 = vld [vmem:[%s2] sm:$0xff]
  %v37 = vld [vmem:[%s2 + $0x8] sm:$0xff]
  %v38 = vld [vmem:[%s2 + $0x10] sm:$0xff]
  %v39 = vld [vmem:[%s2 + $0x18] sm:$0xff]
  %v40 = vld [vmem:[%s2 + $0x20] sm:$0xff]
  %v41 = vld [vmem:[%s2 + $0x28] sm:$0xff]
  %v42 = vld [vmem:[%s2 + $0x30] sm:$0xff]
  %v43 = vld [vmem:[%s2 + $0x38] sm:$0xff]
  %v44 = vld [vmem:[%s4] sm:$0x3]
  %v46 = vperm.slane %v44, 0
  %v47 = vperm.slane %v44, 1
  %vm50 = vcmask 261120
  %v52 = vsel %vm50, %v20, 0
  %v55 = vsel %vm50, %v21, 0
  %v58 = vsel %vm50, %v22, 0
  %v61 = vsel %vm50, %v23, 0
  %v64 = vsel %vm50, %v24, 0
  %v67 = vsel %vm50, %v25, 0
  %v70 = vsel %vm50, %v26, 0
  %v73 = vsel %vm50, %v27, 0
  %v76 = vsel %vm50, %v28, 0
  %v79 = vsel %vm50, %v29, 0
  %v82 = vsel %vm50, %v30, 0
  %v85 = vsel %vm50, %v31, 0
  %v88 = vsel %vm50, %v32, 0
  %v91 = vsel %vm50, %v33, 0
  %v94 = vsel %vm50, %v34, 0
  %v97 = vsel %vm50, %v35, 0
  %99 = vmatpush.msra.mxu0 0.0
  %100 = vmatpush.msra.mxu0 0.0
  %101 = vmatpush.msra.mxu0 0.0
  %102 = vmatpush.msra.mxu0 0.0
  %103 = vmatpush.msra.mxu0 0.0
  %104 = vmatpush.msra.mxu0 0.0
  %105 = vmatpush.msra.mxu0 0.0
  %106 = vmatpush.msra.mxu0 0.0
  %107 = vmatpush.msra.mxu0 0.0
  %108 = vmatpush.msra.mxu0 0.0
  %109 = vmatpush.msra.mxu0 0.0
  %110 = vmatpush.msra.mxu0 0.0
  %111 = vmatpush.msra.mxu0 %v42
  %112 = vmatpush.msra.mxu0 %v40
  %113 = vmatpush.msra.mxu0 %v38
  %114 = vmatpush.msra.mxu0 %v36
  %115 = vmatmul.f32.gmra.mxu0 %v52
  %v116 = vpop.f32.mrf.mxu0
  %v117 = vadd.f32 %v46, %v116
  %118 = vmatmul.f32.gmra.mxu0 %v55
  %v119 = vpop.f32.mrf.mxu0
  %v120 = vadd.f32 %v46, %v119
  %121 = vmatmul.f32.gmra.mxu0 %v58
  %v122 = vpop.f32.mrf.mxu0
  %v123 = vadd.f32 %v46, %v122
  %124 = vmatmul.f32.gmra.mxu0 %v61
  %v125 = vpop.f32.mrf.mxu0
  %v126 = vadd.f32 %v46, %v125
  %127 = vmatmul.f32.gmra.mxu0 %v64
  %v128 = vpop.f32.mrf.mxu0
  %v129 = vadd.f32 %v46, %v128
  %130 = vmatmul.f32.gmra.mxu0 %v67
  %v131 = vpop.f32.mrf.mxu0
  %v132 = vadd.f32 %v46, %v131
  %133 = vmatmul.f32.gmra.mxu0 %v70
  %v134 = vpop.f32.mrf.mxu0
  %v135 = vadd.f32 %v46, %v134
  %136 = vmatmul.f32.gmra.mxu0 %v73
  %v137 = vpop.f32.mrf.mxu0
  %v138 = vadd.f32 %v46, %v137
  %139 = vmatmul.f32.gmra.mxu0 %v76
  %v140 = vpop.f32.mrf.mxu0
  %v141 = vadd.f32 %v46, %v140
  %142 = vmatmul.f32.gmra.mxu0 %v79
  %v143 = vpop.f32.mrf.mxu0
  %v144 = vadd.f32 %v46, %v143
  %145 = vmatmul.f32.gmra.mxu0 %v82
  %v146 = vpop.f32.mrf.mxu0
  %v147 = vadd.f32 %v46, %v146
  %148 = vmatmul.f32.gmra.mxu0 %v85
  %v149 = vpop.f32.mrf.mxu0
  %v150 = vadd.f32 %v46, %v149
  %151 = vmatmul.f32.gmra.mxu0 %v88
  %v152 = vpop.f32.mrf.mxu0
  %v153 = vadd.f32 %v46, %v152
  %154 = vmatmul.f32.gmra.mxu0 %v91
  %v155 = vpop.f32.mrf.mxu0
  %v156 = vadd.f32 %v46, %v155
  %157 = vmatmul.f32.gmra.mxu0 %v94
  %v158 = vpop.f32.mrf.mxu0
  %v159 = vadd.f32 %v46, %v158
  %160 = vmatmul.f32.gmra.mxu0 %v97
  %v161 = vpop.f32.mrf.mxu0
  %v162 = vadd.f32 %v46, %v161
  %163 = vdwg.mxu0
  %164 = vmatpush.msra.mxu0 0.0
  %165 = vmatpush.msra.mxu0 0.0
  %166 = vmatpush.msra.mxu0 0.0
  %167 = vmatpush.msra.mxu0 0.0
  %168 = vmatpush.msra.mxu0 0.0
  %169 = vmatpush.msra.mxu0 0.0
  %170 = vmatpush.msra.mxu0 0.0
  %171 = vmatpush.msra.mxu0 0.0
  %172 = vmatpush.msra.mxu0 0.0
  %173 = vmatpush.msra.mxu0 0.0
  %174 = vmatpush.msra.mxu0 0.0
  %175 = vmatpush.msra.mxu0 0.0
  %176 = vmatpush.msra.mxu0 %v43
  %177 = vmatpush.msra.mxu0 %v41
  %178 = vmatpush.msra.mxu0 %v39
  %179 = vmatpush.msra.mxu0 %v37
  %180 = vmatmul.f32.gmra.mxu0 %v52
  %v181 = vpop.f32.mrf.mxu0
  %v182 = vadd.f32 %v47, %v181
  %183 = vmatmul.f32.gmra.mxu0 %v55
  %v184 = vpop.f32.mrf.mxu0
  %v185 = vadd.f32 %v47, %v184
  %186 = vmatmul.f32.gmra.mxu0 %v58
  %v187 = vpop.f32.mrf.mxu0
  %v188 = vadd.f32 %v47, %v187
  %189 = vmatmul.f32.gmra.mxu0 %v61
  %v190 = vpop.f32.mrf.mxu0
  %v191 = vadd.f32 %v47, %v190
  %192 = vmatmul.f32.gmra.mxu0 %v64
  %v193 = vpop.f32.mrf.mxu0
  %v194 = vadd.f32 %v47, %v193
  %195 = vmatmul.f32.gmra.mxu0 %v67
  %v196 = vpop.f32.mrf.mxu0
  %v197 = vadd.f32 %v47, %v196
  %198 = vmatmul.f32.gmra.mxu0 %v70
  %v199 = vpop.f32.mrf.mxu0
  %v200 = vadd.f32 %v47, %v199
  %201 = vmatmul.f32.gmra.mxu0 %v73
  %v202 = vpop.f32.mrf.mxu0
  %v203 = vadd.f32 %v47, %v202
  %204 = vmatmul.f32.gmra.mxu0 %v76
  %v205 = vpop.f32.mrf.mxu0
  %v206 = vadd.f32 %v47, %v205
  %207 = vmatmul.f32.gmra.mxu0 %v79
  %v208 = vpop.f32.mrf.mxu0
  %v209 = vadd.f32 %v47, %v208
  %210 = vmatmul.f32.gmra.mxu0 %v82
  %v211 = vpop.f32.mrf.mxu0
  %v212 = vadd.f32 %v47, %v211
  %213 = vmatmul.f32.gmra.mxu0 %v85
  %v214 = vpop.f32.mrf.mxu0
  %v215 = vadd.f32 %v47, %v214
  %216 = vmatmul.f32.gmra.mxu0 %v88
  %v217 = vpop.f32.mrf.mxu0
  %v218 = vadd.f32 %v47, %v217
  %219 = vmatmul.f32.gmra.mxu0 %v91
  %v220 = vpop.f32.mrf.mxu0
  %v221 = vadd.f32 %v47, %v220
  %222 = vmatmul.f32.gmra.mxu0 %v94
  %v223 = vpop.f32.mrf.mxu0
  %v224 = vadd.f32 %v47, %v223
  %225 = vmatmul.f32.gmra.mxu0 %v97
  %v226 = vpop.f32.mrf.mxu0
  %v227 = vadd.f32 %v47, %v226
  %228 = vdwg.mxu0
  %229 = vst [vmem:[#allocation2] sm:$0xff] %v117
  %230 = vst [vmem:[#allocation2 + $0x8] sm:$0xff] %v182
  %231 = vst [vmem:[#allocation2 + $0x10] sm:$0xff] %v120
  %232 = vst [vmem:[#allocation2 + $0x18] sm:$0xff] %v185
  %233 = vst [vmem:[#allocation2 + $0x20] sm:$0xff] %v123
  %234 = vst [vmem:[#allocation2 + $0x28] sm:$0xff] %v188
  %235 = vst [vmem:[#allocation2 + $0x30] sm:$0xff] %v126
  %236 = vst [vmem:[#allocation2 + $0x38] sm:$0xff] %v191
  %237 = vst [vmem:[#allocation2 + $0x40] sm:$0xff] %v129
  %238 = vst [vmem:[#allocation2 + $0x48] sm:$0xff] %v194
  %239 = vst [vmem:[#allocation2 + $0x50] sm:$0xff] %v132
  %240 = vst [vmem:[#allocation2 + $0x58] sm:$0xff] %v197
  %241 = vst [vmem:[#allocation2 + $0x60] sm:$0xff] %v135
  %242 = vst [vmem:[#allocation2 + $0x68] sm:$0xff] %v200
  %243 = vst [vmem:[#allocation2 + $0x70] sm:$0xff] %v138
  %244 = vst [vmem:[#allocation2 + $0x78] sm:$0xff] %v203
  %245 = vst [vmem:[#allocation2 + $0x80] sm:$0xff] %v141
  %246 = vst [vmem:[#allocation2 + $0x88] sm:$0xff] %v206
  %247 = vst [vmem:[#allocation2 + $0x90] sm:$0xff] %v144
  %248 = vst [vmem:[#allocation2 + $0x98] sm:$0xff] %v209
  %249 = vst [vmem:[#allocation2 + $0xa0] sm:$0xff] %v147
  %250 = vst [vmem:[#allocation2 + $0xa8] sm:$0xff] %v212
  %251 = vst [vmem:[#allocation2 + $0xb0] sm:$0xff] %v150
  %252 = vst [vmem:[#allocation2 + $0xb8] sm:$0xff] %v215
  %253 = vst [vmem:[#allocation2 + $0xc0] sm:$0xff] %v153
  %254 = vst [vmem:[#allocation2 + $0xc8] sm:$0xff] %v218
  %255 = vst [vmem:[#allocation2 + $0xd0] sm:$0xff] %v156
  %256 = vst [vmem:[#allocation2 + $0xd8] sm:$0xff] %v221
  %257 = vst [vmem:[#allocation2 + $0xe0] sm:$0xff] %v159
  %258 = vst [vmem:[#allocation2 + $0xe8] sm:$0xff] %v224
  %259 = vst [vmem:[#allocation2 + $0xf0] sm:$0xff] %v162
  %260 = vst [vmem:[#allocation2 + $0xf8] sm:$0xff] %v227
  %v261 = vld [vmem:[%s3] sm:$0xff]
  %v262 = vld [vmem:[%s3 + $0x8] sm:$0xff]
  %v263 = vld [vmem:[%s3 + $0x10] sm:$0xff]
  %v264 = vld [vmem:[%s3 + $0x18] sm:$0xff]
  %v265 = vld [vmem:[%s3 + $0x20] sm:$0xff]
  %v266 = vld [vmem:[%s3 + $0x28] sm:$0xff]
  %v267 = vld [vmem:[%s3 + $0x30] sm:$0xff]
  %v268 = vld [vmem:[%s3 + $0x38] sm:$0xff]
  %v269 = vld [vmem:[%s3 + $0x40] sm:$0xff]
  %v270 = vld [vmem:[%s3 + $0x48] sm:$0xff]
  %v271 = vld [vmem:[%s3 + $0x50] sm:$0xff]
  %v272 = vld [vmem:[%s3 + $0x58] sm:$0xff]
  %v273 = vld [vmem:[%s3 + $0x60] sm:$0xff]
  %v274 = vld [vmem:[%s3 + $0x68] sm:$0xff]
  %v275 = vld [vmem:[%s3 + $0x70] sm:$0xff]
  %v276 = vld [vmem:[%s3 + $0x78] sm:$0xff]
  %v277 = vld [vmem:[%s1] sm:$0x3]
  %v279 = vperm.slane %v277, 0
  %v280 = vperm.slane %v277, 1
  %vm283 = vcmp.gt.f32.partialorder %v279, 0.5
  %vm284 = vcmp.gt.f32.partialorder %v280, 0.5
  %v285 = vld [vmem:[#allocation2] sm:$0xff]
  %v286 = vld [vmem:[#allocation2 + $0x8] sm:$0xff]
  %s287 = scalar_lea.vmem [#allocation2], 240
  %v288 = vld [vmem:[%s287] sm:$0xff]
  %v289 = vld [vmem:[%s287 + $0x8] sm:$0xff]
  %v290 = vsel %vm283, %v285, %v288
  %v291 = vsel %vm284, %v286, %v289
  %vm292 = vcmask 523264
  %v294 = vsel %vm292, 0.0, 0
  %296 = vmatpush.msra.mxu0 0.0
  %297 = vmatpush.msra.mxu0 0.0
  %298 = vmatpush.msra.mxu0 0.0
  %299 = vmatpush.msra.mxu0 0.0
  %300 = vmatpush.msra.mxu0 0.0
  %301 = vmatpush.msra.mxu0 0.0
  %302 = vmatpush.msra.mxu0 0.0
  %303 = vmatpush.msra.mxu0 0.0
  %304 = vmatpush.msra.mxu0 %v275
  %305 = vmatpush.msra.mxu0 %v273
  %306 = vmatpush.msra.mxu0 %v271
  %307 = vmatpush.msra.mxu0 %v269
  %308 = vmatpush.msra.mxu0 %v267
  %309 = vmatpush.msra.mxu0 %v265
  %310 = vmatpush.msra.mxu0 %v263
  %311 = vmatpush.msra.mxu0 %v261
  %312 = vmatmul.f32.gmra.mxu0 %v294
  %v313 = vpop.f32.mrf.mxu0
  %v314 = vadd.f32 0.0, %v313
  %315 = vdwg.mxu0
  %316 = vmatpush.msra.mxu0 0.0
  %317 = vmatpush.msra.mxu0 0.0
  %318 = vmatpush.msra.mxu0 0.0
  %319 = vmatpush.msra.mxu0 0.0
  %320 = vmatpush.msra.mxu0 0.0
  %321 = vmatpush.msra.mxu0 0.0
  %322 = vmatpush.msra.mxu0 0.0
  %323 = vmatpush.msra.mxu0 0.0
  %324 = vmatpush.msra.mxu0 %v276
  %325 = vmatpush.msra.mxu0 %v274
  %326 = vmatpush.msra.mxu0 %v272
  %327 = vmatpush.msra.mxu0 %v270
  %328 = vmatpush.msra.mxu0 %v268
  %329 = vmatpush.msra.mxu0 %v266
  %330 = vmatpush.msra.mxu0 %v264
  %331 = vmatpush.msra.mxu0 %v262
  %332 = vmatmul.f32.gmra.mxu0 %v294
  %v333 = vpop.f32.mrf.mxu0
  %v334 = vadd.f32 0.0, %v333
  %335 = vdwg.mxu0
  %v336 = vadd.f32 %v290, %v314
  %v337 = vadd.f32 %v291, %v334
  %v338 = vxor.u32 %v336, 2147483648
  %v339 = vxor.u32 %v337, 2147483648
  %v340 = vmul.f32 %v338, 1.442695
  %v341 = vpow.pop %v340
  %v342 = vmul.f32 %v339, 1.442695
  %v343 = vpow.pop %v342
  %v344 = vadd.f32 %v341, 1.0
  %v345 = vadd.f32 %v343, 1.0
  %v346 = vrcp.pop %v344
  %v347 = vmul.f32 %v344, %v346
  %v348 = vsub.f32 1.0, %v347
  %v349 = vmul.f32 %v346, %v348
  %v350 = vadd.f32 %v346, %v349
  %vm351 = vweird.f32 %v344
  %vm352 = vweird.f32 %v346
  %vm353 = vmor %vm351, %vm352
  %v354 = vsel %vm353, %v346, %v350
  %v355 = vand.u32 2147483647, %v344
  %vm356 = vcmp.eq.f32.partialorder %v355, 8.507059e+37
  %v357 = vand.u32 %v344, 2147483648
  %v358 = vor.u32 1.1754944e-38, %v357
  %v359 = vsel %vm356, %v358, %v354
  %v360 = vmul.f32 1.0, %v359
  %v361 = vrcp.pop %v345
  %v362 = vmul.f32 %v345, %v361
  %v363 = vsub.f32 1.0, %v362
  %v364 = vmul.f32 %v361, %v363
  %v365 = vadd.f32 %v361, %v364
  %vm366 = vweird.f32 %v345
  %vm367 = vweird.f32 %v361
  %vm368 = vmor %vm366, %vm367
  %v369 = vsel %vm368, %v361, %v365
  %v370 = vand.u32 2147483647, %v345
  %vm371 = vcmp.eq.f32.partialorder %v370, 8.507059e+37
  %v372 = vand.u32 %v345, 2147483648
  %v373 = vor.u32 1.1754944e-38, %v372
  %v374 = vsel %vm371, %v373, %v369
  %v375 = vmul.f32 1.0, %v374
  %v376 = vmul.f32 %v375, 2.0
  %v377 = vsub.f32 %v376, 1.0
  %v378 = vmul.f32 %v360, 0.0
  %v379 = vmul.f32 %v360, %v377
  %381 = vrot.lane.b32.xlu0 %v379, 64
  %v382 = vpop.permute.xlu0 %381
  %v384 = vadd.f32 %v378, %v382
  %v385 = vtanh.pop %v384
  %v386 = vmul.f32 %v375, %v385
  %388 = vrot.lane.b32.xlu0 %v386, 64
  %v389 = vpop.permute.xlu0 %388
  %391 = vst.msk [vmem:[%s5] sm:$0xff] %vm50, %v389
  %s392 = scalar_lea.vmem %s5, 120
  %vm393 = vcmask 523520
  %394 = vst.msk [vmem:[%s392] sm:$0xff] %vm393, %v389
  %s395 = scalar_lea.vmem [#allocation2], 16
  %v396 = vld [vmem:[%s395] sm:$0xff]
  %v397 = vld [vmem:[%s395 + $0x8] sm:$0xff]
  %s398 = scalar_lea.vmem [#allocation2], 224
  %v399 = vld [vmem:[%s398] sm:$0xff]
  %v400 = vld [vmem:[%s398 + $0x8] sm:$0xff]
  %v401 = vsel %vm283, %v396, %v399
  %v402 = vsel %vm284, %v397, %v400
  %v403 = vsel %vm292, %v389, 0
  %405 = vmatpush.msra.mxu0 0.0
  %406 = vmatpush.msra.mxu0 0.0
  %407 = vmatpush.msra.mxu0 0.0
  %408 = vmatpush.msra.mxu0 0.0
  %409 = vmatpush.msra.mxu0 0.0
  %410 = vmatpush.msra.mxu0 0.0
  %411 = vmatpush.msra.mxu0 0.0
  %412 = vmatpush.msra.mxu0 0.0
  %413 = vmatpush.msra.mxu0 %v275
  %414 = vmatpush.msra.mxu0 %v273
  %415 = vmatpush.msra.mxu0 %v271
  %416 = vmatpush.msra.mxu0 %v269
  %417 = vmatpush.msra.mxu0 %v267
  %418 = vmatpush.msra.mxu0 %v265
  %419 = vmatpush.msra.mxu0 %v263
  %420 = vmatpush.msra.mxu0 %v261
  %421 = vmatmul.f32.gmra.mxu0 %v403
  %v422 = vpop.f32.mrf.mxu0
  %v423 = vadd.f32 0.0, %v422
  %424 = vdwg.mxu0
  %425 = vmatpush.msra.mxu0 0.0
  %426 = vmatpush.msra.mxu0 0.0
  %427 = vmatpush.msra.mxu0 0.0
  %428 = vmatpush.msra.mxu0 0.0
  %429 = vmatpush.msra.mxu0 0.0
  %430 = vmatpush.msra.mxu0 0.0
  %431 = vmatpush.msra.mxu0 0.0
  %432 = vmatpush.msra.mxu0 0.0
  %433 = vmatpush.msra.mxu0 %v276
  %434 = vmatpush.msra.mxu0 %v274
  %435 = vmatpush.msra.mxu0 %v272
  %436 = vmatpush.msra.mxu0 %v270
  %437 = vmatpush.msra.mxu0 %v268
  %438 = vmatpush.msra.mxu0 %v266
  %439 = vmatpush.msra.mxu0 %v264
  %440 = vmatpush.msra.mxu0 %v262
  %441 = vmatmul.f32.gmra.mxu0 %v403
  %v442 = vpop.f32.mrf.mxu0
  %v443 = vadd.f32 0.0, %v442
  %444 = vdwg.mxu0
  %v445 = vadd.f32 %v401, %v423
  %v446 = vadd.f32 %v402, %v443
  %v447 = vxor.u32 %v445, 2147483648
  %v448 = vxor.u32 %v446, 2147483648
  %v449 = vmul.f32 %v447, 1.442695
  %v450 = vpow.pop %v449
  %v451 = vmul.f32 %v448, 1.442695
  %v452 = vpow.pop %v451
  %v453 = vadd.f32 %v450, 1.0
  %v454 = vadd.f32 %v452, 1.0
  %v455 = vrcp.pop %v453
  %v456 = vmul.f32 %v453, %v455
  %v457 = vsub.f32 1.0, %v456
  %v458 = vmul.f32 %v455, %v457
  %v459 = vadd.f32 %v455, %v458
  %vm460 = vweird.f32 %v453
  %vm461 = vweird.f32 %v455
  %vm462 = vmor %vm460, %vm461
  %v463 = vsel %vm462, %v455, %v459
  %v464 = vand.u32 2147483647, %v453
  %vm465 = vcmp.eq.f32.partialorder %v464, 8.507059e+37
  %v466 = vand.u32 %v453, 2147483648
  %v467 = vor.u32 1.1754944e-38, %v466
  %v468 = vsel %vm465, %v467, %v463
  %v469 = vmul.f32 1.0, %v468
  %v470 = vrcp.pop %v454
  %v471 = vmul.f32 %v454, %v470
  %v472 = vsub.f32 1.0, %v471
  %v473 = vmul.f32 %v470, %v472
  %v474 = vadd.f32 %v470, %v473
  %vm475 = vweird.f32 %v454
  %vm476 = vweird.f32 %v470
  %vm477 = vmor %vm475, %vm476
  %v478 = vsel %vm477, %v470, %v474
  %v479 = vand.u32 2147483647, %v454
  %vm480 = vcmp.eq.f32.partialorder %v479, 8.507059e+37
  %v481 = vand.u32 %v454, 2147483648
  %v482 = vor.u32 1.1754944e-38, %v481
  %v483 = vsel %vm480, %v482, %v478
  %v484 = vmul.f32 1.0, %v483
  %v485 = vmul.f32 %v484, 2.0
  %v486 = vsub.f32 %v485, 1.0
  %v487 = vmul.f32 %v469, %v384
  %v488 = vmul.f32 %v469, %v486
  %490 = vrot.lane.b32.xlu0 %v488, 64
  %v491 = vpop.permute.xlu0 %490
  %v493 = vadd.f32 %v487, %v491
  %v494 = vtanh.pop %v493
  %v495 = vmul.f32 %v484, %v494
  %497 = vrot.lane.b32.xlu0 %v495, 64
  %v498 = vpop.permute.xlu0 %497
  %s500 = scalar_lea.vmem %s5, 8
  %501 = vst.msk [vmem:[%s500] sm:$0xff] %vm50, %v498
  %s502 = scalar_lea.vmem %s5, 112
  %503 = vst.msk [vmem:[%s502] sm:$0xff] %vm393, %v498
  %s504 = scalar_lea.vmem [#allocation2], 32
  %v505 = vld [vmem:[%s504] sm:$0xff]
  %v506 = vld [vmem:[%s504 + $0x8] sm:$0xff]
  %s507 = scalar_lea.vmem [#allocation2], 208
  %v508 = vld [vmem:[%s507] sm:$0xff]
  %v509 = vld [vmem:[%s507 + $0x8] sm:$0xff]
  %v510 = vsel %vm283, %v505, %v508
  %v511 = vsel %vm284, %v506, %v509
  %v512 = vsel %vm292, %v498, 0
  %514 = vmatpush.msra.mxu0 0.0
  %515 = vmatpush.msra.mxu0 0.0
  %516 = vmatpush.msra.mxu0 0.0
  %517 = vmatpush.msra.mxu0 0.0
  %518 = vmatpush.msra.mxu0 0.0
  %519 = vmatpush.msra.mxu0 0.0
  %520 = vmatpush.msra.mxu0 0.0
  %521 = vmatpush.msra.mxu0 0.0
  %522 = vmatpush.msra.mxu0 %v275
  %523 = vmatpush.msra.mxu0 %v273
  %524 = vmatpush.msra.mxu0 %v271
  %525 = vmatpush.msra.mxu0 %v269
  %526 = vmatpush.msra.mxu0 %v267
  %527 = vmatpush.msra.mxu0 %v265
  %528 = vmatpush.msra.mxu0 %v263
  %529 = vmatpush.msra.mxu0 %v261
  %530 = vmatmul.f32.gmra.mxu0 %v512
  %v531 = vpop.f32.mrf.mxu0
  %v532 = vadd.f32 0.0, %v531
  %533 = vdwg.mxu0
  %534 = vmatpush.msra.mxu0 0.0
  %535 = vmatpush.msra.mxu0 0.0
  %536 = vmatpush.msra.mxu0 0.0
  %537 = vmatpush.msra.mxu0 0.0
  %538 = vmatpush.msra.mxu0 0.0
  %539 = vmatpush.msra.mxu0 0.0
  %540 = vmatpush.msra.mxu0 0.0
  %541 = vmatpush.msra.mxu0 0.0
  %542 = vmatpush.msra.mxu0 %v276
  %543 = vmatpush.msra.mxu0 %v274
  %544 = vmatpush.msra.mxu0 %v272
  %545 = vmatpush.msra.mxu0 %v270
  %546 = vmatpush.msra.mxu0 %v268
  %547 = vmatpush.msra.mxu0 %v266
  %548 = vmatpush.msra.mxu0 %v264
  %549 = vmatpush.msra.mxu0 %v262
  %550 = vmatmul.f32.gmra.mxu0 %v512
  %v551 = vpop.f32.mrf.mxu0
  %v552 = vadd.f32 0.0, %v551
  %553 = vdwg.mxu0
  %v554 = vadd.f32 %v510, %v532
  %v555 = vadd.f32 %v511, %v552
  %v556 = vxor.u32 %v554, 2147483648
  %v557 = vxor.u32 %v555, 2147483648
  %v558 = vmul.f32 %v556, 1.442695
  %v559 = vpow.pop %v558
  %v560 = vmul.f32 %v557, 1.442695
  %v561 = vpow.pop %v560
  %v562 = vadd.f32 %v559, 1.0
  %v563 = vadd.f32 %v561, 1.0
  %v564 = vrcp.pop %v562
  %v565 = vmul.f32 %v562, %v564
  %v566 = vsub.f32 1.0, %v565
  %v567 = vmul.f32 %v564, %v566
  %v568 = vadd.f32 %v564, %v567
  %vm569 = vweird.f32 %v562
  %vm570 = vweird.f32 %v564
  %vm571 = vmor %vm569, %vm570
  %v572 = vsel %vm571, %v564, %v568
  %v573 = vand.u32 2147483647, %v562
  %vm574 = vcmp.eq.f32.partialorder %v573, 8.507059e+37
  %v575 = vand.u32 %v562, 2147483648
  %v576 = vor.u32 1.1754944e-38, %v575
  %v577 = vsel %vm574, %v576, %v572
  %v578 = vmul.f32 1.0, %v577
  %v579 = vrcp.pop %v563
  %v580 = vmul.f32 %v563, %v579
  %v581 = vsub.f32 1.0, %v580
  %v582 = vmul.f32 %v579, %v581
  %v583 = vadd.f32 %v579, %v582
  %vm584 = vweird.f32 %v563
  %vm585 = vweird.f32 %v579
  %vm586 = vmor %vm584, %vm585
  %v587 = vsel %vm586, %v579, %v583
  %v588 = vand.u32 2147483647, %v563
  %vm589 = vcmp.eq.f32.partialorder %v588, 8.507059e+37
  %v590 = vand.u32 %v563, 2147483648
  %v591 = vor.u32 1.1754944e-38, %v590
  %v592 = vsel %vm589, %v591, %v587
  %v593 = vmul.f32 1.0, %v592
  %v594 = vmul.f32 %v593, 2.0
  %v595 = vsub.f32 %v594, 1.0
  %v596 = vmul.f32 %v578, %v493
  %v597 = vmul.f32 %v578, %v595
  %599 = vrot.lane.b32.xlu0 %v597, 64
  %v600 = vpop.permute.xlu0 %599
  %v602 = vadd.f32 %v596, %v600
  %v603 = vtanh.pop %v602
  %v604 = vmul.f32 %v593, %v603
  %606 = vrot.lane.b32.xlu0 %v604, 64
  %v607 = vpop.permute.xlu0 %606
  %s609 = scalar_lea.vmem %s5, 16
  %610 = vst.msk [vmem:[%s609] sm:$0xff] %vm50, %v607
  %s611 = scalar_lea.vmem %s5, 104
  %612 = vst.msk [vmem:[%s611] sm:$0xff] %vm393, %v607
  %s613 = scalar_lea.vmem [#allocation2], 48
  %v614 = vld [vmem:[%s613] sm:$0xff]
  %v615 = vld [vmem:[%s613 + $0x8] sm:$0xff]
  %s616 = scalar_lea.vmem [#allocation2], 192
  %v617 = vld [vmem:[%s616] sm:$0xff]
  %v618 = vld [vmem:[%s616 + $0x8] sm:$0xff]
  %v619 = vsel %vm283, %v614, %v617
  %v620 = vsel %vm284, %v615, %v618
  %v621 = vsel %vm292, %v607, 0
  %623 = vmatpush.msra.mxu0 0.0
  %624 = vmatpush.msra.mxu0 0.0
  %625 = vmatpush.msra.mxu0 0.0
  %626 = vmatpush.msra.mxu0 0.0
  %627 = vmatpush.msra.mxu0 0.0
  %628 = vmatpush.msra.mxu0 0.0
  %629 = vmatpush.msra.mxu0 0.0
  %630 = vmatpush.msra.mxu0 0.0
  %631 = vmatpush.msra.mxu0 %v275
  %632 = vmatpush.msra.mxu0 %v273
  %633 = vmatpush.msra.mxu0 %v271
  %634 = vmatpush.msra.mxu0 %v269
  %635 = vmatpush.msra.mxu0 %v267
  %636 = vmatpush.msra.mxu0 %v265
  %637 = vmatpush.msra.mxu0 %v263
  %638 = vmatpush.msra.mxu0 %v261
  %639 = vmatmul.f32.gmra.mxu0 %v621
  %v640 = vpop.f32.mrf.mxu0
  %v641 = vadd.f32 0.0, %v640
  %642 = vdwg.mxu0
  %643 = vmatpush.msra.mxu0 0.0
  %644 = vmatpush.msra.mxu0 0.0
  %645 = vmatpush.msra.mxu0 0.0
  %646 = vmatpush.msra.mxu0 0.0
  %647 = vmatpush.msra.mxu0 0.0
  %648 = vmatpush.msra.mxu0 0.0
  %649 = vmatpush.msra.mxu0 0.0
  %650 = vmatpush.msra.mxu0 0.0
  %651 = vmatpush.msra.mxu0 %v276
  %652 = vmatpush.msra.mxu0 %v274
  %653 = vmatpush.msra.mxu0 %v272
  %654 = vmatpush.msra.mxu0 %v270
  %655 = vmatpush.msra.mxu0 %v268
  %656 = vmatpush.msra.mxu0 %v266
  %657 = vmatpush.msra.mxu0 %v264
  %658 = vmatpush.msra.mxu0 %v262
  %659 = vmatmul.f32.gmra.mxu0 %v621
  %v660 = vpop.f32.mrf.mxu0
  %v661 = vadd.f32 0.0, %v660
  %662 = vdwg.mxu0
  %v663 = vadd.f32 %v619, %v641
  %v664 = vadd.f32 %v620, %v661
  %v665 = vxor.u32 %v663, 2147483648
  %v666 = vxor.u32 %v664, 2147483648
  %v667 = vmul.f32 %v665, 1.442695
  %v668 = vpow.pop %v667
  %v669 = vmul.f32 %v666, 1.442695
  %v670 = vpow.pop %v669
  %v671 = vadd.f32 %v668, 1.0
  %v672 = vadd.f32 %v670, 1.0
  %v673 = vrcp.pop %v671
  %v674 = vmul.f32 %v671, %v673
  %v675 = vsub.f32 1.0, %v674
  %v676 = vmul.f32 %v673, %v675
  %v677 = vadd.f32 %v673, %v676
  %vm678 = vweird.f32 %v671
  %vm679 = vweird.f32 %v673
  %vm680 = vmor %vm678, %vm679
  %v681 = vsel %vm680, %v673, %v677
  %v682 = vand.u32 2147483647, %v671
  %vm683 = vcmp.eq.f32.partialorder %v682, 8.507059e+37
  %v684 = vand.u32 %v671, 2147483648
  %v685 = vor.u32 1.1754944e-38, %v684
  %v686 = vsel %vm683, %v685, %v681
  %v687 = vmul.f32 1.0, %v686
  %v688 = vrcp.pop %v672
  %v689 = vmul.f32 %v672, %v688
  %v690 = vsub.f32 1.0, %v689
  %v691 = vmul.f32 %v688, %v690
  %v692 = vadd.f32 %v688, %v691
  %vm693 = vweird.f32 %v672
  %vm694 = vweird.f32 %v688
  %vm695 = vmor %vm693, %vm694
  %v696 = vsel %vm695, %v688, %v692
  %v697 = vand.u32 2147483647, %v672
  %vm698 = vcmp.eq.f32.partialorder %v697, 8.507059e+37
  %v699 = vand.u32 %v672, 2147483648
  %v700 = vor.u32 1.1754944e-38, %v699
  %v701 = vsel %vm698, %v700, %v696
  %v702 = vmul.f32 1.0, %v701
  %v703 = vmul.f32 %v702, 2.0
  %v704 = vsub.f32 %v703, 1.0
  %v705 = vmul.f32 %v687, %v602
  %v706 = vmul.f32 %v687, %v704
  %708 = vrot.lane.b32.xlu0 %v706, 64
  %v709 = vpop.permute.xlu0 %708
  %v711 = vadd.f32 %v705, %v709
  %v712 = vtanh.pop %v711
  %v713 = vmul.f32 %v702, %v712
  %715 = vrot.lane.b32.xlu0 %v713, 64
  %v716 = vpop.permute.xlu0 %715
  %s718 = scalar_lea.vmem %s5, 24
  %719 = vst.msk [vmem:[%s718] sm:$0xff] %vm50, %v716
  %s720 = scalar_lea.vmem %s5, 96
  %721 = vst.msk [vmem:[%s720] sm:$0xff] %vm393, %v716
  %s722 = scalar_lea.vmem [#allocation2], 64
  %v723 = vld [vmem:[%s722] sm:$0xff]
  %v724 = vld [vmem:[%s722 + $0x8] sm:$0xff]
  %s725 = scalar_lea.vmem [#allocation2], 176
  %v726 = vld [vmem:[%s725] sm:$0xff]
  %v727 = vld [vmem:[%s725 + $0x8] sm:$0xff]
  %v728 = vsel %vm283, %v723, %v726
  %v729 = vsel %vm284, %v724, %v727
  %v730 = vsel %vm292, %v716, 0
  %732 = vmatpush.msra.mxu0 0.0
  %733 = vmatpush.msra.mxu0 0.0
  %734 = vmatpush.msra.mxu0 0.0
  %735 = vmatpush.msra.mxu0 0.0
  %736 = vmatpush.msra.mxu0 0.0
  %737 = vmatpush.msra.mxu0 0.0
  %738 = vmatpush.msra.mxu0 0.0
  %739 = vmatpush.msra.mxu0 0.0
  %740 = vmatpush.msra.mxu0 %v275
  %741 = vmatpush.msra.mxu0 %v273
  %742 = vmatpush.msra.mxu0 %v271
  %743 = vmatpush.msra.mxu0 %v269
  %744 = vmatpush.msra.mxu0 %v267
  %745 = vmatpush.msra.mxu0 %v265
  %746 = vmatpush.msra.mxu0 %v263
  %747 = vmatpush.msra.mxu0 %v261
  %748 = vmatmul.f32.gmra.mxu0 %v730
  %v749 = vpop.f32.mrf.mxu0
  %v750 = vadd.f32 0.0, %v749
  %751 = vdwg.mxu0
  %752 = vmatpush.msra.mxu0 0.0
  %753 = vmatpush.msra.mxu0 0.0
  %754 = vmatpush.msra.mxu0 0.0
  %755 = vmatpush.msra.mxu0 0.0
  %756 = vmatpush.msra.mxu0 0.0
  %757 = vmatpush.msra.mxu0 0.0
  %758 = vmatpush.msra.mxu0 0.0
  %759 = vmatpush.msra.mxu0 0.0
  %760 = vmatpush.msra.mxu0 %v276
  %761 = vmatpush.msra.mxu0 %v274
  %762 = vmatpush.msra.mxu0 %v272
  %763 = vmatpush.msra.mxu0 %v270
  %764 = vmatpush.msra.mxu0 %v268
  %765 = vmatpush.msra.mxu0 %v266
  %766 = vmatpush.msra.mxu0 %v264
  %767 = vmatpush.msra.mxu0 %v262
  %768 = vmatmul.f32.gmra.mxu0 %v730
  %v769 = vpop.f32.mrf.mxu0
  %v770 = vadd.f32 0.0, %v769
  %771 = vdwg.mxu0
  %v772 = vadd.f32 %v728, %v750
  %v773 = vadd.f32 %v729, %v770
  %v774 = vxor.u32 %v772, 2147483648
  %v775 = vxor.u32 %v773, 2147483648
  %v776 = vmul.f32 %v774, 1.442695
  %v777 = vpow.pop %v776
  %v778 = vmul.f32 %v775, 1.442695
  %v779 = vpow.pop %v778
  %v780 = vadd.f32 %v777, 1.0
  %v781 = vadd.f32 %v779, 1.0
  %v782 = vrcp.pop %v780
  %v783 = vmul.f32 %v780, %v782
  %v784 = vsub.f32 1.0, %v783
  %v785 = vmul.f32 %v782, %v784
  %v786 = vadd.f32 %v782, %v785
  %vm787 = vweird.f32 %v780
  %vm788 = vweird.f32 %v782
  %vm789 = vmor %vm787, %vm788
  %v790 = vsel %vm789, %v782, %v786
  %v791 = vand.u32 2147483647, %v780
  %vm792 = vcmp.eq.f32.partialorder %v791, 8.507059e+37
  %v793 = vand.u32 %v780, 2147483648
  %v794 = vor.u32 1.1754944e-38, %v793
  %v795 = vsel %vm792, %v794, %v790
  %v796 = vmul.f32 1.0, %v795
  %v797 = vrcp.pop %v781
  %v798 = vmul.f32 %v781, %v797
  %v799 = vsub.f32 1.0, %v798
  %v800 = vmul.f32 %v797, %v799
  %v801 = vadd.f32 %v797, %v800
  %vm802 = vweird.f32 %v781
  %vm803 = vweird.f32 %v797
  %vm804 = vmor %vm802, %vm803
  %v805 = vsel %vm804, %v797, %v801
  %v806 = vand.u32 2147483647, %v781
  %vm807 = vcmp.eq.f32.partialorder %v806, 8.507059e+37
  %v808 = vand.u32 %v781, 2147483648
  %v809 = vor.u32 1.1754944e-38, %v808
  %v810 = vsel %vm807, %v809, %v805
  %v811 = vmul.f32 1.0, %v810
  %v812 = vmul.f32 %v811, 2.0
  %v813 = vsub.f32 %v812, 1.0
  %v814 = vmul.f32 %v796, %v711
  %v815 = vmul.f32 %v796, %v813
  %817 = vrot.lane.b32.xlu0 %v815, 64
  %v818 = vpop.permute.xlu0 %817
  %v820 = vadd.f32 %v814, %v818
  %v821 = vtanh.pop %v820
  %v822 = vmul.f32 %v811, %v821
  %824 = vrot.lane.b32.xlu0 %v822, 64
  %v825 = vpop.permute.xlu0 %824
  %s827 = scalar_lea.vmem %s5, 32
  %828 = vst.msk [vmem:[%s827] sm:$0xff] %vm50, %v825
  %s829 = scalar_lea.vmem %s5, 88
  %830 = vst.msk [vmem:[%s829] sm:$0xff] %vm393, %v825
  %s831 = scalar_lea.vmem [#allocation2], 80
  %v832 = vld [vmem:[%s831] sm:$0xff]
  %v833 = vld [vmem:[%s831 + $0x8] sm:$0xff]
  %s834 = scalar_lea.vmem [#allocation2], 160
  %v835 = vld [vmem:[%s834] sm:$0xff]
  %v836 = vld [vmem:[%s834 + $0x8] sm:$0xff]
  %v837 = vsel %vm283, %v832, %v835
  %v838 = vsel %vm284, %v833, %v836
  %v839 = vsel %vm292, %v825, 0
  %841 = vmatpush.msra.mxu0 0.0
  %842 = vmatpush.msra.mxu0 0.0
  %843 = vmatpush.msra.mxu0 0.0
  %844 = vmatpush.msra.mxu0 0.0
  %845 = vmatpush.msra.mxu0 0.0
  %846 = vmatpush.msra.mxu0 0.0
  %847 = vmatpush.msra.mxu0 0.0
  %848 = vmatpush.msra.mxu0 0.0
  %849 = vmatpush.msra.mxu0 %v275
  %850 = vmatpush.msra.mxu0 %v273
  %851 = vmatpush.msra.mxu0 %v271
  %852 = vmatpush.msra.mxu0 %v269
  %853 = vmatpush.msra.mxu0 %v267
  %854 = vmatpush.msra.mxu0 %v265
  %855 = vmatpush.msra.mxu0 %v263
  %856 = vmatpush.msra.mxu0 %v261
  %857 = vmatmul.f32.gmra.mxu0 %v839
  %v858 = vpop.f32.mrf.mxu0
  %v859 = vadd.f32 0.0, %v858
  %860 = vdwg.mxu0
  %861 = vmatpush.msra.mxu0 0.0
  %862 = vmatpush.msra.mxu0 0.0
  %863 = vmatpush.msra.mxu0 0.0
  %864 = vmatpush.msra.mxu0 0.0
  %865 = vmatpush.msra.mxu0 0.0
  %866 = vmatpush.msra.mxu0 0.0
  %867 = vmatpush.msra.mxu0 0.0
  %868 = vmatpush.msra.mxu0 0.0
  %869 = vmatpush.msra.mxu0 %v276
  %870 = vmatpush.msra.mxu0 %v274
  %871 = vmatpush.msra.mxu0 %v272
  %872 = vmatpush.msra.mxu0 %v270
  %873 = vmatpush.msra.mxu0 %v268
  %874 = vmatpush.msra.mxu0 %v266
  %875 = vmatpush.msra.mxu0 %v264
  %876 = vmatpush.msra.mxu0 %v262
  %877 = vmatmul.f32.gmra.mxu0 %v839
  %v878 = vpop.f32.mrf.mxu0
  %v879 = vadd.f32 0.0, %v878
  %880 = vdwg.mxu0
  %v881 = vadd.f32 %v837, %v859
  %v882 = vadd.f32 %v838, %v879
  %v883 = vxor.u32 %v881, 2147483648
  %v884 = vxor.u32 %v882, 2147483648
  %v885 = vmul.f32 %v883, 1.442695
  %v886 = vpow.pop %v885
  %v887 = vmul.f32 %v884, 1.442695
  %v888 = vpow.pop %v887
  %v889 = vadd.f32 %v886, 1.0
  %v890 = vadd.f32 %v888, 1.0
  %v891 = vrcp.pop %v889
  %v892 = vmul.f32 %v889, %v891
  %v893 = vsub.f32 1.0, %v892
  %v894 = vmul.f32 %v891, %v893
  %v895 = vadd.f32 %v891, %v894
  %vm896 = vweird.f32 %v889
  %vm897 = vweird.f32 %v891
  %vm898 = vmor %vm896, %vm897
  %v899 = vsel %vm898, %v891, %v895
  %v900 = vand.u32 2147483647, %v889
  %vm901 = vcmp.eq.f32.partialorder %v900, 8.507059e+37
  %v902 = vand.u32 %v889, 2147483648
  %v903 = vor.u32 1.1754944e-38, %v902
  %v904 = vsel %vm901, %v903, %v899
  %v905 = vmul.f32 1.0, %v904
  %v906 = vrcp.pop %v890
  %v907 = vmul.f32 %v890, %v906
  %v908 = vsub.f32 1.0, %v907
  %v909 = vmul.f32 %v906, %v908
  %v910 = vadd.f32 %v906, %v909
  %vm911 = vweird.f32 %v890
  %vm912 = vweird.f32 %v906
  %vm913 = vmor %vm911, %vm912
  %v914 = vsel %vm913, %v906, %v910
  %v915 = vand.u32 2147483647, %v890
  %vm916 = vcmp.eq.f32.partialorder %v915, 8.507059e+37
  %v917 = vand.u32 %v890, 2147483648
  %v918 = vor.u32 1.1754944e-38, %v917
  %v919 = vsel %vm916, %v918, %v914
  %v920 = vmul.f32 1.0, %v919
  %v921 = vmul.f32 %v920, 2.0
  %v922 = vsub.f32 %v921, 1.0
  %v923 = vmul.f32 %v905, %v820
  %v924 = vmul.f32 %v905, %v922
  %926 = vrot.lane.b32.xlu0 %v924, 64
  %v927 = vpop.permute.xlu0 %926
  %v929 = vadd.f32 %v923, %v927
  %v930 = vtanh.pop %v929
  %v931 = vmul.f32 %v920, %v930
  %933 = vrot.lane.b32.xlu0 %v931, 64
  %v934 = vpop.permute.xlu0 %933
  %s936 = scalar_lea.vmem %s5, 40
  %937 = vst.msk [vmem:[%s936] sm:$0xff] %vm50, %v934
  %s938 = scalar_lea.vmem %s5, 80
  %939 = vst.msk [vmem:[%s938] sm:$0xff] %vm393, %v934
  %s940 = scalar_lea.vmem [#allocation2], 96
  %v941 = vld [vmem:[%s940] sm:$0xff]
  %v942 = vld [vmem:[%s940 + $0x8] sm:$0xff]
  %s943 = scalar_lea.vmem [#allocation2], 144
  %v944 = vld [vmem:[%s943] sm:$0xff]
  %v945 = vld [vmem:[%s943 + $0x8] sm:$0xff]
  %v946 = vsel %vm283, %v941, %v944
  %v947 = vsel %vm284, %v942, %v945
  %v948 = vsel %vm292, %v934, 0
  %950 = vmatpush.msra.mxu0 0.0
  %951 = vmatpush.msra.mxu0 0.0
  %952 = vmatpush.msra.mxu0 0.0
  %953 = vmatpush.msra.mxu0 0.0
  %954 = vmatpush.msra.mxu0 0.0
  %955 = vmatpush.msra.mxu0 0.0
  %956 = vmatpush.msra.mxu0 0.0
  %957 = vmatpush.msra.mxu0 0.0
  %958 = vmatpush.msra.mxu0 %v275
  %959 = vmatpush.msra.mxu0 %v273
  %960 = vmatpush.msra.mxu0 %v271
  %961 = vmatpush.msra.mxu0 %v269
  %962 = vmatpush.msra.mxu0 %v267
  %963 = vmatpush.msra.mxu0 %v265
  %964 = vmatpush.msra.mxu0 %v263
  %965 = vmatpush.msra.mxu0 %v261
  %966 = vmatmul.f32.gmra.mxu0 %v948
  %v967 = vpop.f32.mrf.mxu0
  %v968 = vadd.f32 0.0, %v967
  %969 = vdwg.mxu0
  %970 = vmatpush.msra.mxu0 0.0
  %971 = vmatpush.msra.mxu0 0.0
  %972 = vmatpush.msra.mxu0 0.0
  %973 = vmatpush.msra.mxu0 0.0
  %974 = vmatpush.msra.mxu0 0.0
  %975 = vmatpush.msra.mxu0 0.0
  %976 = vmatpush.msra.mxu0 0.0
  %977 = vmatpush.msra.mxu0 0.0
  %978 = vmatpush.msra.mxu0 %v276
  %979 = vmatpush.msra.mxu0 %v274
  %980 = vmatpush.msra.mxu0 %v272
  %981 = vmatpush.msra.mxu0 %v270
  %982 = vmatpush.msra.mxu0 %v268
  %983 = vmatpush.msra.mxu0 %v266
  %984 = vmatpush.msra.mxu0 %v264
  %985 = vmatpush.msra.mxu0 %v262
  %986 = vmatmul.f32.gmra.mxu0 %v948
  %v987 = vpop.f32.mrf.mxu0
  %v988 = vadd.f32 0.0, %v987
  %989 = vdwg.mxu0
  %v990 = vadd.f32 %v946, %v968
  %v991 = vadd.f32 %v947, %v988
  %v992 = vxor.u32 %v990, 2147483648
  %v993 = vxor.u32 %v991, 2147483648
  %v994 = vmul.f32 %v992, 1.442695
  %v995 = vpow.pop %v994
  %v996 = vmul.f32 %v993, 1.442695
  %v997 = vpow.pop %v996
  %v998 = vadd.f32 %v995, 1.0
  %v999 = vadd.f32 %v997, 1.0
  %v1000 = vrcp.pop %v998
  %v1001 = vmul.f32 %v998, %v1000
  %v1002 = vsub.f32 1.0, %v1001
  %v1003 = vmul.f32 %v1000, %v1002
  %v1004 = vadd.f32 %v1000, %v1003
  %vm1005 = vweird.f32 %v998
  %vm1006 = vweird.f32 %v1000
  %vm1007 = vmor %vm1005, %vm1006
  %v1008 = vsel %vm1007, %v1000, %v1004
  %v1009 = vand.u32 2147483647, %v998
  %vm1010 = vcmp.eq.f32.partialorder %v1009, 8.507059e+37
  %v1011 = vand.u32 %v998, 2147483648
  %v1012 = vor.u32 1.1754944e-38, %v1011
  %v1013 = vsel %vm1010, %v1012, %v1008
  %v1014 = vmul.f32 1.0, %v1013
  %v1015 = vrcp.pop %v999
  %v1016 = vmul.f32 %v999, %v1015
  %v1017 = vsub.f32 1.0, %v1016
  %v1018 = vmul.f32 %v1015, %v1017
  %v1019 = vadd.f32 %v1015, %v1018
  %vm1020 = vweird.f32 %v999
  %vm1021 = vweird.f32 %v1015
  %vm1022 = vmor %vm1020, %vm1021
  %v1023 = vsel %vm1022, %v1015, %v1019
  %v1024 = vand.u32 2147483647, %v999
  %vm1025 = vcmp.eq.f32.partialorder %v1024, 8.507059e+37
  %v1026 = vand.u32 %v999, 2147483648
  %v1027 = vor.u32 1.1754944e-38, %v1026
  %v1028 = vsel %vm1025, %v1027, %v1023
  %v1029 = vmul.f32 1.0, %v1028
  %v1030 = vmul.f32 %v1029, 2.0
  %v1031 = vsub.f32 %v1030, 1.0
  %v1032 = vmul.f32 %v1014, %v929
  %v1033 = vmul.f32 %v1014, %v1031
  %1035 = vrot.lane.b32.xlu0 %v1033, 64
  %v1036 = vpop.permute.xlu0 %1035
  %v1038 = vadd.f32 %v1032, %v1036
  %v1039 = vtanh.pop %v1038
  %v1040 = vmul.f32 %v1029, %v1039
  %1042 = vrot.lane.b32.xlu0 %v1040, 64
  %v1043 = vpop.permute.xlu0 %1042
  %s1045 = scalar_lea.vmem %s5, 48
  %1046 = vst.msk [vmem:[%s1045] sm:$0xff] %vm50, %v1043
  %s1047 = scalar_lea.vmem %s5, 72
  %1048 = vst.msk [vmem:[%s1047] sm:$0xff] %vm393, %v1043
  %s1049 = scalar_lea.vmem [#allocation2], 112
  %v1050 = vld [vmem:[%s1049] sm:$0xff]
  %v1051 = vld [vmem:[%s1049 + $0x8] sm:$0xff]
  %s1052 = scalar_lea.vmem [#allocation2], 128
  %v1053 = vld [vmem:[%s1052] sm:$0xff]
  %v1054 = vld [vmem:[%s1052 + $0x8] sm:$0xff]
  %v1055 = vsel %vm283, %v1050, %v1053
  %v1056 = vsel %vm284, %v1051, %v1054
  %v1057 = vsel %vm292, %v1043, 0
  %1059 = vmatpush.msra.mxu0 0.0
  %1060 = vmatpush.msra.mxu0 0.0
  %1061 = vmatpush.msra.mxu0 0.0
  %1062 = vmatpush.msra.mxu0 0.0
  %1063 = vmatpush.msra.mxu0 0.0
  %1064 = vmatpush.msra.mxu0 0.0
  %1065 = vmatpush.msra.mxu0 0.0
  %1066 = vmatpush.msra.mxu0 0.0
  %1067 = vmatpush.msra.mxu0 %v275
  %1068 = vmatpush.msra.mxu0 %v273
  %1069 = vmatpush.msra.mxu0 %v271
  %1070 = vmatpush.msra.mxu0 %v269
  %1071 = vmatpush.msra.mxu0 %v267
  %1072 = vmatpush.msra.mxu0 %v265
  %1073 = vmatpush.msra.mxu0 %v263
  %1074 = vmatpush.msra.mxu0 %v261
  %1075 = vmatmul.f32.gmra.mxu0 %v1057
  %v1076 = vpop.f32.mrf.mxu0
  %v1077 = vadd.f32 0.0, %v1076
  %1078 = vdwg.mxu0
  %1079 = vmatpush.msra.mxu0 0.0
  %1080 = vmatpush.msra.mxu0 0.0
  %1081 = vmatpush.msra.mxu0 0.0
  %1082 = vmatpush.msra.mxu0 0.0
  %1083 = vmatpush.msra.mxu0 0.0
  %1084 = vmatpush.msra.mxu0 0.0
  %1085 = vmatpush.msra.mxu0 0.0
  %1086 = vmatpush.msra.mxu0 0.0
  %1087 = vmatpush.msra.mxu0 %v276
  %1088 = vmatpush.msra.mxu0 %v274
  %1089 = vmatpush.msra.mxu0 %v272
  %1090 = vmatpush.msra.mxu0 %v270
  %1091 = vmatpush.msra.mxu0 %v268
  %1092 = vmatpush.msra.mxu0 %v266
  %1093 = vmatpush.msra.mxu0 %v264
  %1094 = vmatpush.msra.mxu0 %v262
  %1095 = vmatmul.f32.gmra.mxu0 %v1057
  %v1096 = vpop.f32.mrf.mxu0
  %v1097 = vadd.f32 0.0, %v1096
  %1098 = vdwg.mxu0
  %v1099 = vadd.f32 %v1055, %v1077
  %v1100 = vadd.f32 %v1056, %v1097
  %v1101 = vxor.u32 %v1099, 2147483648
  %v1102 = vxor.u32 %v1100, 2147483648
  %v1103 = vmul.f32 %v1101, 1.442695
  %v1104 = vpow.pop %v1103
  %v1105 = vmul.f32 %v1102, 1.442695
  %v1106 = vpow.pop %v1105
  %v1107 = vadd.f32 %v1104, 1.0
  %v1108 = vadd.f32 %v1106, 1.0
  %v1109 = vrcp.pop %v1107
  %v1110 = vmul.f32 %v1107, %v1109
  %v1111 = vsub.f32 1.0, %v1110
  %v1112 = vmul.f32 %v1109, %v1111
  %v1113 = vadd.f32 %v1109, %v1112
  %vm1114 = vweird.f32 %v1107
  %vm1115 = vweird.f32 %v1109
  %vm1116 = vmor %vm1114, %vm1115
  %v1117 = vsel %vm1116, %v1109, %v1113
  %v1118 = vand.u32 2147483647, %v1107
  %vm1119 = vcmp.eq.f32.partialorder %v1118, 8.507059e+37
  %v1120 = vand.u32 %v1107, 2147483648
  %v1121 = vor.u32 1.1754944e-38, %v1120
  %v1122 = vsel %vm1119, %v1121, %v1117
  %v1123 = vmul.f32 1.0, %v1122
  %v1124 = vrcp.pop %v1108
  %v1125 = vmul.f32 %v1108, %v1124
  %v1126 = vsub.f32 1.0, %v1125
  %v1127 = vmul.f32 %v1124, %v1126
  %v1128 = vadd.f32 %v1124, %v1127
  %vm1129 = vweird.f32 %v1108
  %vm1130 = vweird.f32 %v1124
  %vm1131 = vmor %vm1129, %vm1130
  %v1132 = vsel %vm1131, %v1124, %v1128
  %v1133 = vand.u32 2147483647, %v1108
  %vm1134 = vcmp.eq.f32.partialorder %v1133, 8.507059e+37
  %v1135 = vand.u32 %v1108, 2147483648
  %v1136 = vor.u32 1.1754944e-38, %v1135
  %v1137 = vsel %vm1134, %v1136, %v1132
  %v1138 = vmul.f32 1.0, %v1137
  %v1139 = vmul.f32 %v1138, 2.0
  %v1140 = vsub.f32 %v1139, 1.0
  %v1141 = vmul.f32 %v1123, %v1038
  %v1142 = vmul.f32 %v1123, %v1140
  %1144 = vrot.lane.b32.xlu0 %v1142, 64
  %v1145 = vpop.permute.xlu0 %1144
  %v1147 = vadd.f32 %v1141, %v1145
  %v1148 = vtanh.pop %v1147
  %v1149 = vmul.f32 %v1138, %v1148
  %1151 = vrot.lane.b32.xlu0 %v1149, 64
  %v1152 = vpop.permute.xlu0 %1151
  %s1154 = scalar_lea.vmem %s5, 56
  %1155 = vst.msk [vmem:[%s1154] sm:$0xff] %vm50, %v1152
  %s1156 = scalar_lea.vmem %s5, 64
  %1157 = vst.msk [vmem:[%s1156] sm:$0xff] %vm393, %v1152
  %v1158 = vld [vmem:[%s1052] sm:$0xff]
  %v1159 = vld [vmem:[%s1052 + $0x8] sm:$0xff]
  %v1160 = vld [vmem:[%s1049] sm:$0xff]
  %v1161 = vld [vmem:[%s1049 + $0x8] sm:$0xff]
  %v1162 = vsel %vm283, %v1158, %v1160
  %v1163 = vsel %vm284, %v1159, %v1161
  %v1164 = vsel %vm292, %v1152, 0
  %1166 = vmatpush.msra.mxu0 0.0
  %1167 = vmatpush.msra.mxu0 0.0
  %1168 = vmatpush.msra.mxu0 0.0
  %1169 = vmatpush.msra.mxu0 0.0
  %1170 = vmatpush.msra.mxu0 0.0
  %1171 = vmatpush.msra.mxu0 0.0
  %1172 = vmatpush.msra.mxu0 0.0
  %1173 = vmatpush.msra.mxu0 0.0
  %1174 = vmatpush.msra.mxu0 %v275
  %1175 = vmatpush.msra.mxu0 %v273
  %1176 = vmatpush.msra.mxu0 %v271
  %1177 = vmatpush.msra.mxu0 %v269
  %1178 = vmatpush.msra.mxu0 %v267
  %1179 = vmatpush.msra.mxu0 %v265
  %1180 = vmatpush.msra.mxu0 %v263
  %1181 = vmatpush.msra.mxu0 %v261
  %1182 = vmatmul.f32.gmra.mxu0 %v1164
  %v1183 = vpop.f32.mrf.mxu0
  %v1184 = vadd.f32 0.0, %v1183
  %1185 = vdwg.mxu0
  %1186 = vmatpush.msra.mxu0 0.0
  %1187 = vmatpush.msra.mxu0 0.0
  %1188 = vmatpush.msra.mxu0 0.0
  %1189 = vmatpush.msra.mxu0 0.0
  %1190 = vmatpush.msra.mxu0 0.0
  %1191 = vmatpush.msra.mxu0 0.0
  %1192 = vmatpush.msra.mxu0 0.0
  %1193 = vmatpush.msra.mxu0 0.0
  %1194 = vmatpush.msra.mxu0 %v276
  %1195 = vmatpush.msra.mxu0 %v274
  %1196 = vmatpush.msra.mxu0 %v272
  %1197 = vmatpush.msra.mxu0 %v270
  %1198 = vmatpush.msra.mxu0 %v268
  %1199 = vmatpush.msra.mxu0 %v266
  %1200 = vmatpush.msra.mxu0 %v264
  %1201 = vmatpush.msra.mxu0 %v262
  %1202 = vmatmul.f32.gmra.mxu0 %v1164
  %v1203 = vpop.f32.mrf.mxu0
  %v1204 = vadd.f32 0.0, %v1203
  %1205 = vdwg.mxu0
  %v1206 = vadd.f32 %v1162, %v1184
  %v1207 = vadd.f32 %v1163, %v1204
  %v1208 = vxor.u32 %v1206, 2147483648
  %v1209 = vxor.u32 %v1207, 2147483648
  %v1210 = vmul.f32 %v1208, 1.442695
  %v1211 = vpow.pop %v1210
  %v1212 = vmul.f32 %v1209, 1.442695
  %v1213 = vpow.pop %v1212
  %v1214 = vadd.f32 %v1211, 1.0
  %v1215 = vadd.f32 %v1213, 1.0
  %v1216 = vrcp.pop %v1214
  %v1217 = vmul.f32 %v1214, %v1216
  %v1218 = vsub.f32 1.0, %v1217
  %v1219 = vmul.f32 %v1216, %v1218
  %v1220 = vadd.f32 %v1216, %v1219
  %vm1221 = vweird.f32 %v1214
  %vm1222 = vweird.f32 %v1216
  %vm1223 = vmor %vm1221, %vm1222
  %v1224 = vsel %vm1223, %v1216, %v1220
  %v1225 = vand.u32 2147483647, %v1214
  %vm1226 = vcmp.eq.f32.partialorder %v1225, 8.507059e+37
  %v1227 = vand.u32 %v1214, 2147483648
  %v1228 = vor.u32 1.1754944e-38, %v1227
  %v1229 = vsel %vm1226, %v1228, %v1224
  %v1230 = vmul.f32 1.0, %v1229
  %v1231 = vrcp.pop %v1215
  %v1232 = vmul.f32 %v1215, %v1231
  %v1233 = vsub.f32 1.0, %v1232
  %v1234 = vmul.f32 %v1231, %v1233
  %v1235 = vadd.f32 %v1231, %v1234
  %vm1236 = vweird.f32 %v1215
  %vm1237 = vweird.f32 %v1231
  %vm1238 = vmor %vm1236, %vm1237
  %v1239 = vsel %vm1238, %v1231, %v1235
  %v1240 = vand.u32 2147483647, %v1215
  %vm1241 = vcmp.eq.f32.partialorder %v1240, 8.507059e+37
  %v1242 = vand.u32 %v1215, 2147483648
  %v1243 = vor.u32 1.1754944e-38, %v1242
  %v1244 = vsel %vm1241, %v1243, %v1239
  %v1245 = vmul.f32 1.0, %v1244
  %v1246 = vmul.f32 %v1245, 2.0
  %v1247 = vsub.f32 %v1246, 1.0
  %v1248 = vmul.f32 %v1230, %v1147
  %v1249 = vmul.f32 %v1230, %v1247
  %1251 = vrot.lane.b32.xlu0 %v1249, 64
  %v1252 = vpop.permute.xlu0 %1251
  %v1254 = vadd.f32 %v1248, %v1252
  %v1255 = vtanh.pop %v1254
  %v1256 = vmul.f32 %v1245, %v1255
  %1258 = vrot.lane.b32.xlu0 %v1256, 64
  %v1259 = vpop.permute.xlu0 %1258
  %1261 = vst.msk [vmem:[%s1156] sm:$0xff] %vm50, %v1259
  %1262 = vst.msk [vmem:[%s1154] sm:$0xff] %vm393, %v1259
  %v1263 = vld [vmem:[%s943] sm:$0xff]
  %v1264 = vld [vmem:[%s943 + $0x8] sm:$0xff]
  %v1265 = vld [vmem:[%s940] sm:$0xff]
  %v1266 = vld [vmem:[%s940 + $0x8] sm:$0xff]
  %v1267 = vsel %vm283, %v1263, %v1265
  %v1268 = vsel %vm284, %v1264, %v1266
  %v1269 = vsel %vm292, %v1259, 0
  %1271 = vmatpush.msra.mxu0 0.0
  %1272 = vmatpush.msra.mxu0 0.0
  %1273 = vmatpush.msra.mxu0 0.0
  %1274 = vmatpush.msra.mxu0 0.0
  %1275 = vmatpush.msra.mxu0 0.0
  %1276 = vmatpush.msra.mxu0 0.0
  %1277 = vmatpush.msra.mxu0 0.0
  %1278 = vmatpush.msra.mxu0 0.0
  %1279 = vmatpush.msra.mxu0 %v275
  %1280 = vmatpush.msra.mxu0 %v273
  %1281 = vmatpush.msra.mxu0 %v271
  %1282 = vmatpush.msra.mxu0 %v269
  %1283 = vmatpush.msra.mxu0 %v267
  %1284 = vmatpush.msra.mxu0 %v265
  %1285 = vmatpush.msra.mxu0 %v263
  %1286 = vmatpush.msra.mxu0 %v261
  %1287 = vmatmul.f32.gmra.mxu0 %v1269
  %v1288 = vpop.f32.mrf.mxu0
  %v1289 = vadd.f32 0.0, %v1288
  %1290 = vdwg.mxu0
  %1291 = vmatpush.msra.mxu0 0.0
  %1292 = vmatpush.msra.mxu0 0.0
  %1293 = vmatpush.msra.mxu0 0.0
  %1294 = vmatpush.msra.mxu0 0.0
  %1295 = vmatpush.msra.mxu0 0.0
  %1296 = vmatpush.msra.mxu0 0.0
  %1297 = vmatpush.msra.mxu0 0.0
  %1298 = vmatpush.msra.mxu0 0.0
  %1299 = vmatpush.msra.mxu0 %v276
  %1300 = vmatpush.msra.mxu0 %v274
  %1301 = vmatpush.msra.mxu0 %v272
  %1302 = vmatpush.msra.mxu0 %v270
  %1303 = vmatpush.msra.mxu0 %v268
  %1304 = vmatpush.msra.mxu0 %v266
  %1305 = vmatpush.msra.mxu0 %v264
  %1306 = vmatpush.msra.mxu0 %v262
  %1307 = vmatmul.f32.gmra.mxu0 %v1269
  %v1308 = vpop.f32.mrf.mxu0
  %v1309 = vadd.f32 0.0, %v1308
  %1310 = vdwg.mxu0
  %v1311 = vadd.f32 %v1267, %v1289
  %v1312 = vadd.f32 %v1268, %v1309
  %v1313 = vxor.u32 %v1311, 2147483648
  %v1314 = vxor.u32 %v1312, 2147483648
  %v1315 = vmul.f32 %v1313, 1.442695
  %v1316 = vpow.pop %v1315
  %v1317 = vmul.f32 %v1314, 1.442695
  %v1318 = vpow.pop %v1317
  %v1319 = vadd.f32 %v1316, 1.0
  %v1320 = vadd.f32 %v1318, 1.0
  %v1321 = vrcp.pop %v1319
  %v1322 = vmul.f32 %v1319, %v1321
  %v1323 = vsub.f32 1.0, %v1322
  %v1324 = vmul.f32 %v1321, %v1323
  %v1325 = vadd.f32 %v1321, %v1324
  %vm1326 = vweird.f32 %v1319
  %vm1327 = vweird.f32 %v1321
  %vm1328 = vmor %vm1326, %vm1327
  %v1329 = vsel %vm1328, %v1321, %v1325
  %v1330 = vand.u32 2147483647, %v1319
  %vm1331 = vcmp.eq.f32.partialorder %v1330, 8.507059e+37
  %v1332 = vand.u32 %v1319, 2147483648
  %v1333 = vor.u32 1.1754944e-38, %v1332
  %v1334 = vsel %vm1331, %v1333, %v1329
  %v1335 = vmul.f32 1.0, %v1334
  %v1336 = vrcp.pop %v1320
  %v1337 = vmul.f32 %v1320, %v1336
  %v1338 = vsub.f32 1.0, %v1337
  %v1339 = vmul.f32 %v1336, %v1338
  %v1340 = vadd.f32 %v1336, %v1339
  %vm1341 = vweird.f32 %v1320
  %vm1342 = vweird.f32 %v1336
  %vm1343 = vmor %vm1341, %vm1342
  %v1344 = vsel %vm1343, %v1336, %v1340
  %v1345 = vand.u32 2147483647, %v1320
  %vm1346 = vcmp.eq.f32.partialorder %v1345, 8.507059e+37
  %v1347 = vand.u32 %v1320, 2147483648
  %v1348 = vor.u32 1.1754944e-38, %v1347
  %v1349 = vsel %vm1346, %v1348, %v1344
  %v1350 = vmul.f32 1.0, %v1349
  %v1351 = vmul.f32 %v1350, 2.0
  %v1352 = vsub.f32 %v1351, 1.0
  %v1353 = vmul.f32 %v1335, %v1254
  %v1354 = vmul.f32 %v1335, %v1352
  %1356 = vrot.lane.b32.xlu0 %v1354, 64
  %v1357 = vpop.permute.xlu0 %1356
  %v1359 = vadd.f32 %v1353, %v1357
  %v1360 = vtanh.pop %v1359
  %v1361 = vmul.f32 %v1350, %v1360
  %1363 = vrot.lane.b32.xlu0 %v1361, 64
  %v1364 = vpop.permute.xlu0 %1363
  %1366 = vst.msk [vmem:[%s1047] sm:$0xff] %vm50, %v1364
  %1367 = vst.msk [vmem:[%s1045] sm:$0xff] %vm393, %v1364
  %v1368 = vld [vmem:[%s834] sm:$0xff]
  %v1369 = vld [vmem:[%s834 + $0x8] sm:$0xff]
  %v1370 = vld [vmem:[%s831] sm:$0xff]
  %v1371 = vld [vmem:[%s831 + $0x8] sm:$0xff]
  %v1372 = vsel %vm283, %v1368, %v1370
  %v1373 = vsel %vm284, %v1369, %v1371
  %v1374 = vsel %vm292, %v1364, 0
  %1376 = vmatpush.msra.mxu0 0.0
  %1377 = vmatpush.msra.mxu0 0.0
  %1378 = vmatpush.msra.mxu0 0.0
  %1379 = vmatpush.msra.mxu0 0.0
  %1380 = vmatpush.msra.mxu0 0.0
  %1381 = vmatpush.msra.mxu0 0.0
  %1382 = vmatpush.msra.mxu0 0.0
  %1383 = vmatpush.msra.mxu0 0.0
  %1384 = vmatpush.msra.mxu0 %v275
  %1385 = vmatpush.msra.mxu0 %v273
  %1386 = vmatpush.msra.mxu0 %v271
  %1387 = vmatpush.msra.mxu0 %v269
  %1388 = vmatpush.msra.mxu0 %v267
  %1389 = vmatpush.msra.mxu0 %v265
  %1390 = vmatpush.msra.mxu0 %v263
  %1391 = vmatpush.msra.mxu0 %v261
  %1392 = vmatmul.f32.gmra.mxu0 %v1374
  %v1393 = vpop.f32.mrf.mxu0
  %v1394 = vadd.f32 0.0, %v1393
  %1395 = vdwg.mxu0
  %1396 = vmatpush.msra.mxu0 0.0
  %1397 = vmatpush.msra.mxu0 0.0
  %1398 = vmatpush.msra.mxu0 0.0
  %1399 = vmatpush.msra.mxu0 0.0
  %1400 = vmatpush.msra.mxu0 0.0
  %1401 = vmatpush.msra.mxu0 0.0
  %1402 = vmatpush.msra.mxu0 0.0
  %1403 = vmatpush.msra.mxu0 0.0
  %1404 = vmatpush.msra.mxu0 %v276
  %1405 = vmatpush.msra.mxu0 %v274
  %1406 = vmatpush.msra.mxu0 %v272
  %1407 = vmatpush.msra.mxu0 %v270
  %1408 = vmatpush.msra.mxu0 %v268
  %1409 = vmatpush.msra.mxu0 %v266
  %1410 = vmatpush.msra.mxu0 %v264
  %1411 = vmatpush.msra.mxu0 %v262
  %1412 = vmatmul.f32.gmra.mxu0 %v1374
  %v1413 = vpop.f32.mrf.mxu0
  %v1414 = vadd.f32 0.0, %v1413
  %1415 = vdwg.mxu0
  %v1416 = vadd.f32 %v1372, %v1394
  %v1417 = vadd.f32 %v1373, %v1414
  %v1418 = vxor.u32 %v1416, 2147483648
  %v1419 = vxor.u32 %v1417, 2147483648
  %v1420 = vmul.f32 %v1418, 1.442695
  %v1421 = vpow.pop %v1420
  %v1422 = vmul.f32 %v1419, 1.442695
  %v1423 = vpow.pop %v1422
  %v1424 = vadd.f32 %v1421, 1.0
  %v1425 = vadd.f32 %v1423, 1.0
  %v1426 = vrcp.pop %v1424
  %v1427 = vmul.f32 %v1424, %v1426
  %v1428 = vsub.f32 1.0, %v1427
  %v1429 = vmul.f32 %v1426, %v1428
  %v1430 = vadd.f32 %v1426, %v1429
  %vm1431 = vweird.f32 %v1424
  %vm1432 = vweird.f32 %v1426
  %vm1433 = vmor %vm1431, %vm1432
  %v1434 = vsel %vm1433, %v1426, %v1430
  %v1435 = vand.u32 2147483647, %v1424
  %vm1436 = vcmp.eq.f32.partialorder %v1435, 8.507059e+37
  %v1437 = vand.u32 %v1424, 2147483648
  %v1438 = vor.u32 1.1754944e-38, %v1437
  %v1439 = vsel %vm1436, %v1438, %v1434
  %v1440 = vmul.f32 1.0, %v1439
  %v1441 = vrcp.pop %v1425
  %v1442 = vmul.f32 %v1425, %v1441
  %v1443 = vsub.f32 1.0, %v1442
  %v1444 = vmul.f32 %v1441, %v1443
  %v1445 = vadd.f32 %v1441, %v1444
  %vm1446 = vweird.f32 %v1425
  %vm1447 = vweird.f32 %v1441
  %vm1448 = vmor %vm1446, %vm1447
  %v1449 = vsel %vm1448, %v1441, %v1445
  %v1450 = vand.u32 2147483647, %v1425
  %vm1451 = vcmp.eq.f32.partialorder %v1450, 8.507059e+37
  %v1452 = vand.u32 %v1425, 2147483648
  %v1453 = vor.u32 1.1754944e-38, %v1452
  %v1454 = vsel %vm1451, %v1453, %v1449
  %v1455 = vmul.f32 1.0, %v1454
  %v1456 = vmul.f32 %v1455, 2.0
  %v1457 = vsub.f32 %v1456, 1.0
  %v1458 = vmul.f32 %v1440, %v1359
  %v1459 = vmul.f32 %v1440, %v1457
  %1461 = vrot.lane.b32.xlu0 %v1459, 64
  %v1462 = vpop.permute.xlu0 %1461
  %v1464 = vadd.f32 %v1458, %v1462
  %v1465 = vtanh.pop %v1464
  %v1466 = vmul.f32 %v1455, %v1465
  %1468 = vrot.lane.b32.xlu0 %v1466, 64
  %v1469 = vpop.permute.xlu0 %1468
  %1471 = vst.msk [vmem:[%s938] sm:$0xff] %vm50, %v1469
  %1472 = vst.msk [vmem:[%s936] sm:$0xff] %vm393, %v1469
  %v1473 = vld [vmem:[%s725] sm:$0xff]
  %v1474 = vld [vmem:[%s725 + $0x8] sm:$0xff]
  %v1475 = vld [vmem:[%s722] sm:$0xff]
  %v1476 = vld [vmem:[%s722 + $0x8] sm:$0xff]
  %v1477 = vsel %vm283, %v1473, %v1475
  %v1478 = vsel %vm284, %v1474, %v1476
  %v1479 = vsel %vm292, %v1469, 0
  %1481 = vmatpush.msra.mxu0 0.0
  %1482 = vmatpush.msra.mxu0 0.0
  %1483 = vmatpush.msra.mxu0 0.0
  %1484 = vmatpush.msra.mxu0 0.0
  %1485 = vmatpush.msra.mxu0 0.0
  %1486 = vmatpush.msra.mxu0 0.0
  %1487 = vmatpush.msra.mxu0 0.0
  %1488 = vmatpush.msra.mxu0 0.0
  %1489 = vmatpush.msra.mxu0 %v275
  %1490 = vmatpush.msra.mxu0 %v273
  %1491 = vmatpush.msra.mxu0 %v271
  %1492 = vmatpush.msra.mxu0 %v269
  %1493 = vmatpush.msra.mxu0 %v267
  %1494 = vmatpush.msra.mxu0 %v265
  %1495 = vmatpush.msra.mxu0 %v263
  %1496 = vmatpush.msra.mxu0 %v261
  %1497 = vmatmul.f32.gmra.mxu0 %v1479
  %v1498 = vpop.f32.mrf.mxu0
  %v1499 = vadd.f32 0.0, %v1498
  %1500 = vdwg.mxu0
  %1501 = vmatpush.msra.mxu0 0.0
  %1502 = vmatpush.msra.mxu0 0.0
  %1503 = vmatpush.msra.mxu0 0.0
  %1504 = vmatpush.msra.mxu0 0.0
  %1505 = vmatpush.msra.mxu0 0.0
  %1506 = vmatpush.msra.mxu0 0.0
  %1507 = vmatpush.msra.mxu0 0.0
  %1508 = vmatpush.msra.mxu0 0.0
  %1509 = vmatpush.msra.mxu0 %v276
  %1510 = vmatpush.msra.mxu0 %v274
  %1511 = vmatpush.msra.mxu0 %v272
  %1512 = vmatpush.msra.mxu0 %v270
  %1513 = vmatpush.msra.mxu0 %v268
  %1514 = vmatpush.msra.mxu0 %v266
  %1515 = vmatpush.msra.mxu0 %v264
  %1516 = vmatpush.msra.mxu0 %v262
  %1517 = vmatmul.f32.gmra.mxu0 %v1479
  %v1518 = vpop.f32.mrf.mxu0
  %v1519 = vadd.f32 0.0, %v1518
  %1520 = vdwg.mxu0
  %v1521 = vadd.f32 %v1477, %v1499
  %v1522 = vadd.f32 %v1478, %v1519
  %v1523 = vxor.u32 %v1521, 2147483648
  %v1524 = vxor.u32 %v1522, 2147483648
  %v1525 = vmul.f32 %v1523, 1.442695
  %v1526 = vpow.pop %v1525
  %v1527 = vmul.f32 %v1524, 1.442695
  %v1528 = vpow.pop %v1527
  %v1529 = vadd.f32 %v1526, 1.0
  %v1530 = vadd.f32 %v1528, 1.0
  %v1531 = vrcp.pop %v1529
  %v1532 = vmul.f32 %v1529, %v1531
  %v1533 = vsub.f32 1.0, %v1532
  %v1534 = vmul.f32 %v1531, %v1533
  %v1535 = vadd.f32 %v1531, %v1534
  %vm1536 = vweird.f32 %v1529
  %vm1537 = vweird.f32 %v1531
  %vm1538 = vmor %vm1536, %vm1537
  %v1539 = vsel %vm1538, %v1531, %v1535
  %v1540 = vand.u32 2147483647, %v1529
  %vm1541 = vcmp.eq.f32.partialorder %v1540, 8.507059e+37
  %v1542 = vand.u32 %v1529, 2147483648
  %v1543 = vor.u32 1.1754944e-38, %v1542
  %v1544 = vsel %vm1541, %v1543, %v1539
  %v1545 = vmul.f32 1.0, %v1544
  %v1546 = vrcp.pop %v1530
  %v1547 = vmul.f32 %v1530, %v1546
  %v1548 = vsub.f32 1.0, %v1547
  %v1549 = vmul.f32 %v1546, %v1548
  %v1550 = vadd.f32 %v1546, %v1549
  %vm1551 = vweird.f32 %v1530
  %vm1552 = vweird.f32 %v1546
  %vm1553 = vmor %vm1551, %vm1552
  %v1554 = vsel %vm1553, %v1546, %v1550
  %v1555 = vand.u32 2147483647, %v1530
  %vm1556 = vcmp.eq.f32.partialorder %v1555, 8.507059e+37
  %v1557 = vand.u32 %v1530, 2147483648
  %v1558 = vor.u32 1.1754944e-38, %v1557
  %v1559 = vsel %vm1556, %v1558, %v1554
  %v1560 = vmul.f32 1.0, %v1559
  %v1561 = vmul.f32 %v1560, 2.0
  %v1562 = vsub.f32 %v1561, 1.0
  %v1563 = vmul.f32 %v1545, %v1464
  %v1564 = vmul.f32 %v1545, %v1562
  %1566 = vrot.lane.b32.xlu0 %v1564, 64
  %v1567 = vpop.permute.xlu0 %1566
  %v1569 = vadd.f32 %v1563, %v1567
  %v1570 = vtanh.pop %v1569
  %v1571 = vmul.f32 %v1560, %v1570
  %1573 = vrot.lane.b32.xlu0 %v1571, 64
  %v1574 = vpop.permute.xlu0 %1573
  %1576 = vst.msk [vmem:[%s829] sm:$0xff] %vm50, %v1574
  %1577 = vst.msk [vmem:[%s827] sm:$0xff] %vm393, %v1574
  %v1578 = vld [vmem:[%s616] sm:$0xff]
  %v1579 = vld [vmem:[%s616 + $0x8] sm:$0xff]
  %v1580 = vld [vmem:[%s613] sm:$0xff]
  %v1581 = vld [vmem:[%s613 + $0x8] sm:$0xff]
  %v1582 = vsel %vm283, %v1578, %v1580
  %v1583 = vsel %vm284, %v1579, %v1581
  %v1584 = vsel %vm292, %v1574, 0
  %1586 = vmatpush.msra.mxu0 0.0
  %1587 = vmatpush.msra.mxu0 0.0
  %1588 = vmatpush.msra.mxu0 0.0
  %1589 = vmatpush.msra.mxu0 0.0
  %1590 = vmatpush.msra.mxu0 0.0
  %1591 = vmatpush.msra.mxu0 0.0
  %1592 = vmatpush.msra.mxu0 0.0
  %1593 = vmatpush.msra.mxu0 0.0
  %1594 = vmatpush.msra.mxu0 %v275
  %1595 = vmatpush.msra.mxu0 %v273
  %1596 = vmatpush.msra.mxu0 %v271
  %1597 = vmatpush.msra.mxu0 %v269
  %1598 = vmatpush.msra.mxu0 %v267
  %1599 = vmatpush.msra.mxu0 %v265
  %1600 = vmatpush.msra.mxu0 %v263
  %1601 = vmatpush.msra.mxu0 %v261
  %1602 = vmatmul.f32.gmra.mxu0 %v1584
  %v1603 = vpop.f32.mrf.mxu0
  %v1604 = vadd.f32 0.0, %v1603
  %1605 = vdwg.mxu0
  %1606 = vmatpush.msra.mxu0 0.0
  %1607 = vmatpush.msra.mxu0 0.0
  %1608 = vmatpush.msra.mxu0 0.0
  %1609 = vmatpush.msra.mxu0 0.0
  %1610 = vmatpush.msra.mxu0 0.0
  %1611 = vmatpush.msra.mxu0 0.0
  %1612 = vmatpush.msra.mxu0 0.0
  %1613 = vmatpush.msra.mxu0 0.0
  %1614 = vmatpush.msra.mxu0 %v276
  %1615 = vmatpush.msra.mxu0 %v274
  %1616 = vmatpush.msra.mxu0 %v272
  %1617 = vmatpush.msra.mxu0 %v270
  %1618 = vmatpush.msra.mxu0 %v268
  %1619 = vmatpush.msra.mxu0 %v266
  %1620 = vmatpush.msra.mxu0 %v264
  %1621 = vmatpush.msra.mxu0 %v262
  %1622 = vmatmul.f32.gmra.mxu0 %v1584
  %v1623 = vpop.f32.mrf.mxu0
  %v1624 = vadd.f32 0.0, %v1623
  %1625 = vdwg.mxu0
  %v1626 = vadd.f32 %v1582, %v1604
  %v1627 = vadd.f32 %v1583, %v1624
  %v1628 = vxor.u32 %v1626, 2147483648
  %v1629 = vxor.u32 %v1627, 2147483648
  %v1630 = vmul.f32 %v1628, 1.442695
  %v1631 = vpow.pop %v1630
  %v1632 = vmul.f32 %v1629, 1.442695
  %v1633 = vpow.pop %v1632
  %v1634 = vadd.f32 %v1631, 1.0
  %v1635 = vadd.f32 %v1633, 1.0
  %v1636 = vrcp.pop %v1634
  %v1637 = vmul.f32 %v1634, %v1636
  %v1638 = vsub.f32 1.0, %v1637
  %v1639 = vmul.f32 %v1636, %v1638
  %v1640 = vadd.f32 %v1636, %v1639
  %vm1641 = vweird.f32 %v1634
  %vm1642 = vweird.f32 %v1636
  %vm1643 = vmor %vm1641, %vm1642
  %v1644 = vsel %vm1643, %v1636, %v1640
  %v1645 = vand.u32 2147483647, %v1634
  %vm1646 = vcmp.eq.f32.partialorder %v1645, 8.507059e+37
  %v1647 = vand.u32 %v1634, 2147483648
  %v1648 = vor.u32 1.1754944e-38, %v1647
  %v1649 = vsel %vm1646, %v1648, %v1644
  %v1650 = vmul.f32 1.0, %v1649
  %v1651 = vrcp.pop %v1635
  %v1652 = vmul.f32 %v1635, %v1651
  %v1653 = vsub.f32 1.0, %v1652
  %v1654 = vmul.f32 %v1651, %v1653
  %v1655 = vadd.f32 %v1651, %v1654
  %vm1656 = vweird.f32 %v1635
  %vm1657 = vweird.f32 %v1651
  %vm1658 = vmor %vm1656, %vm1657
  %v1659 = vsel %vm1658, %v1651, %v1655
  %v1660 = vand.u32 2147483647, %v1635
  %vm1661 = vcmp.eq.f32.partialorder %v1660, 8.507059e+37
  %v1662 = vand.u32 %v1635, 2147483648
  %v1663 = vor.u32 1.1754944e-38, %v1662
  %v1664 = vsel %vm1661, %v1663, %v1659
  %v1665 = vmul.f32 1.0, %v1664
  %v1666 = vmul.f32 %v1665, 2.0
  %v1667 = vsub.f32 %v1666, 1.0
  %v1668 = vmul.f32 %v1650, %v1569
  %v1669 = vmul.f32 %v1650, %v1667
  %1671 = vrot.lane.b32.xlu0 %v1669, 64
  %v1672 = vpop.permute.xlu0 %1671
  %v1674 = vadd.f32 %v1668, %v1672
  %v1675 = vtanh.pop %v1674
  %v1676 = vmul.f32 %v1665, %v1675
  %1678 = vrot.lane.b32.xlu0 %v1676, 64
  %v1679 = vpop.permute.xlu0 %1678
  %1681 = vst.msk [vmem:[%s720] sm:$0xff] %vm50, %v1679
  %1682 = vst.msk [vmem:[%s718] sm:$0xff] %vm393, %v1679
  %v1683 = vld [vmem:[%s507] sm:$0xff]
  %v1684 = vld [vmem:[%s507 + $0x8] sm:$0xff]
  %v1685 = vld [vmem:[%s504] sm:$0xff]
  %v1686 = vld [vmem:[%s504 + $0x8] sm:$0xff]
  %v1687 = vsel %vm283, %v1683, %v1685
  %v1688 = vsel %vm284, %v1684, %v1686
  %v1689 = vsel %vm292, %v1679, 0
  %1691 = vmatpush.msra.mxu0 0.0
  %1692 = vmatpush.msra.mxu0 0.0
  %1693 = vmatpush.msra.mxu0 0.0
  %1694 = vmatpush.msra.mxu0 0.0
  %1695 = vmatpush.msra.mxu0 0.0
  %1696 = vmatpush.msra.mxu0 0.0
  %1697 = vmatpush.msra.mxu0 0.0
  %1698 = vmatpush.msra.mxu0 0.0
  %1699 = vmatpush.msra.mxu0 %v275
  %1700 = vmatpush.msra.mxu0 %v273
  %1701 = vmatpush.msra.mxu0 %v271
  %1702 = vmatpush.msra.mxu0 %v269
  %1703 = vmatpush.msra.mxu0 %v267
  %1704 = vmatpush.msra.mxu0 %v265
  %1705 = vmatpush.msra.mxu0 %v263
  %1706 = vmatpush.msra.mxu0 %v261
  %1707 = vmatmul.f32.gmra.mxu0 %v1689
  %v1708 = vpop.f32.mrf.mxu0
  %v1709 = vadd.f32 0.0, %v1708
  %1710 = vdwg.mxu0
  %1711 = vmatpush.msra.mxu0 0.0
  %1712 = vmatpush.msra.mxu0 0.0
  %1713 = vmatpush.msra.mxu0 0.0
  %1714 = vmatpush.msra.mxu0 0.0
  %1715 = vmatpush.msra.mxu0 0.0
  %1716 = vmatpush.msra.mxu0 0.0
  %1717 = vmatpush.msra.mxu0 0.0
  %1718 = vmatpush.msra.mxu0 0.0
  %1719 = vmatpush.msra.mxu0 %v276
  %1720 = vmatpush.msra.mxu0 %v274
  %1721 = vmatpush.msra.mxu0 %v272
  %1722 = vmatpush.msra.mxu0 %v270
  %1723 = vmatpush.msra.mxu0 %v268
  %1724 = vmatpush.msra.mxu0 %v266
  %1725 = vmatpush.msra.mxu0 %v264
  %1726 = vmatpush.msra.mxu0 %v262
  %1727 = vmatmul.f32.gmra.mxu0 %v1689
  %v1728 = vpop.f32.mrf.mxu0
  %v1729 = vadd.f32 0.0, %v1728
  %1730 = vdwg.mxu0
  %v1731 = vadd.f32 %v1687, %v1709
  %v1732 = vadd.f32 %v1688, %v1729
  %v1733 = vxor.u32 %v1731, 2147483648
  %v1734 = vxor.u32 %v1732, 2147483648
  %v1735 = vmul.f32 %v1733, 1.442695
  %v1736 = vpow.pop %v1735
  %v1737 = vmul.f32 %v1734, 1.442695
  %v1738 = vpow.pop %v1737
  %v1739 = vadd.f32 %v1736, 1.0
  %v1740 = vadd.f32 %v1738, 1.0
  %v1741 = vrcp.pop %v1739
  %v1742 = vmul.f32 %v1739, %v1741
  %v1743 = vsub.f32 1.0, %v1742
  %v1744 = vmul.f32 %v1741, %v1743
  %v1745 = vadd.f32 %v1741, %v1744
  %vm1746 = vweird.f32 %v1739
  %vm1747 = vweird.f32 %v1741
  %vm1748 = vmor %vm1746, %vm1747
  %v1749 = vsel %vm1748, %v1741, %v1745
  %v1750 = vand.u32 2147483647, %v1739
  %vm1751 = vcmp.eq.f32.partialorder %v1750, 8.507059e+37
  %v1752 = vand.u32 %v1739, 2147483648
  %v1753 = vor.u32 1.1754944e-38, %v1752
  %v1754 = vsel %vm1751, %v1753, %v1749
  %v1755 = vmul.f32 1.0, %v1754
  %v1756 = vrcp.pop %v1740
  %v1757 = vmul.f32 %v1740, %v1756
  %v1758 = vsub.f32 1.0, %v1757
  %v1759 = vmul.f32 %v1756, %v1758
  %v1760 = vadd.f32 %v1756, %v1759
  %vm1761 = vweird.f32 %v1740
  %vm1762 = vweird.f32 %v1756
  %vm1763 = vmor %vm1761, %vm1762
  %v1764 = vsel %vm1763, %v1756, %v1760
  %v1765 = vand.u32 2147483647, %v1740
  %vm1766 = vcmp.eq.f32.partialorder %v1765, 8.507059e+37
  %v1767 = vand.u32 %v1740, 2147483648
  %v1768 = vor.u32 1.1754944e-38, %v1767
  %v1769 = vsel %vm1766, %v1768, %v1764
  %v1770 = vmul.f32 1.0, %v1769
  %v1771 = vmul.f32 %v1770, 2.0
  %v1772 = vsub.f32 %v1771, 1.0
  %v1773 = vmul.f32 %v1755, %v1674
  %v1774 = vmul.f32 %v1755, %v1772
  %1776 = vrot.lane.b32.xlu0 %v1774, 64
  %v1777 = vpop.permute.xlu0 %1776
  %v1779 = vadd.f32 %v1773, %v1777
  %v1780 = vtanh.pop %v1779
  %v1781 = vmul.f32 %v1770, %v1780
  %1783 = vrot.lane.b32.xlu0 %v1781, 64
  %v1784 = vpop.permute.xlu0 %1783
  %1786 = vst.msk [vmem:[%s611] sm:$0xff] %vm50, %v1784
  %1787 = vst.msk [vmem:[%s609] sm:$0xff] %vm393, %v1784
  %v1788 = vld [vmem:[%s398] sm:$0xff]
  %v1789 = vld [vmem:[%s398 + $0x8] sm:$0xff]
  %v1790 = vld [vmem:[%s395] sm:$0xff]
  %v1791 = vld [vmem:[%s395 + $0x8] sm:$0xff]
  %v1792 = vsel %vm283, %v1788, %v1790
  %v1793 = vsel %vm284, %v1789, %v1791
  %v1794 = vsel %vm292, %v1784, 0
  %1796 = vmatpush.msra.mxu0 0.0
  %1797 = vmatpush.msra.mxu0 0.0
  %1798 = vmatpush.msra.mxu0 0.0
  %1799 = vmatpush.msra.mxu0 0.0
  %1800 = vmatpush.msra.mxu0 0.0
  %1801 = vmatpush.msra.mxu0 0.0
  %1802 = vmatpush.msra.mxu0 0.0
  %1803 = vmatpush.msra.mxu0 0.0
  %1804 = vmatpush.msra.mxu0 %v275
  %1805 = vmatpush.msra.mxu0 %v273
  %1806 = vmatpush.msra.mxu0 %v271
  %1807 = vmatpush.msra.mxu0 %v269
  %1808 = vmatpush.msra.mxu0 %v267
  %1809 = vmatpush.msra.mxu0 %v265
  %1810 = vmatpush.msra.mxu0 %v263
  %1811 = vmatpush.msra.mxu0 %v261
  %1812 = vmatmul.f32.gmra.mxu0 %v1794
  %v1813 = vpop.f32.mrf.mxu0
  %v1814 = vadd.f32 0.0, %v1813
  %1815 = vdwg.mxu0
  %1816 = vmatpush.msra.mxu0 0.0
  %1817 = vmatpush.msra.mxu0 0.0
  %1818 = vmatpush.msra.mxu0 0.0
  %1819 = vmatpush.msra.mxu0 0.0
  %1820 = vmatpush.msra.mxu0 0.0
  %1821 = vmatpush.msra.mxu0 0.0
  %1822 = vmatpush.msra.mxu0 0.0
  %1823 = vmatpush.msra.mxu0 0.0
  %1824 = vmatpush.msra.mxu0 %v276
  %1825 = vmatpush.msra.mxu0 %v274
  %1826 = vmatpush.msra.mxu0 %v272
  %1827 = vmatpush.msra.mxu0 %v270
  %1828 = vmatpush.msra.mxu0 %v268
  %1829 = vmatpush.msra.mxu0 %v266
  %1830 = vmatpush.msra.mxu0 %v264
  %1831 = vmatpush.msra.mxu0 %v262
  %1832 = vmatmul.f32.gmra.mxu0 %v1794
  %v1833 = vpop.f32.mrf.mxu0
  %v1834 = vadd.f32 0.0, %v1833
  %1835 = vdwg.mxu0
  %v1836 = vadd.f32 %v1792, %v1814
  %v1837 = vadd.f32 %v1793, %v1834
  %v1838 = vxor.u32 %v1836, 2147483648
  %v1839 = vxor.u32 %v1837, 2147483648
  %v1840 = vmul.f32 %v1838, 1.442695
  %v1841 = vpow.pop %v1840
  %v1842 = vmul.f32 %v1839, 1.442695
  %v1843 = vpow.pop %v1842
  %v1844 = vadd.f32 %v1841, 1.0
  %v1845 = vadd.f32 %v1843, 1.0
  %v1846 = vrcp.pop %v1844
  %v1847 = vmul.f32 %v1844, %v1846
  %v1848 = vsub.f32 1.0, %v1847
  %v1849 = vmul.f32 %v1846, %v1848
  %v1850 = vadd.f32 %v1846, %v1849
  %vm1851 = vweird.f32 %v1844
  %vm1852 = vweird.f32 %v1846
  %vm1853 = vmor %vm1851, %vm1852
  %v1854 = vsel %vm1853, %v1846, %v1850
  %v1855 = vand.u32 2147483647, %v1844
  %vm1856 = vcmp.eq.f32.partialorder %v1855, 8.507059e+37
  %v1857 = vand.u32 %v1844, 2147483648
  %v1858 = vor.u32 1.1754944e-38, %v1857
  %v1859 = vsel %vm1856, %v1858, %v1854
  %v1860 = vmul.f32 1.0, %v1859
  %v1861 = vrcp.pop %v1845
  %v1862 = vmul.f32 %v1845, %v1861
  %v1863 = vsub.f32 1.0, %v1862
  %v1864 = vmul.f32 %v1861, %v1863
  %v1865 = vadd.f32 %v1861, %v1864
  %vm1866 = vweird.f32 %v1845
  %vm1867 = vweird.f32 %v1861
  %vm1868 = vmor %vm1866, %vm1867
  %v1869 = vsel %vm1868, %v1861, %v1865
  %v1870 = vand.u32 2147483647, %v1845
  %vm1871 = vcmp.eq.f32.partialorder %v1870, 8.507059e+37
  %v1872 = vand.u32 %v1845, 2147483648
  %v1873 = vor.u32 1.1754944e-38, %v1872
  %v1874 = vsel %vm1871, %v1873, %v1869
  %v1875 = vmul.f32 1.0, %v1874
  %v1876 = vmul.f32 %v1875, 2.0
  %v1877 = vsub.f32 %v1876, 1.0
  %v1878 = vmul.f32 %v1860, %v1779
  %v1879 = vmul.f32 %v1860, %v1877
  %1881 = vrot.lane.b32.xlu0 %v1879, 64
  %v1882 = vpop.permute.xlu0 %1881
  %v1884 = vadd.f32 %v1878, %v1882
  %v1885 = vtanh.pop %v1884
  %v1886 = vmul.f32 %v1875, %v1885
  %1888 = vrot.lane.b32.xlu0 %v1886, 64
  %v1889 = vpop.permute.xlu0 %1888
  %1891 = vst.msk [vmem:[%s502] sm:$0xff] %vm50, %v1889
  %1892 = vst.msk [vmem:[%s500] sm:$0xff] %vm393, %v1889
  %v1893 = vld [vmem:[%s287] sm:$0xff]
  %v1894 = vld [vmem:[%s287 + $0x8] sm:$0xff]
  %v1895 = vld [vmem:[#allocation2] sm:$0xff]
  %v1896 = vld [vmem:[#allocation2 + $0x8] sm:$0xff]
  %v1897 = vsel %vm283, %v1893, %v1895
  %v1898 = vsel %vm284, %v1894, %v1896
  %v1899 = vsel %vm292, %v1889, 0
  %1901 = vmatpush.msra.mxu0 0.0
  %1902 = vmatpush.msra.mxu0 0.0
  %1903 = vmatpush.msra.mxu0 0.0
  %1904 = vmatpush.msra.mxu0 0.0
  %1905 = vmatpush.msra.mxu0 0.0
  %1906 = vmatpush.msra.mxu0 0.0
  %1907 = vmatpush.msra.mxu0 0.0
  %1908 = vmatpush.msra.mxu0 0.0
  %1909 = vmatpush.msra.mxu0 %v275
  %1910 = vmatpush.msra.mxu0 %v273
  %1911 = vmatpush.msra.mxu0 %v271
  %1912 = vmatpush.msra.mxu0 %v269
  %1913 = vmatpush.msra.mxu0 %v267
  %1914 = vmatpush.msra.mxu0 %v265
  %1915 = vmatpush.msra.mxu0 %v263
  %1916 = vmatpush.msra.mxu0 %v261
  %1917 = vmatmul.f32.gmra.mxu0 %v1899
  %v1918 = vpop.f32.mrf.mxu0
  %v1919 = vadd.f32 0.0, %v1918
  %1920 = vdwg.mxu0
  %1921 = vmatpush.msra.mxu0 0.0
  %1922 = vmatpush.msra.mxu0 0.0
  %1923 = vmatpush.msra.mxu0 0.0
  %1924 = vmatpush.msra.mxu0 0.0
  %1925 = vmatpush.msra.mxu0 0.0
  %1926 = vmatpush.msra.mxu0 0.0
  %1927 = vmatpush.msra.mxu0 0.0
  %1928 = vmatpush.msra.mxu0 0.0
  %1929 = vmatpush.msra.mxu0 %v276
  %1930 = vmatpush.msra.mxu0 %v274
  %1931 = vmatpush.msra.mxu0 %v272
  %1932 = vmatpush.msra.mxu0 %v270
  %1933 = vmatpush.msra.mxu0 %v268
  %1934 = vmatpush.msra.mxu0 %v266
  %1935 = vmatpush.msra.mxu0 %v264
  %1936 = vmatpush.msra.mxu0 %v262
  %1937 = vmatmul.f32.gmra.mxu0 %v1899
  %v1938 = vpop.f32.mrf.mxu0
  %v1939 = vadd.f32 0.0, %v1938
  %1940 = vdwg.mxu0
  %v1941 = vadd.f32 %v1897, %v1919
  %v1942 = vadd.f32 %v1898, %v1939
  %v1943 = vxor.u32 %v1941, 2147483648
  %v1944 = vxor.u32 %v1942, 2147483648
  %v1945 = vmul.f32 %v1943, 1.442695
  %v1946 = vpow.pop %v1945
  %v1947 = vmul.f32 %v1944, 1.442695
  %v1948 = vpow.pop %v1947
  %v1949 = vadd.f32 %v1946, 1.0
  %v1950 = vadd.f32 %v1948, 1.0
  %v1951 = vrcp.pop %v1949
  %v1952 = vmul.f32 %v1949, %v1951
  %v1953 = vsub.f32 1.0, %v1952
  %v1954 = vmul.f32 %v1951, %v1953
  %v1955 = vadd.f32 %v1951, %v1954
  %vm1956 = vweird.f32 %v1949
  %vm1957 = vweird.f32 %v1951
  %vm1958 = vmor %vm1956, %vm1957
  %v1959 = vsel %vm1958, %v1951, %v1955
  %v1960 = vand.u32 2147483647, %v1949
  %vm1961 = vcmp.eq.f32.partialorder %v1960, 8.507059e+37
  %v1962 = vand.u32 %v1949, 2147483648
  %v1963 = vor.u32 1.1754944e-38, %v1962
  %v1964 = vsel %vm1961, %v1963, %v1959
  %v1965 = vmul.f32 1.0, %v1964
  %v1966 = vrcp.pop %v1950
  %v1967 = vmul.f32 %v1950, %v1966
  %v1968 = vsub.f32 1.0, %v1967
  %v1969 = vmul.f32 %v1966, %v1968
  %v1970 = vadd.f32 %v1966, %v1969
  %vm1971 = vweird.f32 %v1950
  %vm1972 = vweird.f32 %v1966
  %vm1973 = vmor %vm1971, %vm1972
  %v1974 = vsel %vm1973, %v1966, %v1970
  %v1975 = vand.u32 2147483647, %v1950
  %vm1976 = vcmp.eq.f32.partialorder %v1975, 8.507059e+37
  %v1977 = vand.u32 %v1950, 2147483648
  %v1978 = vor.u32 1.1754944e-38, %v1977
  %v1979 = vsel %vm1976, %v1978, %v1974
  %v1980 = vmul.f32 1.0, %v1979
  %v1981 = vmul.f32 %v1980, 2.0
  %v1982 = vsub.f32 %v1981, 1.0
  %v1983 = vmul.f32 %v1965, %v1884
  %v1984 = vmul.f32 %v1965, %v1982
  %1986 = vrot.lane.b32.xlu0 %v1984, 64
  %v1987 = vpop.permute.xlu0 %1986
  %v1989 = vadd.f32 %v1983, %v1987
  %v1990 = vtanh.pop %v1989
  %v1991 = vmul.f32 %v1980, %v1990
  %1993 = vrot.lane.b32.xlu0 %v1991, 64
  %v1994 = vpop.permute.xlu0 %1993
  %1996 = vst.msk [vmem:[%s392] sm:$0xff] %vm50, %v1994
  %1997 = vst.msk [vmem:[%s5] sm:$0xff] %vm393, %v1994
  // Predicated region
  $region22: #{c_rnn_forward.2} parent=0 // pred_check
    _
  $region23: #{c_rnn_forward.2} parent=0 // pred_check_branch
    %1999 = sbr.rel (0) target = $region25
  $region24: #{c_rnn_forward.2} parent=0 // pred_region
    _
  $region25: #{c_rnn_forward.2} parent=0 // pred_fallthru
    _
  // Predicated region
  $region26: #{c_rnn_forward.2} parent=0 // pred_check
    _
  $region27: #{c_rnn_forward.2} parent=0 // pred_check_branch
    %2001 = sbr.rel (0) target = $region29
  $region28: #{c_rnn_forward.2} parent=0 // pred_region
    _
  $region29: #{c_rnn_forward.2} parent=0 // pred_fallthru
    _

// kernel: c_rnn_forward.3
$region0: #{c_rnn_forward.3}
  #allocation0 [shape = 'u32[]', space=smem, size = 0x4, offset = 0x4, fixed_abs, tag = 'smem constant byte address 0x4 - core index']
  #allocation1 [shape = 'u32[72,128]{1,0:T(1,128)}', space=vmem, size = 0x9000, scoped, tag = 'internal scratch']
  #allocation2 [shape = 'f32[16,8,256]{2,1,0:T(8,128)}', space=vmem, size = 0x20000, scoped, tag = 'scratch operand']
  #allocation3 [shape = 'f32[22,8,32]{2,1,0:T(8,128)}', space=vmem, size = 0x16000, scoped, tag = 'scratch operand']
  %s0 = inlined_call_operand.vmem [shape: f32[16,8,64], index: 0, kind: input, shape index: {}]
  %s1 = inlined_call_operand.vmem [shape: f32[1,256], index: 1, kind: input, shape index: {}]
  %s2 = inlined_call_operand.vmem [shape: f32[64,256], index: 2, kind: input, shape index: {}]
  %s3 = inlined_call_operand.vmem [shape: f32[64,256], index: 3, kind: input, shape index: {}]
  %s4 = inlined_call_operand.vmem [shape: f32[1,256], index: 4, kind: input, shape index: {}]
  %s5 = inlined_call_operand.vmem [shape: f32[16,8,32], index: 5, kind: input, shape index: {}]
  %s6 = inlined_call_operand.vmem [shape: f32[7,32,128], index: 6, kind: input, shape index: {}]
  %s7 = inlined_call_operand.vmem [shape: f32[1,128], index: 7, kind: input, shape index: {}]
  %s8 = inlined_call_operand.vmem [shape: f32[1,128], index: 8, kind: input, shape index: {}]
  %s9 = inlined_call_operand.vmem [shape: f32[1,128], index: 9, kind: input, shape index: {}]
  %s10 = inlined_call_operand.vmem [shape: f32[128,256], index: 10, kind: input, shape index: {}]
  %s11 = inlined_call_operand.vmem [shape: f32[32,256], index: 11, kind: input, shape index: {}]
  %s12 = inlined_call_operand.vmem [shape: f32[32,256], index: 12, kind: input, shape index: {}]
  %s13 = inlined_call_operand.vmem [shape: f32[1,256], index: 13, kind: input, shape index: {}]
  %s14 = inlined_call_operand.vmem [shape: f32[256,128], index: 14, kind: input, shape index: {}]
  %s15 = inlined_call_operand.vmem [shape: f32[1,128], index: 15, kind: input, shape index: {}]
  %s16 = inlined_call_operand.vmem [shape: f32[128,5], index: 16, kind: input, shape index: {}]
  %s17 = inlined_call_operand.vmem [shape: f32[1,5], index: 17, kind: input, shape index: {}]
  %s18 = inlined_call_operand.hbm [shape: f32[8,5], index: 18, kind: output, shape index: {}]
  %s19 = sld [smem:[#allocation0]]
  $region82: #{c_rnn_forward.3} parent=0
    _
  %s21 = ssub.s32 1, %s19
  %s22 = scalar_select 0, %s21, %s19
  $region1: #{c_rnn_forward.3} parent=0
    #allocation4 [shape = 'u8[4096]{0}', space=vmem, size = 0x1000, scoped, tag = 'output window, operand 0, single buffered']
    #allocation5 [shape = 's32[1]{0}', space=sflag, size = 0x4, scoped, tag = 'scoped memory for c_rnn_forward.3']
    %23 = vsyncpa [#allocation5], 0
    // Predicated region
    $region2: #{c_rnn_forward.3} parent=1 // pred_check
      _
    $region3: #{c_rnn_forward.3} parent=1 // pred_check_branch
      %25 = sbr.rel (0) target = $region5
    $region4: #{c_rnn_forward.3} parent=1 // pred_region
      _
    $region5: #{c_rnn_forward.3} parent=1 // pred_fallthru
      _
    // Predicated region
    $region6: #{c_rnn_forward.3} parent=1 // pred_check
      _
    $region7: #{c_rnn_forward.3} parent=1 // pred_check_branch
      %27 = sbr.rel (0) target = $region9
    $region8: #{c_rnn_forward.3} parent=1 // pred_region
      _
    $region9: #{c_rnn_forward.3} parent=1 // pred_fallthru
      _
    // Predicated region
    $region10: #{c_rnn_forward.3} parent=1 // pred_check
      _
    $region11: #{c_rnn_forward.3} parent=1 // pred_check_branch
      %29 = sbr.rel (0) target = $region13
    $region12: #{c_rnn_forward.3} parent=1 // pred_region
      _
    $region13: #{c_rnn_forward.3} parent=1 // pred_fallthru
      _
    // Predicated region
    $region14: #{c_rnn_forward.3} parent=1 // pred_check
      _
    $region15: #{c_rnn_forward.3} parent=1 // pred_check_branch
      %31 = sbr.rel (0) target = $region17
    $region16: #{c_rnn_forward.3} parent=1 // pred_region
      _
    $region17: #{c_rnn_forward.3} parent=1 // pred_fallthru
      _
    // Predicated region
    $region18: #{c_rnn_forward.3} parent=1 // pred_check
      _
    $region19: #{c_rnn_forward.3} parent=1 // pred_check_branch
      %33 = sbr.rel (0) target = $region21
    $region20: #{c_rnn_forward.3} parent=1 // pred_region
      _
    $region21: #{c_rnn_forward.3} parent=1 // pred_fallthru
      _
    // Predicated region
    $region22: #{c_rnn_forward.3} parent=1 // pred_check
      _
    $region23: #{c_rnn_forward.3} parent=1 // pred_check_branch
      %35 = sbr.rel (0) target = $region25
    $region24: #{c_rnn_forward.3} parent=1 // pred_region
      _
    $region25: #{c_rnn_forward.3} parent=1 // pred_fallthru
      _
    // Predicated region
    $region26: #{c_rnn_forward.3} parent=1 // pred_check
      _
    $region27: #{c_rnn_forward.3} parent=1 // pred_check_branch
      %37 = sbr.rel (0) target = $region29
    $region28: #{c_rnn_forward.3} parent=1 // pred_region
      _
    $region29: #{c_rnn_forward.3} parent=1 // pred_fallthru
      _
    // Predicated region
    $region30: #{c_rnn_forward.3} parent=1 // pred_check
      _
    $region31: #{c_rnn_forward.3} parent=1 // pred_check_branch
      %39 = sbr.rel (0) target = $region33
    $region32: #{c_rnn_forward.3} parent=1 // pred_region
      _
    $region33: #{c_rnn_forward.3} parent=1 // pred_fallthru
      _
    // Predicated region
    $region34: #{c_rnn_forward.3} parent=1 // pred_check
      _
    $region35: #{c_rnn_forward.3} parent=1 // pred_check_branch
      %41 = sbr.rel (0) target = $region37
    $region36: #{c_rnn_forward.3} parent=1 // pred_region
      _
    $region37: #{c_rnn_forward.3} parent=1 // pred_fallthru
      _
    // Predicated region
    $region38: #{c_rnn_forward.3} parent=1 // pred_check
      _
    $region39: #{c_rnn_forward.3} parent=1 // pred_check_branch
      %43 = sbr.rel (0) target = $region41
    $region40: #{c_rnn_forward.3} parent=1 // pred_region
      _
    $region41: #{c_rnn_forward.3} parent=1 // pred_fallthru
      _
    // Predicated region
    $region42: #{c_rnn_forward.3} parent=1 // pred_check
      _
    $region43: #{c_rnn_forward.3} parent=1 // pred_check_branch
      %45 = sbr.rel (0) target = $region45
    $region44: #{c_rnn_forward.3} parent=1 // pred_region
      _
    $region45: #{c_rnn_forward.3} parent=1 // pred_fallthru
      _
    // Predicated region
    $region46: #{c_rnn_forward.3} parent=1 // pred_check
      _
    $region47: #{c_rnn_forward.3} parent=1 // pred_check_branch
      %47 = sbr.rel (0) target = $region49
    $region48: #{c_rnn_forward.3} parent=1 // pred_region
      _
    $region49: #{c_rnn_forward.3} parent=1 // pred_fallthru
      _
    // Predicated region
    $region50: #{c_rnn_forward.3} parent=1 // pred_check
      _
    $region51: #{c_rnn_forward.3} parent=1 // pred_check_branch
      %49 = sbr.rel (0) target = $region53
    $region52: #{c_rnn_forward.3} parent=1 // pred_region
      _
    $region53: #{c_rnn_forward.3} parent=1 // pred_fallthru
      _
    // Predicated region
    $region54: #{c_rnn_forward.3} parent=1 // pred_check
      _
    $region55: #{c_rnn_forward.3} parent=1 // pred_check_branch
      %51 = sbr.rel (0) target = $region57
    $region56: #{c_rnn_forward.3} parent=1 // pred_region
      _
    $region57: #{c_rnn_forward.3} parent=1 // pred_fallthru
      _
    // Predicated region
    $region58: #{c_rnn_forward.3} parent=1 // pred_check
      _
    $region59: #{c_rnn_forward.3} parent=1 // pred_check_branch
      %53 = sbr.rel (0) target = $region61
    $region60: #{c_rnn_forward.3} parent=1 // pred_region
      _
    $region61: #{c_rnn_forward.3} parent=1 // pred_fallthru
      _
    // Predicated region
    $region62: #{c_rnn_forward.3} parent=1 // pred_check
      _
    $region63: #{c_rnn_forward.3} parent=1 // pred_check_branch
      %55 = sbr.rel (0) target = $region65
    $region64: #{c_rnn_forward.3} parent=1 // pred_region
      _
    $region65: #{c_rnn_forward.3} parent=1 // pred_fallthru
      _
    // Predicated region
    $region66: #{c_rnn_forward.3} parent=1 // pred_check
      _
    $region67: #{c_rnn_forward.3} parent=1 // pred_check_branch
      %57 = sbr.rel (0) target = $region69
    $region68: #{c_rnn_forward.3} parent=1 // pred_region
      _
    $region69: #{c_rnn_forward.3} parent=1 // pred_fallthru
      _
    // Predicated region
    $region70: #{c_rnn_forward.3} parent=1 // pred_check
      _
    $region71: #{c_rnn_forward.3} parent=1 // pred_check_branch
      %59 = sbr.rel (0) target = $region73
    $region72: #{c_rnn_forward.3} parent=1 // pred_region
      _
    $region73: #{c_rnn_forward.3} parent=1 // pred_fallthru
      _
    %v60 = vld [vmem:[%s0] sm:$0xff]
    %v61 = vld [vmem:[%s0 + $0x8] sm:$0xff]
    %v62 = vld [vmem:[%s0 + $0x10] sm:$0xff]
    %v63 = vld [vmem:[%s0 + $0x18] sm:$0xff]
    %v64 = vld [vmem:[%s0 + $0x20] sm:$0xff]
    %v65 = vld [vmem:[%s0 + $0x28] sm:$0xff]
    %v66 = vld [vmem:[%s0 + $0x30] sm:$0xff]
    %v67 = vld [vmem:[%s0 + $0x38] sm:$0xff]
    %v68 = vld [vmem:[%s0 + $0x40] sm:$0xff]
    %v69 = vld [vmem:[%s0 + $0x48] sm:$0xff]
    %v70 = vld [vmem:[%s0 + $0x50] sm:$0xff]
    %v71 = vld [vmem:[%s0 + $0x58] sm:$0xff]
    %v72 = vld [vmem:[%s0 + $0x60] sm:$0xff]
    %v73 = vld [vmem:[%s0 + $0x68] sm:$0xff]
    %v74 = vld [vmem:[%s0 + $0x70] sm:$0xff]
    %v75 = vld [vmem:[%s0 + $0x78] sm:$0xff]
    %v76 = vld [vmem:[%s2] sm:$0xff]
    %v77 = vld [vmem:[%s2 + $0x8] sm:$0xff]
    %v78 = vld [vmem:[%s2 + $0x10] sm:$0xff]
    %v79 = vld [vmem:[%s2 + $0x18] sm:$0xff]
    %v80 = vld [vmem:[%s2 + $0x20] sm:$0xff]
    %v81 = vld [vmem:[%s2 + $0x28] sm:$0xff]
    %v82 = vld [vmem:[%s2 + $0x30] sm:$0xff]
    %v83 = vld [vmem:[%s2 + $0x38] sm:$0xff]
    %v84 = vld [vmem:[%s2 + $0x40] sm:$0xff]
    %v85 = vld [vmem:[%s2 + $0x48] sm:$0xff]
    %v86 = vld [vmem:[%s2 + $0x50] sm:$0xff]
    %v87 = vld [vmem:[%s2 + $0x58] sm:$0xff]
    %v88 = vld [vmem:[%s2 + $0x60] sm:$0xff]
    %v89 = vld [vmem:[%s2 + $0x68] sm:$0xff]
    %v90 = vld [vmem:[%s2 + $0x70] sm:$0xff]
    %v91 = vld [vmem:[%s2 + $0x78] sm:$0xff]
    %v92 = vld [vmem:[%s4] sm:$0x3]
    %v94 = vperm.slane %v92, 0
    %v95 = vperm.slane %v92, 1
    %vm98 = vcmask 523264
    %v100 = vsel %vm98, %v60, 0
    %v103 = vsel %vm98, %v61, 0
    %v106 = vsel %vm98, %v62, 0
    %v109 = vsel %vm98, %v63, 0
    %v112 = vsel %vm98, %v64, 0
    %v115 = vsel %vm98, %v65, 0
    %v118 = vsel %vm98, %v66, 0
    %v121 = vsel %vm98, %v67, 0
    %v124 = vsel %vm98, %v68, 0
    %v127 = vsel %vm98, %v69, 0
    %v130 = vsel %vm98, %v70, 0
    %v133 = vsel %vm98, %v71, 0
    %v136 = vsel %vm98, %v72, 0
    %v139 = vsel %vm98, %v73, 0
    %v142 = vsel %vm98, %v74, 0
    %v145 = vsel %vm98, %v75, 0
    %147 = vmatpush.msra.mxu0 0.0
    %148 = vmatpush.msra.mxu0 0.0
    %149 = vmatpush.msra.mxu0 0.0
    %150 = vmatpush.msra.mxu0 0.0
    %151 = vmatpush.msra.mxu0 0.0
    %152 = vmatpush.msra.mxu0 0.0
    %153 = vmatpush.msra.mxu0 0.0
    %154 = vmatpush.msra.mxu0 0.0
    %155 = vmatpush.msra.mxu0 %v90
    %156 = vmatpush.msra.mxu0 %v88
    %157 = vmatpush.msra.mxu0 %v86
    %158 = vmatpush.msra.mxu0 %v84
    %159 = vmatpush.msra.mxu0 %v82
    %160 = vmatpush.msra.mxu0 %v80
    %161 = vmatpush.msra.mxu0 %v78
    %162 = vmatpush.msra.mxu0 %v76
    %163 = vmatmul.f32.gmra.mxu0 %v100
    %v164 = vpop.f32.mrf.mxu0
    %v165 = vadd.f32 %v94, %v164
    %166 = vmatmul.f32.gmra.mxu0 %v103
    %v167 = vpop.f32.mrf.mxu0
    %v168 = vadd.f32 %v94, %v167
    %169 = vmatmul.f32.gmra.mxu0 %v106
    %v170 = vpop.f32.mrf.mxu0
    %v171 = vadd.f32 %v94, %v170
    %172 = vmatmul.f32.gmra.mxu0 %v109
    %v173 = vpop.f32.mrf.mxu0
    %v174 = vadd.f32 %v94, %v173
    %175 = vmatmul.f32.gmra.mxu0 %v112
    %v176 = vpop.f32.mrf.mxu0
    %v177 = vadd.f32 %v94, %v176
    %178 = vmatmul.f32.gmra.mxu0 %v115
    %v179 = vpop.f32.mrf.mxu0
    %v180 = vadd.f32 %v94, %v179
    %181 = vmatmul.f32.gmra.mxu0 %v118
    %v182 = vpop.f32.mrf.mxu0
    %v183 = vadd.f32 %v94, %v182
    %184 = vmatmul.f32.gmra.mxu0 %v121
    %v185 = vpop.f32.mrf.mxu0
    %v186 = vadd.f32 %v94, %v185
    %187 = vmatmul.f32.gmra.mxu0 %v124
    %v188 = vpop.f32.mrf.mxu0
    %v189 = vadd.f32 %v94, %v188
    %190 = vmatmul.f32.gmra.mxu0 %v127
    %v191 = vpop.f32.mrf.mxu0
    %v192 = vadd.f32 %v94, %v191
    %193 = vmatmul.f32.gmra.mxu0 %v130
    %v194 = vpop.f32.mrf.mxu0
    %v195 = vadd.f32 %v94, %v194
    %196 = vmatmul.f32.gmra.mxu0 %v133
    %v197 = vpop.f32.mrf.mxu0
    %v198 = vadd.f32 %v94, %v197
    %199 = vmatmul.f32.gmra.mxu0 %v136
    %v200 = vpop.f32.mrf.mxu0
    %v201 = vadd.f32 %v94, %v200
    %202 = vmatmul.f32.gmra.mxu0 %v139
    %v203 = vpop.f32.mrf.mxu0
    %v204 = vadd.f32 %v94, %v203
    %205 = vmatmul.f32.gmra.mxu0 %v142
    %v206 = vpop.f32.mrf.mxu0
    %v207 = vadd.f32 %v94, %v206
    %208 = vmatmul.f32.gmra.mxu0 %v145
    %v209 = vpop.f32.mrf.mxu0
    %v210 = vadd.f32 %v94, %v209
    %211 = vdwg.mxu0
    %212 = vmatpush.msra.mxu0 0.0
    %213 = vmatpush.msra.mxu0 0.0
    %214 = vmatpush.msra.mxu0 0.0
    %215 = vmatpush.msra.mxu0 0.0
    %216 = vmatpush.msra.mxu0 0.0
    %217 = vmatpush.msra.mxu0 0.0
    %218 = vmatpush.msra.mxu0 0.0
    %219 = vmatpush.msra.mxu0 0.0
    %220 = vmatpush.msra.mxu0 %v91
    %221 = vmatpush.msra.mxu0 %v89
    %222 = vmatpush.msra.mxu0 %v87
    %223 = vmatpush.msra.mxu0 %v85
    %224 = vmatpush.msra.mxu0 %v83
    %225 = vmatpush.msra.mxu0 %v81
    %226 = vmatpush.msra.mxu0 %v79
    %227 = vmatpush.msra.mxu0 %v77
    %228 = vmatmul.f32.gmra.mxu0 %v100
    %v229 = vpop.f32.mrf.mxu0
    %v230 = vadd.f32 %v95, %v229
    %231 = vmatmul.f32.gmra.mxu0 %v103
    %v232 = vpop.f32.mrf.mxu0
    %v233 = vadd.f32 %v95, %v232
    %234 = vmatmul.f32.gmra.mxu0 %v106
    %v235 = vpop.f32.mrf.mxu0
    %v236 = vadd.f32 %v95, %v235
    %237 = vmatmul.f32.gmra.mxu0 %v109
    %v238 = vpop.f32.mrf.mxu0
    %v239 = vadd.f32 %v95, %v238
    %240 = vmatmul.f32.gmra.mxu0 %v112
    %v241 = vpop.f32.mrf.mxu0
    %v242 = vadd.f32 %v95, %v241
    %243 = vmatmul.f32.gmra.mxu0 %v115
    %v244 = vpop.f32.mrf.mxu0
    %v245 = vadd.f32 %v95, %v244
    %246 = vmatmul.f32.gmra.mxu0 %v118
    %v247 = vpop.f32.mrf.mxu0
    %v248 = vadd.f32 %v95, %v247
    %249 = vmatmul.f32.gmra.mxu0 %v121
    %v250 = vpop.f32.mrf.mxu0
    %v251 = vadd.f32 %v95, %v250
    %252 = vmatmul.f32.gmra.mxu0 %v124
    %v253 = vpop.f32.mrf.mxu0
    %v254 = vadd.f32 %v95, %v253
    %255 = vmatmul.f32.gmra.mxu0 %v127
    %v256 = vpop.f32.mrf.mxu0
    %v257 = vadd.f32 %v95, %v256
    %258 = vmatmul.f32.gmra.mxu0 %v130
    %v259 = vpop.f32.mrf.mxu0
    %v260 = vadd.f32 %v95, %v259
    %261 = vmatmul.f32.gmra.mxu0 %v133
    %v262 = vpop.f32.mrf.mxu0
    %v263 = vadd.f32 %v95, %v262
    %264 = vmatmul.f32.gmra.mxu0 %v136
    %v265 = vpop.f32.mrf.mxu0
    %v266 = vadd.f32 %v95, %v265
    %267 = vmatmul.f32.gmra.mxu0 %v139
    %v268 = vpop.f32.mrf.mxu0
    %v269 = vadd.f32 %v95, %v268
    %270 = vmatmul.f32.gmra.mxu0 %v142
    %v271 = vpop.f32.mrf.mxu0
    %v272 = vadd.f32 %v95, %v271
    %273 = vmatmul.f32.gmra.mxu0 %v145
    %v274 = vpop.f32.mrf.mxu0
    %v275 = vadd.f32 %v95, %v274
    %276 = vdwg.mxu0
    %277 = vst [vmem:[#allocation2] sm:$0xff] %v165
    %278 = vst [vmem:[#allocation2 + $0x8] sm:$0xff] %v230
    %279 = vst [vmem:[#allocation2 + $0x10] sm:$0xff] %v168
    %280 = vst [vmem:[#allocation2 + $0x18] sm:$0xff] %v233
    %281 = vst [vmem:[#allocation2 + $0x20] sm:$0xff] %v171
    %282 = vst [vmem:[#allocation2 + $0x28] sm:$0xff] %v236
    %283 = vst [vmem:[#allocation2 + $0x30] sm:$0xff] %v174
    %284 = vst [vmem:[#allocation2 + $0x38] sm:$0xff] %v239
    %285 = vst [vmem:[#allocation2 + $0x40] sm:$0xff] %v177
    %286 = vst [vmem:[#allocation2 + $0x48] sm:$0xff] %v242
    %287 = vst [vmem:[#allocation2 + $0x50] sm:$0xff] %v180
    %288 = vst [vmem:[#allocation2 + $0x58] sm:$0xff] %v245
    %289 = vst [vmem:[#allocation2 + $0x60] sm:$0xff] %v183
    %290 = vst [vmem:[#allocation2 + $0x68] sm:$0xff] %v248
    %291 = vst [vmem:[#allocation2 + $0x70] sm:$0xff] %v186
    %292 = vst [vmem:[#allocation2 + $0x78] sm:$0xff] %v251
    %293 = vst [vmem:[#allocation2 + $0x80] sm:$0xff] %v189
    %294 = vst [vmem:[#allocation2 + $0x88] sm:$0xff] %v254
    %295 = vst [vmem:[#allocation2 + $0x90] sm:$0xff] %v192
    %296 = vst [vmem:[#allocation2 + $0x98] sm:$0xff] %v257
    %297 = vst [vmem:[#allocation2 + $0xa0] sm:$0xff] %v195
    %298 = vst [vmem:[#allocation2 + $0xa8] sm:$0xff] %v260
    %299 = vst [vmem:[#allocation2 + $0xb0] sm:$0xff] %v198
    %300 = vst [vmem:[#allocation2 + $0xb8] sm:$0xff] %v263
    %301 = vst [vmem:[#allocation2 + $0xc0] sm:$0xff] %v201
    %302 = vst [vmem:[#allocation2 + $0xc8] sm:$0xff] %v266
    %303 = vst [vmem:[#allocation2 + $0xd0] sm:$0xff] %v204
    %304 = vst [vmem:[#allocation2 + $0xd8] sm:$0xff] %v269
    %305 = vst [vmem:[#allocation2 + $0xe0] sm:$0xff] %v207
    %306 = vst [vmem:[#allocation2 + $0xe8] sm:$0xff] %v272
    %307 = vst [vmem:[#allocation2 + $0xf0] sm:$0xff] %v210
    %308 = vst [vmem:[#allocation2 + $0xf8] sm:$0xff] %v275
    %v309 = vld [vmem:[%s3] sm:$0xff]
    %v310 = vld [vmem:[%s3 + $0x8] sm:$0xff]
    %v311 = vld [vmem:[%s3 + $0x10] sm:$0xff]
    %v312 = vld [vmem:[%s3 + $0x18] sm:$0xff]
    %v313 = vld [vmem:[%s3 + $0x20] sm:$0xff]
    %v314 = vld [vmem:[%s3 + $0x28] sm:$0xff]
    %v315 = vld [vmem:[%s3 + $0x30] sm:$0xff]
    %v316 = vld [vmem:[%s3 + $0x38] sm:$0xff]
    %v317 = vld [vmem:[%s3 + $0x40] sm:$0xff]
    %v318 = vld [vmem:[%s3 + $0x48] sm:$0xff]
    %v319 = vld [vmem:[%s3 + $0x50] sm:$0xff]
    %v320 = vld [vmem:[%s3 + $0x58] sm:$0xff]
    %v321 = vld [vmem:[%s3 + $0x60] sm:$0xff]
    %v322 = vld [vmem:[%s3 + $0x68] sm:$0xff]
    %v323 = vld [vmem:[%s3 + $0x70] sm:$0xff]
    %v324 = vld [vmem:[%s3 + $0x78] sm:$0xff]
    %v325 = vld [vmem:[%s1] sm:$0x3]
    %v327 = vperm.slane %v325, 0
    %v328 = vperm.slane %v325, 1
    %vm331 = vcmp.gt.f32.partialorder %v327, 0.5
    %vm332 = vcmp.gt.f32.partialorder %v328, 0.5
    %v333 = vld [vmem:[#allocation2] sm:$0xff]
    %v334 = vld [vmem:[#allocation2 + $0x8] sm:$0xff]
    %s335 = scalar_lea.vmem [#allocation2], 240
    %v336 = vld [vmem:[%s335] sm:$0xff]
    %v337 = vld [vmem:[%s335 + $0x8] sm:$0xff]
    %v338 = vsel %vm331, %v333, %v336
    %v339 = vsel %vm332, %v334, %v337
    %v341 = vsel %vm98, 0.0, 0
    %343 = vmatpush.msra.mxu0 0.0
    %344 = vmatpush.msra.mxu0 0.0
    %345 = vmatpush.msra.mxu0 0.0
    %346 = vmatpush.msra.mxu0 0.0
    %347 = vmatpush.msra.mxu0 0.0
    %348 = vmatpush.msra.mxu0 0.0
    %349 = vmatpush.msra.mxu0 0.0
    %350 = vmatpush.msra.mxu0 0.0
    %351 = vmatpush.msra.mxu0 %v323
    %352 = vmatpush.msra.mxu0 %v321
    %353 = vmatpush.msra.mxu0 %v319
    %354 = vmatpush.msra.mxu0 %v317
    %355 = vmatpush.msra.mxu0 %v315
    %356 = vmatpush.msra.mxu0 %v313
    %357 = vmatpush.msra.mxu0 %v311
    %358 = vmatpush.msra.mxu0 %v309
    %359 = vmatmul.f32.gmra.mxu0 %v341
    %v360 = vpop.f32.mrf.mxu0
    %v361 = vadd.f32 0.0, %v360
    %362 = vdwg.mxu0
    %363 = vmatpush.msra.mxu0 0.0
    %364 = vmatpush.msra.mxu0 0.0
    %365 = vmatpush.msra.mxu0 0.0
    %366 = vmatpush.msra.mxu0 0.0
    %367 = vmatpush.msra.mxu0 0.0
    %368 = vmatpush.msra.mxu0 0.0
    %369 = vmatpush.msra.mxu0 0.0
    %370 = vmatpush.msra.mxu0 0.0
    %371 = vmatpush.msra.mxu0 %v324
    %372 = vmatpush.msra.mxu0 %v322
    %373 = vmatpush.msra.mxu0 %v320
    %374 = vmatpush.msra.mxu0 %v318
    %375 = vmatpush.msra.mxu0 %v316
    %376 = vmatpush.msra.mxu0 %v314
    %377 = vmatpush.msra.mxu0 %v312
    %378 = vmatpush.msra.mxu0 %v310
    %379 = vmatmul.f32.gmra.mxu0 %v341
    %v380 = vpop.f32.mrf.mxu0
    %v381 = vadd.f32 0.0, %v380
    %382 = vdwg.mxu0
    %v383 = vadd.f32 %v338, %v361
    %v384 = vadd.f32 %v339, %v381
    %v385 = vxor.u32 %v383, 2147483648
    %v386 = vxor.u32 %v384, 2147483648
    %v387 = vmul.f32 %v385, 1.442695
    %v388 = vpow.pop %v387
    %v389 = vmul.f32 %v386, 1.442695
    %v390 = vpow.pop %v389
    %v391 = vadd.f32 %v388, 1.0
    %v392 = vadd.f32 %v390, 1.0
    %v393 = vrcp.pop %v391
    %v394 = vmul.f32 %v391, %v393
    %v395 = vsub.f32 1.0, %v394
    %v396 = vmul.f32 %v393, %v395
    %v397 = vadd.f32 %v393, %v396
    %vm398 = vweird.f32 %v391
    %vm399 = vweird.f32 %v393
    %vm400 = vmor %vm398, %vm399
    %v401 = vsel %vm400, %v393, %v397
    %v402 = vand.u32 2147483647, %v391
    %vm403 = vcmp.eq.f32.partialorder %v402, 8.507059e+37
    %v404 = vand.u32 %v391, 2147483648
    %v405 = vor.u32 1.1754944e-38, %v404
    %v406 = vsel %vm403, %v405, %v401
    %v407 = vmul.f32 1.0, %v406
    %v408 = vrcp.pop %v392
    %v409 = vmul.f32 %v392, %v408
    %v410 = vsub.f32 1.0, %v409
    %v411 = vmul.f32 %v408, %v410
    %v412 = vadd.f32 %v408, %v411
    %vm413 = vweird.f32 %v392
    %vm414 = vweird.f32 %v408
    %vm415 = vmor %vm413, %vm414
    %v416 = vsel %vm415, %v408, %v412
    %v417 = vand.u32 2147483647, %v392
    %vm418 = vcmp.eq.f32.partialorder %v417, 8.507059e+37
    %v419 = vand.u32 %v392, 2147483648
    %v420 = vor.u32 1.1754944e-38, %v419
    %v421 = vsel %vm418, %v420, %v416
    %v422 = vmul.f32 1.0, %v421
    %v423 = vmul.f32 %v422, 2.0
    %v424 = vsub.f32 %v423, 1.0
    %v425 = vmul.f32 %v407, 0.0
    %v426 = vmul.f32 %v407, %v424
    %428 = vrot.lane.b32.xlu0 %v426, 64
    %v429 = vpop.permute.xlu0 %428
    %v431 = vadd.f32 %v425, %v429
    %v432 = vtanh.pop %v431
    %v433 = vmul.f32 %v422, %v432
    %s434 = scalar_lea.vmem [#allocation2], 16
    %v435 = vld [vmem:[%s434] sm:$0xff]
    %v436 = vld [vmem:[%s434 + $0x8] sm:$0xff]
    %s437 = scalar_lea.vmem [#allocation2], 224
    %v438 = vld [vmem:[%s437] sm:$0xff]
    %v439 = vld [vmem:[%s437 + $0x8] sm:$0xff]
    %v440 = vsel %vm331, %v435, %v438
    %v441 = vsel %vm332, %v436, %v439
    %443 = vrot.lane.b32.xlu0 %v433, 64
    %v444 = vpop.permute.xlu0 %443
    %v445 = vsel %vm98, %v444, 0
    %447 = vmatpush.msra.mxu0 0.0
    %448 = vmatpush.msra.mxu0 0.0
    %449 = vmatpush.msra.mxu0 0.0
    %450 = vmatpush.msra.mxu0 0.0
    %451 = vmatpush.msra.mxu0 0.0
    %452 = vmatpush.msra.mxu0 0.0
    %453 = vmatpush.msra.mxu0 0.0
    %454 = vmatpush.msra.mxu0 0.0
    %455 = vmatpush.msra.mxu0 %v323
    %456 = vmatpush.msra.mxu0 %v321
    %457 = vmatpush.msra.mxu0 %v319
    %458 = vmatpush.msra.mxu0 %v317
    %459 = vmatpush.msra.mxu0 %v315
    %460 = vmatpush.msra.mxu0 %v313
    %461 = vmatpush.msra.mxu0 %v311
    %462 = vmatpush.msra.mxu0 %v309
    %463 = vmatmul.f32.gmra.mxu0 %v445
    %v464 = vpop.f32.mrf.mxu0
    %v465 = vadd.f32 0.0, %v464
    %466 = vdwg.mxu0
    %467 = vmatpush.msra.mxu0 0.0
    %468 = vmatpush.msra.mxu0 0.0
    %469 = vmatpush.msra.mxu0 0.0
    %470 = vmatpush.msra.mxu0 0.0
    %471 = vmatpush.msra.mxu0 0.0
    %472 = vmatpush.msra.mxu0 0.0
    %473 = vmatpush.msra.mxu0 0.0
    %474 = vmatpush.msra.mxu0 0.0
    %475 = vmatpush.msra.mxu0 %v324
    %476 = vmatpush.msra.mxu0 %v322
    %477 = vmatpush.msra.mxu0 %v320
    %478 = vmatpush.msra.mxu0 %v318
    %479 = vmatpush.msra.mxu0 %v316
    %480 = vmatpush.msra.mxu0 %v314
    %481 = vmatpush.msra.mxu0 %v312
    %482 = vmatpush.msra.mxu0 %v310
    %483 = vmatmul.f32.gmra.mxu0 %v445
    %v484 = vpop.f32.mrf.mxu0
    %v485 = vadd.f32 0.0, %v484
    %486 = vdwg.mxu0
    %v487 = vadd.f32 %v440, %v465
    %v488 = vadd.f32 %v441, %v485
    %v489 = vxor.u32 %v487, 2147483648
    %v490 = vxor.u32 %v488, 2147483648
    %v491 = vmul.f32 %v489, 1.442695
    %v492 = vpow.pop %v491
    %v493 = vmul.f32 %v490, 1.442695
    %v494 = vpow.pop %v493
    %v495 = vadd.f32 %v492, 1.0
    %v496 = vadd.f32 %v494, 1.0
    %v497 = vrcp.pop %v495
    %v498 = vmul.f32 %v495, %v497
    %v499 = vsub.f32 1.0, %v498
    %v500 = vmul.f32 %v497, %v499
    %v501 = vadd.f32 %v497, %v500
    %vm502 = vweird.f32 %v495
    %vm503 = vweird.f32 %v497
    %vm504 = vmor %vm502, %vm503
    %v505 = vsel %vm504, %v497, %v501
    %v506 = vand.u32 2147483647, %v495
    %vm507 = vcmp.eq.f32.partialorder %v506, 8.507059e+37
    %v508 = vand.u32 %v495, 2147483648
    %v509 = vor.u32 1.1754944e-38, %v508
    %v510 = vsel %vm507, %v509, %v505
    %v511 = vmul.f32 1.0, %v510
    %v512 = vrcp.pop %v496
    %v513 = vmul.f32 %v496, %v512
    %v514 = vsub.f32 1.0, %v513
    %v515 = vmul.f32 %v512, %v514
    %v516 = vadd.f32 %v512, %v515
    %vm517 = vweird.f32 %v496
    %vm518 = vweird.f32 %v512
    %vm519 = vmor %vm517, %vm518
    %v520 = vsel %vm519, %v512, %v516
    %v521 = vand.u32 2147483647, %v496
    %vm522 = vcmp.eq.f32.partialorder %v521, 8.507059e+37
    %v523 = vand.u32 %v496, 2147483648
    %v524 = vor.u32 1.1754944e-38, %v523
    %v525 = vsel %vm522, %v524, %v520
    %v526 = vmul.f32 1.0, %v525
    %v527 = vmul.f32 %v526, 2.0
    %v528 = vsub.f32 %v527, 1.0
    %v529 = vmul.f32 %v511, %v431
    %v530 = vmul.f32 %v511, %v528
    %532 = vrot.lane.b32.xlu0 %v530, 64
    %v533 = vpop.permute.xlu0 %532
    %v535 = vadd.f32 %v529, %v533
    %v536 = vtanh.pop %v535
    %v537 = vmul.f32 %v526, %v536
    %s538 = scalar_lea.vmem [#allocation2], 32
    %v539 = vld [vmem:[%s538] sm:$0xff]
    %v540 = vld [vmem:[%s538 + $0x8] sm:$0xff]
    %s541 = scalar_lea.vmem [#allocation2], 208
    %v542 = vld [vmem:[%s541] sm:$0xff]
    %v543 = vld [vmem:[%s541 + $0x8] sm:$0xff]
    %v544 = vsel %vm331, %v539, %v542
    %v545 = vsel %vm332, %v540, %v543
    %547 = vrot.lane.b32.xlu0 %v537, 64
    %v548 = vpop.permute.xlu0 %547
    %v549 = vsel %vm98, %v548, 0
    %551 = vmatpush.msra.mxu0 0.0
    %552 = vmatpush.msra.mxu0 0.0
    %553 = vmatpush.msra.mxu0 0.0
    %554 = vmatpush.msra.mxu0 0.0
    %555 = vmatpush.msra.mxu0 0.0
    %556 = vmatpush.msra.mxu0 0.0
    %557 = vmatpush.msra.mxu0 0.0
    %558 = vmatpush.msra.mxu0 0.0
    %559 = vmatpush.msra.mxu0 %v323
    %560 = vmatpush.msra.mxu0 %v321
    %561 = vmatpush.msra.mxu0 %v319
    %562 = vmatpush.msra.mxu0 %v317
    %563 = vmatpush.msra.mxu0 %v315
    %564 = vmatpush.msra.mxu0 %v313
    %565 = vmatpush.msra.mxu0 %v311
    %566 = vmatpush.msra.mxu0 %v309
    %567 = vmatmul.f32.gmra.mxu0 %v549
    %v568 = vpop.f32.mrf.mxu0
    %v569 = vadd.f32 0.0, %v568
    %570 = vdwg.mxu0
    %571 = vmatpush.msra.mxu0 0.0
    %572 = vmatpush.msra.mxu0 0.0
    %573 = vmatpush.msra.mxu0 0.0
    %574 = vmatpush.msra.mxu0 0.0
    %575 = vmatpush.msra.mxu0 0.0
    %576 = vmatpush.msra.mxu0 0.0
    %577 = vmatpush.msra.mxu0 0.0
    %578 = vmatpush.msra.mxu0 0.0
    %579 = vmatpush.msra.mxu0 %v324
    %580 = vmatpush.msra.mxu0 %v322
    %581 = vmatpush.msra.mxu0 %v320
    %582 = vmatpush.msra.mxu0 %v318
    %583 = vmatpush.msra.mxu0 %v316
    %584 = vmatpush.msra.mxu0 %v314
    %585 = vmatpush.msra.mxu0 %v312
    %586 = vmatpush.msra.mxu0 %v310
    %587 = vmatmul.f32.gmra.mxu0 %v549
    %v588 = vpop.f32.mrf.mxu0
    %v589 = vadd.f32 0.0, %v588
    %590 = vdwg.mxu0
    %v591 = vadd.f32 %v544, %v569
    %v592 = vadd.f32 %v545, %v589
    %v593 = vxor.u32 %v591, 2147483648
    %v594 = vxor.u32 %v592, 2147483648
    %v595 = vmul.f32 %v593, 1.442695
    %v596 = vpow.pop %v595
    %v597 = vmul.f32 %v594, 1.442695
    %v598 = vpow.pop %v597
    %v599 = vadd.f32 %v596, 1.0
    %v600 = vadd.f32 %v598, 1.0
    %v601 = vrcp.pop %v599
    %v602 = vmul.f32 %v599, %v601
    %v603 = vsub.f32 1.0, %v602
    %v604 = vmul.f32 %v601, %v603
    %v605 = vadd.f32 %v601, %v604
    %vm606 = vweird.f32 %v599
    %vm607 = vweird.f32 %v601
    %vm608 = vmor %vm606, %vm607
    %v609 = vsel %vm608, %v601, %v605
    %v610 = vand.u32 2147483647, %v599
    %vm611 = vcmp.eq.f32.partialorder %v610, 8.507059e+37
    %v612 = vand.u32 %v599, 2147483648
    %v613 = vor.u32 1.1754944e-38, %v612
    %v614 = vsel %vm611, %v613, %v609
    %v615 = vmul.f32 1.0, %v614
    %v616 = vrcp.pop %v600
    %v617 = vmul.f32 %v600, %v616
    %v618 = vsub.f32 1.0, %v617
    %v619 = vmul.f32 %v616, %v618
    %v620 = vadd.f32 %v616, %v619
    %vm621 = vweird.f32 %v600
    %vm622 = vweird.f32 %v616
    %vm623 = vmor %vm621, %vm622
    %v624 = vsel %vm623, %v616, %v620
    %v625 = vand.u32 2147483647, %v600
    %vm626 = vcmp.eq.f32.partialorder %v625, 8.507059e+37
    %v627 = vand.u32 %v600, 2147483648
    %v628 = vor.u32 1.1754944e-38, %v627
    %v629 = vsel %vm626, %v628, %v624
    %v630 = vmul.f32 1.0, %v629
    %v631 = vmul.f32 %v630, 2.0
    %v632 = vsub.f32 %v631, 1.0
    %v633 = vmul.f32 %v615, %v535
    %v634 = vmul.f32 %v615, %v632
    %636 = vrot.lane.b32.xlu0 %v634, 64
    %v637 = vpop.permute.xlu0 %636
    %v639 = vadd.f32 %v633, %v637
    %v640 = vtanh.pop %v639
    %v641 = vmul.f32 %v630, %v640
    %s642 = scalar_lea.vmem [#allocation2], 48
    %v643 = vld [vmem:[%s642] sm:$0xff]
    %v644 = vld [vmem:[%s642 + $0x8] sm:$0xff]
    %s645 = scalar_lea.vmem [#allocation2], 192
    %v646 = vld [vmem:[%s645] sm:$0xff]
    %v647 = vld [vmem:[%s645 + $0x8] sm:$0xff]
    %v648 = vsel %vm331, %v643, %v646
    %v649 = vsel %vm332, %v644, %v647
    %651 = vrot.lane.b32.xlu0 %v641, 64
    %v652 = vpop.permute.xlu0 %651
    %v653 = vsel %vm98, %v652, 0
    %655 = vmatpush.msra.mxu0 0.0
    %656 = vmatpush.msra.mxu0 0.0
    %657 = vmatpush.msra.mxu0 0.0
    %658 = vmatpush.msra.mxu0 0.0
    %659 = vmatpush.msra.mxu0 0.0
    %660 = vmatpush.msra.mxu0 0.0
    %661 = vmatpush.msra.mxu0 0.0
    %662 = vmatpush.msra.mxu0 0.0
    %663 = vmatpush.msra.mxu0 %v323
    %664 = vmatpush.msra.mxu0 %v321
    %665 = vmatpush.msra.mxu0 %v319
    %666 = vmatpush.msra.mxu0 %v317
    %667 = vmatpush.msra.mxu0 %v315
    %668 = vmatpush.msra.mxu0 %v313
    %669 = vmatpush.msra.mxu0 %v311
    %670 = vmatpush.msra.mxu0 %v309
    %671 = vmatmul.f32.gmra.mxu0 %v653
    %v672 = vpop.f32.mrf.mxu0
    %v673 = vadd.f32 0.0, %v672
    %674 = vdwg.mxu0
    %675 = vmatpush.msra.mxu0 0.0
    %676 = vmatpush.msra.mxu0 0.0
    %677 = vmatpush.msra.mxu0 0.0
    %678 = vmatpush.msra.mxu0 0.0
    %679 = vmatpush.msra.mxu0 0.0
    %680 = vmatpush.msra.mxu0 0.0
    %681 = vmatpush.msra.mxu0 0.0
    %682 = vmatpush.msra.mxu0 0.0
    %683 = vmatpush.msra.mxu0 %v324
    %684 = vmatpush.msra.mxu0 %v322
    %685 = vmatpush.msra.mxu0 %v320
    %686 = vmatpush.msra.mxu0 %v318
    %687 = vmatpush.msra.mxu0 %v316
    %688 = vmatpush.msra.mxu0 %v314
    %689 = vmatpush.msra.mxu0 %v312
    %690 = vmatpush.msra.mxu0 %v310
    %691 = vmatmul.f32.gmra.mxu0 %v653
    %v692 = vpop.f32.mrf.mxu0
    %v693 = vadd.f32 0.0, %v692
    %694 = vdwg.mxu0
    %v695 = vadd.f32 %v648, %v673
    %v696 = vadd.f32 %v649, %v693
    %v697 = vxor.u32 %v695, 2147483648
    %v698 = vxor.u32 %v696, 2147483648
    %v699 = vmul.f32 %v697, 1.442695
    %v700 = vpow.pop %v699
    %v701 = vmul.f32 %v698, 1.442695
    %v702 = vpow.pop %v701
    %v703 = vadd.f32 %v700, 1.0
    %v704 = vadd.f32 %v702, 1.0
    %v705 = vrcp.pop %v703
    %v706 = vmul.f32 %v703, %v705
    %v707 = vsub.f32 1.0, %v706
    %v708 = vmul.f32 %v705, %v707
    %v709 = vadd.f32 %v705, %v708
    %vm710 = vweird.f32 %v703
    %vm711 = vweird.f32 %v705
    %vm712 = vmor %vm710, %vm711
    %v713 = vsel %vm712, %v705, %v709
    %v714 = vand.u32 2147483647, %v703
    %vm715 = vcmp.eq.f32.partialorder %v714, 8.507059e+37
    %v716 = vand.u32 %v703, 2147483648
    %v717 = vor.u32 1.1754944e-38, %v716
    %v718 = vsel %vm715, %v717, %v713
    %v719 = vmul.f32 1.0, %v718
    %v720 = vrcp.pop %v704
    %v721 = vmul.f32 %v704, %v720
    %v722 = vsub.f32 1.0, %v721
    %v723 = vmul.f32 %v720, %v722
    %v724 = vadd.f32 %v720, %v723
    %vm725 = vweird.f32 %v704
    %vm726 = vweird.f32 %v720
    %vm727 = vmor %vm725, %vm726
    %v728 = vsel %vm727, %v720, %v724
    %v729 = vand.u32 2147483647, %v704
    %vm730 = vcmp.eq.f32.partialorder %v729, 8.507059e+37
    %v731 = vand.u32 %v704, 2147483648
    %v732 = vor.u32 1.1754944e-38, %v731
    %v733 = vsel %vm730, %v732, %v728
    %v734 = vmul.f32 1.0, %v733
    %v735 = vmul.f32 %v734, 2.0
    %v736 = vsub.f32 %v735, 1.0
    %v737 = vmul.f32 %v719, %v639
    %v738 = vmul.f32 %v719, %v736
    %740 = vrot.lane.b32.xlu0 %v738, 64
    %v741 = vpop.permute.xlu0 %740
    %v743 = vadd.f32 %v737, %v741
    %v744 = vtanh.pop %v743
    %v745 = vmul.f32 %v734, %v744
    %s746 = scalar_lea.vmem [#allocation2], 64
    %v747 = vld [vmem:[%s746] sm:$0xff]
    %v748 = vld [vmem:[%s746 + $0x8] sm:$0xff]
    %s749 = scalar_lea.vmem [#allocation2], 176
    %v750 = vld [vmem:[%s749] sm:$0xff]
    %v751 = vld [vmem:[%s749 + $0x8] sm:$0xff]
    %v752 = vsel %vm331, %v747, %v750
    %v753 = vsel %vm332, %v748, %v751
    %755 = vrot.lane.b32.xlu0 %v745, 64
    %v756 = vpop.permute.xlu0 %755
    %v757 = vsel %vm98, %v756, 0
    %759 = vmatpush.msra.mxu0 0.0
    %760 = vmatpush.msra.mxu0 0.0
    %761 = vmatpush.msra.mxu0 0.0
    %762 = vmatpush.msra.mxu0 0.0
    %763 = vmatpush.msra.mxu0 0.0
    %764 = vmatpush.msra.mxu0 0.0
    %765 = vmatpush.msra.mxu0 0.0
    %766 = vmatpush.msra.mxu0 0.0
    %767 = vmatpush.msra.mxu0 %v323
    %768 = vmatpush.msra.mxu0 %v321
    %769 = vmatpush.msra.mxu0 %v319
    %770 = vmatpush.msra.mxu0 %v317
    %771 = vmatpush.msra.mxu0 %v315
    %772 = vmatpush.msra.mxu0 %v313
    %773 = vmatpush.msra.mxu0 %v311
    %774 = vmatpush.msra.mxu0 %v309
    %775 = vmatmul.f32.gmra.mxu0 %v757
    %v776 = vpop.f32.mrf.mxu0
    %v777 = vadd.f32 0.0, %v776
    %778 = vdwg.mxu0
    %779 = vmatpush.msra.mxu0 0.0
    %780 = vmatpush.msra.mxu0 0.0
    %781 = vmatpush.msra.mxu0 0.0
    %782 = vmatpush.msra.mxu0 0.0
    %783 = vmatpush.msra.mxu0 0.0
    %784 = vmatpush.msra.mxu0 0.0
    %785 = vmatpush.msra.mxu0 0.0
    %786 = vmatpush.msra.mxu0 0.0
    %787 = vmatpush.msra.mxu0 %v324
    %788 = vmatpush.msra.mxu0 %v322
    %789 = vmatpush.msra.mxu0 %v320
    %790 = vmatpush.msra.mxu0 %v318
    %791 = vmatpush.msra.mxu0 %v316
    %792 = vmatpush.msra.mxu0 %v314
    %793 = vmatpush.msra.mxu0 %v312
    %794 = vmatpush.msra.mxu0 %v310
    %795 = vmatmul.f32.gmra.mxu0 %v757
    %v796 = vpop.f32.mrf.mxu0
    %v797 = vadd.f32 0.0, %v796
    %798 = vdwg.mxu0
    %v799 = vadd.f32 %v752, %v777
    %v800 = vadd.f32 %v753, %v797
    %v801 = vxor.u32 %v799, 2147483648
    %v802 = vxor.u32 %v800, 2147483648
    %v803 = vmul.f32 %v801, 1.442695
    %v804 = vpow.pop %v803
    %v805 = vmul.f32 %v802, 1.442695
    %v806 = vpow.pop %v805
    %v807 = vadd.f32 %v804, 1.0
    %v808 = vadd.f32 %v806, 1.0
    %v809 = vrcp.pop %v807
    %v810 = vmul.f32 %v807, %v809
    %v811 = vsub.f32 1.0, %v810
    %v812 = vmul.f32 %v809, %v811
    %v813 = vadd.f32 %v809, %v812
    %vm814 = vweird.f32 %v807
    %vm815 = vweird.f32 %v809
    %vm816 = vmor %vm814, %vm815
    %v817 = vsel %vm816, %v809, %v813
    %v818 = vand.u32 2147483647, %v807
    %vm819 = vcmp.eq.f32.partialorder %v818, 8.507059e+37
    %v820 = vand.u32 %v807, 2147483648
    %v821 = vor.u32 1.1754944e-38, %v820
    %v822 = vsel %vm819, %v821, %v817
    %v823 = vmul.f32 1.0, %v822
    %v824 = vrcp.pop %v808
    %v825 = vmul.f32 %v808, %v824
    %v826 = vsub.f32 1.0, %v825
    %v827 = vmul.f32 %v824, %v826
    %v828 = vadd.f32 %v824, %v827
    %vm829 = vweird.f32 %v808
    %vm830 = vweird.f32 %v824
    %vm831 = vmor %vm829, %vm830
    %v832 = vsel %vm831, %v824, %v828
    %v833 = vand.u32 2147483647, %v808
    %vm834 = vcmp.eq.f32.partialorder %v833, 8.507059e+37
    %v835 = vand.u32 %v808, 2147483648
    %v836 = vor.u32 1.1754944e-38, %v835
    %v837 = vsel %vm834, %v836, %v832
    %v838 = vmul.f32 1.0, %v837
    %v839 = vmul.f32 %v838, 2.0
    %v840 = vsub.f32 %v839, 1.0
    %v841 = vmul.f32 %v823, %v743
    %v842 = vmul.f32 %v823, %v840
    %844 = vrot.lane.b32.xlu0 %v842, 64
    %v845 = vpop.permute.xlu0 %844
    %v847 = vadd.f32 %v841, %v845
    %v848 = vtanh.pop %v847
    %v849 = vmul.f32 %v838, %v848
    %s850 = scalar_lea.vmem [#allocation2], 80
    %v851 = vld [vmem:[%s850] sm:$0xff]
    %v852 = vld [vmem:[%s850 + $0x8] sm:$0xff]
    %s853 = scalar_lea.vmem [#allocation2], 160
    %v854 = vld [vmem:[%s853] sm:$0xff]
    %v855 = vld [vmem:[%s853 + $0x8] sm:$0xff]
    %v856 = vsel %vm331, %v851, %v854
    %v857 = vsel %vm332, %v852, %v855
    %859 = vrot.lane.b32.xlu0 %v849, 64
    %v860 = vpop.permute.xlu0 %859
    %v861 = vsel %vm98, %v860, 0
    %863 = vmatpush.msra.mxu0 0.0
    %864 = vmatpush.msra.mxu0 0.0
    %865 = vmatpush.msra.mxu0 0.0
    %866 = vmatpush.msra.mxu0 0.0
    %867 = vmatpush.msra.mxu0 0.0
    %868 = vmatpush.msra.mxu0 0.0
    %869 = vmatpush.msra.mxu0 0.0
    %870 = vmatpush.msra.mxu0 0.0
    %871 = vmatpush.msra.mxu0 %v323
    %872 = vmatpush.msra.mxu0 %v321
    %873 = vmatpush.msra.mxu0 %v319
    %874 = vmatpush.msra.mxu0 %v317
    %875 = vmatpush.msra.mxu0 %v315
    %876 = vmatpush.msra.mxu0 %v313
    %877 = vmatpush.msra.mxu0 %v311
    %878 = vmatpush.msra.mxu0 %v309
    %879 = vmatmul.f32.gmra.mxu0 %v861
    %v880 = vpop.f32.mrf.mxu0
    %v881 = vadd.f32 0.0, %v880
    %882 = vdwg.mxu0
    %883 = vmatpush.msra.mxu0 0.0
    %884 = vmatpush.msra.mxu0 0.0
    %885 = vmatpush.msra.mxu0 0.0
    %886 = vmatpush.msra.mxu0 0.0
    %887 = vmatpush.msra.mxu0 0.0
    %888 = vmatpush.msra.mxu0 0.0
    %889 = vmatpush.msra.mxu0 0.0
    %890 = vmatpush.msra.mxu0 0.0
    %891 = vmatpush.msra.mxu0 %v324
    %892 = vmatpush.msra.mxu0 %v322
    %893 = vmatpush.msra.mxu0 %v320
    %894 = vmatpush.msra.mxu0 %v318
    %895 = vmatpush.msra.mxu0 %v316
    %896 = vmatpush.msra.mxu0 %v314
    %897 = vmatpush.msra.mxu0 %v312
    %898 = vmatpush.msra.mxu0 %v310
    %899 = vmatmul.f32.gmra.mxu0 %v861
    %v900 = vpop.f32.mrf.mxu0
    %v901 = vadd.f32 0.0, %v900
    %902 = vdwg.mxu0
    %v903 = vadd.f32 %v856, %v881
    %v904 = vadd.f32 %v857, %v901
    %v905 = vxor.u32 %v903, 2147483648
    %v906 = vxor.u32 %v904, 2147483648
    %v907 = vmul.f32 %v905, 1.442695
    %v908 = vpow.pop %v907
    %v909 = vmul.f32 %v906, 1.442695
    %v910 = vpow.pop %v909
    %v911 = vadd.f32 %v908, 1.0
    %v912 = vadd.f32 %v910, 1.0
    %v913 = vrcp.pop %v911
    %v914 = vmul.f32 %v911, %v913
    %v915 = vsub.f32 1.0, %v914
    %v916 = vmul.f32 %v913, %v915
    %v917 = vadd.f32 %v913, %v916
    %vm918 = vweird.f32 %v911
    %vm919 = vweird.f32 %v913
    %vm920 = vmor %vm918, %vm919
    %v921 = vsel %vm920, %v913, %v917
    %v922 = vand.u32 2147483647, %v911
    %vm923 = vcmp.eq.f32.partialorder %v922, 8.507059e+37
    %v924 = vand.u32 %v911, 2147483648
    %v925 = vor.u32 1.1754944e-38, %v924
    %v926 = vsel %vm923, %v925, %v921
    %v927 = vmul.f32 1.0, %v926
    %v928 = vrcp.pop %v912
    %v929 = vmul.f32 %v912, %v928
    %v930 = vsub.f32 1.0, %v929
    %v931 = vmul.f32 %v928, %v930
    %v932 = vadd.f32 %v928, %v931
    %vm933 = vweird.f32 %v912
    %vm934 = vweird.f32 %v928
    %vm935 = vmor %vm933, %vm934
    %v936 = vsel %vm935, %v928, %v932
    %v937 = vand.u32 2147483647, %v912
    %vm938 = vcmp.eq.f32.partialorder %v937, 8.507059e+37
    %v939 = vand.u32 %v912, 2147483648
    %v940 = vor.u32 1.1754944e-38, %v939
    %v941 = vsel %vm938, %v940, %v936
    %v942 = vmul.f32 1.0, %v941
    %v943 = vmul.f32 %v942, 2.0
    %v944 = vsub.f32 %v943, 1.0
    %v945 = vmul.f32 %v927, %v847
    %v946 = vmul.f32 %v927, %v944
    %948 = vrot.lane.b32.xlu0 %v946, 64
    %v949 = vpop.permute.xlu0 %948
    %v951 = vadd.f32 %v945, %v949
    %v952 = vtanh.pop %v951
    %v953 = vmul.f32 %v942, %v952
    %s954 = scalar_lea.vmem [#allocation2], 96
    %v955 = vld [vmem:[%s954] sm:$0xff]
    %v956 = vld [vmem:[%s954 + $0x8] sm:$0xff]
    %s957 = scalar_lea.vmem [#allocation2], 144
    %v958 = vld [vmem:[%s957] sm:$0xff]
    %v959 = vld [vmem:[%s957 + $0x8] sm:$0xff]
    %v960 = vsel %vm331, %v955, %v958
    %v961 = vsel %vm332, %v956, %v959
    %963 = vrot.lane.b32.xlu0 %v953, 64
    %v964 = vpop.permute.xlu0 %963
    %v965 = vsel %vm98, %v964, 0
    %967 = vmatpush.msra.mxu0 0.0
    %968 = vmatpush.msra.mxu0 0.0
    %969 = vmatpush.msra.mxu0 0.0
    %970 = vmatpush.msra.mxu0 0.0
    %971 = vmatpush.msra.mxu0 0.0
    %972 = vmatpush.msra.mxu0 0.0
    %973 = vmatpush.msra.mxu0 0.0
    %974 = vmatpush.msra.mxu0 0.0
    %975 = vmatpush.msra.mxu0 %v323
    %976 = vmatpush.msra.mxu0 %v321
    %977 = vmatpush.msra.mxu0 %v319
    %978 = vmatpush.msra.mxu0 %v317
    %979 = vmatpush.msra.mxu0 %v315
    %980 = vmatpush.msra.mxu0 %v313
    %981 = vmatpush.msra.mxu0 %v311
    %982 = vmatpush.msra.mxu0 %v309
    %983 = vmatmul.f32.gmra.mxu0 %v965
    %v984 = vpop.f32.mrf.mxu0
    %v985 = vadd.f32 0.0, %v984
    %986 = vdwg.mxu0
    %987 = vmatpush.msra.mxu0 0.0
    %988 = vmatpush.msra.mxu0 0.0
    %989 = vmatpush.msra.mxu0 0.0
    %990 = vmatpush.msra.mxu0 0.0
    %991 = vmatpush.msra.mxu0 0.0
    %992 = vmatpush.msra.mxu0 0.0
    %993 = vmatpush.msra.mxu0 0.0
    %994 = vmatpush.msra.mxu0 0.0
    %995 = vmatpush.msra.mxu0 %v324
    %996 = vmatpush.msra.mxu0 %v322
    %997 = vmatpush.msra.mxu0 %v320
    %998 = vmatpush.msra.mxu0 %v318
    %999 = vmatpush.msra.mxu0 %v316
    %1000 = vmatpush.msra.mxu0 %v314
    %1001 = vmatpush.msra.mxu0 %v312
    %1002 = vmatpush.msra.mxu0 %v310
    %1003 = vmatmul.f32.gmra.mxu0 %v965
    %v1004 = vpop.f32.mrf.mxu0
    %v1005 = vadd.f32 0.0, %v1004
    %1006 = vdwg.mxu0
    %v1007 = vadd.f32 %v960, %v985
    %v1008 = vadd.f32 %v961, %v1005
    %v1009 = vxor.u32 %v1007, 2147483648
    %v1010 = vxor.u32 %v1008, 2147483648
    %v1011 = vmul.f32 %v1009, 1.442695
    %v1012 = vpow.pop %v1011
    %v1013 = vmul.f32 %v1010, 1.442695
    %v1014 = vpow.pop %v1013
    %v1015 = vadd.f32 %v1012, 1.0
    %v1016 = vadd.f32 %v1014, 1.0
    %v1017 = vrcp.pop %v1015
    %v1018 = vmul.f32 %v1015, %v1017
    %v1019 = vsub.f32 1.0, %v1018
    %v1020 = vmul.f32 %v1017, %v1019
    %v1021 = vadd.f32 %v1017, %v1020
    %vm1022 = vweird.f32 %v1015
    %vm1023 = vweird.f32 %v1017
    %vm1024 = vmor %vm1022, %vm1023
    %v1025 = vsel %vm1024, %v1017, %v1021
    %v1026 = vand.u32 2147483647, %v1015
    %vm1027 = vcmp.eq.f32.partialorder %v1026, 8.507059e+37
    %v1028 = vand.u32 %v1015, 2147483648
    %v1029 = vor.u32 1.1754944e-38, %v1028
    %v1030 = vsel %vm1027, %v1029, %v1025
    %v1031 = vmul.f32 1.0, %v1030
    %v1032 = vrcp.pop %v1016
    %v1033 = vmul.f32 %v1016, %v1032
    %v1034 = vsub.f32 1.0, %v1033
    %v1035 = vmul.f32 %v1032, %v1034
    %v1036 = vadd.f32 %v1032, %v1035
    %vm1037 = vweird.f32 %v1016
    %vm1038 = vweird.f32 %v1032
    %vm1039 = vmor %vm1037, %vm1038
    %v1040 = vsel %vm1039, %v1032, %v1036
    %v1041 = vand.u32 2147483647, %v1016
    %vm1042 = vcmp.eq.f32.partialorder %v1041, 8.507059e+37
    %v1043 = vand.u32 %v1016, 2147483648
    %v1044 = vor.u32 1.1754944e-38, %v1043
    %v1045 = vsel %vm1042, %v1044, %v1040
    %v1046 = vmul.f32 1.0, %v1045
    %v1047 = vmul.f32 %v1046, 2.0
    %v1048 = vsub.f32 %v1047, 1.0
    %v1049 = vmul.f32 %v1031, %v951
    %v1050 = vmul.f32 %v1031, %v1048
    %1052 = vrot.lane.b32.xlu0 %v1050, 64
    %v1053 = vpop.permute.xlu0 %1052
    %v1055 = vadd.f32 %v1049, %v1053
    %v1056 = vtanh.pop %v1055
    %v1057 = vmul.f32 %v1046, %v1056
    %s1058 = scalar_lea.vmem [#allocation2], 112
    %v1059 = vld [vmem:[%s1058] sm:$0xff]
    %v1060 = vld [vmem:[%s1058 + $0x8] sm:$0xff]
    %s1061 = scalar_lea.vmem [#allocation2], 128
    %v1062 = vld [vmem:[%s1061] sm:$0xff]
    %v1063 = vld [vmem:[%s1061 + $0x8] sm:$0xff]
    %v1064 = vsel %vm331, %v1059, %v1062
    %v1065 = vsel %vm332, %v1060, %v1063
    %1067 = vrot.lane.b32.xlu0 %v1057, 64
    %v1068 = vpop.permute.xlu0 %1067
    %v1069 = vsel %vm98, %v1068, 0
    %1071 = vmatpush.msra.mxu0 0.0
    %1072 = vmatpush.msra.mxu0 0.0
    %1073 = vmatpush.msra.mxu0 0.0
    %1074 = vmatpush.msra.mxu0 0.0
    %1075 = vmatpush.msra.mxu0 0.0
    %1076 = vmatpush.msra.mxu0 0.0
    %1077 = vmatpush.msra.mxu0 0.0
    %1078 = vmatpush.msra.mxu0 0.0
    %1079 = vmatpush.msra.mxu0 %v323
    %1080 = vmatpush.msra.mxu0 %v321
    %1081 = vmatpush.msra.mxu0 %v319
    %1082 = vmatpush.msra.mxu0 %v317
    %1083 = vmatpush.msra.mxu0 %v315
    %1084 = vmatpush.msra.mxu0 %v313
    %1085 = vmatpush.msra.mxu0 %v311
    %1086 = vmatpush.msra.mxu0 %v309
    %1087 = vmatmul.f32.gmra.mxu0 %v1069
    %v1088 = vpop.f32.mrf.mxu0
    %v1089 = vadd.f32 0.0, %v1088
    %1090 = vdwg.mxu0
    %1091 = vmatpush.msra.mxu0 0.0
    %1092 = vmatpush.msra.mxu0 0.0
    %1093 = vmatpush.msra.mxu0 0.0
    %1094 = vmatpush.msra.mxu0 0.0
    %1095 = vmatpush.msra.mxu0 0.0
    %1096 = vmatpush.msra.mxu0 0.0
    %1097 = vmatpush.msra.mxu0 0.0
    %1098 = vmatpush.msra.mxu0 0.0
    %1099 = vmatpush.msra.mxu0 %v324
    %1100 = vmatpush.msra.mxu0 %v322
    %1101 = vmatpush.msra.mxu0 %v320
    %1102 = vmatpush.msra.mxu0 %v318
    %1103 = vmatpush.msra.mxu0 %v316
    %1104 = vmatpush.msra.mxu0 %v314
    %1105 = vmatpush.msra.mxu0 %v312
    %1106 = vmatpush.msra.mxu0 %v310
    %1107 = vmatmul.f32.gmra.mxu0 %v1069
    %v1108 = vpop.f32.mrf.mxu0
    %v1109 = vadd.f32 0.0, %v1108
    %1110 = vdwg.mxu0
    %v1111 = vadd.f32 %v1064, %v1089
    %v1112 = vadd.f32 %v1065, %v1109
    %v1113 = vxor.u32 %v1111, 2147483648
    %v1114 = vxor.u32 %v1112, 2147483648
    %v1115 = vmul.f32 %v1113, 1.442695
    %v1116 = vpow.pop %v1115
    %v1117 = vmul.f32 %v1114, 1.442695
    %v1118 = vpow.pop %v1117
    %v1119 = vadd.f32 %v1116, 1.0
    %v1120 = vadd.f32 %v1118, 1.0
    %v1121 = vrcp.pop %v1119
    %v1122 = vmul.f32 %v1119, %v1121
    %v1123 = vsub.f32 1.0, %v1122
    %v1124 = vmul.f32 %v1121, %v1123
    %v1125 = vadd.f32 %v1121, %v1124
    %vm1126 = vweird.f32 %v1119
    %vm1127 = vweird.f32 %v1121
    %vm1128 = vmor %vm1126, %vm1127
    %v1129 = vsel %vm1128, %v1121, %v1125
    %v1130 = vand.u32 2147483647, %v1119
    %vm1131 = vcmp.eq.f32.partialorder %v1130, 8.507059e+37
    %v1132 = vand.u32 %v1119, 2147483648
    %v1133 = vor.u32 1.1754944e-38, %v1132
    %v1134 = vsel %vm1131, %v1133, %v1129
    %v1135 = vmul.f32 1.0, %v1134
    %v1136 = vrcp.pop %v1120
    %v1137 = vmul.f32 %v1120, %v1136
    %v1138 = vsub.f32 1.0, %v1137
    %v1139 = vmul.f32 %v1136, %v1138
    %v1140 = vadd.f32 %v1136, %v1139
    %vm1141 = vweird.f32 %v1120
    %vm1142 = vweird.f32 %v1136
    %vm1143 = vmor %vm1141, %vm1142
    %v1144 = vsel %vm1143, %v1136, %v1140
    %v1145 = vand.u32 2147483647, %v1120
    %vm1146 = vcmp.eq.f32.partialorder %v1145, 8.507059e+37
    %v1147 = vand.u32 %v1120, 2147483648
    %v1148 = vor.u32 1.1754944e-38, %v1147
    %v1149 = vsel %vm1146, %v1148, %v1144
    %v1150 = vmul.f32 1.0, %v1149
    %v1151 = vmul.f32 %v1150, 2.0
    %v1152 = vsub.f32 %v1151, 1.0
    %v1153 = vmul.f32 %v1135, %v1055
    %v1154 = vmul.f32 %v1135, %v1152
    %1156 = vrot.lane.b32.xlu0 %v1154, 64
    %v1157 = vpop.permute.xlu0 %1156
    %v1159 = vadd.f32 %v1153, %v1157
    %v1160 = vtanh.pop %v1159
    %v1161 = vmul.f32 %v1150, %v1160
    %v1162 = vsel %vm331, %v1062, %v1059
    %v1163 = vsel %vm332, %v1063, %v1060
    %1165 = vrot.lane.b32.xlu0 %v1161, 64
    %v1166 = vpop.permute.xlu0 %1165
    %v1167 = vsel %vm98, %v1166, 0
    %1169 = vmatpush.msra.mxu0 0.0
    %1170 = vmatpush.msra.mxu0 0.0
    %1171 = vmatpush.msra.mxu0 0.0
    %1172 = vmatpush.msra.mxu0 0.0
    %1173 = vmatpush.msra.mxu0 0.0
    %1174 = vmatpush.msra.mxu0 0.0
    %1175 = vmatpush.msra.mxu0 0.0
    %1176 = vmatpush.msra.mxu0 0.0
    %1177 = vmatpush.msra.mxu0 %v323
    %1178 = vmatpush.msra.mxu0 %v321
    %1179 = vmatpush.msra.mxu0 %v319
    %1180 = vmatpush.msra.mxu0 %v317
    %1181 = vmatpush.msra.mxu0 %v315
    %1182 = vmatpush.msra.mxu0 %v313
    %1183 = vmatpush.msra.mxu0 %v311
    %1184 = vmatpush.msra.mxu0 %v309
    %1185 = vmatmul.f32.gmra.mxu0 %v1167
    %v1186 = vpop.f32.mrf.mxu0
    %v1187 = vadd.f32 0.0, %v1186
    %1188 = vdwg.mxu0
    %1189 = vmatpush.msra.mxu0 0.0
    %1190 = vmatpush.msra.mxu0 0.0
    %1191 = vmatpush.msra.mxu0 0.0
    %1192 = vmatpush.msra.mxu0 0.0
    %1193 = vmatpush.msra.mxu0 0.0
    %1194 = vmatpush.msra.mxu0 0.0
    %1195 = vmatpush.msra.mxu0 0.0
    %1196 = vmatpush.msra.mxu0 0.0
    %1197 = vmatpush.msra.mxu0 %v324
    %1198 = vmatpush.msra.mxu0 %v322
    %1199 = vmatpush.msra.mxu0 %v320
    %1200 = vmatpush.msra.mxu0 %v318
    %1201 = vmatpush.msra.mxu0 %v316
    %1202 = vmatpush.msra.mxu0 %v314
    %1203 = vmatpush.msra.mxu0 %v312
    %1204 = vmatpush.msra.mxu0 %v310
    %1205 = vmatmul.f32.gmra.mxu0 %v1167
    %v1206 = vpop.f32.mrf.mxu0
    %v1207 = vadd.f32 0.0, %v1206
    %1208 = vdwg.mxu0
    %v1209 = vadd.f32 %v1162, %v1187
    %v1210 = vadd.f32 %v1163, %v1207
    %v1211 = vxor.u32 %v1209, 2147483648
    %v1212 = vxor.u32 %v1210, 2147483648
    %v1213 = vmul.f32 %v1211, 1.442695
    %v1214 = vpow.pop %v1213
    %v1215 = vmul.f32 %v1212, 1.442695
    %v1216 = vpow.pop %v1215
    %v1217 = vadd.f32 %v1214, 1.0
    %v1218 = vadd.f32 %v1216, 1.0
    %v1219 = vrcp.pop %v1217
    %v1220 = vmul.f32 %v1217, %v1219
    %v1221 = vsub.f32 1.0, %v1220
    %v1222 = vmul.f32 %v1219, %v1221
    %v1223 = vadd.f32 %v1219, %v1222
    %vm1224 = vweird.f32 %v1217
    %vm1225 = vweird.f32 %v1219
    %vm1226 = vmor %vm1224, %vm1225
    %v1227 = vsel %vm1226, %v1219, %v1223
    %v1228 = vand.u32 2147483647, %v1217
    %vm1229 = vcmp.eq.f32.partialorder %v1228, 8.507059e+37
    %v1230 = vand.u32 %v1217, 2147483648
    %v1231 = vor.u32 1.1754944e-38, %v1230
    %v1232 = vsel %vm1229, %v1231, %v1227
    %v1233 = vmul.f32 1.0, %v1232
    %v1234 = vrcp.pop %v1218
    %v1235 = vmul.f32 %v1218, %v1234
    %v1236 = vsub.f32 1.0, %v1235
    %v1237 = vmul.f32 %v1234, %v1236
    %v1238 = vadd.f32 %v1234, %v1237
    %vm1239 = vweird.f32 %v1218
    %vm1240 = vweird.f32 %v1234
    %vm1241 = vmor %vm1239, %vm1240
    %v1242 = vsel %vm1241, %v1234, %v1238
    %v1243 = vand.u32 2147483647, %v1218
    %vm1244 = vcmp.eq.f32.partialorder %v1243, 8.507059e+37
    %v1245 = vand.u32 %v1218, 2147483648
    %v1246 = vor.u32 1.1754944e-38, %v1245
    %v1247 = vsel %vm1244, %v1246, %v1242
    %v1248 = vmul.f32 1.0, %v1247
    %v1249 = vmul.f32 %v1248, 2.0
    %v1250 = vsub.f32 %v1249, 1.0
    %v1251 = vmul.f32 %v1233, %v1159
    %v1252 = vmul.f32 %v1233, %v1250
    %1254 = vrot.lane.b32.xlu0 %v1252, 64
    %v1255 = vpop.permute.xlu0 %1254
    %v1257 = vadd.f32 %v1251, %v1255
    %v1258 = vtanh.pop %v1257
    %v1259 = vmul.f32 %v1248, %v1258
    %v1260 = vsel %vm331, %v958, %v955
    %v1261 = vsel %vm332, %v959, %v956
    %1263 = vrot.lane.b32.xlu0 %v1259, 64
    %v1264 = vpop.permute.xlu0 %1263
    %v1265 = vsel %vm98, %v1264, 0
    %1267 = vmatpush.msra.mxu0 0.0
    %1268 = vmatpush.msra.mxu0 0.0
    %1269 = vmatpush.msra.mxu0 0.0
    %1270 = vmatpush.msra.mxu0 0.0
    %1271 = vmatpush.msra.mxu0 0.0
    %1272 = vmatpush.msra.mxu0 0.0
    %1273 = vmatpush.msra.mxu0 0.0
    %1274 = vmatpush.msra.mxu0 0.0
    %1275 = vmatpush.msra.mxu0 %v323
    %1276 = vmatpush.msra.mxu0 %v321
    %1277 = vmatpush.msra.mxu0 %v319
    %1278 = vmatpush.msra.mxu0 %v317
    %1279 = vmatpush.msra.mxu0 %v315
    %1280 = vmatpush.msra.mxu0 %v313
    %1281 = vmatpush.msra.mxu0 %v311
    %1282 = vmatpush.msra.mxu0 %v309
    %1283 = vmatmul.f32.gmra.mxu0 %v1265
    %v1284 = vpop.f32.mrf.mxu0
    %v1285 = vadd.f32 0.0, %v1284
    %1286 = vdwg.mxu0
    %1287 = vmatpush.msra.mxu0 0.0
    %1288 = vmatpush.msra.mxu0 0.0
    %1289 = vmatpush.msra.mxu0 0.0
    %1290 = vmatpush.msra.mxu0 0.0
    %1291 = vmatpush.msra.mxu0 0.0
    %1292 = vmatpush.msra.mxu0 0.0
    %1293 = vmatpush.msra.mxu0 0.0
    %1294 = vmatpush.msra.mxu0 0.0
    %1295 = vmatpush.msra.mxu0 %v324
    %1296 = vmatpush.msra.mxu0 %v322
    %1297 = vmatpush.msra.mxu0 %v320
    %1298 = vmatpush.msra.mxu0 %v318
    %1299 = vmatpush.msra.mxu0 %v316
    %1300 = vmatpush.msra.mxu0 %v314
    %1301 = vmatpush.msra.mxu0 %v312
    %1302 = vmatpush.msra.mxu0 %v310
    %1303 = vmatmul.f32.gmra.mxu0 %v1265
    %v1304 = vpop.f32.mrf.mxu0
    %v1305 = vadd.f32 0.0, %v1304
    %1306 = vdwg.mxu0
    %v1307 = vadd.f32 %v1260, %v1285
    %v1308 = vadd.f32 %v1261, %v1305
    %v1309 = vxor.u32 %v1307, 2147483648
    %v1310 = vxor.u32 %v1308, 2147483648
    %v1311 = vmul.f32 %v1309, 1.442695
    %v1312 = vpow.pop %v1311
    %v1313 = vmul.f32 %v1310, 1.442695
    %v1314 = vpow.pop %v1313
    %v1315 = vadd.f32 %v1312, 1.0
    %v1316 = vadd.f32 %v1314, 1.0
    %v1317 = vrcp.pop %v1315
    %v1318 = vmul.f32 %v1315, %v1317
    %v1319 = vsub.f32 1.0, %v1318
    %v1320 = vmul.f32 %v1317, %v1319
    %v1321 = vadd.f32 %v1317, %v1320
    %vm1322 = vweird.f32 %v1315
    %vm1323 = vweird.f32 %v1317
    %vm1324 = vmor %vm1322, %vm1323
    %v1325 = vsel %vm1324, %v1317, %v1321
    %v1326 = vand.u32 2147483647, %v1315
    %vm1327 = vcmp.eq.f32.partialorder %v1326, 8.507059e+37
    %v1328 = vand.u32 %v1315, 2147483648
    %v1329 = vor.u32 1.1754944e-38, %v1328
    %v1330 = vsel %vm1327, %v1329, %v1325
    %v1331 = vmul.f32 1.0, %v1330
    %v1332 = vrcp.pop %v1316
    %v1333 = vmul.f32 %v1316, %v1332
    %v1334 = vsub.f32 1.0, %v1333
    %v1335 = vmul.f32 %v1332, %v1334
    %v1336 = vadd.f32 %v1332, %v1335
    %vm1337 = vweird.f32 %v1316
    %vm1338 = vweird.f32 %v1332
    %vm1339 = vmor %vm1337, %vm1338
    %v1340 = vsel %vm1339, %v1332, %v1336
    %v1341 = vand.u32 2147483647, %v1316
    %vm1342 = vcmp.eq.f32.partialorder %v1341, 8.507059e+37
    %v1343 = vand.u32 %v1316, 2147483648
    %v1344 = vor.u32 1.1754944e-38, %v1343
    %v1345 = vsel %vm1342, %v1344, %v1340
    %v1346 = vmul.f32 1.0, %v1345
    %v1347 = vmul.f32 %v1346, 2.0
    %v1348 = vsub.f32 %v1347, 1.0
    %v1349 = vmul.f32 %v1331, %v1257
    %v1350 = vmul.f32 %v1331, %v1348
    %1352 = vrot.lane.b32.xlu0 %v1350, 64
    %v1353 = vpop.permute.xlu0 %1352
    %v1355 = vadd.f32 %v1349, %v1353
    %v1356 = vtanh.pop %v1355
    %v1357 = vmul.f32 %v1346, %v1356
    %v1358 = vsel %vm331, %v854, %v851
    %v1359 = vsel %vm332, %v855, %v852
    %1361 = vrot.lane.b32.xlu0 %v1357, 64
    %v1362 = vpop.permute.xlu0 %1361
    %v1363 = vsel %vm98, %v1362, 0
    %1365 = vmatpush.msra.mxu0 0.0
    %1366 = vmatpush.msra.mxu0 0.0
    %1367 = vmatpush.msra.mxu0 0.0
    %1368 = vmatpush.msra.mxu0 0.0
    %1369 = vmatpush.msra.mxu0 0.0
    %1370 = vmatpush.msra.mxu0 0.0
    %1371 = vmatpush.msra.mxu0 0.0
    %1372 = vmatpush.msra.mxu0 0.0
    %1373 = vmatpush.msra.mxu0 %v323
    %1374 = vmatpush.msra.mxu0 %v321
    %1375 = vmatpush.msra.mxu0 %v319
    %1376 = vmatpush.msra.mxu0 %v317
    %1377 = vmatpush.msra.mxu0 %v315
    %1378 = vmatpush.msra.mxu0 %v313
    %1379 = vmatpush.msra.mxu0 %v311
    %1380 = vmatpush.msra.mxu0 %v309
    %1381 = vmatmul.f32.gmra.mxu0 %v1363
    %v1382 = vpop.f32.mrf.mxu0
    %v1383 = vadd.f32 0.0, %v1382
    %1384 = vdwg.mxu0
    %1385 = vmatpush.msra.mxu0 0.0
    %1386 = vmatpush.msra.mxu0 0.0
    %1387 = vmatpush.msra.mxu0 0.0
    %1388 = vmatpush.msra.mxu0 0.0
    %1389 = vmatpush.msra.mxu0 0.0
    %1390 = vmatpush.msra.mxu0 0.0
    %1391 = vmatpush.msra.mxu0 0.0
    %1392 = vmatpush.msra.mxu0 0.0
    %1393 = vmatpush.msra.mxu0 %v324
    %1394 = vmatpush.msra.mxu0 %v322
    %1395 = vmatpush.msra.mxu0 %v320
    %1396 = vmatpush.msra.mxu0 %v318
    %1397 = vmatpush.msra.mxu0 %v316
    %1398 = vmatpush.msra.mxu0 %v314
    %1399 = vmatpush.msra.mxu0 %v312
    %1400 = vmatpush.msra.mxu0 %v310
    %1401 = vmatmul.f32.gmra.mxu0 %v1363
    %v1402 = vpop.f32.mrf.mxu0
    %v1403 = vadd.f32 0.0, %v1402
    %1404 = vdwg.mxu0
    %v1405 = vadd.f32 %v1358, %v1383
    %v1406 = vadd.f32 %v1359, %v1403
    %v1407 = vxor.u32 %v1405, 2147483648
    %v1408 = vxor.u32 %v1406, 2147483648
    %v1409 = vmul.f32 %v1407, 1.442695
    %v1410 = vpow.pop %v1409
    %v1411 = vmul.f32 %v1408, 1.442695
    %v1412 = vpow.pop %v1411
    %v1413 = vadd.f32 %v1410, 1.0
    %v1414 = vadd.f32 %v1412, 1.0
    %v1415 = vrcp.pop %v1413
    %v1416 = vmul.f32 %v1413, %v1415
    %v1417 = vsub.f32 1.0, %v1416
    %v1418 = vmul.f32 %v1415, %v1417
    %v1419 = vadd.f32 %v1415, %v1418
    %vm1420 = vweird.f32 %v1413
    %vm1421 = vweird.f32 %v1415
    %vm1422 = vmor %vm1420, %vm1421
    %v1423 = vsel %vm1422, %v1415, %v1419
    %v1424 = vand.u32 2147483647, %v1413
    %vm1425 = vcmp.eq.f32.partialorder %v1424, 8.507059e+37
    %v1426 = vand.u32 %v1413, 2147483648
    %v1427 = vor.u32 1.1754944e-38, %v1426
    %v1428 = vsel %vm1425, %v1427, %v1423
    %v1429 = vmul.f32 1.0, %v1428
    %v1430 = vrcp.pop %v1414
    %v1431 = vmul.f32 %v1414, %v1430
    %v1432 = vsub.f32 1.0, %v1431
    %v1433 = vmul.f32 %v1430, %v1432
    %v1434 = vadd.f32 %v1430, %v1433
    %vm1435 = vweird.f32 %v1414
    %vm1436 = vweird.f32 %v1430
    %vm1437 = vmor %vm1435, %vm1436
    %v1438 = vsel %vm1437, %v1430, %v1434
    %v1439 = vand.u32 2147483647, %v1414
    %vm1440 = vcmp.eq.f32.partialorder %v1439, 8.507059e+37
    %v1441 = vand.u32 %v1414, 2147483648
    %v1442 = vor.u32 1.1754944e-38, %v1441
    %v1443 = vsel %vm1440, %v1442, %v1438
    %v1444 = vmul.f32 1.0, %v1443
    %v1445 = vmul.f32 %v1444, 2.0
    %v1446 = vsub.f32 %v1445, 1.0
    %v1447 = vmul.f32 %v1429, %v1355
    %v1448 = vmul.f32 %v1429, %v1446
    %1450 = vrot.lane.b32.xlu0 %v1448, 64
    %v1451 = vpop.permute.xlu0 %1450
    %v1453 = vadd.f32 %v1447, %v1451
    %v1454 = vtanh.pop %v1453
    %v1455 = vmul.f32 %v1444, %v1454
    %v1456 = vsel %vm331, %v750, %v747
    %v1457 = vsel %vm332, %v751, %v748
    %1459 = vrot.lane.b32.xlu0 %v1455, 64
    %v1460 = vpop.permute.xlu0 %1459
    %v1461 = vsel %vm98, %v1460, 0
    %1463 = vmatpush.msra.mxu0 0.0
    %1464 = vmatpush.msra.mxu0 0.0
    %1465 = vmatpush.msra.mxu0 0.0
    %1466 = vmatpush.msra.mxu0 0.0
    %1467 = vmatpush.msra.mxu0 0.0
    %1468 = vmatpush.msra.mxu0 0.0
    %1469 = vmatpush.msra.mxu0 0.0
    %1470 = vmatpush.msra.mxu0 0.0
    %1471 = vmatpush.msra.mxu0 %v323
    %1472 = vmatpush.msra.mxu0 %v321
    %1473 = vmatpush.msra.mxu0 %v319
    %1474 = vmatpush.msra.mxu0 %v317
    %1475 = vmatpush.msra.mxu0 %v315
    %1476 = vmatpush.msra.mxu0 %v313
    %1477 = vmatpush.msra.mxu0 %v311
    %1478 = vmatpush.msra.mxu0 %v309
    %1479 = vmatmul.f32.gmra.mxu0 %v1461
    %v1480 = vpop.f32.mrf.mxu0
    %v1481 = vadd.f32 0.0, %v1480
    %1482 = vdwg.mxu0
    %1483 = vmatpush.msra.mxu0 0.0
    %1484 = vmatpush.msra.mxu0 0.0
    %1485 = vmatpush.msra.mxu0 0.0
    %1486 = vmatpush.msra.mxu0 0.0
    %1487 = vmatpush.msra.mxu0 0.0
    %1488 = vmatpush.msra.mxu0 0.0
    %1489 = vmatpush.msra.mxu0 0.0
    %1490 = vmatpush.msra.mxu0 0.0
    %1491 = vmatpush.msra.mxu0 %v324
    %1492 = vmatpush.msra.mxu0 %v322
    %1493 = vmatpush.msra.mxu0 %v320
    %1494 = vmatpush.msra.mxu0 %v318
    %1495 = vmatpush.msra.mxu0 %v316
    %1496 = vmatpush.msra.mxu0 %v314
    %1497 = vmatpush.msra.mxu0 %v312
    %1498 = vmatpush.msra.mxu0 %v310
    %1499 = vmatmul.f32.gmra.mxu0 %v1461
    %v1500 = vpop.f32.mrf.mxu0
    %v1501 = vadd.f32 0.0, %v1500
    %1502 = vdwg.mxu0
    %v1503 = vadd.f32 %v1456, %v1481
    %v1504 = vadd.f32 %v1457, %v1501
    %v1505 = vxor.u32 %v1503, 2147483648
    %v1506 = vxor.u32 %v1504, 2147483648
    %v1507 = vmul.f32 %v1505, 1.442695
    %v1508 = vpow.pop %v1507
    %v1509 = vmul.f32 %v1506, 1.442695
    %v1510 = vpow.pop %v1509
    %v1511 = vadd.f32 %v1508, 1.0
    %v1512 = vadd.f32 %v1510, 1.0
    %v1513 = vrcp.pop %v1511
    %v1514 = vmul.f32 %v1511, %v1513
    %v1515 = vsub.f32 1.0, %v1514
    %v1516 = vmul.f32 %v1513, %v1515
    %v1517 = vadd.f32 %v1513, %v1516
    %vm1518 = vweird.f32 %v1511
    %vm1519 = vweird.f32 %v1513
    %vm1520 = vmor %vm1518, %vm1519
    %v1521 = vsel %vm1520, %v1513, %v1517
    %v1522 = vand.u32 2147483647, %v1511
    %vm1523 = vcmp.eq.f32.partialorder %v1522, 8.507059e+37
    %v1524 = vand.u32 %v1511, 2147483648
    %v1525 = vor.u32 1.1754944e-38, %v1524
    %v1526 = vsel %vm1523, %v1525, %v1521
    %v1527 = vmul.f32 1.0, %v1526
    %v1528 = vrcp.pop %v1512
    %v1529 = vmul.f32 %v1512, %v1528
    %v1530 = vsub.f32 1.0, %v1529
    %v1531 = vmul.f32 %v1528, %v1530
    %v1532 = vadd.f32 %v1528, %v1531
    %vm1533 = vweird.f32 %v1512
    %vm1534 = vweird.f32 %v1528
    %vm1535 = vmor %vm1533, %vm1534
    %v1536 = vsel %vm1535, %v1528, %v1532
    %v1537 = vand.u32 2147483647, %v1512
    %vm1538 = vcmp.eq.f32.partialorder %v1537, 8.507059e+37
    %v1539 = vand.u32 %v1512, 2147483648
    %v1540 = vor.u32 1.1754944e-38, %v1539
    %v1541 = vsel %vm1538, %v1540, %v1536
    %v1542 = vmul.f32 1.0, %v1541
    %v1543 = vmul.f32 %v1542, 2.0
    %v1544 = vsub.f32 %v1543, 1.0
    %v1545 = vmul.f32 %v1527, %v1453
    %v1546 = vmul.f32 %v1527, %v1544
    %1548 = vrot.lane.b32.xlu0 %v1546, 64
    %v1549 = vpop.permute.xlu0 %1548
    %v1551 = vadd.f32 %v1545, %v1549
    %v1552 = vtanh.pop %v1551
    %v1553 = vmul.f32 %v1542, %v1552
    %v1554 = vsel %vm331, %v646, %v643
    %v1555 = vsel %vm332, %v647, %v644
    %1557 = vrot.lane.b32.xlu0 %v1553, 64
    %v1558 = vpop.permute.xlu0 %1557
    %v1559 = vsel %vm98, %v1558, 0
    %1561 = vmatpush.msra.mxu0 0.0
    %1562 = vmatpush.msra.mxu0 0.0
    %1563 = vmatpush.msra.mxu0 0.0
    %1564 = vmatpush.msra.mxu0 0.0
    %1565 = vmatpush.msra.mxu0 0.0
    %1566 = vmatpush.msra.mxu0 0.0
    %1567 = vmatpush.msra.mxu0 0.0
    %1568 = vmatpush.msra.mxu0 0.0
    %1569 = vmatpush.msra.mxu0 %v323
    %1570 = vmatpush.msra.mxu0 %v321
    %1571 = vmatpush.msra.mxu0 %v319
    %1572 = vmatpush.msra.mxu0 %v317
    %1573 = vmatpush.msra.mxu0 %v315
    %1574 = vmatpush.msra.mxu0 %v313
    %1575 = vmatpush.msra.mxu0 %v311
    %1576 = vmatpush.msra.mxu0 %v309
    %1577 = vmatmul.f32.gmra.mxu0 %v1559
    %v1578 = vpop.f32.mrf.mxu0
    %v1579 = vadd.f32 0.0, %v1578
    %1580 = vdwg.mxu0
    %1581 = vmatpush.msra.mxu0 0.0
    %1582 = vmatpush.msra.mxu0 0.0
    %1583 = vmatpush.msra.mxu0 0.0
    %1584 = vmatpush.msra.mxu0 0.0
    %1585 = vmatpush.msra.mxu0 0.0
    %1586 = vmatpush.msra.mxu0 0.0
    %1587 = vmatpush.msra.mxu0 0.0
    %1588 = vmatpush.msra.mxu0 0.0
    %1589 = vmatpush.msra.mxu0 %v324
    %1590 = vmatpush.msra.mxu0 %v322
    %1591 = vmatpush.msra.mxu0 %v320
    %1592 = vmatpush.msra.mxu0 %v318
    %1593 = vmatpush.msra.mxu0 %v316
    %1594 = vmatpush.msra.mxu0 %v314
    %1595 = vmatpush.msra.mxu0 %v312
    %1596 = vmatpush.msra.mxu0 %v310
    %1597 = vmatmul.f32.gmra.mxu0 %v1559
    %v1598 = vpop.f32.mrf.mxu0
    %v1599 = vadd.f32 0.0, %v1598
    %1600 = vdwg.mxu0
    %v1601 = vadd.f32 %v1554, %v1579
    %v1602 = vadd.f32 %v1555, %v1599
    %v1603 = vxor.u32 %v1601, 2147483648
    %v1604 = vxor.u32 %v1602, 2147483648
    %v1605 = vmul.f32 %v1603, 1.442695
    %v1606 = vpow.pop %v1605
    %v1607 = vmul.f32 %v1604, 1.442695
    %v1608 = vpow.pop %v1607
    %v1609 = vadd.f32 %v1606, 1.0
    %v1610 = vadd.f32 %v1608, 1.0
    %v1611 = vrcp.pop %v1609
    %v1612 = vmul.f32 %v1609, %v1611
    %v1613 = vsub.f32 1.0, %v1612
    %v1614 = vmul.f32 %v1611, %v1613
    %v1615 = vadd.f32 %v1611, %v1614
    %vm1616 = vweird.f32 %v1609
    %vm1617 = vweird.f32 %v1611
    %vm1618 = vmor %vm1616, %vm1617
    %v1619 = vsel %vm1618, %v1611, %v1615
    %v1620 = vand.u32 2147483647, %v1609
    %vm1621 = vcmp.eq.f32.partialorder %v1620, 8.507059e+37
    %v1622 = vand.u32 %v1609, 2147483648
    %v1623 = vor.u32 1.1754944e-38, %v1622
    %v1624 = vsel %vm1621, %v1623, %v1619
    %v1625 = vmul.f32 1.0, %v1624
    %v1626 = vrcp.pop %v1610
    %v1627 = vmul.f32 %v1610, %v1626
    %v1628 = vsub.f32 1.0, %v1627
    %v1629 = vmul.f32 %v1626, %v1628
    %v1630 = vadd.f32 %v1626, %v1629
    %vm1631 = vweird.f32 %v1610
    %vm1632 = vweird.f32 %v1626
    %vm1633 = vmor %vm1631, %vm1632
    %v1634 = vsel %vm1633, %v1626, %v1630
    %v1635 = vand.u32 2147483647, %v1610
    %vm1636 = vcmp.eq.f32.partialorder %v1635, 8.507059e+37
    %v1637 = vand.u32 %v1610, 2147483648
    %v1638 = vor.u32 1.1754944e-38, %v1637
    %v1639 = vsel %vm1636, %v1638, %v1634
    %v1640 = vmul.f32 1.0, %v1639
    %v1641 = vmul.f32 %v1640, 2.0
    %v1642 = vsub.f32 %v1641, 1.0
    %v1643 = vmul.f32 %v1625, %v1551
    %v1644 = vmul.f32 %v1625, %v1642
    %1646 = vrot.lane.b32.xlu0 %v1644, 64
    %v1647 = vpop.permute.xlu0 %1646
    %v1649 = vadd.f32 %v1643, %v1647
    %v1650 = vtanh.pop %v1649
    %v1651 = vmul.f32 %v1640, %v1650
    %v1652 = vsel %vm331, %v542, %v539
    %v1653 = vsel %vm332, %v543, %v540
    %1655 = vrot.lane.b32.xlu0 %v1651, 64
    %v1656 = vpop.permute.xlu0 %1655
    %v1657 = vsel %vm98, %v1656, 0
    %1659 = vmatpush.msra.mxu0 0.0
    %1660 = vmatpush.msra.mxu0 0.0
    %1661 = vmatpush.msra.mxu0 0.0
    %1662 = vmatpush.msra.mxu0 0.0
    %1663 = vmatpush.msra.mxu0 0.0
    %1664 = vmatpush.msra.mxu0 0.0
    %1665 = vmatpush.msra.mxu0 0.0
    %1666 = vmatpush.msra.mxu0 0.0
    %1667 = vmatpush.msra.mxu0 %v323
    %1668 = vmatpush.msra.mxu0 %v321
    %1669 = vmatpush.msra.mxu0 %v319
    %1670 = vmatpush.msra.mxu0 %v317
    %1671 = vmatpush.msra.mxu0 %v315
    %1672 = vmatpush.msra.mxu0 %v313
    %1673 = vmatpush.msra.mxu0 %v311
    %1674 = vmatpush.msra.mxu0 %v309
    %1675 = vmatmul.f32.gmra.mxu0 %v1657
    %v1676 = vpop.f32.mrf.mxu0
    %v1677 = vadd.f32 0.0, %v1676
    %1678 = vdwg.mxu0
    %1679 = vmatpush.msra.mxu0 0.0
    %1680 = vmatpush.msra.mxu0 0.0
    %1681 = vmatpush.msra.mxu0 0.0
    %1682 = vmatpush.msra.mxu0 0.0
    %1683 = vmatpush.msra.mxu0 0.0
    %1684 = vmatpush.msra.mxu0 0.0
    %1685 = vmatpush.msra.mxu0 0.0
    %1686 = vmatpush.msra.mxu0 0.0
    %1687 = vmatpush.msra.mxu0 %v324
    %1688 = vmatpush.msra.mxu0 %v322
    %1689 = vmatpush.msra.mxu0 %v320
    %1690 = vmatpush.msra.mxu0 %v318
    %1691 = vmatpush.msra.mxu0 %v316
    %1692 = vmatpush.msra.mxu0 %v314
    %1693 = vmatpush.msra.mxu0 %v312
    %1694 = vmatpush.msra.mxu0 %v310
    %1695 = vmatmul.f32.gmra.mxu0 %v1657
    %v1696 = vpop.f32.mrf.mxu0
    %v1697 = vadd.f32 0.0, %v1696
    %1698 = vdwg.mxu0
    %v1699 = vadd.f32 %v1652, %v1677
    %v1700 = vadd.f32 %v1653, %v1697
    %v1701 = vxor.u32 %v1699, 2147483648
    %v1702 = vxor.u32 %v1700, 2147483648
    %v1703 = vmul.f32 %v1701, 1.442695
    %v1704 = vpow.pop %v1703
    %v1705 = vmul.f32 %v1702, 1.442695
    %v1706 = vpow.pop %v1705
    %v1707 = vadd.f32 %v1704, 1.0
    %v1708 = vadd.f32 %v1706, 1.0
    %v1709 = vrcp.pop %v1707
    %v1710 = vmul.f32 %v1707, %v1709
    %v1711 = vsub.f32 1.0, %v1710
    %v1712 = vmul.f32 %v1709, %v1711
    %v1713 = vadd.f32 %v1709, %v1712
    %vm1714 = vweird.f32 %v1707
    %vm1715 = vweird.f32 %v1709
    %vm1716 = vmor %vm1714, %vm1715
    %v1717 = vsel %vm1716, %v1709, %v1713
    %v1718 = vand.u32 2147483647, %v1707
    %vm1719 = vcmp.eq.f32.partialorder %v1718, 8.507059e+37
    %v1720 = vand.u32 %v1707, 2147483648
    %v1721 = vor.u32 1.1754944e-38, %v1720
    %v1722 = vsel %vm1719, %v1721, %v1717
    %v1723 = vmul.f32 1.0, %v1722
    %v1724 = vrcp.pop %v1708
    %v1725 = vmul.f32 %v1708, %v1724
    %v1726 = vsub.f32 1.0, %v1725
    %v1727 = vmul.f32 %v1724, %v1726
    %v1728 = vadd.f32 %v1724, %v1727
    %vm1729 = vweird.f32 %v1708
    %vm1730 = vweird.f32 %v1724
    %vm1731 = vmor %vm1729, %vm1730
    %v1732 = vsel %vm1731, %v1724, %v1728
    %v1733 = vand.u32 2147483647, %v1708
    %vm1734 = vcmp.eq.f32.partialorder %v1733, 8.507059e+37
    %v1735 = vand.u32 %v1708, 2147483648
    %v1736 = vor.u32 1.1754944e-38, %v1735
    %v1737 = vsel %vm1734, %v1736, %v1732
    %v1738 = vmul.f32 1.0, %v1737
    %v1739 = vmul.f32 %v1738, 2.0
    %v1740 = vsub.f32 %v1739, 1.0
    %v1741 = vmul.f32 %v1723, %v1649
    %v1742 = vmul.f32 %v1723, %v1740
    %1744 = vrot.lane.b32.xlu0 %v1742, 64
    %v1745 = vpop.permute.xlu0 %1744
    %v1747 = vadd.f32 %v1741, %v1745
    %v1748 = vtanh.pop %v1747
    %v1749 = vmul.f32 %v1738, %v1748
    %v1750 = vsel %vm331, %v438, %v435
    %v1751 = vsel %vm332, %v439, %v436
    %1753 = vrot.lane.b32.xlu0 %v1749, 64
    %v1754 = vpop.permute.xlu0 %1753
    %v1755 = vsel %vm98, %v1754, 0
    %1757 = vmatpush.msra.mxu0 0.0
    %1758 = vmatpush.msra.mxu0 0.0
    %1759 = vmatpush.msra.mxu0 0.0
    %1760 = vmatpush.msra.mxu0 0.0
    %1761 = vmatpush.msra.mxu0 0.0
    %1762 = vmatpush.msra.mxu0 0.0
    %1763 = vmatpush.msra.mxu0 0.0
    %1764 = vmatpush.msra.mxu0 0.0
    %1765 = vmatpush.msra.mxu0 %v323
    %1766 = vmatpush.msra.mxu0 %v321
    %1767 = vmatpush.msra.mxu0 %v319
    %1768 = vmatpush.msra.mxu0 %v317
    %1769 = vmatpush.msra.mxu0 %v315
    %1770 = vmatpush.msra.mxu0 %v313
    %1771 = vmatpush.msra.mxu0 %v311
    %1772 = vmatpush.msra.mxu0 %v309
    %1773 = vmatmul.f32.gmra.mxu0 %v1755
    %v1774 = vpop.f32.mrf.mxu0
    %v1775 = vadd.f32 0.0, %v1774
    %1776 = vdwg.mxu0
    %1777 = vmatpush.msra.mxu0 0.0
    %1778 = vmatpush.msra.mxu0 0.0
    %1779 = vmatpush.msra.mxu0 0.0
    %1780 = vmatpush.msra.mxu0 0.0
    %1781 = vmatpush.msra.mxu0 0.0
    %1782 = vmatpush.msra.mxu0 0.0
    %1783 = vmatpush.msra.mxu0 0.0
    %1784 = vmatpush.msra.mxu0 0.0
    %1785 = vmatpush.msra.mxu0 %v324
    %1786 = vmatpush.msra.mxu0 %v322
    %1787 = vmatpush.msra.mxu0 %v320
    %1788 = vmatpush.msra.mxu0 %v318
    %1789 = vmatpush.msra.mxu0 %v316
    %1790 = vmatpush.msra.mxu0 %v314
    %1791 = vmatpush.msra.mxu0 %v312
    %1792 = vmatpush.msra.mxu0 %v310
    %1793 = vmatmul.f32.gmra.mxu0 %v1755
    %v1794 = vpop.f32.mrf.mxu0
    %v1795 = vadd.f32 0.0, %v1794
    %1796 = vdwg.mxu0
    %v1797 = vadd.f32 %v1750, %v1775
    %v1798 = vadd.f32 %v1751, %v1795
    %v1799 = vxor.u32 %v1797, 2147483648
    %v1800 = vxor.u32 %v1798, 2147483648
    %v1801 = vmul.f32 %v1799, 1.442695
    %v1802 = vpow.pop %v1801
    %v1803 = vmul.f32 %v1800, 1.442695
    %v1804 = vpow.pop %v1803
    %v1805 = vadd.f32 %v1802, 1.0
    %v1806 = vadd.f32 %v1804, 1.0
    %v1807 = vrcp.pop %v1805
    %v1808 = vmul.f32 %v1805, %v1807
    %v1809 = vsub.f32 1.0, %v1808
    %v1810 = vmul.f32 %v1807, %v1809
    %v1811 = vadd.f32 %v1807, %v1810
    %vm1812 = vweird.f32 %v1805
    %vm1813 = vweird.f32 %v1807
    %vm1814 = vmor %vm1812, %vm1813
    %v1815 = vsel %vm1814, %v1807, %v1811
    %v1816 = vand.u32 2147483647, %v1805
    %vm1817 = vcmp.eq.f32.partialorder %v1816, 8.507059e+37
    %v1818 = vand.u32 %v1805, 2147483648
    %v1819 = vor.u32 1.1754944e-38, %v1818
    %v1820 = vsel %vm1817, %v1819, %v1815
    %v1821 = vmul.f32 1.0, %v1820
    %v1822 = vrcp.pop %v1806
    %v1823 = vmul.f32 %v1806, %v1822
    %v1824 = vsub.f32 1.0, %v1823
    %v1825 = vmul.f32 %v1822, %v1824
    %v1826 = vadd.f32 %v1822, %v1825
    %vm1827 = vweird.f32 %v1806
    %vm1828 = vweird.f32 %v1822
    %vm1829 = vmor %vm1827, %vm1828
    %v1830 = vsel %vm1829, %v1822, %v1826
    %v1831 = vand.u32 2147483647, %v1806
    %vm1832 = vcmp.eq.f32.partialorder %v1831, 8.507059e+37
    %v1833 = vand.u32 %v1806, 2147483648
    %v1834 = vor.u32 1.1754944e-38, %v1833
    %v1835 = vsel %vm1832, %v1834, %v1830
    %v1836 = vmul.f32 1.0, %v1835
    %v1837 = vmul.f32 %v1836, 2.0
    %v1838 = vsub.f32 %v1837, 1.0
    %v1839 = vmul.f32 %v1821, %v1747
    %v1840 = vmul.f32 %v1821, %v1838
    %1842 = vrot.lane.b32.xlu0 %v1840, 64
    %v1843 = vpop.permute.xlu0 %1842
    %v1845 = vadd.f32 %v1839, %v1843
    %v1846 = vtanh.pop %v1845
    %v1847 = vmul.f32 %v1836, %v1846
    %v1848 = vsel %vm331, %v336, %v333
    %v1849 = vsel %vm332, %v337, %v334
    %1851 = vrot.lane.b32.xlu0 %v1847, 64
    %v1852 = vpop.permute.xlu0 %1851
    %v1853 = vsel %vm98, %v1852, 0
    %1855 = vmatpush.msra.mxu0 0.0
    %1856 = vmatpush.msra.mxu0 0.0
    %1857 = vmatpush.msra.mxu0 0.0
    %1858 = vmatpush.msra.mxu0 0.0
    %1859 = vmatpush.msra.mxu0 0.0
    %1860 = vmatpush.msra.mxu0 0.0
    %1861 = vmatpush.msra.mxu0 0.0
    %1862 = vmatpush.msra.mxu0 0.0
    %1863 = vmatpush.msra.mxu0 %v323
    %1864 = vmatpush.msra.mxu0 %v321
    %1865 = vmatpush.msra.mxu0 %v319
    %1866 = vmatpush.msra.mxu0 %v317
    %1867 = vmatpush.msra.mxu0 %v315
    %1868 = vmatpush.msra.mxu0 %v313
    %1869 = vmatpush.msra.mxu0 %v311
    %1870 = vmatpush.msra.mxu0 %v309
    %1871 = vmatmul.f32.gmra.mxu0 %v1853
    %v1872 = vpop.f32.mrf.mxu0
    %v1873 = vadd.f32 0.0, %v1872
    %1874 = vdwg.mxu0
    %1875 = vmatpush.msra.mxu0 0.0
    %1876 = vmatpush.msra.mxu0 0.0
    %1877 = vmatpush.msra.mxu0 0.0
    %1878 = vmatpush.msra.mxu0 0.0
    %1879 = vmatpush.msra.mxu0 0.0
    %1880 = vmatpush.msra.mxu0 0.0
    %1881 = vmatpush.msra.mxu0 0.0
    %1882 = vmatpush.msra.mxu0 0.0
    %1883 = vmatpush.msra.mxu0 %v324
    %1884 = vmatpush.msra.mxu0 %v322
    %1885 = vmatpush.msra.mxu0 %v320
    %1886 = vmatpush.msra.mxu0 %v318
    %1887 = vmatpush.msra.mxu0 %v316
    %1888 = vmatpush.msra.mxu0 %v314
    %1889 = vmatpush.msra.mxu0 %v312
    %1890 = vmatpush.msra.mxu0 %v310
    %1891 = vmatmul.f32.gmra.mxu0 %v1853
    %v1892 = vpop.f32.mrf.mxu0
    %v1893 = vadd.f32 0.0, %v1892
    %1894 = vdwg.mxu0
    %v1895 = vadd.f32 %v1848, %v1873
    %v1896 = vadd.f32 %v1849, %v1893
    %v1897 = vxor.u32 %v1895, 2147483648
    %v1898 = vxor.u32 %v1896, 2147483648
    %v1899 = vmul.f32 %v1897, 1.442695
    %v1900 = vpow.pop %v1899
    %v1901 = vmul.f32 %v1898, 1.442695
    %v1902 = vpow.pop %v1901
    %v1903 = vadd.f32 %v1900, 1.0
    %v1904 = vadd.f32 %v1902, 1.0
    %v1905 = vrcp.pop %v1903
    %v1906 = vmul.f32 %v1903, %v1905
    %v1907 = vsub.f32 1.0, %v1906
    %v1908 = vmul.f32 %v1905, %v1907
    %v1909 = vadd.f32 %v1905, %v1908
    %vm1910 = vweird.f32 %v1903
    %vm1911 = vweird.f32 %v1905
    %vm1912 = vmor %vm1910, %vm1911
    %v1913 = vsel %vm1912, %v1905, %v1909
    %v1914 = vand.u32 2147483647, %v1903
    %vm1915 = vcmp.eq.f32.partialorder %v1914, 8.507059e+37
    %v1916 = vand.u32 %v1903, 2147483648
    %v1917 = vor.u32 1.1754944e-38, %v1916
    %v1918 = vsel %vm1915, %v1917, %v1913
    %v1919 = vmul.f32 1.0, %v1918
    %v1920 = vrcp.pop %v1904
    %v1921 = vmul.f32 %v1904, %v1920
    %v1922 = vsub.f32 1.0, %v1921
    %v1923 = vmul.f32 %v1920, %v1922
    %v1924 = vadd.f32 %v1920, %v1923
    %vm1925 = vweird.f32 %v1904
    %vm1926 = vweird.f32 %v1920
    %vm1927 = vmor %vm1925, %vm1926
    %v1928 = vsel %vm1927, %v1920, %v1924
    %v1929 = vand.u32 2147483647, %v1904
    %vm1930 = vcmp.eq.f32.partialorder %v1929, 8.507059e+37
    %v1931 = vand.u32 %v1904, 2147483648
    %v1932 = vor.u32 1.1754944e-38, %v1931
    %v1933 = vsel %vm1930, %v1932, %v1928
    %v1934 = vmul.f32 1.0, %v1933
    %v1935 = vmul.f32 %v1934, 2.0
    %v1936 = vsub.f32 %v1935, 1.0
    %v1937 = vmul.f32 %v1919, %v1845
    %v1938 = vmul.f32 %v1919, %v1936
    %1940 = vrot.lane.b32.xlu0 %v1938, 64
    %v1941 = vpop.permute.xlu0 %1940
    %v1943 = vadd.f32 %v1937, %v1941
    %v1944 = vtanh.pop %v1943
    %v1945 = vmul.f32 %v1934, %v1944
    %vm1946 = vcmask 261120
    %1947 = vst.msk [vmem:[#allocation3] sm:$0xff] %vm1946, 0.0
    %1948 = vst.msk [vmem:[#allocation3 + $0x8] sm:$0xff] %vm1946, 0.0
    %1949 = vst.msk [vmem:[#allocation3 + $0x10] sm:$0xff] %vm1946, 0.0
    %v1950 = vld [vmem:[%s5] sm:$0xff]
    %v1951 = vld [vmem:[%s5 + $0x8] sm:$0xff]
    %v1952 = vld [vmem:[%s5 + $0x10] sm:$0xff]
    %v1953 = vld [vmem:[%s5 + $0x18] sm:$0xff]
    %v1954 = vld [vmem:[%s5 + $0x20] sm:$0xff]
    %v1955 = vld [vmem:[%s5 + $0x28] sm:$0xff]
    %v1956 = vld [vmem:[%s5 + $0x30] sm:$0xff]
    %v1957 = vld [vmem:[%s5 + $0x38] sm:$0xff]
    %v1958 = vld [vmem:[%s5 + $0x40] sm:$0xff]
    %v1959 = vld [vmem:[%s5 + $0x48] sm:$0xff]
    %v1960 = vld [vmem:[%s5 + $0x50] sm:$0xff]
    %v1961 = vld [vmem:[%s5 + $0x58] sm:$0xff]
    %v1962 = vld [vmem:[%s5 + $0x60] sm:$0xff]
    %v1963 = vld [vmem:[%s5 + $0x68] sm:$0xff]
    %v1964 = vld [vmem:[%s5 + $0x70] sm:$0xff]
    %v1965 = vld [vmem:[%s5 + $0x78] sm:$0xff]
    %s1966 = scalar_lea.vmem [#allocation3], 24
    %1967 = vst.msk [vmem:[%s1966] sm:$0xff] %vm1946, %v1950
    %1968 = vst.msk [vmem:[%s1966 + $0x8] sm:$0xff] %vm1946, %v1951
    %1969 = vst.msk [vmem:[%s1966 + $0x10] sm:$0xff] %vm1946, %v1952
    %1970 = vst.msk [vmem:[%s1966 + $0x18] sm:$0xff] %vm1946, %v1953
    %1971 = vst.msk [vmem:[%s1966 + $0x20] sm:$0xff] %vm1946, %v1954
    %1972 = vst.msk [vmem:[%s1966 + $0x28] sm:$0xff] %vm1946, %v1955
    %1973 = vst.msk [vmem:[%s1966 + $0x30] sm:$0xff] %vm1946, %v1956
    %1974 = vst.msk [vmem:[%s1966 + $0x38] sm:$0xff] %vm1946, %v1957
    %1975 = vst.msk [vmem:[%s1966 + $0x40] sm:$0xff] %vm1946, %v1958
    %1976 = vst.msk [vmem:[%s1966 + $0x48] sm:$0xff] %vm1946, %v1959
    %1977 = vst.msk [vmem:[%s1966 + $0x50] sm:$0xff] %vm1946, %v1960
    %1978 = vst.msk [vmem:[%s1966 + $0x58] sm:$0xff] %vm1946, %v1961
    %1979 = vst.msk [vmem:[%s1966 + $0x60] sm:$0xff] %vm1946, %v1962
    %1980 = vst.msk [vmem:[%s1966 + $0x68] sm:$0xff] %vm1946, %v1963
    %1981 = vst.msk [vmem:[%s1966 + $0x70] sm:$0xff] %vm1946, %v1964
    %1982 = vst.msk [vmem:[%s1966 + $0x78] sm:$0xff] %vm1946, %v1965
    %s1983 = scalar_lea.vmem [#allocation3], 152
    %1984 = vst.msk [vmem:[%s1983] sm:$0xff] %vm1946, 0.0
    %1985 = vst.msk [vmem:[%s1983 + $0x8] sm:$0xff] %vm1946, 0.0
    %1986 = vst.msk [vmem:[%s1983 + $0x10] sm:$0xff] %vm1946, 0.0
    %v1987 = vld [vmem:[#allocation3] sm:$0xff]
    %v1988 = vld [vmem:[#allocation3 + $0x8] sm:$0xff]
    %v1989 = vld [vmem:[#allocation3 + $0x10] sm:$0xff]
    %v1990 = vld [vmem:[#allocation3 + $0x18] sm:$0xff]
    %v1991 = vld [vmem:[#allocation3 + $0x20] sm:$0xff]
    %v1992 = vld [vmem:[#allocation3 + $0x28] sm:$0xff]
    %v1993 = vld [vmem:[#allocation3 + $0x30] sm:$0xff]
    %v1994 = vld [vmem:[#allocation3 + $0x38] sm:$0xff]
    %v1995 = vld [vmem:[#allocation3 + $0x40] sm:$0xff]
    %v1996 = vld [vmem:[#allocation3 + $0x48] sm:$0xff]
    %v1997 = vld [vmem:[#allocation3 + $0x50] sm:$0xff]
    %v1998 = vld [vmem:[#allocation3 + $0x58] sm:$0xff]
    %v1999 = vld [vmem:[#allocation3 + $0x60] sm:$0xff]
    %v2000 = vld [vmem:[#allocation3 + $0x68] sm:$0xff]
    %v2001 = vld [vmem:[#allocation3 + $0x70] sm:$0xff]
    %v2002 = vld [vmem:[#allocation3 + $0x78] sm:$0xff]
    %v2003 = vld [vmem:[#allocation3 + $0x80] sm:$0xff]
    %v2004 = vld [vmem:[#allocation3 + $0x88] sm:$0xff]
    %v2005 = vld [vmem:[#allocation3 + $0x90] sm:$0xff]
    %v2006 = vld [vmem:[#allocation3 + $0x98] sm:$0xff]
    %v2007 = vld [vmem:[#allocation3 + $0xa0] sm:$0xff]
    %v2008 = vld [vmem:[#allocation3 + $0xa8] sm:$0xff]
    %v2009 = vld [vmem:[%s6] sm:$0xff]
    %v2010 = vld [vmem:[%s6 + $0x8] sm:$0xff]
    %v2011 = vld [vmem:[%s6 + $0x10] sm:$0xff]
    %v2012 = vld [vmem:[%s6 + $0x18] sm:$0xff]
    %s2013 = scalar_lea.vmem %s6, 32
    %v2014 = vld [vmem:[%s2013] sm:$0xff]
    %v2015 = vld [vmem:[%s2013 + $0x8] sm:$0xff]
    %v2016 = vld [vmem:[%s2013 + $0x10] sm:$0xff]
    %v2017 = vld [vmem:[%s2013 + $0x18] sm:$0xff]
    %v2019 = vsel %vm1946, %v1988, 0
    %v2022 = vsel %vm1946, %v1989, 0
    %v2025 = vsel %vm1946, %v1990, 0
    %v2028 = vsel %vm1946, %v1991, 0
    %v2031 = vsel %vm1946, %v1992, 0
    %v2034 = vsel %vm1946, %v1993, 0
    %v2037 = vsel %vm1946, %v1994, 0
    %v2040 = vsel %vm1946, %v1995, 0
    %v2043 = vsel %vm1946, %v1996, 0
    %v2046 = vsel %vm1946, %v1997, 0
    %v2049 = vsel %vm1946, %v1998, 0
    %v2052 = vsel %vm1946, %v1999, 0
    %v2055 = vsel %vm1946, %v2000, 0
    %v2058 = vsel %vm1946, %v2001, 0
    %v2061 = vsel %vm1946, %v2002, 0
    %v2064 = vsel %vm1946, %v2003, 0
    %2066 = vmatpush.msra.mxu0 0.0
    %2067 = vmatpush.msra.mxu0 0.0
    %2068 = vmatpush.msra.mxu0 0.0
    %2069 = vmatpush.msra.mxu0 0.0
    %2070 = vmatpush.msra.mxu0 0.0
    %2071 = vmatpush.msra.mxu0 0.0
    %2072 = vmatpush.msra.mxu0 0.0
    %2073 = vmatpush.msra.mxu0 0.0
    %2074 = vmatpush.msra.mxu0 0.0
    %2075 = vmatpush.msra.mxu0 0.0
    %2076 = vmatpush.msra.mxu0 0.0
    %2077 = vmatpush.msra.mxu0 0.0
    %2078 = vmatpush.msra.mxu0 %v2017
    %2079 = vmatpush.msra.mxu0 %v2016
    %2080 = vmatpush.msra.mxu0 %v2015
    %2081 = vmatpush.msra.mxu0 %v2014
    %2082 = vmatmul.f32.gmra.mxu0 %v2019
    %v2083 = vpop.f32.mrf.mxu0
    %v2084 = vadd.f32 0.0, %v2083
    %2085 = vmatmul.f32.gmra.mxu0 %v2022
    %v2086 = vpop.f32.mrf.mxu0
    %v2087 = vadd.f32 0.0, %v2086
    %2088 = vmatmul.f32.gmra.mxu0 %v2025
    %v2089 = vpop.f32.mrf.mxu0
    %v2090 = vadd.f32 0.0, %v2089
    %2091 = vmatmul.f32.gmra.mxu0 %v2028
    %v2092 = vpop.f32.mrf.mxu0
    %v2093 = vadd.f32 0.0, %v2092
    %2094 = vmatmul.f32.gmra.mxu0 %v2031
    %v2095 = vpop.f32.mrf.mxu0
    %v2096 = vadd.f32 0.0, %v2095
    %2097 = vmatmul.f32.gmra.mxu0 %v2034
    %v2098 = vpop.f32.mrf.mxu0
    %v2099 = vadd.f32 0.0, %v2098
    %2100 = vmatmul.f32.gmra.mxu0 %v2037
    %v2101 = vpop.f32.mrf.mxu0
    %v2102 = vadd.f32 0.0, %v2101
    %2103 = vmatmul.f32.gmra.mxu0 %v2040
    %v2104 = vpop.f32.mrf.mxu0
    %v2105 = vadd.f32 0.0, %v2104
    %2106 = vmatmul.f32.gmra.mxu0 %v2043
    %v2107 = vpop.f32.mrf.mxu0
    %v2108 = vadd.f32 0.0, %v2107
    %2109 = vmatmul.f32.gmra.mxu0 %v2046
    %v2110 = vpop.f32.mrf.mxu0
    %v2111 = vadd.f32 0.0, %v2110
    %2112 = vmatmul.f32.gmra.mxu0 %v2049
    %v2113 = vpop.f32.mrf.mxu0
    %v2114 = vadd.f32 0.0, %v2113
    %2115 = vmatmul.f32.gmra.mxu0 %v2052
    %v2116 = vpop.f32.mrf.mxu0
    %v2117 = vadd.f32 0.0, %v2116
    %2118 = vmatmul.f32.gmra.mxu0 %v2055
    %v2119 = vpop.f32.mrf.mxu0
    %v2120 = vadd.f32 0.0, %v2119
    %2121 = vmatmul.f32.gmra.mxu0 %v2058
    %v2122 = vpop.f32.mrf.mxu0
    %v2123 = vadd.f32 0.0, %v2122
    %2124 = vmatmul.f32.gmra.mxu0 %v2061
    %v2125 = vpop.f32.mrf.mxu0
    %v2126 = vadd.f32 0.0, %v2125
    %2127 = vmatmul.f32.gmra.mxu0 %v2064
    %v2128 = vpop.f32.mrf.mxu0
    %v2129 = vadd.f32 0.0, %v2128
    %2130 = vdwg.mxu0
    %v2132 = vsel %vm1946, %v1987, 0
    %2134 = vmatpush.msra.mxu0 0.0
    %2135 = vmatpush.msra.mxu0 0.0
    %2136 = vmatpush.msra.mxu0 0.0
    %2137 = vmatpush.msra.mxu0 0.0
    %2138 = vmatpush.msra.mxu0 0.0
    %2139 = vmatpush.msra.mxu0 0.0
    %2140 = vmatpush.msra.mxu0 0.0
    %2141 = vmatpush.msra.mxu0 0.0
    %2142 = vmatpush.msra.mxu0 0.0
    %2143 = vmatpush.msra.mxu0 0.0
    %2144 = vmatpush.msra.mxu0 0.0
    %2145 = vmatpush.msra.mxu0 0.0
    %2146 = vmatpush.msra.mxu0 %v2012
    %2147 = vmatpush.msra.mxu0 %v2011
    %2148 = vmatpush.msra.mxu0 %v2010
    %2149 = vmatpush.msra.mxu0 %v2009
    %2150 = vmatmul.f32.gmra.mxu0 %v2132
    %v2151 = vpop.f32.mrf.mxu0
    %v2152 = vadd.f32 %v2084, %v2151
    %2153 = vmatmul.f32.gmra.mxu0 %v2019
    %v2154 = vpop.f32.mrf.mxu0
    %v2155 = vadd.f32 %v2087, %v2154
    %2156 = vmatmul.f32.gmra.mxu0 %v2022
    %v2157 = vpop.f32.mrf.mxu0
    %v2158 = vadd.f32 %v2090, %v2157
    %2159 = vmatmul.f32.gmra.mxu0 %v2025
    %v2160 = vpop.f32.mrf.mxu0
    %v2161 = vadd.f32 %v2093, %v2160
    %2162 = vmatmul.f32.gmra.mxu0 %v2028
    %v2163 = vpop.f32.mrf.mxu0
    %v2164 = vadd.f32 %v2096, %v2163
    %2165 = vmatmul.f32.gmra.mxu0 %v2031
    %v2166 = vpop.f32.mrf.mxu0
    %v2167 = vadd.f32 %v2099, %v2166
    %2168 = vmatmul.f32.gmra.mxu0 %v2034
    %v2169 = vpop.f32.mrf.mxu0
    %v2170 = vadd.f32 %v2102, %v2169
    %2171 = vmatmul.f32.gmra.mxu0 %v2037
    %v2172 = vpop.f32.mrf.mxu0
    %v2173 = vadd.f32 %v2105, %v2172
    %2174 = vmatmul.f32.gmra.mxu0 %v2040
    %v2175 = vpop.f32.mrf.mxu0
    %v2176 = vadd.f32 %v2108, %v2175
    %2177 = vmatmul.f32.gmra.mxu0 %v2043
    %v2178 = vpop.f32.mrf.mxu0
    %v2179 = vadd.f32 %v2111, %v2178
    %2180 = vmatmul.f32.gmra.mxu0 %v2046
    %v2181 = vpop.f32.mrf.mxu0
    %v2182 = vadd.f32 %v2114, %v2181
    %2183 = vmatmul.f32.gmra.mxu0 %v2049
    %v2184 = vpop.f32.mrf.mxu0
    %v2185 = vadd.f32 %v2117, %v2184
    %2186 = vmatmul.f32.gmra.mxu0 %v2052
    %v2187 = vpop.f32.mrf.mxu0
    %v2188 = vadd.f32 %v2120, %v2187
    %2189 = vmatmul.f32.gmra.mxu0 %v2055
    %v2190 = vpop.f32.mrf.mxu0
    %v2191 = vadd.f32 %v2123, %v2190
    %2192 = vmatmul.f32.gmra.mxu0 %v2058
    %v2193 = vpop.f32.mrf.mxu0
    %v2194 = vadd.f32 %v2126, %v2193
    %2195 = vmatmul.f32.gmra.mxu0 %v2061
    %v2196 = vpop.f32.mrf.mxu0
    %v2197 = vadd.f32 %v2129, %v2196
    %2198 = vdwg.mxu0
    %s2199 = scalar_lea.vmem %s6, 64
    %v2200 = vld [vmem:[%s2199] sm:$0xff]
    %v2201 = vld [vmem:[%s2199 + $0x8] sm:$0xff]
    %v2202 = vld [vmem:[%s2199 + $0x10] sm:$0xff]
    %v2203 = vld [vmem:[%s2199 + $0x18] sm:$0xff]
    %v2205 = vsel %vm1946, %v2004, 0
    %2207 = vmatpush.msra.mxu0 0.0
    %2208 = vmatpush.msra.mxu0 0.0
    %2209 = vmatpush.msra.mxu0 0.0
    %2210 = vmatpush.msra.mxu0 0.0
    %2211 = vmatpush.msra.mxu0 0.0
    %2212 = vmatpush.msra.mxu0 0.0
    %2213 = vmatpush.msra.mxu0 0.0
    %2214 = vmatpush.msra.mxu0 0.0
    %2215 = vmatpush.msra.mxu0 0.0
    %2216 = vmatpush.msra.mxu0 0.0
    %2217 = vmatpush.msra.mxu0 0.0
    %2218 = vmatpush.msra.mxu0 0.0
    %2219 = vmatpush.msra.mxu0 %v2203
    %2220 = vmatpush.msra.mxu0 %v2202
    %2221 = vmatpush.msra.mxu0 %v2201
    %2222 = vmatpush.msra.mxu0 %v2200
    %2223 = vmatmul.f32.gmra.mxu0 %v2022
    %v2224 = vpop.f32.mrf.mxu0
    %v2225 = vadd.f32 0.0, %v2224
    %2226 = vmatmul.f32.gmra.mxu0 %v2025
    %v2227 = vpop.f32.mrf.mxu0
    %v2228 = vadd.f32 0.0, %v2227
    %2229 = vmatmul.f32.gmra.mxu0 %v2028
    %v2230 = vpop.f32.mrf.mxu0
    %v2231 = vadd.f32 0.0, %v2230
    %2232 = vmatmul.f32.gmra.mxu0 %v2031
    %v2233 = vpop.f32.mrf.mxu0
    %v2234 = vadd.f32 0.0, %v2233
    %2235 = vmatmul.f32.gmra.mxu0 %v2034
    %v2236 = vpop.f32.mrf.mxu0
    %v2237 = vadd.f32 0.0, %v2236
    %2238 = vmatmul.f32.gmra.mxu0 %v2037
    %v2239 = vpop.f32.mrf.mxu0
    %v2240 = vadd.f32 0.0, %v2239
    %2241 = vmatmul.f32.gmra.mxu0 %v2040
    %v2242 = vpop.f32.mrf.mxu0
    %v2243 = vadd.f32 0.0, %v2242
    %2244 = vmatmul.f32.gmra.mxu0 %v2043
    %v2245 = vpop.f32.mrf.mxu0
    %v2246 = vadd.f32 0.0, %v2245
    %2247 = vmatmul.f32.gmra.mxu0 %v2046
    %v2248 = vpop.f32.mrf.mxu0
    %v2249 = vadd.f32 0.0, %v2248
    %2250 = vmatmul.f32.gmra.mxu0 %v2049
    %v2251 = vpop.f32.mrf.mxu0
    %v2252 = vadd.f32 0.0, %v2251
    %2253 = vmatmul.f32.gmra.mxu0 %v2052
    %v2254 = vpop.f32.mrf.mxu0
    %v2255 = vadd.f32 0.0, %v2254
    %2256 = vmatmul.f32.gmra.mxu0 %v2055
    %v2257 = vpop.f32.mrf.mxu0
    %v2258 = vadd.f32 0.0, %v2257
    %2259 = vmatmul.f32.gmra.mxu0 %v2058
    %v2260 = vpop.f32.mrf.mxu0
    %v2261 = vadd.f32 0.0, %v2260
    %2262 = vmatmul.f32.gmra.mxu0 %v2061
    %v2263 = vpop.f32.mrf.mxu0
    %v2264 = vadd.f32 0.0, %v2263
    %2265 = vmatmul.f32.gmra.mxu0 %v2064
    %v2266 = vpop.f32.mrf.mxu0
    %v2267 = vadd.f32 0.0, %v2266
    %2268 = vmatmul.f32.gmra.mxu0 %v2205
    %v2269 = vpop.f32.mrf.mxu0
    %v2270 = vadd.f32 0.0, %v2269
    %2271 = vdwg.mxu0
    %v2272 = vadd.f32 %v2152, %v2225
    %v2273 = vadd.f32 %v2155, %v2228
    %v2274 = vadd.f32 %v2158, %v2231
    %v2275 = vadd.f32 %v2161, %v2234
    %v2276 = vadd.f32 %v2164, %v2237
    %v2277 = vadd.f32 %v2167, %v2240
    %v2278 = vadd.f32 %v2170, %v2243
    %v2279 = vadd.f32 %v2173, %v2246
    %v2280 = vadd.f32 %v2176, %v2249
    %v2281 = vadd.f32 %v2179, %v2252
    %v2282 = vadd.f32 %v2182, %v2255
    %v2283 = vadd.f32 %v2185, %v2258
    %v2284 = vadd.f32 %v2188, %v2261
    %v2285 = vadd.f32 %v2191, %v2264
    %v2286 = vadd.f32 %v2194, %v2267
    %v2287 = vadd.f32 %v2197, %v2270
    %s2288 = scalar_lea.vmem %s6, 96
    %v2289 = vld [vmem:[%s2288] sm:$0xff]
    %v2290 = vld [vmem:[%s2288 + $0x8] sm:$0xff]
    %v2291 = vld [vmem:[%s2288 + $0x10] sm:$0xff]
    %v2292 = vld [vmem:[%s2288 + $0x18] sm:$0xff]
    %v2294 = vsel %vm1946, %v2005, 0
    %2296 = vmatpush.msra.mxu0 0.0
    %2297 = vmatpush.msra.mxu0 0.0
    %2298 = vmatpush.msra.mxu0 0.0
    %2299 = vmatpush.msra.mxu0 0.0
    %2300 = vmatpush.msra.mxu0 0.0
    %2301 = vmatpush.msra.mxu0 0.0
    %2302 = vmatpush.msra.mxu0 0.0
    %2303 = vmatpush.msra.mxu0 0.0
    %2304 = vmatpush.msra.mxu0 0.0
    %2305 = vmatpush.msra.mxu0 0.0
    %2306 = vmatpush.msra.mxu0 0.0
    %2307 = vmatpush.msra.mxu0 0.0
    %2308 = vmatpush.msra.mxu0 %v2292
    %2309 = vmatpush.msra.mxu0 %v2291
    %2310 = vmatpush.msra.mxu0 %v2290
    %2311 = vmatpush.msra.mxu0 %v2289
    %2312 = vmatmul.f32.gmra.mxu0 %v2025
    %v2313 = vpop.f32.mrf.mxu0
    %v2314 = vadd.f32 0.0, %v2313
    %2315 = vmatmul.f32.gmra.mxu0 %v2028
    %v2316 = vpop.f32.mrf.mxu0
    %v2317 = vadd.f32 0.0, %v2316
    %2318 = vmatmul.f32.gmra.mxu0 %v2031
    %v2319 = vpop.f32.mrf.mxu0
    %v2320 = vadd.f32 0.0, %v2319
    %2321 = vmatmul.f32.gmra.mxu0 %v2034
    %v2322 = vpop.f32.mrf.mxu0
    %v2323 = vadd.f32 0.0, %v2322
    %2324 = vmatmul.f32.gmra.mxu0 %v2037
    %v2325 = vpop.f32.mrf.mxu0
    %v2326 = vadd.f32 0.0, %v2325
    %2327 = vmatmul.f32.gmra.mxu0 %v2040
    %v2328 = vpop.f32.mrf.mxu0
    %v2329 = vadd.f32 0.0, %v2328
    %2330 = vmatmul.f32.gmra.mxu0 %v2043
    %v2331 = vpop.f32.mrf.mxu0
    %v2332 = vadd.f32 0.0, %v2331
    %2333 = vmatmul.f32.gmra.mxu0 %v2046
    %v2334 = vpop.f32.mrf.mxu0
    %v2335 = vadd.f32 0.0, %v2334
    %2336 = vmatmul.f32.gmra.mxu0 %v2049
    %v2337 = vpop.f32.mrf.mxu0
    %v2338 = vadd.f32 0.0, %v2337
    %2339 = vmatmul.f32.gmra.mxu0 %v2052
    %v2340 = vpop.f32.mrf.mxu0
    %v2341 = vadd.f32 0.0, %v2340
    %2342 = vmatmul.f32.gmra.mxu0 %v2055
    %v2343 = vpop.f32.mrf.mxu0
    %v2344 = vadd.f32 0.0, %v2343
    %2345 = vmatmul.f32.gmra.mxu0 %v2058
    %v2346 = vpop.f32.mrf.mxu0
    %v2347 = vadd.f32 0.0, %v2346
    %2348 = vmatmul.f32.gmra.mxu0 %v2061
    %v2349 = vpop.f32.mrf.mxu0
    %v2350 = vadd.f32 0.0, %v2349
    %2351 = vmatmul.f32.gmra.mxu0 %v2064
    %v2352 = vpop.f32.mrf.mxu0
    %v2353 = vadd.f32 0.0, %v2352
    %2354 = vmatmul.f32.gmra.mxu0 %v2205
    %v2355 = vpop.f32.mrf.mxu0
    %v2356 = vadd.f32 0.0, %v2355
    %2357 = vmatmul.f32.gmra.mxu0 %v2294
    %v2358 = vpop.f32.mrf.mxu0
    %v2359 = vadd.f32 0.0, %v2358
    %2360 = vdwg.mxu0
    %v2361 = vadd.f32 %v2272, %v2314
    %v2362 = vadd.f32 %v2273, %v2317
    %v2363 = vadd.f32 %v2274, %v2320
    %v2364 = vadd.f32 %v2275, %v2323
    %v2365 = vadd.f32 %v2276, %v2326
    %v2366 = vadd.f32 %v2277, %v2329
    %v2367 = vadd.f32 %v2278, %v2332
    %v2368 = vadd.f32 %v2279, %v2335
    %v2369 = vadd.f32 %v2280, %v2338
    %v2370 = vadd.f32 %v2281, %v2341
    %v2371 = vadd.f32 %v2282, %v2344
    %v2372 = vadd.f32 %v2283, %v2347
    %v2373 = vadd.f32 %v2284, %v2350
    %v2374 = vadd.f32 %v2285, %v2353
    %v2375 = vadd.f32 %v2286, %v2356
    %v2376 = vadd.f32 %v2287, %v2359
    %s2377 = scalar_lea.vmem %s6, 128
    %v2378 = vld [vmem:[%s2377] sm:$0xff]
    %v2379 = vld [vmem:[%s2377 + $0x8] sm:$0xff]
    %v2380 = vld [vmem:[%s2377 + $0x10] sm:$0xff]
    %v2381 = vld [vmem:[%s2377 + $0x18] sm:$0xff]
    %v2383 = vsel %vm1946, %v2006, 0
    %2385 = vmatpush.msra.mxu0 0.0
    %2386 = vmatpush.msra.mxu0 0.0
    %2387 = vmatpush.msra.mxu0 0.0
    %2388 = vmatpush.msra.mxu0 0.0
    %2389 = vmatpush.msra.mxu0 0.0
    %2390 = vmatpush.msra.mxu0 0.0
    %2391 = vmatpush.msra.mxu0 0.0
    %2392 = vmatpush.msra.mxu0 0.0
    %2393 = vmatpush.msra.mxu0 0.0
    %2394 = vmatpush.msra.mxu0 0.0
    %2395 = vmatpush.msra.mxu0 0.0
    %2396 = vmatpush.msra.mxu0 0.0
    %2397 = vmatpush.msra.mxu0 %v2381
    %2398 = vmatpush.msra.mxu0 %v2380
    %2399 = vmatpush.msra.mxu0 %v2379
    %2400 = vmatpush.msra.mxu0 %v2378
    %2401 = vmatmul.f32.gmra.mxu0 %v2028
    %v2402 = vpop.f32.mrf.mxu0
    %v2403 = vadd.f32 0.0, %v2402
    %2404 = vmatmul.f32.gmra.mxu0 %v2031
    %v2405 = vpop.f32.mrf.mxu0
    %v2406 = vadd.f32 0.0, %v2405
    %2407 = vmatmul.f32.gmra.mxu0 %v2034
    %v2408 = vpop.f32.mrf.mxu0
    %v2409 = vadd.f32 0.0, %v2408
    %2410 = vmatmul.f32.gmra.mxu0 %v2037
    %v2411 = vpop.f32.mrf.mxu0
    %v2412 = vadd.f32 0.0, %v2411
    %2413 = vmatmul.f32.gmra.mxu0 %v2040
    %v2414 = vpop.f32.mrf.mxu0
    %v2415 = vadd.f32 0.0, %v2414
    %2416 = vmatmul.f32.gmra.mxu0 %v2043
    %v2417 = vpop.f32.mrf.mxu0
    %v2418 = vadd.f32 0.0, %v2417
    %2419 = vmatmul.f32.gmra.mxu0 %v2046
    %v2420 = vpop.f32.mrf.mxu0
    %v2421 = vadd.f32 0.0, %v2420
    %2422 = vmatmul.f32.gmra.mxu0 %v2049
    %v2423 = vpop.f32.mrf.mxu0
    %v2424 = vadd.f32 0.0, %v2423
    %2425 = vmatmul.f32.gmra.mxu0 %v2052
    %v2426 = vpop.f32.mrf.mxu0
    %v2427 = vadd.f32 0.0, %v2426
    %2428 = vmatmul.f32.gmra.mxu0 %v2055
    %v2429 = vpop.f32.mrf.mxu0
    %v2430 = vadd.f32 0.0, %v2429
    %2431 = vmatmul.f32.gmra.mxu0 %v2058
    %v2432 = vpop.f32.mrf.mxu0
    %v2433 = vadd.f32 0.0, %v2432
    %2434 = vmatmul.f32.gmra.mxu0 %v2061
    %v2435 = vpop.f32.mrf.mxu0
    %v2436 = vadd.f32 0.0, %v2435
    %2437 = vmatmul.f32.gmra.mxu0 %v2064
    %v2438 = vpop.f32.mrf.mxu0
    %v2439 = vadd.f32 0.0, %v2438
    %2440 = vmatmul.f32.gmra.mxu0 %v2205
    %v2441 = vpop.f32.mrf.mxu0
    %v2442 = vadd.f32 0.0, %v2441
    %2443 = vmatmul.f32.gmra.mxu0 %v2294
    %v2444 = vpop.f32.mrf.mxu0
    %v2445 = vadd.f32 0.0, %v2444
    %2446 = vmatmul.f32.gmra.mxu0 %v2383
    %v2447 = vpop.f32.mrf.mxu0
    %v2448 = vadd.f32 0.0, %v2447
    %2449 = vdwg.mxu0
    %v2450 = vadd.f32 %v2361, %v2403
    %v2451 = vadd.f32 %v2362, %v2406
    %v2452 = vadd.f32 %v2363, %v2409
    %v2453 = vadd.f32 %v2364, %v2412
    %v2454 = vadd.f32 %v2365, %v2415
    %v2455 = vadd.f32 %v2366, %v2418
    %v2456 = vadd.f32 %v2367, %v2421
    %v2457 = vadd.f32 %v2368, %v2424
    %v2458 = vadd.f32 %v2369, %v2427
    %v2459 = vadd.f32 %v2370, %v2430
    %v2460 = vadd.f32 %v2371, %v2433
    %v2461 = vadd.f32 %v2372, %v2436
    %v2462 = vadd.f32 %v2373, %v2439
    %v2463 = vadd.f32 %v2374, %v2442
    %v2464 = vadd.f32 %v2375, %v2445
    %v2465 = vadd.f32 %v2376, %v2448
    %s2466 = scalar_lea.vmem %s6, 160
    %v2467 = vld [vmem:[%s2466] sm:$0xff]
    %v2468 = vld [vmem:[%s2466 + $0x8] sm:$0xff]
    %v2469 = vld [vmem:[%s2466 + $0x10] sm:$0xff]
    %v2470 = vld [vmem:[%s2466 + $0x18] sm:$0xff]
    %v2472 = vsel %vm1946, %v2007, 0
    %2474 = vmatpush.msra.mxu0 0.0
    %2475 = vmatpush.msra.mxu0 0.0
    %2476 = vmatpush.msra.mxu0 0.0
    %2477 = vmatpush.msra.mxu0 0.0
    %2478 = vmatpush.msra.mxu0 0.0
    %2479 = vmatpush.msra.mxu0 0.0
    %2480 = vmatpush.msra.mxu0 0.0
    %2481 = vmatpush.msra.mxu0 0.0
    %2482 = vmatpush.msra.mxu0 0.0
    %2483 = vmatpush.msra.mxu0 0.0
    %2484 = vmatpush.msra.mxu0 0.0
    %2485 = vmatpush.msra.mxu0 0.0
    %2486 = vmatpush.msra.mxu0 %v2470
    %2487 = vmatpush.msra.mxu0 %v2469
    %2488 = vmatpush.msra.mxu0 %v2468
    %2489 = vmatpush.msra.mxu0 %v2467
    %2490 = vmatmul.f32.gmra.mxu0 %v2031
    %v2491 = vpop.f32.mrf.mxu0
    %v2492 = vadd.f32 0.0, %v2491
    %2493 = vmatmul.f32.gmra.mxu0 %v2034
    %v2494 = vpop.f32.mrf.mxu0
    %v2495 = vadd.f32 0.0, %v2494
    %2496 = vmatmul.f32.gmra.mxu0 %v2037
    %v2497 = vpop.f32.mrf.mxu0
    %v2498 = vadd.f32 0.0, %v2497
    %2499 = vmatmul.f32.gmra.mxu0 %v2040
    %v2500 = vpop.f32.mrf.mxu0
    %v2501 = vadd.f32 0.0, %v2500
    %2502 = vmatmul.f32.gmra.mxu0 %v2043
    %v2503 = vpop.f32.mrf.mxu0
    %v2504 = vadd.f32 0.0, %v2503
    %2505 = vmatmul.f32.gmra.mxu0 %v2046
    %v2506 = vpop.f32.mrf.mxu0
    %v2507 = vadd.f32 0.0, %v2506
    %2508 = vmatmul.f32.gmra.mxu0 %v2049
    %v2509 = vpop.f32.mrf.mxu0
    %v2510 = vadd.f32 0.0, %v2509
    %2511 = vmatmul.f32.gmra.mxu0 %v2052
    %v2512 = vpop.f32.mrf.mxu0
    %v2513 = vadd.f32 0.0, %v2512
    %2514 = vmatmul.f32.gmra.mxu0 %v2055
    %v2515 = vpop.f32.mrf.mxu0
    %v2516 = vadd.f32 0.0, %v2515
    %2517 = vmatmul.f32.gmra.mxu0 %v2058
    %v2518 = vpop.f32.mrf.mxu0
    %v2519 = vadd.f32 0.0, %v2518
    %2520 = vmatmul.f32.gmra.mxu0 %v2061
    %v2521 = vpop.f32.mrf.mxu0
    %v2522 = vadd.f32 0.0, %v2521
    %2523 = vmatmul.f32.gmra.mxu0 %v2064
    %v2524 = vpop.f32.mrf.mxu0
    %v2525 = vadd.f32 0.0, %v2524
    %2526 = vmatmul.f32.gmra.mxu0 %v2205
    %v2527 = vpop.f32.mrf.mxu0
    %v2528 = vadd.f32 0.0, %v2527
    %2529 = vmatmul.f32.gmra.mxu0 %v2294
    %v2530 = vpop.f32.mrf.mxu0
    %v2531 = vadd.f32 0.0, %v2530
    %2532 = vmatmul.f32.gmra.mxu0 %v2383
    %v2533 = vpop.f32.mrf.mxu0
    %v2534 = vadd.f32 0.0, %v2533
    %2535 = vmatmul.f32.gmra.mxu0 %v2472
    %v2536 = vpop.f32.mrf.mxu0
    %v2537 = vadd.f32 0.0, %v2536
    %2538 = vdwg.mxu0
    %v2539 = vadd.f32 %v2450, %v2492
    %v2540 = vadd.f32 %v2451, %v2495
    %v2541 = vadd.f32 %v2452, %v2498
    %v2542 = vadd.f32 %v2453, %v2501
    %v2543 = vadd.f32 %v2454, %v2504
    %v2544 = vadd.f32 %v2455, %v2507
    %v2545 = vadd.f32 %v2456, %v2510
    %v2546 = vadd.f32 %v2457, %v2513
    %v2547 = vadd.f32 %v2458, %v2516
    %v2548 = vadd.f32 %v2459, %v2519
    %v2549 = vadd.f32 %v2460, %v2522
    %v2550 = vadd.f32 %v2461, %v2525
    %v2551 = vadd.f32 %v2462, %v2528
    %v2552 = vadd.f32 %v2463, %v2531
    %v2553 = vadd.f32 %v2464, %v2534
    %v2554 = vadd.f32 %v2465, %v2537
    %s2555 = scalar_lea.vmem %s6, 192
    %v2556 = vld [vmem:[%s2555] sm:$0xff]
    %v2557 = vld [vmem:[%s2555 + $0x8] sm:$0xff]
    %v2558 = vld [vmem:[%s2555 + $0x10] sm:$0xff]
    %v2559 = vld [vmem:[%s2555 + $0x18] sm:$0xff]
    %v2561 = vsel %vm1946, %v2008, 0
    %2563 = vmatpush.msra.mxu0 0.0
    %2564 = vmatpush.msra.mxu0 0.0
    %2565 = vmatpush.msra.mxu0 0.0
    %2566 = vmatpush.msra.mxu0 0.0
    %2567 = vmatpush.msra.mxu0 0.0
    %2568 = vmatpush.msra.mxu0 0.0
    %2569 = vmatpush.msra.mxu0 0.0
    %2570 = vmatpush.msra.mxu0 0.0
    %2571 = vmatpush.msra.mxu0 0.0
    %2572 = vmatpush.msra.mxu0 0.0
    %2573 = vmatpush.msra.mxu0 0.0
    %2574 = vmatpush.msra.mxu0 0.0
    %2575 = vmatpush.msra.mxu0 %v2559
    %2576 = vmatpush.msra.mxu0 %v2558
    %2577 = vmatpush.msra.mxu0 %v2557
    %2578 = vmatpush.msra.mxu0 %v2556
    %2579 = vmatmul.f32.gmra.mxu0 %v2034
    %v2580 = vpop.f32.mrf.mxu0
    %v2581 = vadd.f32 0.0, %v2580
    %2582 = vmatmul.f32.gmra.mxu0 %v2037
    %v2583 = vpop.f32.mrf.mxu0
    %v2584 = vadd.f32 0.0, %v2583
    %2585 = vmatmul.f32.gmra.mxu0 %v2040
    %v2586 = vpop.f32.mrf.mxu0
    %v2587 = vadd.f32 0.0, %v2586
    %2588 = vmatmul.f32.gmra.mxu0 %v2043
    %v2589 = vpop.f32.mrf.mxu0
    %v2590 = vadd.f32 0.0, %v2589
    %2591 = vmatmul.f32.gmra.mxu0 %v2046
    %v2592 = vpop.f32.mrf.mxu0
    %v2593 = vadd.f32 0.0, %v2592
    %2594 = vmatmul.f32.gmra.mxu0 %v2049
    %v2595 = vpop.f32.mrf.mxu0
    %v2596 = vadd.f32 0.0, %v2595
    %2597 = vmatmul.f32.gmra.mxu0 %v2052
    %v2598 = vpop.f32.mrf.mxu0
    %v2599 = vadd.f32 0.0, %v2598
    %2600 = vmatmul.f32.gmra.mxu0 %v2055
    %v2601 = vpop.f32.mrf.mxu0
    %v2602 = vadd.f32 0.0, %v2601
    %2603 = vmatmul.f32.gmra.mxu0 %v2058
    %v2604 = vpop.f32.mrf.mxu0
    %v2605 = vadd.f32 0.0, %v2604
    %2606 = vmatmul.f32.gmra.mxu0 %v2061
    %v2607 = vpop.f32.mrf.mxu0
    %v2608 = vadd.f32 0.0, %v2607
    %2609 = vmatmul.f32.gmra.mxu0 %v2064
    %v2610 = vpop.f32.mrf.mxu0
    %v2611 = vadd.f32 0.0, %v2610
    %2612 = vmatmul.f32.gmra.mxu0 %v2205
    %v2613 = vpop.f32.mrf.mxu0
    %v2614 = vadd.f32 0.0, %v2613
    %2615 = vmatmul.f32.gmra.mxu0 %v2294
    %v2616 = vpop.f32.mrf.mxu0
    %v2617 = vadd.f32 0.0, %v2616
    %2618 = vmatmul.f32.gmra.mxu0 %v2383
    %v2619 = vpop.f32.mrf.mxu0
    %v2620 = vadd.f32 0.0, %v2619
    %2621 = vmatmul.f32.gmra.mxu0 %v2472
    %v2622 = vpop.f32.mrf.mxu0
    %v2623 = vadd.f32 0.0, %v2622
    %2624 = vmatmul.f32.gmra.mxu0 %v2561
    %v2625 = vpop.f32.mrf.mxu0
    %v2626 = vadd.f32 0.0, %v2625
    %2627 = vdwg.mxu0
    %v2628 = vadd.f32 %v2539, %v2581
    %v2629 = vadd.f32 %v2540, %v2584
    %v2630 = vadd.f32 %v2541, %v2587
    %v2631 = vadd.f32 %v2542, %v2590
    %v2632 = vadd.f32 %v2543, %v2593
    %v2633 = vadd.f32 %v2544, %v2596
    %v2634 = vadd.f32 %v2545, %v2599
    %v2635 = vadd.f32 %v2546, %v2602
    %v2636 = vadd.f32 %v2547, %v2605
    %v2637 = vadd.f32 %v2548, %v2608
    %v2638 = vadd.f32 %v2549, %v2611
    %v2639 = vadd.f32 %v2550, %v2614
    %v2640 = vadd.f32 %v2551, %v2617
    %v2641 = vadd.f32 %v2552, %v2620
    %v2642 = vadd.f32 %v2553, %v2623
    %v2643 = vadd.f32 %v2554, %v2626
    %v2644 = vld [vmem:[%s7] sm:$0x1]
    %v2646 = vperm.slane %v2644, 0
    %v2648 = vadd.f32 %v2628, %v2646
    %v2649 = vadd.f32 %v2629, %v2646
    %v2650 = vadd.f32 %v2630, %v2646
    %v2651 = vadd.f32 %v2631, %v2646
    %v2652 = vadd.f32 %v2632, %v2646
    %v2653 = vadd.f32 %v2633, %v2646
    %v2654 = vadd.f32 %v2634, %v2646
    %v2655 = vadd.f32 %v2635, %v2646
    %v2656 = vadd.f32 %v2636, %v2646
    %v2657 = vadd.f32 %v2637, %v2646
    %v2658 = vadd.f32 %v2638, %v2646
    %v2659 = vadd.f32 %v2639, %v2646
    %v2660 = vadd.f32 %v2640, %v2646
    %v2661 = vadd.f32 %v2641, %v2646
    %v2662 = vadd.f32 %v2642, %v2646
    %v2663 = vadd.f32 %v2643, %v2646
    %v2664 = vadd.f32 %v2648, %v2649
    %v2665 = vadd.f32 %v2664, %v2650
    %v2666 = vadd.f32 %v2665, %v2651
    %v2667 = vadd.f32 %v2666, %v2652
    %v2668 = vadd.f32 %v2667, %v2653
    %v2669 = vadd.f32 %v2668, %v2654
    %v2670 = vadd.f32 %v2669, %v2655
    %v2671 = vadd.f32 %v2670, %v2656
    %v2672 = vadd.f32 %v2671, %v2657
    %v2673 = vadd.f32 %v2672, %v2658
    %v2674 = vadd.f32 %v2673, %v2659
    %v2675 = vadd.f32 %v2674, %v2660
    %v2676 = vadd.f32 %v2675, %v2661
    %v2677 = vadd.f32 %v2676, %v2662
    %v2678 = vadd.f32 %v2677, %v2663
    %v2679 = vrot.slane %v2678, 4
    %v2680 = vadd.f32 %v2678, %v2679
    %v2681 = vrot.slane %v2680, 2
    %v2682 = vadd.f32 %v2680, %v2681
    %v2683 = vrot.slane %v2682, 1
    %v2684 = vadd.f32 %v2682, %v2683
    %v2685 = vmul.f32 %v2684, 0.0078125
    %v2686 = vsub.f32 %v2648, %v2685
    %v2687 = vsub.f32 %v2649, %v2685
    %v2688 = vsub.f32 %v2650, %v2685
    %v2689 = vsub.f32 %v2651, %v2685
    %v2690 = vsub.f32 %v2652, %v2685
    %v2691 = vsub.f32 %v2653, %v2685
    %v2692 = vsub.f32 %v2654, %v2685
    %v2693 = vsub.f32 %v2655, %v2685
    %v2694 = vsub.f32 %v2656, %v2685
    %v2695 = vsub.f32 %v2657, %v2685
    %v2696 = vsub.f32 %v2658, %v2685
    %v2697 = vsub.f32 %v2659, %v2685
    %v2698 = vsub.f32 %v2660, %v2685
    %v2699 = vsub.f32 %v2661, %v2685
    %v2700 = vsub.f32 %v2662, %v2685
    %v2701 = vsub.f32 %v2663, %v2685
    %v2702 = vmul.f32 %v2686, %v2686
    %v2703 = vmul.f32 %v2687, %v2687
    %v2704 = vmul.f32 %v2688, %v2688
    %v2705 = vmul.f32 %v2689, %v2689
    %v2706 = vmul.f32 %v2690, %v2690
    %v2707 = vmul.f32 %v2691, %v2691
    %v2708 = vmul.f32 %v2692, %v2692
    %v2709 = vmul.f32 %v2693, %v2693
    %v2710 = vmul.f32 %v2694, %v2694
    %v2711 = vmul.f32 %v2695, %v2695
    %v2712 = vmul.f32 %v2696, %v2696
    %v2713 = vmul.f32 %v2697, %v2697
    %v2714 = vmul.f32 %v2698, %v2698
    %v2715 = vmul.f32 %v2699, %v2699
    %v2716 = vmul.f32 %v2700, %v2700
    %v2717 = vmul.f32 %v2701, %v2701
    %v2718 = vadd.f32 %v2702, %v2703
    %v2719 = vadd.f32 %v2718, %v2704
    %v2720 = vadd.f32 %v2719, %v2705
    %v2721 = vadd.f32 %v2720, %v2706
    %v2722 = vadd.f32 %v2721, %v2707
    %v2723 = vadd.f32 %v2722, %v2708
    %v2724 = vadd.f32 %v2723, %v2709
    %v2725 = vadd.f32 %v2724, %v2710
    %v2726 = vadd.f32 %v2725, %v2711
    %v2727 = vadd.f32 %v2726, %v2712
    %v2728 = vadd.f32 %v2727, %v2713
    %v2729 = vadd.f32 %v2728, %v2714
    %v2730 = vadd.f32 %v2729, %v2715
    %v2731 = vadd.f32 %v2730, %v2716
    %v2732 = vadd.f32 %v2731, %v2717
    %v2733 = vrot.slane %v2732, 4
    %v2734 = vadd.f32 %v2732, %v2733
    %v2735 = vrot.slane %v2734, 2
    %v2736 = vadd.f32 %v2734, %v2735
    %v2737 = vrot.slane %v2736, 1
    %v2738 = vadd.f32 %v2736, %v2737
    %v2739 = vmul.f32 %v2738, 0.0078125
    %v2740 = vadd.f32 %v2739, 1e-05
    %v2741 = vrsqrt.pop %v2740
    %v2742 = vmul.f32 %v2741, %v2740
    %v2743 = vmul.f32 %v2742, %v2741
    %v2744 = vmul.f32 0.5, %v2743
    %v2745 = vsub.f32 1.5, %v2744
    %v2746 = vmul.f32 %v2741, %v2745
    %vm2747 = vweird.f32 %v2740
    %vm2748 = vweird.f32 %v2741
    %vm2749 = vmor %vm2747, %vm2748
    %v2750 = vsel %vm2749, %v2741, %v2746
    %v2751 = vmul.f32 %v2686, %v2750
    %v2752 = vmul.f32 %v2687, %v2750
    %v2753 = vmul.f32 %v2688, %v2750
    %v2754 = vmul.f32 %v2689, %v2750
    %v2755 = vmul.f32 %v2690, %v2750
    %v2756 = vmul.f32 %v2691, %v2750
    %v2757 = vmul.f32 %v2692, %v2750
    %v2758 = vmul.f32 %v2693, %v2750
    %v2759 = vmul.f32 %v2694, %v2750
    %v2760 = vmul.f32 %v2695, %v2750
    %v2761 = vmul.f32 %v2696, %v2750
    %v2762 = vmul.f32 %v2697, %v2750
    %v2763 = vmul.f32 %v2698, %v2750
    %v2764 = vmul.f32 %v2699, %v2750
    %v2765 = vmul.f32 %v2700, %v2750
    %v2766 = vmul.f32 %v2701, %v2750
    %v2767 = vld [vmem:[%s8] sm:$0x1]
    %v2769 = vperm.slane %v2767, 0
    %v2771 = vmul.f32 %v2751, %v2769
    %v2772 = vmul.f32 %v2752, %v2769
    %v2773 = vmul.f32 %v2753, %v2769
    %v2774 = vmul.f32 %v2754, %v2769
    %v2775 = vmul.f32 %v2755, %v2769
    %v2776 = vmul.f32 %v2756, %v2769
    %v2777 = vmul.f32 %v2757, %v2769
    %v2778 = vmul.f32 %v2758, %v2769
    %v2779 = vmul.f32 %v2759, %v2769
    %v2780 = vmul.f32 %v2760, %v2769
    %v2781 = vmul.f32 %v2761, %v2769
    %v2782 = vmul.f32 %v2762, %v2769
    %v2783 = vmul.f32 %v2763, %v2769
    %v2784 = vmul.f32 %v2764, %v2769
    %v2785 = vmul.f32 %v2765, %v2769
    %v2786 = vmul.f32 %v2766, %v2769
    %v2787 = vld [vmem:[%s9] sm:$0x1]
    %v2789 = vperm.slane %v2787, 0
    %v2791 = vadd.f32 %v2771, %v2789
    %v2792 = vadd.f32 %v2772, %v2789
    %v2793 = vadd.f32 %v2773, %v2789
    %v2794 = vadd.f32 %v2774, %v2789
    %v2795 = vadd.f32 %v2775, %v2789
    %v2796 = vadd.f32 %v2776, %v2789
    %v2797 = vadd.f32 %v2777, %v2789
    %v2798 = vadd.f32 %v2778, %v2789
    %v2799 = vadd.f32 %v2779, %v2789
    %v2800 = vadd.f32 %v2780, %v2789
    %v2801 = vadd.f32 %v2781, %v2789
    %v2802 = vadd.f32 %v2782, %v2789
    %v2803 = vadd.f32 %v2783, %v2789
    %v2804 = vadd.f32 %v2784, %v2789
    %v2805 = vadd.f32 %v2785, %v2789
    %v2806 = vadd.f32 %v2786, %v2789
    %v2807 = vmax.f32 %v2791, 0.0
    %v2808 = vmax.f32 %v2792, 0.0
    %v2809 = vmax.f32 %v2793, 0.0
    %v2810 = vmax.f32 %v2794, 0.0
    %v2811 = vmax.f32 %v2795, 0.0
    %v2812 = vmax.f32 %v2796, 0.0
    %v2813 = vmax.f32 %v2797, 0.0
    %v2814 = vmax.f32 %v2798, 0.0
    %v2815 = vmax.f32 %v2799, 0.0
    %v2816 = vmax.f32 %v2800, 0.0
    %v2817 = vmax.f32 %v2801, 0.0
    %v2818 = vmax.f32 %v2802, 0.0
    %v2819 = vmax.f32 %v2803, 0.0
    %v2820 = vmax.f32 %v2804, 0.0
    %v2821 = vmax.f32 %v2805, 0.0
    %v2822 = vmax.f32 %v2806, 0.0
    %v2823 = vmax.f32 %v2807, %v2811
    %v2824 = vmax.f32 %v2808, %v2812
    %v2825 = vmax.f32 %v2809, %v2813
    %v2826 = vmax.f32 %v2810, %v2814
    %v2827 = vmax.f32 %v2823, %v2815
    %v2828 = vmax.f32 %v2824, %v2816
    %v2829 = vmax.f32 %v2825, %v2817
    %v2830 = vmax.f32 %v2826, %v2818
    %v2831 = vmax.f32 %v2827, %v2819
    %v2832 = vmax.f32 %v2828, %v2820
    %v2833 = vmax.f32 %v2829, %v2821
    %v2834 = vmax.f32 %v2830, %v2822
    %v2835 = vmax.f32 %v2831, %v2832
    %v2836 = vmax.f32 %v2833, %v2834
    %v2837 = vmax.f32 %v2835, %v2836
    %v2838 = vld [vmem:[%s10] sm:$0xff]
    %v2839 = vld [vmem:[%s10 + $0x8] sm:$0xff]
    %v2840 = vld [vmem:[%s10 + $0x10] sm:$0xff]
    %v2841 = vld [vmem:[%s10 + $0x18] sm:$0xff]
    %v2842 = vld [vmem:[%s10 + $0x20] sm:$0xff]
    %v2843 = vld [vmem:[%s10 + $0x28] sm:$0xff]
    %v2844 = vld [vmem:[%s10 + $0x30] sm:$0xff]
    %v2845 = vld [vmem:[%s10 + $0x38] sm:$0xff]
    %v2846 = vld [vmem:[%s10 + $0x40] sm:$0xff]
    %v2847 = vld [vmem:[%s10 + $0x48] sm:$0xff]
    %v2848 = vld [vmem:[%s10 + $0x50] sm:$0xff]
    %v2849 = vld [vmem:[%s10 + $0x58] sm:$0xff]
    %v2850 = vld [vmem:[%s10 + $0x60] sm:$0xff]
    %v2851 = vld [vmem:[%s10 + $0x68] sm:$0xff]
    %v2852 = vld [vmem:[%s10 + $0x70] sm:$0xff]
    %v2853 = vld [vmem:[%s10 + $0x78] sm:$0xff]
    %v2854 = vld [vmem:[%s10 + $0x80] sm:$0xff]
    %v2855 = vld [vmem:[%s10 + $0x88] sm:$0xff]
    %v2856 = vld [vmem:[%s10 + $0x90] sm:$0xff]
    %v2857 = vld [vmem:[%s10 + $0x98] sm:$0xff]
    %v2858 = vld [vmem:[%s10 + $0xa0] sm:$0xff]
    %v2859 = vld [vmem:[%s10 + $0xa8] sm:$0xff]
    %v2860 = vld [vmem:[%s10 + $0xb0] sm:$0xff]
    %v2861 = vld [vmem:[%s10 + $0xb8] sm:$0xff]
    %v2862 = vld [vmem:[%s10 + $0xc0] sm:$0xff]
    %v2863 = vld [vmem:[%s10 + $0xc8] sm:$0xff]
    %v2864 = vld [vmem:[%s10 + $0xd0] sm:$0xff]
    %v2865 = vld [vmem:[%s10 + $0xd8] sm:$0xff]
    %v2866 = vld [vmem:[%s10 + $0xe0] sm:$0xff]
    %v2867 = vld [vmem:[%s10 + $0xe8] sm:$0xff]
    %v2868 = vld [vmem:[%s10 + $0xf0] sm:$0xff]
    %v2869 = vld [vmem:[%s10 + $0xf8] sm:$0xff]
    %v2870 = vld [vmem:[%s11] sm:$0xff]
    %v2871 = vld [vmem:[%s11 + $0x8] sm:$0xff]
    %v2872 = vld [vmem:[%s11 + $0x10] sm:$0xff]
    %v2873 = vld [vmem:[%s11 + $0x18] sm:$0xff]
    %v2874 = vld [vmem:[%s11 + $0x20] sm:$0xff]
    %v2875 = vld [vmem:[%s11 + $0x28] sm:$0xff]
    %v2876 = vld [vmem:[%s11 + $0x30] sm:$0xff]
    %v2877 = vld [vmem:[%s11 + $0x38] sm:$0xff]
    %2879 = vrot.lane.b32.xlu0 %v1945, 64
    %v2880 = vpop.permute.xlu0 %2879
    %v2881 = vsel %vm1946, %v2880, 0
    %2883 = vmatpush.msra.mxu0 0.0
    %2884 = vmatpush.msra.mxu0 0.0
    %2885 = vmatpush.msra.mxu0 0.0
    %2886 = vmatpush.msra.mxu0 0.0
    %2887 = vmatpush.msra.mxu0 0.0
    %2888 = vmatpush.msra.mxu0 0.0
    %2889 = vmatpush.msra.mxu0 0.0
    %2890 = vmatpush.msra.mxu0 0.0
    %2891 = vmatpush.msra.mxu0 0.0
    %2892 = vmatpush.msra.mxu0 0.0
    %2893 = vmatpush.msra.mxu0 0.0
    %2894 = vmatpush.msra.mxu0 0.0
    %2895 = vmatpush.msra.mxu0 %v2876
    %2896 = vmatpush.msra.mxu0 %v2874
    %2897 = vmatpush.msra.mxu0 %v2872
    %2898 = vmatpush.msra.mxu0 %v2870
    %2899 = vmatmul.f32.gmra.mxu0 %v2881
    %v2900 = vpop.f32.mrf.mxu0
    %v2901 = vadd.f32 0.0, %v2900
    %2902 = vdwg.mxu0
    %2903 = vmatpush.msra.mxu0 0.0
    %2904 = vmatpush.msra.mxu0 0.0
    %2905 = vmatpush.msra.mxu0 0.0
    %2906 = vmatpush.msra.mxu0 0.0
    %2907 = vmatpush.msra.mxu0 0.0
    %2908 = vmatpush.msra.mxu0 0.0
    %2909 = vmatpush.msra.mxu0 0.0
    %2910 = vmatpush.msra.mxu0 0.0
    %2911 = vmatpush.msra.mxu0 0.0
    %2912 = vmatpush.msra.mxu0 0.0
    %2913 = vmatpush.msra.mxu0 0.0
    %2914 = vmatpush.msra.mxu0 0.0
    %2915 = vmatpush.msra.mxu0 %v2877
    %2916 = vmatpush.msra.mxu0 %v2875
    %2917 = vmatpush.msra.mxu0 %v2873
    %2918 = vmatpush.msra.mxu0 %v2871
    %2919 = vmatmul.f32.gmra.mxu0 %v2881
    %v2920 = vpop.f32.mrf.mxu0
    %v2921 = vadd.f32 0.0, %v2920
    %2922 = vdwg.mxu0
    %2923 = vmatpush.msra.mxu0 %v2868
    %2924 = vmatpush.msra.mxu0 %v2866
    %2925 = vmatpush.msra.mxu0 %v2864
    %2926 = vmatpush.msra.mxu0 %v2862
    %2927 = vmatpush.msra.mxu0 %v2860
    %2928 = vmatpush.msra.mxu0 %v2858
    %2929 = vmatpush.msra.mxu0 %v2856
    %2930 = vmatpush.msra.mxu0 %v2854
    %2931 = vmatpush.msra.mxu0 %v2852
    %2932 = vmatpush.msra.mxu0 %v2850
    %2933 = vmatpush.msra.mxu0 %v2848
    %2934 = vmatpush.msra.mxu0 %v2846
    %2935 = vmatpush.msra.mxu0 %v2844
    %2936 = vmatpush.msra.mxu0 %v2842
    %2937 = vmatpush.msra.mxu0 %v2840
    %2938 = vmatpush.msra.mxu0 %v2838
    %2939 = vmatmul.f32.gmra.mxu0 %v2837
    %v2940 = vpop.f32.mrf.mxu0
    %v2941 = vadd.f32 %v2901, %v2940
    %2942 = vdwg.mxu0
    %2943 = vmatpush.msra.mxu0 %v2869
    %2944 = vmatpush.msra.mxu0 %v2867
    %2945 = vmatpush.msra.mxu0 %v2865
    %2946 = vmatpush.msra.mxu0 %v2863
    %2947 = vmatpush.msra.mxu0 %v2861
    %2948 = vmatpush.msra.mxu0 %v2859
    %2949 = vmatpush.msra.mxu0 %v2857
    %2950 = vmatpush.msra.mxu0 %v2855
    %2951 = vmatpush.msra.mxu0 %v2853
    %2952 = vmatpush.msra.mxu0 %v2851
    %2953 = vmatpush.msra.mxu0 %v2849
    %2954 = vmatpush.msra.mxu0 %v2847
    %2955 = vmatpush.msra.mxu0 %v2845
    %2956 = vmatpush.msra.mxu0 %v2843
    %2957 = vmatpush.msra.mxu0 %v2841
    %2958 = vmatpush.msra.mxu0 %v2839
    %2959 = vmatmul.f32.gmra.mxu0 %v2837
    %v2960 = vpop.f32.mrf.mxu0
    %v2961 = vadd.f32 %v2921, %v2960
    %2962 = vdwg.mxu0
    %v2963 = vld [vmem:[%s12] sm:$0xff]
    %v2964 = vld [vmem:[%s12 + $0x8] sm:$0xff]
    %v2965 = vld [vmem:[%s12 + $0x10] sm:$0xff]
    %v2966 = vld [vmem:[%s12 + $0x18] sm:$0xff]
    %v2967 = vld [vmem:[%s12 + $0x20] sm:$0xff]
    %v2968 = vld [vmem:[%s12 + $0x28] sm:$0xff]
    %v2969 = vld [vmem:[%s12 + $0x30] sm:$0xff]
    %v2970 = vld [vmem:[%s12 + $0x38] sm:$0xff]
    %2971 = vrot.lane.b32.xlu0 %v433, 32
    %v2972 = vpop.permute.xlu0 %2971
    %v2973 = vsel %vm1946, %v2972, 0
    %2975 = vmatpush.msra.mxu0 0.0
    %2976 = vmatpush.msra.mxu0 0.0
    %2977 = vmatpush.msra.mxu0 0.0
    %2978 = vmatpush.msra.mxu0 0.0
    %2979 = vmatpush.msra.mxu0 0.0
    %2980 = vmatpush.msra.mxu0 0.0
    %2981 = vmatpush.msra.mxu0 0.0
    %2982 = vmatpush.msra.mxu0 0.0
    %2983 = vmatpush.msra.mxu0 0.0
    %2984 = vmatpush.msra.mxu0 0.0
    %2985 = vmatpush.msra.mxu0 0.0
    %2986 = vmatpush.msra.mxu0 0.0
    %2987 = vmatpush.msra.mxu0 %v2969
    %2988 = vmatpush.msra.mxu0 %v2967
    %2989 = vmatpush.msra.mxu0 %v2965
    %2990 = vmatpush.msra.mxu0 %v2963
    %2991 = vmatmul.f32.gmra.mxu0 %v2973
    %v2992 = vpop.f32.mrf.mxu0
    %v2993 = vadd.f32 0.0, %v2992
    %2994 = vdwg.mxu0
    %2995 = vmatpush.msra.mxu0 0.0
    %2996 = vmatpush.msra.mxu0 0.0
    %2997 = vmatpush.msra.mxu0 0.0
    %2998 = vmatpush.msra.mxu0 0.0
    %2999 = vmatpush.msra.mxu0 0.0
    %3000 = vmatpush.msra.mxu0 0.0
    %3001 = vmatpush.msra.mxu0 0.0
    %3002 = vmatpush.msra.mxu0 0.0
    %3003 = vmatpush.msra.mxu0 0.0
    %3004 = vmatpush.msra.mxu0 0.0
    %3005 = vmatpush.msra.mxu0 0.0
    %3006 = vmatpush.msra.mxu0 0.0
    %3007 = vmatpush.msra.mxu0 %v2970
    %3008 = vmatpush.msra.mxu0 %v2968
    %3009 = vmatpush.msra.mxu0 %v2966
    %3010 = vmatpush.msra.mxu0 %v2964
    %3011 = vmatmul.f32.gmra.mxu0 %v2973
    %v3012 = vpop.f32.mrf.mxu0
    %v3013 = vadd.f32 0.0, %v3012
    %3014 = vdwg.mxu0
    %v3015 = vadd.f32 %v2941, %v2993
    %v3016 = vadd.f32 %v2961, %v3013
    %v3017 = vld [vmem:[%s13] sm:$0x3]
    %v3019 = vperm.slane %v3017, 0
    %v3020 = vperm.slane %v3017, 1
    %v3023 = vadd.f32 %v3015, %v3019
    %v3024 = vadd.f32 %v3016, %v3020
    %v3025 = vmax.f32 %v3023, 0.0
    %v3026 = vmax.f32 %v3024, 0.0
    %v3027 = vld [vmem:[%s14] sm:$0xff]
    %v3028 = vld [vmem:[%s14 + $0x8] sm:$0xff]
    %v3029 = vld [vmem:[%s14 + $0x10] sm:$0xff]
    %v3030 = vld [vmem:[%s14 + $0x18] sm:$0xff]
    %v3031 = vld [vmem:[%s14 + $0x20] sm:$0xff]
    %v3032 = vld [vmem:[%s14 + $0x28] sm:$0xff]
    %v3033 = vld [vmem:[%s14 + $0x30] sm:$0xff]
    %v3034 = vld [vmem:[%s14 + $0x38] sm:$0xff]
    %v3035 = vld [vmem:[%s14 + $0x40] sm:$0xff]
    %v3036 = vld [vmem:[%s14 + $0x48] sm:$0xff]
    %v3037 = vld [vmem:[%s14 + $0x50] sm:$0xff]
    %v3038 = vld [vmem:[%s14 + $0x58] sm:$0xff]
    %v3039 = vld [vmem:[%s14 + $0x60] sm:$0xff]
    %v3040 = vld [vmem:[%s14 + $0x68] sm:$0xff]
    %v3041 = vld [vmem:[%s14 + $0x70] sm:$0xff]
    %v3042 = vld [vmem:[%s14 + $0x78] sm:$0xff]
    %v3043 = vld [vmem:[%s14 + $0x80] sm:$0xff]
    %v3044 = vld [vmem:[%s14 + $0x88] sm:$0xff]
    %v3045 = vld [vmem:[%s14 + $0x90] sm:$0xff]
    %v3046 = vld [vmem:[%s14 + $0x98] sm:$0xff]
    %v3047 = vld [vmem:[%s14 + $0xa0] sm:$0xff]
    %v3048 = vld [vmem:[%s14 + $0xa8] sm:$0xff]
    %v3049 = vld [vmem:[%s14 + $0xb0] sm:$0xff]
    %v3050 = vld [vmem:[%s14 + $0xb8] sm:$0xff]
    %v3051 = vld [vmem:[%s14 + $0xc0] sm:$0xff]
    %v3052 = vld [vmem:[%s14 + $0xc8] sm:$0xff]
    %v3053 = vld [vmem:[%s14 + $0xd0] sm:$0xff]
    %v3054 = vld [vmem:[%s14 + $0xd8] sm:$0xff]
    %v3055 = vld [vmem:[%s14 + $0xe0] sm:$0xff]
    %v3056 = vld [vmem:[%s14 + $0xe8] sm:$0xff]
    %v3057 = vld [vmem:[%s14 + $0xf0] sm:$0xff]
    %v3058 = vld [vmem:[%s14 + $0xf8] sm:$0xff]
    %v3059 = vld [vmem:[%s15] sm:$0x1]
    %v3061 = vperm.slane %v3059, 0
    %3063 = vmatpush.msra.mxu0 %v3042
    %3064 = vmatpush.msra.mxu0 %v3041
    %3065 = vmatpush.msra.mxu0 %v3040
    %3066 = vmatpush.msra.mxu0 %v3039
    %3067 = vmatpush.msra.mxu0 %v3038
    %3068 = vmatpush.msra.mxu0 %v3037
    %3069 = vmatpush.msra.mxu0 %v3036
    %3070 = vmatpush.msra.mxu0 %v3035
    %3071 = vmatpush.msra.mxu0 %v3034
    %3072 = vmatpush.msra.mxu0 %v3033
    %3073 = vmatpush.msra.mxu0 %v3032
    %3074 = vmatpush.msra.mxu0 %v3031
    %3075 = vmatpush.msra.mxu0 %v3030
    %3076 = vmatpush.msra.mxu0 %v3029
    %3077 = vmatpush.msra.mxu0 %v3028
    %3078 = vmatpush.msra.mxu0 %v3027
    %3079 = vmatmul.f32.gmra.mxu0 %v3025
    %v3080 = vpop.f32.mrf.mxu0
    %v3081 = vadd.f32 %v3061, %v3080
    %3082 = vdwg.mxu0
    %3083 = vmatpush.msra.mxu0 %v3058
    %3084 = vmatpush.msra.mxu0 %v3057
    %3085 = vmatpush.msra.mxu0 %v3056
    %3086 = vmatpush.msra.mxu0 %v3055
    %3087 = vmatpush.msra.mxu0 %v3054
    %3088 = vmatpush.msra.mxu0 %v3053
    %3089 = vmatpush.msra.mxu0 %v3052
    %3090 = vmatpush.msra.mxu0 %v3051
    %3091 = vmatpush.msra.mxu0 %v3050
    %3092 = vmatpush.msra.mxu0 %v3049
    %3093 = vmatpush.msra.mxu0 %v3048
    %3094 = vmatpush.msra.mxu0 %v3047
    %3095 = vmatpush.msra.mxu0 %v3046
    %3096 = vmatpush.msra.mxu0 %v3045
    %3097 = vmatpush.msra.mxu0 %v3044
    %3098 = vmatpush.msra.mxu0 %v3043
    %3099 = vmatmul.f32.gmra.mxu0 %v3026
    %v3100 = vpop.f32.mrf.mxu0
    %v3101 = vadd.f32 %v3081, %v3100
    %3102 = vdwg.mxu0
    %v3103 = vmax.f32 %v3101, 0.0
    %v3104 = vld [vmem:[%s16] sm:$0xff]
    %v3105 = vld [vmem:[%s16 + $0x8] sm:$0xff]
    %v3106 = vld [vmem:[%s16 + $0x10] sm:$0xff]
    %v3107 = vld [vmem:[%s16 + $0x18] sm:$0xff]
    %v3108 = vld [vmem:[%s16 + $0x20] sm:$0xff]
    %v3109 = vld [vmem:[%s16 + $0x28] sm:$0xff]
    %v3110 = vld [vmem:[%s16 + $0x30] sm:$0xff]
    %v3111 = vld [vmem:[%s16 + $0x38] sm:$0xff]
    %v3112 = vld [vmem:[%s16 + $0x40] sm:$0xff]
    %v3113 = vld [vmem:[%s16 + $0x48] sm:$0xff]
    %v3114 = vld [vmem:[%s16 + $0x50] sm:$0xff]
    %v3115 = vld [vmem:[%s16 + $0x58] sm:$0xff]
    %v3116 = vld [vmem:[%s16 + $0x60] sm:$0xff]
    %v3117 = vld [vmem:[%s16 + $0x68] sm:$0xff]
    %v3118 = vld [vmem:[%s16 + $0x70] sm:$0xff]
    %v3119 = vld [vmem:[%s16 + $0x78] sm:$0xff]
    %v3120 = vld [vmem:[%s17] sm:$0x1]
    %v3122 = vperm.slane %v3120, 0
    %3124 = vmatpush.msra.mxu0 %v3119
    %3125 = vmatpush.msra.mxu0 %v3118
    %3126 = vmatpush.msra.mxu0 %v3117
    %3127 = vmatpush.msra.mxu0 %v3116
    %3128 = vmatpush.msra.mxu0 %v3115
    %3129 = vmatpush.msra.mxu0 %v3114
    %3130 = vmatpush.msra.mxu0 %v3113
    %3131 = vmatpush.msra.mxu0 %v3112
    %3132 = vmatpush.msra.mxu0 %v3111
    %3133 = vmatpush.msra.mxu0 %v3110
    %3134 = vmatpush.msra.mxu0 %v3109
    %3135 = vmatpush.msra.mxu0 %v3108
    %3136 = vmatpush.msra.mxu0 %v3107
    %3137 = vmatpush.msra.mxu0 %v3106
    %3138 = vmatpush.msra.mxu0 %v3105
    %3139 = vmatpush.msra.mxu0 %v3104
    %3140 = vmatmul.f32.gmra.mxu0 %v3103
    %v3141 = vpop.f32.mrf.mxu0
    %v3142 = vadd.f32 %v3122, %v3141
    %3143 = vdwg.mxu0
    %vm3144 = vcmask 39936
    %3145 = vst.msk [vmem:[#allocation4] sm:$0xff] %vm3144, %v3142
    // Predicated region
    $region74: #{c_rnn_forward.3} parent=1 // pred_check
      _
    $region75: #{c_rnn_forward.3} parent=1 // pred_check_branch
      %3147 = sbr.rel (0) target = $region77
    $region76: #{c_rnn_forward.3} parent=1 // pred_region
      %3149 = vsyncadd [#allocation5], 0
      %s3151 = sshll.u32 [#allocation4], 4
      %s3152 = int_to_ptr.vmem [resolvable:$true] %s3151
      %s3153 = sshll.u32 %s18, 4
      %s3154 = int_to_ptr.hbm [resolvable:$true] %s3153
      %3156 = dma.vmem_to_hbm [thread:$0]  %s3152, 128, %s3154, [#allocation5]
    $region77: #{c_rnn_forward.3} parent=1 // pred_fallthru
      _
    // Predicated region
    $region78: #{c_rnn_forward.3} parent=1 // pred_check
      _
    $region79: #{c_rnn_forward.3} parent=1 // pred_check_branch
      %3158 = sbr.rel (0) target = $region81
    $region80: #{c_rnn_forward.3} parent=1 // pred_region
      %3160 = dma.done [#allocation5], 128
    $region81: #{c_rnn_forward.3} parent=1 // pred_fallthru
      _
    %3161 = vsyncpa [#allocation5], 1

</llo_original>
